<compile_context>
chip_gen: v5e
topology: v5e:2x2
jax: 0.10.0
libtpu: 0.0.40
codegen_flags: <defaults>
</compile_context>

<pallas_src>
import math
from functools import partial

import jax
import jax.numpy as jnp
from jax.experimental import pallas as pl
from jax.experimental.pallas import tpu as pltpu


# ---------------------------------------------------------------------------
# parameters
# ---------------------------------------------------------------------------
def init_params(key, embed_dim, num_heads):
    """Deterministic synthetic init (torch-Linear-style uniform).

    Weights are (in_features, out_features) so the kernel computes x @ W + b.
    The attention scale 1/sqrt(head_dim) is folded into Wq / bq (documented:
    do not reuse these params unscaled elsewhere).
    """
    head_dim = embed_dim // num_heads
    scale = 1.0 / math.sqrt(head_dim)
    bound = 1.0 / math.sqrt(embed_dim)
    ks = jax.random.split(key, 8)

    def lin(kw, kb):
        w = jax.random.uniform(kw, (embed_dim, embed_dim), jnp.float32, -bound, bound)
        b = jax.random.uniform(kb, (1, embed_dim), jnp.float32, -bound, bound)
        return w, b

    wq, bq = lin(ks[0], ks[1])
    wk, bk = lin(ks[2], ks[3])
    wv, bv = lin(ks[4], ks[5])
    wo, bo = lin(ks[6], ks[7])
    return (wq * scale, bq * scale, wk, bk, wv, bv, wo, bo)


def _pick_q_tile(q_len, batch, target_rows=512):
    """Largest divisor tq of q_len with tq*batch <= target_rows (>= 1 row tile)."""
    best = 1
    for tq in range(1, q_len + 1):
        if q_len % tq == 0 and tq * batch <= target_rows:
            best = tq
    return best


# ---------------------------------------------------------------------------
# fused multi-head cross-attention kernel (single pallas_call)
# ---------------------------------------------------------------------------
def _mha_kernel(q_ref, k_ref, v_ref,
                wq_ref, bq_ref, wk_ref, bk_ref, wv_ref, bv_ref,
                wo_ref, bo_ref, o_ref,
                *, q_tile, batch, kv_len, num_heads, head_dim):
    embed = num_heads * head_dim
    f32, bf16 = jnp.float32, jnp.bfloat16

    # resident weights -> bf16 once (MXU is bf16-native; accumulation stays f32)
    wq = wq_ref[...].astype(bf16)
    wk = wk_ref[...].astype(bf16)
    wv = wv_ref[...].astype(bf16)
    wo = wo_ref[...].astype(bf16)

    # ---- input projections: one wide 2-D matmul per tensor over ALL rows ----
    # rows stay in (seq, batch) order -> no layout transposes anywhere
    q2 = q_ref[...].reshape(q_tile * batch, embed).astype(bf16)
    k2 = k_ref[...].reshape(kv_len * batch, embed).astype(bf16)
    v2 = v_ref[...].reshape(kv_len * batch, embed).astype(bf16)

    # scale 1/sqrt(head_dim) is already folded into wq/bq
    q_p = jnp.dot(q2, wq, preferred_element_type=f32) + bq_ref[...]
    k_p = jnp.dot(k2, wk, preferred_element_type=f32) + bk_ref[...]
    v_p = jnp.dot(v2, wv, preferred_element_type=f32) + bv_ref[...]

    q3 = q_p.reshape(q_tile, batch, embed)
    k3 = k_p.reshape(kv_len, batch, embed)
    v3 = v_p.reshape(kv_len, batch, embed)

    # ---- attention: all heads in ONE batched einsum pair per batch element ----
    ctx_all = []
    for b in range(batch):                                   # static unroll, batch is small
        qb = pltpu.einshape("qhd->hqd",
                            q3[:, b, :].reshape(q_tile, num_heads, head_dim))
        kb = pltpu.einshape("khd->hkd",
                            k3[:, b, :].reshape(kv_len, num_heads, head_dim))
        vb = pltpu.einshape("khd->hkd",
                            v3[:, b, :].reshape(kv_len, num_heads, head_dim))

        # (H, tq, Lk): heads are the (leading) batch dim of a single dot_general
        s = jnp.einsum("hqd,hkd->hqk", qb.astype(bf16), kb.astype(bf16),
                       preferred_element_type=f32)
        s = s - jnp.max(s, axis=-1, keepdims=True)
        p = jnp.exp(s)
        denom = jnp.sum(p, axis=-1, keepdims=True)           # (H, tq, 1)

        ctx = jnp.einsum("hqk,hkd->hqd", p.astype(bf16), vb.astype(bf16),
                         preferred_element_type=f32)         # (H, tq, Dh)
        # deferred softmax normalization: scale the small context, not p
        ctx = ctx * pl.reciprocal(denom)                     # exact reciprocal
        ctx_all.append(pltpu.einshape("hqd->qhd", ctx).reshape(q_tile, embed))

    # reassemble rows in (q, b) order and run ONE output-projection matmul
    ctx_rows = jnp.stack(ctx_all, axis=1).reshape(q_tile * batch, embed)
    out = jnp.dot(ctx_rows.astype(bf16), wo, preferred_element_type=f32) + bo_ref[...]

    # lane-dense store (last dim = embed = 128), already in (Lq, B, E) order
    o_ref[...] = out.reshape(q_tile, batch, embed).astype(o_ref.dtype)


def cross_attention_block(q, k, v, params, *, num_heads=8):
    """q:(Lq,B,E), k/v:(Lkv,B,E) -> (Lq,B,E); nn.MultiheadAttention semantics."""
    Lq, B, E = q.shape
    Lk = k.shape[0]
    assert E % num_heads == 0
    head_dim = E // num_heads
    wq, bq, wk, bk, wv, bv, wo, bo = params

    tq = _pick_q_tile(Lq, B)           # toy shapes -> tq = Lq -> single grid step
    grid = (Lq // tq,)

    kernel = partial(_mha_kernel, q_tile=tq, batch=B, kv_len=Lk,
                     num_heads=num_heads, head_dim=head_dim)

    q_spec = pl.BlockSpec((tq, B, E), lambda i: (i, 0, 0))      # query-row tile
    kv_spec = pl.BlockSpec((Lk, B, E), lambda i: (0, 0, 0))     # full, resident
    w_spec = pl.BlockSpec((E, E), lambda i: (0, 0))             # resident weights
    b_spec = pl.BlockSpec((1, E), lambda i: (0, 0))             # resident biases

    out = pl.pallas_call(
        kernel,
        out_shape=jax.ShapeDtypeStruct((Lq, B, E), jnp.float32),
        grid=grid,
        in_specs=[q_spec, kv_spec, kv_spec,
                  w_spec, b_spec, w_spec, b_spec, w_spec, b_spec,
                  w_spec, b_spec],
        out_specs=pl.BlockSpec((tq, B, E), lambda i: (i, 0, 0)),
        compiler_params=pltpu.CompilerParams(
            dimension_semantics=("parallel",)),                 # v7x: 2 TCs split q tiles
    )(q, k, v, wq, bq, wk, bk, wv, bv, wo, bo)
    return out


# ---------------------------------------------------------------------------
# pure-JAX f32 reference (numerical sanity check)
# ---------------------------------------------------------------------------
def _reference(q, k, v, params, num_heads):
    wq, bq, wk, bk, wv, bv, wo, bo = params      # scale already folded in wq/bq
    Lq, B, E = q.shape
    Lk = k.shape[0]
    Dh = E // num_heads
    Q = q @ wq + bq[0]
    K = k @ wk + bk[0]
    V = v @ wv + bv[0]
    Q = Q.reshape(Lq, B, num_heads, Dh).transpose(1, 2, 0, 3)
    K = K.reshape(Lk, B, num_heads, Dh).transpose(1, 2, 0, 3)
    V = V.reshape(Lk, B, num_heads, Dh).transpose(1, 2, 0, 3)
    s = jnp.einsum("bhqd,bhkd->bhqk", Q, K)
    p = jax.nn.softmax(s, axis=-1)
    ctx = jnp.einsum("bhqk,bhkd->bhqd", p, V)
    ctx = ctx.transpose(2, 0, 1, 3).reshape(Lq, B, E)
    return ctx @ wo + bo[0]


# ---------------------------------------------------------------------------
# main
# ---------------------------------------------------------------------------
if __name__ == "__main__":
    # small example: batch=2, query seq=8, key/value seq=16, embed_dim=128
    # (num_heads=8 -> head_dim=16; E=128 keeps the HBM output lane-dense)
    B, LQ, LKV = 2, 8, 16
    NUM_HEADS = 8
    E = 128

    key = jax.random.PRNGKey(0)
    kq, kk, kvv, kp = jax.random.split(key, 4)
    q = jax.random.normal(kq, (LQ, B, E), jnp.float32)
    k = jax.random.normal(kk, (LKV, B, E), jnp.float32)
    v = jax.random.normal(kvv, (LKV, B, E), jnp.float32)

    # TODO(synk): the PyTorch module builds its MultiheadAttention lazily inside
    # forward and also returns (and discards) averaged attention weights; here
    # parameters are built ahead of time and only attn_output is produced.
    params = init_params(kp, E, NUM_HEADS)

    out = cross_attention_block(q, k, v, params, num_heads=NUM_HEADS)
    out = jax.block_until_ready(out)
    assert out.shape == (LQ, B, E) and out.dtype == jnp.float32

    ref = _reference(q, k, v, params, NUM_HEADS)
    max_err = float(jnp.max(jnp.abs(out - ref)))
    # tolerance covers bf16 MXU inputs (softmax math & accumulation stay f32)
    assert max_err < 5e-2, f"max abs err too large: {max_err}"

    print("KERNEL_OK")
</pallas_src>

<mosaic_0001>
module attributes {stable_mosaic.version = 11 : i64} {
  func.func @_mha_kernel(%arg0: i32, %arg1: memref<8x2x128xf32, #tpu.memory_space<vmem>>, %arg2: memref<16x2x128xf32, #tpu.memory_space<vmem>>, %arg3: memref<16x2x128xf32, #tpu.memory_space<vmem>>, %arg4: memref<128x128xf32, #tpu.memory_space<vmem>>, %arg5: memref<1x128xf32, #tpu.memory_space<vmem>>, %arg6: memref<128x128xf32, #tpu.memory_space<vmem>>, %arg7: memref<1x128xf32, #tpu.memory_space<vmem>>, %arg8: memref<128x128xf32, #tpu.memory_space<vmem>>, %arg9: memref<1x128xf32, #tpu.memory_space<vmem>>, %arg10: memref<128x128xf32, #tpu.memory_space<vmem>>, %arg11: memref<1x128xf32, #tpu.memory_space<vmem>>, %arg12: memref<8x2x128xf32, #tpu.memory_space<vmem>>) attributes {dimension_semantics = [#tpu.dimension_semantics<parallel>], iteration_bounds = array<i64: 1>, scalar_prefetch = 0 : i64, scratch_operands = 0 : i64, tpu.core_type = #tpu.core_type<tc>, window_params = [{transform_indices = @transform_0, window_bounds = array<i64: 8, 2, 128>}, {pipeline_mode = #tpu.pipeline_mode<synchronous>, transform_indices = @transform_1, window_bounds = array<i64: 16, 2, 128>}, {pipeline_mode = #tpu.pipeline_mode<synchronous>, transform_indices = @transform_2, window_bounds = array<i64: 16, 2, 128>}, {pipeline_mode = #tpu.pipeline_mode<synchronous>, transform_indices = @transform_3, window_bounds = array<i64: 128, 128>}, {pipeline_mode = #tpu.pipeline_mode<synchronous>, transform_indices = @transform_4, window_bounds = array<i64: 1, 128>}, {pipeline_mode = #tpu.pipeline_mode<synchronous>, transform_indices = @transform_5, window_bounds = array<i64: 128, 128>}, {pipeline_mode = #tpu.pipeline_mode<synchronous>, transform_indices = @transform_6, window_bounds = array<i64: 1, 128>}, {pipeline_mode = #tpu.pipeline_mode<synchronous>, transform_indices = @transform_7, window_bounds = array<i64: 128, 128>}, {pipeline_mode = #tpu.pipeline_mode<synchronous>, transform_indices = @transform_8, window_bounds = array<i64: 1, 128>}, {pipeline_mode = #tpu.pipeline_mode<synchronous>, transform_indices = @transform_9, window_bounds = array<i64: 128, 128>}, {pipeline_mode = #tpu.pipeline_mode<synchronous>, transform_indices = @transform_10, window_bounds = array<i64: 1, 128>}, {transform_indices = @transform_11, window_bounds = array<i64: 8, 2, 128>}]} {
    %c0 = arith.constant 0 : index
    %c0_0 = arith.constant 0 : index
    %0 = vector.load %arg4[%c0, %c0_0] : memref<128x128xf32, #tpu.memory_space<vmem>>, vector<128x128xf32>
    %1 = arith.truncf %0 : vector<128x128xf32> to vector<128x128xbf16>
    %c0_1 = arith.constant 0 : index
    %c0_2 = arith.constant 0 : index
    %2 = vector.load %arg6[%c0_1, %c0_2] : memref<128x128xf32, #tpu.memory_space<vmem>>, vector<128x128xf32>
    %3 = arith.truncf %2 : vector<128x128xf32> to vector<128x128xbf16>
    %c0_3 = arith.constant 0 : index
    %c0_4 = arith.constant 0 : index
    %4 = vector.load %arg8[%c0_3, %c0_4] : memref<128x128xf32, #tpu.memory_space<vmem>>, vector<128x128xf32>
    %5 = arith.truncf %4 : vector<128x128xf32> to vector<128x128xbf16>
    %c0_5 = arith.constant 0 : index
    %c0_6 = arith.constant 0 : index
    %6 = vector.load %arg10[%c0_5, %c0_6] : memref<128x128xf32, #tpu.memory_space<vmem>>, vector<128x128xf32>
    %7 = arith.truncf %6 : vector<128x128xf32> to vector<128x128xbf16>
    %c0_7 = arith.constant 0 : index
    %c0_8 = arith.constant 0 : index
    %c0_9 = arith.constant 0 : index
    %8 = vector.load %arg1[%c0_7, %c0_8, %c0_9] : memref<8x2x128xf32, #tpu.memory_space<vmem>>, vector<8x2x128xf32>
    %9 = vector.shape_cast %8 : vector<8x2x128xf32> to vector<16x128xf32>
    %10 = arith.truncf %9 : vector<16x128xf32> to vector<16x128xbf16>
    %c0_10 = arith.constant 0 : index
    %c0_11 = arith.constant 0 : index
    %c0_12 = arith.constant 0 : index
    %11 = vector.load %arg2[%c0_10, %c0_11, %c0_12] : memref<16x2x128xf32, #tpu.memory_space<vmem>>, vector<16x2x128xf32>
    %12 = vector.shape_cast %11 : vector<16x2x128xf32> to vector<32x128xf32>
    %13 = arith.truncf %12 : vector<32x128xf32> to vector<32x128xbf16>
    %c0_13 = arith.constant 0 : index
    %c0_14 = arith.constant 0 : index
    %c0_15 = arith.constant 0 : index
    %14 = vector.load %arg3[%c0_13, %c0_14, %c0_15] : memref<16x2x128xf32, #tpu.memory_space<vmem>>, vector<16x2x128xf32>
    %15 = vector.shape_cast %14 : vector<16x2x128xf32> to vector<32x128xf32>
    %16 = arith.truncf %15 : vector<32x128xf32> to vector<32x128xbf16>
    %cst = arith.constant dense<0.000000e+00> : vector<16x128xf32>
    %17 = tpu.matmul %10, %1, %cst {dimension_numbers = #tpu.dot_dimension_numbers<[1], [0], [0], [1], [0, 0, 1, 1], [], []>} : vector<16x128xbf16>, vector<128x128xbf16>, vector<16x128xf32> -> vector<16x128xf32>
    %c0_16 = arith.constant 0 : index
    %c0_17 = arith.constant 0 : index
    %18 = vector.load %arg5[%c0_16, %c0_17] : memref<1x128xf32, #tpu.memory_space<vmem>>, vector<1x128xf32>
    %19 = vector.broadcast %18 : vector<1x128xf32> to vector<16x128xf32>
    %20 = arith.addf %17, %19 : vector<16x128xf32>
    %cst_18 = arith.constant dense<0.000000e+00> : vector<32x128xf32>
    %21 = tpu.matmul %13, %3, %cst_18 {dimension_numbers = #tpu.dot_dimension_numbers<[1], [0], [0], [1], [0, 0, 1, 1], [], []>} : vector<32x128xbf16>, vector<128x128xbf16>, vector<32x128xf32> -> vector<32x128xf32>
    %c0_19 = arith.constant 0 : index
    %c0_20 = arith.constant 0 : index
    %22 = vector.load %arg7[%c0_19, %c0_20] : memref<1x128xf32, #tpu.memory_space<vmem>>, vector<1x128xf32>
    %23 = vector.broadcast %22 : vector<1x128xf32> to vector<32x128xf32>
    %24 = arith.addf %21, %23 : vector<32x128xf32>
    %cst_21 = arith.constant dense<0.000000e+00> : vector<32x128xf32>
    %25 = tpu.matmul %16, %5, %cst_21 {dimension_numbers = #tpu.dot_dimension_numbers<[1], [0], [0], [1], [0, 0, 1, 1], [], []>} : vector<32x128xbf16>, vector<128x128xbf16>, vector<32x128xf32> -> vector<32x128xf32>
    %c0_22 = arith.constant 0 : index
    %c0_23 = arith.constant 0 : index
    %26 = vector.load %arg9[%c0_22, %c0_23] : memref<1x128xf32, #tpu.memory_space<vmem>>, vector<1x128xf32>
    %27 = vector.broadcast %26 : vector<1x128xf32> to vector<32x128xf32>
    %28 = arith.addf %25, %27 : vector<32x128xf32>
    %29 = vector.shape_cast %20 : vector<16x128xf32> to vector<8x2x128xf32>
    %30 = vector.shape_cast %24 : vector<32x128xf32> to vector<16x2x128xf32>
    %31 = vector.shape_cast %28 : vector<32x128xf32> to vector<16x2x128xf32>
    %32 = vector.extract_strided_slice %29 {offsets = [0, 0, 0], sizes = [8, 1, 128], strides = [1, 1, 1]} : vector<8x2x128xf32> to vector<8x1x128xf32>
    %33 = vector.shape_cast %32 : vector<8x1x128xf32> to vector<8x128xf32>
    %34 = vector.shape_cast %33 : vector<8x128xf32> to vector<8x8x16xf32>
    %35 = tpu.transpose %34, [1, 0, 2] : vector<8x8x16xf32> -> vector<8x8x16xf32>
    %36 = vector.extract_strided_slice %30 {offsets = [0, 0, 0], sizes = [16, 1, 128], strides = [1, 1, 1]} : vector<16x2x128xf32> to vector<16x1x128xf32>
    %37 = vector.shape_cast %36 : vector<16x1x128xf32> to vector<16x128xf32>
    %38 = vector.shape_cast %37 : vector<16x128xf32> to vector<16x8x16xf32>
    %39 = tpu.transpose %38, [1, 0, 2] : vector<16x8x16xf32> -> vector<8x16x16xf32>
    %40 = vector.extract_strided_slice %31 {offsets = [0, 0, 0], sizes = [16, 1, 128], strides = [1, 1, 1]} : vector<16x2x128xf32> to vector<16x1x128xf32>
    %41 = vector.shape_cast %40 : vector<16x1x128xf32> to vector<16x128xf32>
    %42 = vector.shape_cast %41 : vector<16x128xf32> to vector<16x8x16xf32>
    %43 = tpu.transpose %42, [1, 0, 2] : vector<16x8x16xf32> -> vector<8x16x16xf32>
    %44 = arith.truncf %35 : vector<8x8x16xf32> to vector<8x8x16xbf16>
    %45 = arith.truncf %39 : vector<8x16x16xf32> to vector<8x16x16xbf16>
    "tpu.trace_start"() <{level = 10 : i32, message = "hqd,hkd->hqk"}> : () -> ()
    %cst_24 = arith.constant dense<0.000000e+00> : vector<8x8x16xf32>
    %46 = tpu.matmul %44, %45, %cst_24 {dimension_numbers = #tpu.dot_dimension_numbers<[2], [2], [1], [1], [0, 0, 0, 1, 1, 1], [0], [0]>} : vector<8x8x16xbf16>, vector<8x16x16xbf16>, vector<8x8x16xf32> -> vector<8x8x16xf32>
    "tpu.trace_stop"() : () -> ()
    %cst_25 = arith.constant dense<0xFF800000> : vector<8x8xf32>
    %47 = vector.multi_reduction <maximumf>, %46, %cst_25 [2] : vector<8x8x16xf32> to vector<8x8xf32>
    %48 = vector.shape_cast %47 : vector<8x8xf32> to vector<8x8x1xf32>
    %49 = vector.broadcast %48 : vector<8x8x1xf32> to vector<8x8x16xf32>
    %50 = arith.subf %46, %49 : vector<8x8x16xf32>
    %51 = math.exp %50 : vector<8x8x16xf32>
    %cst_26 = arith.constant dense<0.000000e+00> : vector<8x8xf32>
    %52 = vector.multi_reduction <add>, %51, %cst_26 [2] : vector<8x8x16xf32> to vector<8x8xf32>
    %53 = vector.shape_cast %52 : vector<8x8xf32> to vector<8x8x1xf32>
    %54 = arith.truncf %51 : vector<8x8x16xf32> to vector<8x8x16xbf16>
    %55 = arith.truncf %43 : vector<8x16x16xf32> to vector<8x16x16xbf16>
    "tpu.trace_start"() <{level = 10 : i32, message = "hqk,hkd->hqd"}> : () -> ()
    %cst_27 = arith.constant dense<0.000000e+00> : vector<8x8x16xf32>
    %56 = tpu.matmul %54, %55, %cst_27 {dimension_numbers = #tpu.dot_dimension_numbers<[2], [1], [1], [2], [0, 0, 0, 1, 1, 2], [0], [0]>} : vector<8x8x16xbf16>, vector<8x16x16xbf16>, vector<8x8x16xf32> -> vector<8x8x16xf32>
    "tpu.trace_stop"() : () -> ()
    %57 = tpu.reciprocal %53 : vector<8x8x1xf32> -> vector<8x8x1xf32>
    %58 = vector.broadcast %57 : vector<8x8x1xf32> to vector<8x8x16xf32>
    %59 = arith.mulf %56, %58 : vector<8x8x16xf32>
    %60 = tpu.transpose %59, [1, 0, 2] : vector<8x8x16xf32> -> vector<8x8x16xf32>
    %61 = vector.shape_cast %60 : vector<8x8x16xf32> to vector<8x128xf32>
    %62 = vector.extract_strided_slice %29 {offsets = [0, 1, 0], sizes = [8, 1, 128], strides = [1, 1, 1]} : vector<8x2x128xf32> to vector<8x1x128xf32>
    %63 = vector.shape_cast %62 : vector<8x1x128xf32> to vector<8x128xf32>
    %64 = vector.shape_cast %63 : vector<8x128xf32> to vector<8x8x16xf32>
    %65 = tpu.transpose %64, [1, 0, 2] : vector<8x8x16xf32> -> vector<8x8x16xf32>
    %66 = vector.extract_strided_slice %30 {offsets = [0, 1, 0], sizes = [16, 1, 128], strides = [1, 1, 1]} : vector<16x2x128xf32> to vector<16x1x128xf32>
    %67 = vector.shape_cast %66 : vector<16x1x128xf32> to vector<16x128xf32>
    %68 = vector.shape_cast %67 : vector<16x128xf32> to vector<16x8x16xf32>
    %69 = tpu.transpose %68, [1, 0, 2] : vector<16x8x16xf32> -> vector<8x16x16xf32>
    %70 = vector.extract_strided_slice %31 {offsets = [0, 1, 0], sizes = [16, 1, 128], strides = [1, 1, 1]} : vector<16x2x128xf32> to vector<16x1x128xf32>
    %71 = vector.shape_cast %70 : vector<16x1x128xf32> to vector<16x128xf32>
    %72 = vector.shape_cast %71 : vector<16x128xf32> to vector<16x8x16xf32>
    %73 = tpu.transpose %72, [1, 0, 2] : vector<16x8x16xf32> -> vector<8x16x16xf32>
    %74 = arith.truncf %65 : vector<8x8x16xf32> to vector<8x8x16xbf16>
    %75 = arith.truncf %69 : vector<8x16x16xf32> to vector<8x16x16xbf16>
    "tpu.trace_start"() <{level = 10 : i32, message = "hqd,hkd->hqk"}> : () -> ()
    %cst_28 = arith.constant dense<0.000000e+00> : vector<8x8x16xf32>
    %76 = tpu.matmul %74, %75, %cst_28 {dimension_numbers = #tpu.dot_dimension_numbers<[2], [2], [1], [1], [0, 0, 0, 1, 1, 1], [0], [0]>} : vector<8x8x16xbf16>, vector<8x16x16xbf16>, vector<8x8x16xf32> -> vector<8x8x16xf32>
    "tpu.trace_stop"() : () -> ()
    %cst_29 = arith.constant dense<0xFF800000> : vector<8x8xf32>
    %77 = vector.multi_reduction <maximumf>, %76, %cst_29 [2] : vector<8x8x16xf32> to vector<8x8xf32>
    %78 = vector.shape_cast %77 : vector<8x8xf32> to vector<8x8x1xf32>
    %79 = vector.broadcast %78 : vector<8x8x1xf32> to vector<8x8x16xf32>
    %80 = arith.subf %76, %79 : vector<8x8x16xf32>
    %81 = math.exp %80 : vector<8x8x16xf32>
    %cst_30 = arith.constant dense<0.000000e+00> : vector<8x8xf32>
    %82 = vector.multi_reduction <add>, %81, %cst_30 [2] : vector<8x8x16xf32> to vector<8x8xf32>
    %83 = vector.shape_cast %82 : vector<8x8xf32> to vector<8x8x1xf32>
    %84 = arith.truncf %81 : vector<8x8x16xf32> to vector<8x8x16xbf16>
    %85 = arith.truncf %73 : vector<8x16x16xf32> to vector<8x16x16xbf16>
    "tpu.trace_start"() <{level = 10 : i32, message = "hqk,hkd->hqd"}> : () -> ()
    %cst_31 = arith.constant dense<0.000000e+00> : vector<8x8x16xf32>
    %86 = tpu.matmul %84, %85, %cst_31 {dimension_numbers = #tpu.dot_dimension_numbers<[2], [1], [1], [2], [0, 0, 0, 1, 1, 2], [0], [0]>} : vector<8x8x16xbf16>, vector<8x16x16xbf16>, vector<8x8x16xf32> -> vector<8x8x16xf32>
    "tpu.trace_stop"() : () -> ()
    %87 = tpu.reciprocal %83 : vector<8x8x1xf32> -> vector<8x8x1xf32>
    %88 = vector.broadcast %87 : vector<8x8x1xf32> to vector<8x8x16xf32>
    %89 = arith.mulf %86, %88 : vector<8x8x16xf32>
    %90 = tpu.transpose %89, [1, 0, 2] : vector<8x8x16xf32> -> vector<8x8x16xf32>
    %91 = vector.shape_cast %90 : vector<8x8x16xf32> to vector<8x128xf32>
    %92 = vector.shape_cast %61 : vector<8x128xf32> to vector<8x1x128xf32>
    %93 = vector.shape_cast %91 : vector<8x128xf32> to vector<8x1x128xf32>
    %94 = tpu.concatenate %92, %93 in 1 : vector<8x1x128xf32>, vector<8x1x128xf32> -> vector<8x2x128xf32>
    %95 = vector.shape_cast %94 : vector<8x2x128xf32> to vector<16x128xf32>
    %96 = arith.truncf %95 : vector<16x128xf32> to vector<16x128xbf16>
    %cst_32 = arith.constant dense<0.000000e+00> : vector<16x128xf32>
    %97 = tpu.matmul %96, %7, %cst_32 {dimension_numbers = #tpu.dot_dimension_numbers<[1], [0], [0], [1], [0, 0, 1, 1], [], []>} : vector<16x128xbf16>, vector<128x128xbf16>, vector<16x128xf32> -> vector<16x128xf32>
    %c0_33 = arith.constant 0 : index
    %c0_34 = arith.constant 0 : index
    %98 = vector.load %arg11[%c0_33, %c0_34] : memref<1x128xf32, #tpu.memory_space<vmem>>, vector<1x128xf32>
    %99 = vector.broadcast %98 : vector<1x128xf32> to vector<16x128xf32>
    %100 = arith.addf %97, %99 : vector<16x128xf32>
    %101 = vector.shape_cast %100 : vector<16x128xf32> to vector<8x2x128xf32>
    %c0_35 = arith.constant 0 : index
    %c0_36 = arith.constant 0 : index
    %c0_37 = arith.constant 0 : index
    %102 = vector.load %arg12[%c0_35, %c0_36, %c0_37] : memref<8x2x128xf32, #tpu.memory_space<vmem>>, vector<8x2x128xf32>
    tpu.vector_store %arg12[%c0_35, %c0_36, %c0_37], %101 {strides = array<i32>} : memref<8x2x128xf32, #tpu.memory_space<vmem>>, vector<8x2x128xf32>,
    return
  }
  func.func @transform_0(%arg0: i32) -> (i32, i32, i32) {
    %c0_i32 = arith.constant 0 : i32
    %c0_i32_0 = arith.constant 0 : i32
    %c0_i32_1 = arith.constant 0 : i32
    return %arg0, %c0_i32, %c0_i32_0 : i32, i32, i32
  }
  func.func @transform_1(%arg0: i32) -> (i32, i32, i32) {
    %c0_i32 = arith.constant 0 : i32
    %c0_i32_0 = arith.constant 0 : i32
    %c0_i32_1 = arith.constant 0 : i32
    %c0_i32_2 = arith.constant 0 : i32
    return %c0_i32, %c0_i32_0, %c0_i32_1 : i32, i32, i32
  }
  func.func @transform_2(%arg0: i32) -> (i32, i32, i32) {
    %c0_i32 = arith.constant 0 : i32
    %c0_i32_0 = arith.constant 0 : i32
    %c0_i32_1 = arith.constant 0 : i32
    %c0_i32_2 = arith.constant 0 : i32
    return %c0_i32, %c0_i32_0, %c0_i32_1 : i32, i32, i32
  }
  func.func @transform_3(%arg0: i32) -> (i32, i32) {
    %c0_i32 = arith.constant 0 : i32
    %c0_i32_0 = arith.constant 0 : i32
    %c0_i32_1 = arith.constant 0 : i32
    return %c0_i32, %c0_i32_0 : i32, i32
  }
  func.func @transform_4(%arg0: i32) -> (i32, i32) {
    %c0_i32 = arith.constant 0 : i32
    %c0_i32_0 = arith.constant 0 : i32
    %c0_i32_1 = arith.constant 0 : i32
    return %c0_i32, %c0_i32_0 : i32, i32
  }
  func.func @transform_5(%arg0: i32) -> (i32, i32) {
    %c0_i32 = arith.constant 0 : i32
    %c0_i32_0 = arith.constant 0 : i32
    %c0_i32_1 = arith.constant 0 : i32
    return %c0_i32, %c0_i32_0 : i32, i32
  }
  func.func @transform_6(%arg0: i32) -> (i32, i32) {
    %c0_i32 = arith.constant 0 : i32
    %c0_i32_0 = arith.constant 0 : i32
    %c0_i32_1 = arith.constant 0 : i32
    return %c0_i32, %c0_i32_0 : i32, i32
  }
  func.func @transform_7(%arg0: i32) -> (i32, i32) {
    %c0_i32 = arith.constant 0 : i32
    %c0_i32_0 = arith.constant 0 : i32
    %c0_i32_1 = arith.constant 0 : i32
    return %c0_i32, %c0_i32_0 : i32, i32
  }
  func.func @transform_8(%arg0: i32) -> (i32, i32) {
    %c0_i32 = arith.constant 0 : i32
    %c0_i32_0 = arith.constant 0 : i32
    %c0_i32_1 = arith.constant 0 : i32
    return %c0_i32, %c0_i32_0 : i32, i32
  }
  func.func @transform_9(%arg0: i32) -> (i32, i32) {
    %c0_i32 = arith.constant 0 : i32
    %c0_i32_0 = arith.constant 0 : i32
    %c0_i32_1 = arith.constant 0 : i32
    return %c0_i32, %c0_i32_0 : i32, i32
  }
  func.func @transform_10(%arg0: i32) -> (i32, i32) {
    %c0_i32 = arith.constant 0 : i32
    %c0_i32_0 = arith.constant 0 : i32
    %c0_i32_1 = arith.constant 0 : i32
    return %c0_i32, %c0_i32_0 : i32, i32
  }
  func.func @transform_11(%arg0: i32) -> (i32, i32, i32) {
    %c0_i32 = arith.constant 0 : i32
    %c0_i32_0 = arith.constant 0 : i32
    %c0_i32_1 = arith.constant 0 : i32
    return %arg0, %c0_i32, %c0_i32_0 : i32, i32, i32
  }
}

</mosaic_0001>

<llo_original>
// kernel: tpu_custom_call.1
$region0: #{tpu_custom_call.1}
  #allocation0 [shape = 'u32[]', space=smem, size = 0x4, offset = 0x4, fixed_abs, tag = 'smem constant byte address 0x4 - core index']
  #allocation1 [shape = 'u32[72,128]{1,0:T(1,128)}', space=vmem, size = 0x9000, scoped, tag = 'internal scratch']
  %s0 = inlined_call_operand.hbm [shape: f32[8,2,128], index: 0, kind: input, shape index: {}]
  %s1 = inlined_call_operand.hbm [shape: f32[16,2,128], index: 1, kind: input, shape index: {}]
  %s2 = inlined_call_operand.hbm [shape: f32[16,2,128], index: 2, kind: input, shape index: {}]
  %s3 = inlined_call_operand.hbm [shape: f32[128,128], index: 3, kind: input, shape index: {}]
  %s4 = inlined_call_operand.vmem [shape: f32[1,128], index: 4, kind: input, shape index: {}]
  %s5 = inlined_call_operand.hbm [shape: f32[128,128], index: 5, kind: input, shape index: {}]
  %s6 = inlined_call_operand.vmem [shape: f32[1,128], index: 6, kind: input, shape index: {}]
  %s7 = inlined_call_operand.hbm [shape: f32[128,128], index: 7, kind: input, shape index: {}]
  %s8 = inlined_call_operand.vmem [shape: f32[1,128], index: 8, kind: input, shape index: {}]
  %s9 = inlined_call_operand.hbm [shape: f32[128,128], index: 9, kind: input, shape index: {}]
  %s10 = inlined_call_operand.vmem [shape: f32[1,128], index: 10, kind: input, shape index: {}]
  %s11 = inlined_call_operand.hbm [shape: f32[8,2,128], index: 11, kind: output, shape index: {}]
  %s12 = sld [smem:[#allocation0]]
  $region82: #{tpu_custom_call.1} parent=0
    _
  %s14 = ssub.s32 1, %s12
  %s15 = scalar_select 0, %s14, %s12
  $region1: #{tpu_custom_call.1} parent=0
    #allocation2 [shape = 'u8[8192]{0}', space=vmem, size = 0x2000, scoped, tag = 'input window, operand 0, single buffered']
    #allocation3 [shape = 's32[1]{0}', space=sflag, size = 0x4, scoped, tag = 'scoped memory for tpu_custom_call.1']
    #allocation4 [shape = 's32[1]{0}', space=sflag, size = 0x4, scoped, tag = 'scoped memory for tpu_custom_call.1']
    #allocation5 [shape = 'u8[16384]{0}', space=vmem, size = 0x4000, scoped, tag = 'input window, operand 1, single buffered']
    #allocation6 [shape = 's32[1]{0}', space=sflag, size = 0x4, scoped, tag = 'scoped memory for tpu_custom_call.1']
    #allocation7 [shape = 'u8[16384]{0}', space=vmem, size = 0x4000, scoped, tag = 'input window, operand 2, single buffered']
    #allocation8 [shape = 'u8[65536]{0}', space=vmem, size = 0x10000, scoped, tag = 'input window, operand 3, single buffered']
    #allocation9 [shape = 's32[1]{0}', space=sflag, size = 0x4, scoped, tag = 'scoped memory for tpu_custom_call.1']
    #allocation10 [shape = 'u8[65536]{0}', space=vmem, size = 0x10000, scoped, tag = 'input window, operand 5, single buffered']
    #allocation11 [shape = 'u8[65536]{0}', space=vmem, size = 0x10000, scoped, tag = 'input window, operand 7, single buffered']
    #allocation12 [shape = 's32[1]{0}', space=sflag, size = 0x4, scoped, tag = 'scoped memory for tpu_custom_call.1']
    #allocation13 [shape = 'u8[65536]{0}', space=vmem, size = 0x10000, scoped, tag = 'input window, operand 9, single buffered']
    #allocation14 [shape = 'u8[8192]{0}', space=vmem, size = 0x2000, scoped, tag = 'output window, operand 0, single buffered']
    %16 = vsyncpa [#allocation3], 0
    %17 = vsyncpa [#allocation6], 0
    %18 = vsyncpa [#allocation9], 0
    %19 = vsyncpa [#allocation12], 0
    %20 = vsyncpa [#allocation4], 0
    // Predicated region
    $region2: #{tpu_custom_call.1} parent=1 // pred_check
      _
    $region3: #{tpu_custom_call.1} parent=1 // pred_check_branch
      %22 = sbr.rel (0) target = $region5
    $region4: #{tpu_custom_call.1} parent=1 // pred_region
      %24 = vsyncadd [#allocation3], 0
      %s25 = sshll.u32 %s0, 4
      %s26 = int_to_ptr.hbm [resolvable:$true] %s25
      %s27 = sshll.u32 [#allocation2], 4
      %s28 = int_to_ptr.vmem [resolvable:$true] %s27
      %33 = dma.hbm_to_vmem [thread:$0]  %s26, 256, %s28, [#allocation3], 32, 32, 2
    $region5: #{tpu_custom_call.1} parent=1 // pred_fallthru
      _
    // Predicated region
    $region6: #{tpu_custom_call.1} parent=1 // pred_check
      _
    $region7: #{tpu_custom_call.1} parent=1 // pred_check_branch
      %35 = sbr.rel (0) target = $region9
    $region8: #{tpu_custom_call.1} parent=1 // pred_region
      %37 = vsyncadd [#allocation6], 0
      %s38 = sshll.u32 %s1, 4
      %s39 = int_to_ptr.hbm [resolvable:$true] %s38
      %s40 = sshll.u32 [#allocation5], 4
      %s41 = int_to_ptr.vmem [resolvable:$true] %s40
      %46 = dma.hbm_to_vmem [thread:$0]  %s39, 512, %s41, [#allocation6], 32, 32, 2
    $region9: #{tpu_custom_call.1} parent=1 // pred_fallthru
      _
    // Predicated region
    $region10: #{tpu_custom_call.1} parent=1 // pred_check
      _
    $region11: #{tpu_custom_call.1} parent=1 // pred_check_branch
      %48 = sbr.rel (0) target = $region13
    $region12: #{tpu_custom_call.1} parent=1 // pred_region
      %50 = vsyncadd [#allocation6], 0
      %s51 = sshll.u32 %s2, 4
      %s52 = int_to_ptr.hbm [resolvable:$true] %s51
      %s53 = sshll.u32 [#allocation7], 4
      %s54 = int_to_ptr.vmem [resolvable:$true] %s53
      %59 = dma.hbm_to_vmem [thread:$0]  %s52, 512, %s54, [#allocation6], 32, 32, 2
    $region13: #{tpu_custom_call.1} parent=1 // pred_fallthru
      _
    // Predicated region
    $region14: #{tpu_custom_call.1} parent=1 // pred_check
      _
    $region15: #{tpu_custom_call.1} parent=1 // pred_check_branch
      %61 = sbr.rel (0) target = $region17
    $region16: #{tpu_custom_call.1} parent=1 // pred_region
      %63 = vsyncadd [#allocation9], 0
      %s64 = sshll.u32 %s3, 4
      %s65 = int_to_ptr.hbm [resolvable:$true] %s64
      %s66 = sshll.u32 [#allocation8], 4
      %s67 = int_to_ptr.vmem [resolvable:$true] %s66
      %72 = dma.hbm_to_vmem [thread:$0]  %s65, 2048, %s67, [#allocation9], 128, 128, 8
    $region17: #{tpu_custom_call.1} parent=1 // pred_fallthru
      _
    // Predicated region
    $region18: #{tpu_custom_call.1} parent=1 // pred_check
      _
    $region19: #{tpu_custom_call.1} parent=1 // pred_check_branch
      %74 = sbr.rel (0) target = $region21
    $region20: #{tpu_custom_call.1} parent=1 // pred_region
      _
    $region21: #{tpu_custom_call.1} parent=1 // pred_fallthru
      _
    // Predicated region
    $region22: #{tpu_custom_call.1} parent=1 // pred_check
      _
    $region23: #{tpu_custom_call.1} parent=1 // pred_check_branch
      %76 = sbr.rel (0) target = $region25
    $region24: #{tpu_custom_call.1} parent=1 // pred_region
      %78 = vsyncadd [#allocation9], 0
      %s79 = sshll.u32 %s5, 4
      %s80 = int_to_ptr.hbm [resolvable:$true] %s79
      %s81 = sshll.u32 [#allocation10], 4
      %s82 = int_to_ptr.vmem [resolvable:$true] %s81
      %87 = dma.hbm_to_vmem [thread:$0]  %s80, 2048, %s82, [#allocation9], 128, 128, 8
    $region25: #{tpu_custom_call.1} parent=1 // pred_fallthru
      _
    // Predicated region
    $region26: #{tpu_custom_call.1} parent=1 // pred_check
      _
    $region27: #{tpu_custom_call.1} parent=1 // pred_check_branch
      %89 = sbr.rel (0) target = $region29
    $region28: #{tpu_custom_call.1} parent=1 // pred_region
      _
    $region29: #{tpu_custom_call.1} parent=1 // pred_fallthru
      _
    // Predicated region
    $region30: #{tpu_custom_call.1} parent=1 // pred_check
      _
    $region31: #{tpu_custom_call.1} parent=1 // pred_check_branch
      %91 = sbr.rel (0) target = $region33
    $region32: #{tpu_custom_call.1} parent=1 // pred_region
      %93 = vsyncadd [#allocation12], 0
      %s94 = sshll.u32 %s7, 4
      %s95 = int_to_ptr.hbm [resolvable:$true] %s94
      %s96 = sshll.u32 [#allocation11], 4
      %s97 = int_to_ptr.vmem [resolvable:$true] %s96
      %102 = dma.hbm_to_vmem [thread:$0]  %s95, 2048, %s97, [#allocation12], 128, 128, 8
    $region33: #{tpu_custom_call.1} parent=1 // pred_fallthru
      _
    // Predicated region
    $region34: #{tpu_custom_call.1} parent=1 // pred_check
      _
    $region35: #{tpu_custom_call.1} parent=1 // pred_check_branch
      %104 = sbr.rel (0) target = $region37
    $region36: #{tpu_custom_call.1} parent=1 // pred_region
      _
    $region37: #{tpu_custom_call.1} parent=1 // pred_fallthru
      _
    // Predicated region
    $region38: #{tpu_custom_call.1} parent=1 // pred_check
      _
    $region39: #{tpu_custom_call.1} parent=1 // pred_check_branch
      %106 = sbr.rel (0) target = $region41
    $region40: #{tpu_custom_call.1} parent=1 // pred_region
      %108 = vsyncadd [#allocation12], 0
      %s109 = sshll.u32 %s9, 4
      %s110 = int_to_ptr.hbm [resolvable:$true] %s109
      %s111 = sshll.u32 [#allocation13], 4
      %s112 = int_to_ptr.vmem [resolvable:$true] %s111
      %117 = dma.hbm_to_vmem [thread:$0]  %s110, 2048, %s112, [#allocation12], 128, 128, 8
    $region41: #{tpu_custom_call.1} parent=1 // pred_fallthru
      _
    // Predicated region
    $region42: #{tpu_custom_call.1} parent=1 // pred_check
      _
    $region43: #{tpu_custom_call.1} parent=1 // pred_check_branch
      %119 = sbr.rel (0) target = $region45
    $region44: #{tpu_custom_call.1} parent=1 // pred_region
      _
    $region45: #{tpu_custom_call.1} parent=1 // pred_fallthru
      _
    // Predicated region
    $region46: #{tpu_custom_call.1} parent=1 // pred_check
      _
    $region47: #{tpu_custom_call.1} parent=1 // pred_check_branch
      %121 = sbr.rel (0) target = $region49
    $region48: #{tpu_custom_call.1} parent=1 // pred_region
      %123 = dma.done [#allocation3], 256
    $region49: #{tpu_custom_call.1} parent=1 // pred_fallthru
      _
    // Predicated region
    $region50: #{tpu_custom_call.1} parent=1 // pred_check
      _
    $region51: #{tpu_custom_call.1} parent=1 // pred_check_branch
      %125 = sbr.rel (0) target = $region53
    $region52: #{tpu_custom_call.1} parent=1 // pred_region
      %127 = dma.done [#allocation6], 512
    $region53: #{tpu_custom_call.1} parent=1 // pred_fallthru
      _
    // Predicated region
    $region54: #{tpu_custom_call.1} parent=1 // pred_check
      _
    $region55: #{tpu_custom_call.1} parent=1 // pred_check_branch
      %129 = sbr.rel (0) target = $region57
    $region56: #{tpu_custom_call.1} parent=1 // pred_region
      %131 = dma.done [#allocation6], 512
    $region57: #{tpu_custom_call.1} parent=1 // pred_fallthru
      _
    // Predicated region
    $region58: #{tpu_custom_call.1} parent=1 // pred_check
      _
    $region59: #{tpu_custom_call.1} parent=1 // pred_check_branch
      %133 = sbr.rel (0) target = $region61
    $region60: #{tpu_custom_call.1} parent=1 // pred_region
      %135 = dma.done [#allocation9], 2048
    $region61: #{tpu_custom_call.1} parent=1 // pred_fallthru
      _
    // Predicated region
    $region62: #{tpu_custom_call.1} parent=1 // pred_check
      _
    $region63: #{tpu_custom_call.1} parent=1 // pred_check_branch
      %137 = sbr.rel (0) target = $region65
    $region64: #{tpu_custom_call.1} parent=1 // pred_region
      %139 = dma.done [#allocation9], 2048
    $region65: #{tpu_custom_call.1} parent=1 // pred_fallthru
      _
    // Predicated region
    $region66: #{tpu_custom_call.1} parent=1 // pred_check
      _
    $region67: #{tpu_custom_call.1} parent=1 // pred_check_branch
      %141 = sbr.rel (0) target = $region69
    $region68: #{tpu_custom_call.1} parent=1 // pred_region
      %143 = dma.done [#allocation12], 2048
    $region69: #{tpu_custom_call.1} parent=1 // pred_fallthru
      _
    // Predicated region
    $region70: #{tpu_custom_call.1} parent=1 // pred_check
      _
    $region71: #{tpu_custom_call.1} parent=1 // pred_check_branch
      %145 = sbr.rel (0) target = $region73
    $region72: #{tpu_custom_call.1} parent=1 // pred_region
      %147 = dma.done [#allocation12], 2048
    $region73: #{tpu_custom_call.1} parent=1 // pred_fallthru
      _
    %v149 = vld [vmem:[#allocation8] sm:$0xff]
    %v150 = vld [vmem:[#allocation8 + $0x8] sm:$0xff]
    %v151 = vld [vmem:[#allocation8 + $0x10] sm:$0xff]
    %v152 = vld [vmem:[#allocation8 + $0x18] sm:$0xff]
    %v153 = vld [vmem:[#allocation8 + $0x20] sm:$0xff]
    %v154 = vld [vmem:[#allocation8 + $0x28] sm:$0xff]
    %v155 = vld [vmem:[#allocation8 + $0x30] sm:$0xff]
    %v156 = vld [vmem:[#allocation8 + $0x38] sm:$0xff]
    %v157 = vld [vmem:[#allocation8 + $0x40] sm:$0xff]
    %v158 = vld [vmem:[#allocation8 + $0x48] sm:$0xff]
    %v159 = vld [vmem:[#allocation8 + $0x50] sm:$0xff]
    %v160 = vld [vmem:[#allocation8 + $0x58] sm:$0xff]
    %v161 = vld [vmem:[#allocation8 + $0x60] sm:$0xff]
    %v162 = vld [vmem:[#allocation8 + $0x68] sm:$0xff]
    %v163 = vld [vmem:[#allocation8 + $0x70] sm:$0xff]
    %v164 = vld [vmem:[#allocation8 + $0x78] sm:$0xff]
    %v165 = vpack.c.bf16 %v150, %v149
    %v166 = vpack.c.bf16 %v152, %v151
    %v167 = vpack.c.bf16 %v154, %v153
    %v168 = vpack.c.bf16 %v156, %v155
    %v169 = vpack.c.bf16 %v158, %v157
    %v170 = vpack.c.bf16 %v160, %v159
    %v171 = vpack.c.bf16 %v162, %v161
    %v172 = vpack.c.bf16 %v164, %v163
    %v173 = vld [vmem:[#allocation10] sm:$0xff]
    %v174 = vld [vmem:[#allocation10 + $0x8] sm:$0xff]
    %v175 = vld [vmem:[#allocation10 + $0x10] sm:$0xff]
    %v176 = vld [vmem:[#allocation10 + $0x18] sm:$0xff]
    %v177 = vld [vmem:[#allocation10 + $0x20] sm:$0xff]
    %v178 = vld [vmem:[#allocation10 + $0x28] sm:$0xff]
    %v179 = vld [vmem:[#allocation10 + $0x30] sm:$0xff]
    %v180 = vld [vmem:[#allocation10 + $0x38] sm:$0xff]
    %v181 = vld [vmem:[#allocation10 + $0x40] sm:$0xff]
    %v182 = vld [vmem:[#allocation10 + $0x48] sm:$0xff]
    %v183 = vld [vmem:[#allocation10 + $0x50] sm:$0xff]
    %v184 = vld [vmem:[#allocation10 + $0x58] sm:$0xff]
    %v185 = vld [vmem:[#allocation10 + $0x60] sm:$0xff]
    %v186 = vld [vmem:[#allocation10 + $0x68] sm:$0xff]
    %v187 = vld [vmem:[#allocation10 + $0x70] sm:$0xff]
    %v188 = vld [vmem:[#allocation10 + $0x78] sm:$0xff]
    %v189 = vpack.c.bf16 %v174, %v173
    %v190 = vpack.c.bf16 %v176, %v175
    %v191 = vpack.c.bf16 %v178, %v177
    %v192 = vpack.c.bf16 %v180, %v179
    %v193 = vpack.c.bf16 %v182, %v181
    %v194 = vpack.c.bf16 %v184, %v183
    %v195 = vpack.c.bf16 %v186, %v185
    %v196 = vpack.c.bf16 %v188, %v187
    %v197 = vld [vmem:[#allocation11] sm:$0xff]
    %v198 = vld [vmem:[#allocation11 + $0x8] sm:$0xff]
    %v199 = vld [vmem:[#allocation11 + $0x10] sm:$0xff]
    %v200 = vld [vmem:[#allocation11 + $0x18] sm:$0xff]
    %v201 = vld [vmem:[#allocation11 + $0x20] sm:$0xff]
    %v202 = vld [vmem:[#allocation11 + $0x28] sm:$0xff]
    %v203 = vld [vmem:[#allocation11 + $0x30] sm:$0xff]
    %v204 = vld [vmem:[#allocation11 + $0x38] sm:$0xff]
    %v205 = vld [vmem:[#allocation11 + $0x40] sm:$0xff]
    %v206 = vld [vmem:[#allocation11 + $0x48] sm:$0xff]
    %v207 = vld [vmem:[#allocation11 + $0x50] sm:$0xff]
    %v208 = vld [vmem:[#allocation11 + $0x58] sm:$0xff]
    %v209 = vld [vmem:[#allocation11 + $0x60] sm:$0xff]
    %v210 = vld [vmem:[#allocation11 + $0x68] sm:$0xff]
    %v211 = vld [vmem:[#allocation11 + $0x70] sm:$0xff]
    %v212 = vld [vmem:[#allocation11 + $0x78] sm:$0xff]
    %v213 = vpack.c.bf16 %v198, %v197
    %v214 = vpack.c.bf16 %v200, %v199
    %v215 = vpack.c.bf16 %v202, %v201
    %v216 = vpack.c.bf16 %v204, %v203
    %v217 = vpack.c.bf16 %v206, %v205
    %v218 = vpack.c.bf16 %v208, %v207
    %v219 = vpack.c.bf16 %v210, %v209
    %v220 = vpack.c.bf16 %v212, %v211
    %v221 = vld [vmem:[#allocation13] sm:$0xff]
    %v222 = vld [vmem:[#allocation13 + $0x8] sm:$0xff]
    %v223 = vld [vmem:[#allocation13 + $0x10] sm:$0xff]
    %v224 = vld [vmem:[#allocation13 + $0x18] sm:$0xff]
    %v225 = vld [vmem:[#allocation13 + $0x20] sm:$0xff]
    %v226 = vld [vmem:[#allocation13 + $0x28] sm:$0xff]
    %v227 = vld [vmem:[#allocation13 + $0x30] sm:$0xff]
    %v228 = vld [vmem:[#allocation13 + $0x38] sm:$0xff]
    %v229 = vld [vmem:[#allocation13 + $0x40] sm:$0xff]
    %v230 = vld [vmem:[#allocation13 + $0x48] sm:$0xff]
    %v231 = vld [vmem:[#allocation13 + $0x50] sm:$0xff]
    %v232 = vld [vmem:[#allocation13 + $0x58] sm:$0xff]
    %v233 = vld [vmem:[#allocation13 + $0x60] sm:$0xff]
    %v234 = vld [vmem:[#allocation13 + $0x68] sm:$0xff]
    %v235 = vld [vmem:[#allocation13 + $0x70] sm:$0xff]
    %v236 = vld [vmem:[#allocation13 + $0x78] sm:$0xff]
    %v237 = vpack.c.bf16 %v222, %v221
    %v238 = vpack.c.bf16 %v224, %v223
    %v239 = vpack.c.bf16 %v226, %v225
    %v240 = vpack.c.bf16 %v228, %v227
    %v241 = vpack.c.bf16 %v230, %v229
    %v242 = vpack.c.bf16 %v232, %v231
    %v243 = vpack.c.bf16 %v234, %v233
    %v244 = vpack.c.bf16 %v236, %v235
    %v245 = vld [vmem:[#allocation2] sm:$0x3]
    %v246 = vld [vmem:[#allocation2 + $0x2] sm:$0x3]
    %v247 = vld [vmem:[#allocation2 + $0x4] sm:$0x3]
    %v248 = vld [vmem:[#allocation2 + $0x6] sm:$0x3]
    %v249 = vld [vmem:[#allocation2 + $0x8] sm:$0x3]
    %v250 = vld [vmem:[#allocation2 + $0xa] sm:$0x3]
    %v251 = vld [vmem:[#allocation2 + $0xc] sm:$0x3]
    %v252 = vld [vmem:[#allocation2 + $0xe] sm:$0x3]
    %261 = vst [vmem:[#allocation1] ss:$4 sm:$0xff] %v245
    %s262 = scalar_lea.vmem [#allocation1], 1
    %263 = vst [vmem:[%s262] ss:$4 sm:$0xff] %v246
    %s264 = scalar_lea.vmem [#allocation1], 2
    %265 = vst [vmem:[%s264] ss:$4 sm:$0xff] %v247
    %s266 = scalar_lea.vmem [#allocation1], 3
    %267 = vst [vmem:[%s266] ss:$4 sm:$0xff] %v248
    %s268 = scalar_lea.vmem [#allocation1], 32
    %269 = vst [vmem:[%s268] ss:$4 sm:$0xff] %v249
    %s270 = scalar_lea.vmem [#allocation1], 33
    %271 = vst [vmem:[%s270] ss:$4 sm:$0xff] %v250
    %s272 = scalar_lea.vmem [#allocation1], 34
    %273 = vst [vmem:[%s272] ss:$4 sm:$0xff] %v251
    %s274 = scalar_lea.vmem [#allocation1], 35
    %275 = vst [vmem:[%s274] ss:$4 sm:$0xff] %v252
    %v276 = vld.sshfl [vmem:[#allocation1] sm:$0xff pattern:$0x73625140]
    %v277 = vld.sshfl [vmem:[#allocation1 + $0x20] sm:$0xff pattern:$0x73625140]
    %v280 = vpack.c.bf16 %v277, %v276
    %v281 = vld [vmem:[#allocation5] sm:$0x3]
    %v282 = vld [vmem:[#allocation5 + $0x2] sm:$0x3]
    %v283 = vld [vmem:[#allocation5 + $0x4] sm:$0x3]
    %v284 = vld [vmem:[#allocation5 + $0x6] sm:$0x3]
    %v285 = vld [vmem:[#allocation5 + $0x8] sm:$0x3]
    %v286 = vld [vmem:[#allocation5 + $0xa] sm:$0x3]
    %v287 = vld [vmem:[#allocation5 + $0xc] sm:$0x3]
    %v288 = vld [vmem:[#allocation5 + $0xe] sm:$0x3]
    %v289 = vld [vmem:[#allocation5 + $0x10] sm:$0x3]
    %v290 = vld [vmem:[#allocation5 + $0x12] sm:$0x3]
    %v291 = vld [vmem:[#allocation5 + $0x14] sm:$0x3]
    %v292 = vld [vmem:[#allocation5 + $0x16] sm:$0x3]
    %v293 = vld [vmem:[#allocation5 + $0x18] sm:$0x3]
    %v294 = vld [vmem:[#allocation5 + $0x1a] sm:$0x3]
    %v295 = vld [vmem:[#allocation5 + $0x1c] sm:$0x3]
    %v296 = vld [vmem:[#allocation5 + $0x1e] sm:$0x3]
    %313 = vst [vmem:[#allocation1] ss:$4 sm:$0xff] %v281
    %s314 = scalar_lea.vmem [#allocation1], 1
    %315 = vst [vmem:[%s314] ss:$4 sm:$0xff] %v282
    %s316 = scalar_lea.vmem [#allocation1], 2
    %317 = vst [vmem:[%s316] ss:$4 sm:$0xff] %v283
    %s318 = scalar_lea.vmem [#allocation1], 3
    %319 = vst [vmem:[%s318] ss:$4 sm:$0xff] %v284
    %s320 = scalar_lea.vmem [#allocation1], 32
    %321 = vst [vmem:[%s320] ss:$4 sm:$0xff] %v285
    %s322 = scalar_lea.vmem [#allocation1], 33
    %323 = vst [vmem:[%s322] ss:$4 sm:$0xff] %v286
    %s324 = scalar_lea.vmem [#allocation1], 34
    %325 = vst [vmem:[%s324] ss:$4 sm:$0xff] %v287
    %s326 = scalar_lea.vmem [#allocation1], 35
    %327 = vst [vmem:[%s326] ss:$4 sm:$0xff] %v288
    %v328 = vld.sshfl [vmem:[#allocation1] sm:$0xff pattern:$0x73625140]
    %v329 = vld.sshfl [vmem:[#allocation1 + $0x20] sm:$0xff pattern:$0x73625140]
    %330 = vst [vmem:[#allocation1] ss:$4 sm:$0xff] %v289
    %331 = vst [vmem:[%s314] ss:$4 sm:$0xff] %v290
    %332 = vst [vmem:[%s316] ss:$4 sm:$0xff] %v291
    %333 = vst [vmem:[%s318] ss:$4 sm:$0xff] %v292
    %334 = vst [vmem:[%s320] ss:$4 sm:$0xff] %v293
    %335 = vst [vmem:[%s322] ss:$4 sm:$0xff] %v294
    %336 = vst [vmem:[%s324] ss:$4 sm:$0xff] %v295
    %337 = vst [vmem:[%s326] ss:$4 sm:$0xff] %v296
    %v338 = vld.sshfl [vmem:[#allocation1] sm:$0xff pattern:$0x73625140]
    %v339 = vld.sshfl [vmem:[#allocation1 + $0x20] sm:$0xff pattern:$0x73625140]
    %v344 = vpack.c.bf16 %v329, %v328
    %v345 = vpack.c.bf16 %v339, %v338
    %v346 = vld [vmem:[#allocation7] sm:$0x3]
    %v347 = vld [vmem:[#allocation7 + $0x2] sm:$0x3]
    %v348 = vld [vmem:[#allocation7 + $0x4] sm:$0x3]
    %v349 = vld [vmem:[#allocation7 + $0x6] sm:$0x3]
    %v350 = vld [vmem:[#allocation7 + $0x8] sm:$0x3]
    %v351 = vld [vmem:[#allocation7 + $0xa] sm:$0x3]
    %v352 = vld [vmem:[#allocation7 + $0xc] sm:$0x3]
    %v353 = vld [vmem:[#allocation7 + $0xe] sm:$0x3]
    %v354 = vld [vmem:[#allocation7 + $0x10] sm:$0x3]
    %v355 = vld [vmem:[#allocation7 + $0x12] sm:$0x3]
    %v356 = vld [vmem:[#allocation7 + $0x14] sm:$0x3]
    %v357 = vld [vmem:[#allocation7 + $0x16] sm:$0x3]
    %v358 = vld [vmem:[#allocation7 + $0x18] sm:$0x3]
    %v359 = vld [vmem:[#allocation7 + $0x1a] sm:$0x3]
    %v360 = vld [vmem:[#allocation7 + $0x1c] sm:$0x3]
    %v361 = vld [vmem:[#allocation7 + $0x1e] sm:$0x3]
    %378 = vst [vmem:[#allocation1] ss:$4 sm:$0xff] %v346
    %s379 = scalar_lea.vmem [#allocation1], 1
    %380 = vst [vmem:[%s379] ss:$4 sm:$0xff] %v347
    %s381 = scalar_lea.vmem [#allocation1], 2
    %382 = vst [vmem:[%s381] ss:$4 sm:$0xff] %v348
    %s383 = scalar_lea.vmem [#allocation1], 3
    %384 = vst [vmem:[%s383] ss:$4 sm:$0xff] %v349
    %s385 = scalar_lea.vmem [#allocation1], 32
    %386 = vst [vmem:[%s385] ss:$4 sm:$0xff] %v350
    %s387 = scalar_lea.vmem [#allocation1], 33
    %388 = vst [vmem:[%s387] ss:$4 sm:$0xff] %v351
    %s389 = scalar_lea.vmem [#allocation1], 34
    %390 = vst [vmem:[%s389] ss:$4 sm:$0xff] %v352
    %s391 = scalar_lea.vmem [#allocation1], 35
    %392 = vst [vmem:[%s391] ss:$4 sm:$0xff] %v353
    %v393 = vld.sshfl [vmem:[#allocation1] sm:$0xff pattern:$0x73625140]
    %v394 = vld.sshfl [vmem:[#allocation1 + $0x20] sm:$0xff pattern:$0x73625140]
    %395 = vst [vmem:[#allocation1] ss:$4 sm:$0xff] %v354
    %396 = vst [vmem:[%s379] ss:$4 sm:$0xff] %v355
    %397 = vst [vmem:[%s381] ss:$4 sm:$0xff] %v356
    %398 = vst [vmem:[%s383] ss:$4 sm:$0xff] %v357
    %399 = vst [vmem:[%s385] ss:$4 sm:$0xff] %v358
    %400 = vst [vmem:[%s387] ss:$4 sm:$0xff] %v359
    %401 = vst [vmem:[%s389] ss:$4 sm:$0xff] %v360
    %402 = vst [vmem:[%s391] ss:$4 sm:$0xff] %v361
    %v403 = vld.sshfl [vmem:[#allocation1] sm:$0xff pattern:$0x73625140]
    %v404 = vld.sshfl [vmem:[#allocation1 + $0x20] sm:$0xff pattern:$0x73625140]
    %v409 = vpack.c.bf16 %v394, %v393
    %v410 = vpack.c.bf16 %v404, %v403
    %v411 = vld [vmem:[%s4] sm:$0x1]
    %v413 = vperm.slane %v411, 0
    %415 = vmatpush.bf16.msra.mxu0 %v172
    %416 = vmatpush.bf16.msra.mxu0 %v171
    %417 = vmatpush.bf16.msra.mxu0 %v170
    %418 = vmatpush.bf16.msra.mxu0 %v169
    %419 = vmatpush.bf16.msra.mxu0 %v168
    %420 = vmatpush.bf16.msra.mxu0 %v167
    %421 = vmatpush.bf16.msra.mxu0 %v166
    %422 = vmatpush.bf16.msra.mxu0 %v165
    %423 = vmatmul.bf16.gmra.mxu0 %v280
    %v424 = vpop.f32.mrf.mxu0
    %v425 = vadd.f32 %v413, %v424
    %v426 = vpop.f32.mrf.mxu0
    %v427 = vadd.f32 %v413, %v426
    %428 = vdwg.mxu0
    %v429 = vld [vmem:[%s6] sm:$0x1]
    %v431 = vperm.slane %v429, 0
    %433 = vmatpush.bf16.msra.mxu0 %v196
    %434 = vmatpush.bf16.msra.mxu0 %v195
    %435 = vmatpush.bf16.msra.mxu0 %v194
    %436 = vmatpush.bf16.msra.mxu0 %v193
    %437 = vmatpush.bf16.msra.mxu0 %v192
    %438 = vmatpush.bf16.msra.mxu0 %v191
    %439 = vmatpush.bf16.msra.mxu0 %v190
    %440 = vmatpush.bf16.msra.mxu0 %v189
    %441 = vmatmul.bf16.gmra.mxu0 %v344
    %v442 = vpop.f32.mrf.mxu0
    %v443 = vadd.f32 %v431, %v442
    %v444 = vpop.f32.mrf.mxu0
    %v445 = vadd.f32 %v431, %v444
    %446 = vmatmul.bf16.gmra.mxu0 %v345
    %v447 = vpop.f32.mrf.mxu0
    %v448 = vadd.f32 %v431, %v447
    %v449 = vpop.f32.mrf.mxu0
    %v450 = vadd.f32 %v431, %v449
    %451 = vdwg.mxu0
    %v452 = vld [vmem:[%s8] sm:$0x1]
    %v454 = vperm.slane %v452, 0
    %456 = vmatpush.bf16.msra.mxu0 %v220
    %457 = vmatpush.bf16.msra.mxu0 %v219
    %458 = vmatpush.bf16.msra.mxu0 %v218
    %459 = vmatpush.bf16.msra.mxu0 %v217
    %460 = vmatpush.bf16.msra.mxu0 %v216
    %461 = vmatpush.bf16.msra.mxu0 %v215
    %462 = vmatpush.bf16.msra.mxu0 %v214
    %463 = vmatpush.bf16.msra.mxu0 %v213
    %464 = vmatmul.bf16.gmra.mxu0 %v409
    %v465 = vpop.f32.mrf.mxu0
    %v466 = vadd.f32 %v454, %v465
    %v467 = vpop.f32.mrf.mxu0
    %v468 = vadd.f32 %v454, %v467
    %469 = vmatmul.bf16.gmra.mxu0 %v410
    %v470 = vpop.f32.mrf.mxu0
    %v471 = vadd.f32 %v454, %v470
    %v472 = vpop.f32.mrf.mxu0
    %v473 = vadd.f32 %v454, %v472
    %474 = vdwg.mxu0
    %v477 = vrot.slane %v425, 2
    %v478 = vrot.slane %v425, 4
    %v479 = vrot.slane %v425, 6
    %v480 = vrot.slane %v427, 2
    %v481 = vrot.slane %v427, 4
    %v482 = vrot.slane %v427, 6
    %v493 = vrot.slane %v443, 2
    %v494 = vrot.slane %v443, 4
    %v495 = vrot.slane %v443, 6
    %v496 = vrot.slane %v445, 2
    %v497 = vrot.slane %v445, 4
    %v498 = vrot.slane %v445, 6
    %v499 = vrot.slane %v448, 2
    %v500 = vrot.slane %v448, 4
    %v501 = vrot.slane %v448, 6
    %v502 = vrot.slane %v450, 2
    %v503 = vrot.slane %v450, 4
    %v504 = vrot.slane %v450, 6
    %v521 = vrot.slane %v466, 2
    %v522 = vrot.slane %v466, 4
    %v523 = vrot.slane %v466, 6
    %v524 = vrot.slane %v468, 2
    %v525 = vrot.slane %v468, 4
    %v526 = vrot.slane %v468, 6
    %v527 = vrot.slane %v471, 2
    %v528 = vrot.slane %v471, 4
    %v529 = vrot.slane %v471, 6
    %v530 = vrot.slane %v473, 2
    %v531 = vrot.slane %v473, 4
    %v532 = vrot.slane %v473, 6
    %545 = vrot.lane.b32.xlu0 %v425, 112
    %v546 = vpop.permute.xlu0 %545
    %547 = vrot.lane.b32.xlu0 %v477, 112
    %v548 = vpop.permute.xlu0 %547
    %549 = vrot.lane.b32.xlu0 %v478, 112
    %v550 = vpop.permute.xlu0 %549
    %551 = vrot.lane.b32.xlu0 %v479, 112
    %v552 = vpop.permute.xlu0 %551
    %553 = vrot.lane.b32.xlu0 %v427, 112
    %v554 = vpop.permute.xlu0 %553
    %555 = vrot.lane.b32.xlu0 %v480, 112
    %v556 = vpop.permute.xlu0 %555
    %557 = vrot.lane.b32.xlu0 %v481, 112
    %v558 = vpop.permute.xlu0 %557
    %559 = vrot.lane.b32.xlu0 %v482, 112
    %v560 = vpop.permute.xlu0 %559
    %569 = vrot.lane.b32.xlu0 %v425, 96
    %v570 = vpop.permute.xlu0 %569
    %571 = vrot.lane.b32.xlu0 %v477, 96
    %v572 = vpop.permute.xlu0 %571
    %573 = vrot.lane.b32.xlu0 %v478, 96
    %v574 = vpop.permute.xlu0 %573
    %575 = vrot.lane.b32.xlu0 %v479, 96
    %v576 = vpop.permute.xlu0 %575
    %577 = vrot.lane.b32.xlu0 %v427, 96
    %v578 = vpop.permute.xlu0 %577
    %579 = vrot.lane.b32.xlu0 %v480, 96
    %v580 = vpop.permute.xlu0 %579
    %581 = vrot.lane.b32.xlu0 %v481, 96
    %v582 = vpop.permute.xlu0 %581
    %583 = vrot.lane.b32.xlu0 %v482, 96
    %v584 = vpop.permute.xlu0 %583
    %593 = vrot.lane.b32.xlu0 %v425, 80
    %v594 = vpop.permute.xlu0 %593
    %595 = vrot.lane.b32.xlu0 %v477, 80
    %v596 = vpop.permute.xlu0 %595
    %597 = vrot.lane.b32.xlu0 %v478, 80
    %v598 = vpop.permute.xlu0 %597
    %599 = vrot.lane.b32.xlu0 %v479, 80
    %v600 = vpop.permute.xlu0 %599
    %601 = vrot.lane.b32.xlu0 %v427, 80
    %v602 = vpop.permute.xlu0 %601
    %603 = vrot.lane.b32.xlu0 %v480, 80
    %v604 = vpop.permute.xlu0 %603
    %605 = vrot.lane.b32.xlu0 %v481, 80
    %v606 = vpop.permute.xlu0 %605
    %607 = vrot.lane.b32.xlu0 %v482, 80
    %v608 = vpop.permute.xlu0 %607
    %617 = vrot.lane.b32.xlu0 %v425, 64
    %v618 = vpop.permute.xlu0 %617
    %619 = vrot.lane.b32.xlu0 %v477, 64
    %v620 = vpop.permute.xlu0 %619
    %621 = vrot.lane.b32.xlu0 %v478, 64
    %v622 = vpop.permute.xlu0 %621
    %623 = vrot.lane.b32.xlu0 %v479, 64
    %v624 = vpop.permute.xlu0 %623
    %625 = vrot.lane.b32.xlu0 %v427, 64
    %v626 = vpop.permute.xlu0 %625
    %627 = vrot.lane.b32.xlu0 %v480, 64
    %v628 = vpop.permute.xlu0 %627
    %629 = vrot.lane.b32.xlu0 %v481, 64
    %v630 = vpop.permute.xlu0 %629
    %631 = vrot.lane.b32.xlu0 %v482, 64
    %v632 = vpop.permute.xlu0 %631
    %641 = vrot.lane.b32.xlu0 %v425, 48
    %v642 = vpop.permute.xlu0 %641
    %643 = vrot.lane.b32.xlu0 %v477, 48
    %v644 = vpop.permute.xlu0 %643
    %645 = vrot.lane.b32.xlu0 %v478, 48
    %v646 = vpop.permute.xlu0 %645
    %647 = vrot.lane.b32.xlu0 %v479, 48
    %v648 = vpop.permute.xlu0 %647
    %649 = vrot.lane.b32.xlu0 %v427, 48
    %v650 = vpop.permute.xlu0 %649
    %651 = vrot.lane.b32.xlu0 %v480, 48
    %v652 = vpop.permute.xlu0 %651
    %653 = vrot.lane.b32.xlu0 %v481, 48
    %v654 = vpop.permute.xlu0 %653
    %655 = vrot.lane.b32.xlu0 %v482, 48
    %v656 = vpop.permute.xlu0 %655
    %665 = vrot.lane.b32.xlu0 %v425, 32
    %v666 = vpop.permute.xlu0 %665
    %667 = vrot.lane.b32.xlu0 %v477, 32
    %v668 = vpop.permute.xlu0 %667
    %669 = vrot.lane.b32.xlu0 %v478, 32
    %v670 = vpop.permute.xlu0 %669
    %671 = vrot.lane.b32.xlu0 %v479, 32
    %v672 = vpop.permute.xlu0 %671
    %673 = vrot.lane.b32.xlu0 %v427, 32
    %v674 = vpop.permute.xlu0 %673
    %675 = vrot.lane.b32.xlu0 %v480, 32
    %v676 = vpop.permute.xlu0 %675
    %677 = vrot.lane.b32.xlu0 %v481, 32
    %v678 = vpop.permute.xlu0 %677
    %679 = vrot.lane.b32.xlu0 %v482, 32
    %v680 = vpop.permute.xlu0 %679
    %689 = vrot.lane.b32.xlu0 %v425, 16
    %v690 = vpop.permute.xlu0 %689
    %691 = vrot.lane.b32.xlu0 %v477, 16
    %v692 = vpop.permute.xlu0 %691
    %693 = vrot.lane.b32.xlu0 %v478, 16
    %v694 = vpop.permute.xlu0 %693
    %695 = vrot.lane.b32.xlu0 %v479, 16
    %v696 = vpop.permute.xlu0 %695
    %697 = vrot.lane.b32.xlu0 %v427, 16
    %v698 = vpop.permute.xlu0 %697
    %699 = vrot.lane.b32.xlu0 %v480, 16
    %v700 = vpop.permute.xlu0 %699
    %701 = vrot.lane.b32.xlu0 %v481, 16
    %v702 = vpop.permute.xlu0 %701
    %703 = vrot.lane.b32.xlu0 %v482, 16
    %v704 = vpop.permute.xlu0 %703
    %v713 = vrot.slane %v546, 4
    %vm714 = vcmask 1047556
    %v715 = vsel %vm714, %v713, %v425
    %v717 = vunpack.c.l.s4 1934713408
    %v718 = vunpack.c.0.s8 %v717
    %v719 = vperm.slane %v715, %v718
    %v720 = vrot.slane %v594, 4
    %v721 = vsel %vm714, %v720, %v570
    %v723 = vunpack.c.l.s4 1934713408
    %v724 = vunpack.c.0.s8 %v723
    %v725 = vperm.slane %v721, %v724
    %v726 = vrot.slane %v642, 4
    %v727 = vsel %vm714, %v726, %v618
    %v729 = vunpack.c.l.s4 1934713408
    %v730 = vunpack.c.0.s8 %v729
    %v731 = vperm.slane %v727, %v730
    %v732 = vrot.slane %v690, 4
    %v733 = vsel %vm714, %v732, %v666
    %v735 = vunpack.c.l.s4 1934713408
    %v736 = vunpack.c.0.s8 %v735
    %v737 = vperm.slane %v733, %v736
    %v738 = vrot.slane %v548, 4
    %v739 = vsel %vm714, %v738, %v477
    %v741 = vunpack.c.l.s4 1934713408
    %v742 = vunpack.c.0.s8 %v741
    %v743 = vperm.slane %v739, %v742
    %v744 = vrot.slane %v596, 4
    %v745 = vsel %vm714, %v744, %v572
    %v747 = vunpack.c.l.s4 1934713408
    %v748 = vunpack.c.0.s8 %v747
    %v749 = vperm.slane %v745, %v748
    %v750 = vrot.slane %v644, 4
    %v751 = vsel %vm714, %v750, %v620
    %v753 = vunpack.c.l.s4 1934713408
    %v754 = vunpack.c.0.s8 %v753
    %v755 = vperm.slane %v751, %v754
    %v756 = vrot.slane %v692, 4
    %v757 = vsel %vm714, %v756, %v668
    %v759 = vunpack.c.l.s4 1934713408
    %v760 = vunpack.c.0.s8 %v759
    %v761 = vperm.slane %v757, %v760
    %v762 = vrot.slane %v550, 4
    %v763 = vsel %vm714, %v762, %v478
    %v765 = vunpack.c.l.s4 1934713408
    %v766 = vunpack.c.0.s8 %v765
    %v767 = vperm.slane %v763, %v766
    %v768 = vrot.slane %v598, 4
    %v769 = vsel %vm714, %v768, %v574
    %v771 = vunpack.c.l.s4 1934713408
    %v772 = vunpack.c.0.s8 %v771
    %v773 = vperm.slane %v769, %v772
    %v774 = vrot.slane %v646, 4
    %v775 = vsel %vm714, %v774, %v622
    %v777 = vunpack.c.l.s4 1934713408
    %v778 = vunpack.c.0.s8 %v777
    %v779 = vperm.slane %v775, %v778
    %v780 = vrot.slane %v694, 4
    %v781 = vsel %vm714, %v780, %v670
    %v783 = vunpack.c.l.s4 1934713408
    %v784 = vunpack.c.0.s8 %v783
    %v785 = vperm.slane %v781, %v784
    %v786 = vrot.slane %v552, 4
    %v787 = vsel %vm714, %v786, %v479
    %v789 = vunpack.c.l.s4 1934713408
    %v790 = vunpack.c.0.s8 %v789
    %v791 = vperm.slane %v787, %v790
    %v792 = vrot.slane %v600, 4
    %v793 = vsel %vm714, %v792, %v576
    %v795 = vunpack.c.l.s4 1934713408
    %v796 = vunpack.c.0.s8 %v795
    %v797 = vperm.slane %v793, %v796
    %v798 = vrot.slane %v648, 4
    %v799 = vsel %vm714, %v798, %v624
    %v801 = vunpack.c.l.s4 1934713408
    %v802 = vunpack.c.0.s8 %v801
    %v803 = vperm.slane %v799, %v802
    %v804 = vrot.slane %v696, 4
    %v805 = vsel %vm714, %v804, %v672
    %v807 = vunpack.c.l.s4 1934713408
    %v808 = vunpack.c.0.s8 %v807
    %v809 = vperm.slane %v805, %v808
    %v810 = vrot.slane %v554, 4
    %v811 = vsel %vm714, %v810, %v427
    %v813 = vunpack.c.l.s4 1934713408
    %v814 = vunpack.c.0.s8 %v813
    %v815 = vperm.slane %v811, %v814
    %v816 = vrot.slane %v602, 4
    %v817 = vsel %vm714, %v816, %v578
    %v819 = vunpack.c.l.s4 1934713408
    %v820 = vunpack.c.0.s8 %v819
    %v821 = vperm.slane %v817, %v820
    %v822 = vrot.slane %v650, 4
    %v823 = vsel %vm714, %v822, %v626
    %v825 = vunpack.c.l.s4 1934713408
    %v826 = vunpack.c.0.s8 %v825
    %v827 = vperm.slane %v823, %v826
    %v828 = vrot.slane %v698, 4
    %v829 = vsel %vm714, %v828, %v674
    %v831 = vunpack.c.l.s4 1934713408
    %v832 = vunpack.c.0.s8 %v831
    %v833 = vperm.slane %v829, %v832
    %v834 = vrot.slane %v556, 4
    %v835 = vsel %vm714, %v834, %v480
    %v837 = vunpack.c.l.s4 1934713408
    %v838 = vunpack.c.0.s8 %v837
    %v839 = vperm.slane %v835, %v838
    %v840 = vrot.slane %v604, 4
    %v841 = vsel %vm714, %v840, %v580
    %v843 = vunpack.c.l.s4 1934713408
    %v844 = vunpack.c.0.s8 %v843
    %v845 = vperm.slane %v841, %v844
    %v846 = vrot.slane %v652, 4
    %v847 = vsel %vm714, %v846, %v628
    %v849 = vunpack.c.l.s4 1934713408
    %v850 = vunpack.c.0.s8 %v849
    %v851 = vperm.slane %v847, %v850
    %v852 = vrot.slane %v700, 4
    %v853 = vsel %vm714, %v852, %v676
    %v855 = vunpack.c.l.s4 1934713408
    %v856 = vunpack.c.0.s8 %v855
    %v857 = vperm.slane %v853, %v856
    %v858 = vrot.slane %v558, 4
    %v859 = vsel %vm714, %v858, %v481
    %v861 = vunpack.c.l.s4 1934713408
    %v862 = vunpack.c.0.s8 %v861
    %v863 = vperm.slane %v859, %v862
    %v864 = vrot.slane %v606, 4
    %v865 = vsel %vm714, %v864, %v582
    %v867 = vunpack.c.l.s4 1934713408
    %v868 = vunpack.c.0.s8 %v867
    %v869 = vperm.slane %v865, %v868
    %v870 = vrot.slane %v654, 4
    %v871 = vsel %vm714, %v870, %v630
    %v873 = vunpack.c.l.s4 1934713408
    %v874 = vunpack.c.0.s8 %v873
    %v875 = vperm.slane %v871, %v874
    %v876 = vrot.slane %v702, 4
    %v877 = vsel %vm714, %v876, %v678
    %v879 = vunpack.c.l.s4 1934713408
    %v880 = vunpack.c.0.s8 %v879
    %v881 = vperm.slane %v877, %v880
    %v882 = vrot.slane %v560, 4
    %v883 = vsel %vm714, %v882, %v482
    %v885 = vunpack.c.l.s4 1934713408
    %v886 = vunpack.c.0.s8 %v885
    %v887 = vperm.slane %v883, %v886
    %v888 = vrot.slane %v608, 4
    %v889 = vsel %vm714, %v888, %v584
    %v891 = vunpack.c.l.s4 1934713408
    %v892 = vunpack.c.0.s8 %v891
    %v893 = vperm.slane %v889, %v892
    %v894 = vrot.slane %v656, 4
    %v895 = vsel %vm714, %v894, %v632
    %v897 = vunpack.c.l.s4 1934713408
    %v898 = vunpack.c.0.s8 %v897
    %v899 = vperm.slane %v895, %v898
    %v900 = vrot.slane %v704, 4
    %v901 = vsel %vm714, %v900, %v680
    %v903 = vunpack.c.l.s4 1934713408
    %v904 = vunpack.c.0.s8 %v903
    %v905 = vperm.slane %v901, %v904
    %v906 = vrot.slane %v743, 4
    %v907 = vsel %vm714, %v906, %v719
    %v909 = vunpack.c.l.s4 1934713408
    %v910 = vunpack.c.0.s8 %v909
    %v911 = vperm.slane %v907, %v910
    %v912 = vrot.slane %v911, 4
    %v913 = vsel %vm714, 0.0, %v912
    %v914 = vrot.slane %v791, 4
    %v915 = vsel %vm714, %v914, %v767
    %v917 = vunpack.c.l.s4 1934713408
    %v918 = vunpack.c.0.s8 %v917
    %v919 = vperm.slane %v915, %v918
    %v920 = vrot.slane %v919, 4
    %v921 = vsel %vm714, 0.0, %v920
    %v922 = vrot.slane %v839, 4
    %v923 = vsel %vm714, %v922, %v815
    %v925 = vunpack.c.l.s4 1934713408
    %v926 = vunpack.c.0.s8 %v925
    %v927 = vperm.slane %v923, %v926
    %v928 = vrot.slane %v927, 4
    %v929 = vsel %vm714, 0.0, %v928
    %v930 = vrot.slane %v887, 4
    %v931 = vsel %vm714, %v930, %v863
    %v933 = vunpack.c.l.s4 1934713408
    %v934 = vunpack.c.0.s8 %v933
    %v935 = vperm.slane %v931, %v934
    %v936 = vrot.slane %v935, 4
    %v937 = vsel %vm714, 0.0, %v936
    %v938 = vrot.slane %v749, 4
    %v939 = vsel %vm714, %v938, %v725
    %v941 = vunpack.c.l.s4 1934713408
    %v942 = vunpack.c.0.s8 %v941
    %v943 = vperm.slane %v939, %v942
    %v944 = vrot.slane %v943, 4
    %v945 = vsel %vm714, 0.0, %v944
    %v946 = vrot.slane %v797, 4
    %v947 = vsel %vm714, %v946, %v773
    %v949 = vunpack.c.l.s4 1934713408
    %v950 = vunpack.c.0.s8 %v949
    %v951 = vperm.slane %v947, %v950
    %v952 = vrot.slane %v951, 4
    %v953 = vsel %vm714, 0.0, %v952
    %v954 = vrot.slane %v845, 4
    %v955 = vsel %vm714, %v954, %v821
    %v957 = vunpack.c.l.s4 1934713408
    %v958 = vunpack.c.0.s8 %v957
    %v959 = vperm.slane %v955, %v958
    %v960 = vrot.slane %v959, 4
    %v961 = vsel %vm714, 0.0, %v960
    %v962 = vrot.slane %v893, 4
    %v963 = vsel %vm714, %v962, %v869
    %v965 = vunpack.c.l.s4 1934713408
    %v966 = vunpack.c.0.s8 %v965
    %v967 = vperm.slane %v963, %v966
    %v968 = vrot.slane %v967, 4
    %v969 = vsel %vm714, 0.0, %v968
    %v970 = vrot.slane %v755, 4
    %v971 = vsel %vm714, %v970, %v731
    %v973 = vunpack.c.l.s4 1934713408
    %v974 = vunpack.c.0.s8 %v973
    %v975 = vperm.slane %v971, %v974
    %v976 = vrot.slane %v975, 4
    %v977 = vsel %vm714, 0.0, %v976
    %v978 = vrot.slane %v803, 4
    %v979 = vsel %vm714, %v978, %v779
    %v981 = vunpack.c.l.s4 1934713408
    %v982 = vunpack.c.0.s8 %v981
    %v983 = vperm.slane %v979, %v982
    %v984 = vrot.slane %v983, 4
    %v985 = vsel %vm714, 0.0, %v984
    %v986 = vrot.slane %v851, 4
    %v987 = vsel %vm714, %v986, %v827
    %v989 = vunpack.c.l.s4 1934713408
    %v990 = vunpack.c.0.s8 %v989
    %v991 = vperm.slane %v987, %v990
    %v992 = vrot.slane %v991, 4
    %v993 = vsel %vm714, 0.0, %v992
    %v994 = vrot.slane %v899, 4
    %v995 = vsel %vm714, %v994, %v875
    %v997 = vunpack.c.l.s4 1934713408
    %v998 = vunpack.c.0.s8 %v997
    %v999 = vperm.slane %v995, %v998
    %v1000 = vrot.slane %v999, 4
    %v1001 = vsel %vm714, 0.0, %v1000
    %v1002 = vrot.slane %v761, 4
    %v1003 = vsel %vm714, %v1002, %v737
    %v1005 = vunpack.c.l.s4 1934713408
    %v1006 = vunpack.c.0.s8 %v1005
    %v1007 = vperm.slane %v1003, %v1006
    %v1008 = vrot.slane %v1007, 4
    %v1009 = vsel %vm714, 0.0, %v1008
    %v1010 = vrot.slane %v809, 4
    %v1011 = vsel %vm714, %v1010, %v785
    %v1013 = vunpack.c.l.s4 1934713408
    %v1014 = vunpack.c.0.s8 %v1013
    %v1015 = vperm.slane %v1011, %v1014
    %v1016 = vrot.slane %v1015, 4
    %v1017 = vsel %vm714, 0.0, %v1016
    %v1018 = vrot.slane %v857, 4
    %v1019 = vsel %vm714, %v1018, %v833
    %v1021 = vunpack.c.l.s4 1934713408
    %v1022 = vunpack.c.0.s8 %v1021
    %v1023 = vperm.slane %v1019, %v1022
    %v1024 = vrot.slane %v1023, 4
    %v1025 = vsel %vm714, 0.0, %v1024
    %v1026 = vrot.slane %v905, 4
    %v1027 = vsel %vm714, %v1026, %v881
    %v1029 = vunpack.c.l.s4 1934713408
    %v1030 = vunpack.c.0.s8 %v1029
    %v1031 = vperm.slane %v1027, %v1030
    %v1032 = vrot.slane %v1031, 4
    %v1033 = vsel %vm714, 0.0, %v1032
    %1034 = vrot.lane.b32.xlu0 %v443, 112
    %v1035 = vpop.permute.xlu0 %1034
    %1036 = vrot.lane.b32.xlu0 %v493, 112
    %v1037 = vpop.permute.xlu0 %1036
    %1038 = vrot.lane.b32.xlu0 %v494, 112
    %v1039 = vpop.permute.xlu0 %1038
    %1040 = vrot.lane.b32.xlu0 %v495, 112
    %v1041 = vpop.permute.xlu0 %1040
    %1042 = vrot.lane.b32.xlu0 %v445, 112
    %v1043 = vpop.permute.xlu0 %1042
    %1044 = vrot.lane.b32.xlu0 %v496, 112
    %v1045 = vpop.permute.xlu0 %1044
    %1046 = vrot.lane.b32.xlu0 %v497, 112
    %v1047 = vpop.permute.xlu0 %1046
    %1048 = vrot.lane.b32.xlu0 %v498, 112
    %v1049 = vpop.permute.xlu0 %1048
    %1050 = vrot.lane.b32.xlu0 %v448, 112
    %v1051 = vpop.permute.xlu0 %1050
    %1052 = vrot.lane.b32.xlu0 %v499, 112
    %v1053 = vpop.permute.xlu0 %1052
    %1054 = vrot.lane.b32.xlu0 %v500, 112
    %v1055 = vpop.permute.xlu0 %1054
    %1056 = vrot.lane.b32.xlu0 %v501, 112
    %v1057 = vpop.permute.xlu0 %1056
    %1058 = vrot.lane.b32.xlu0 %v450, 112
    %v1059 = vpop.permute.xlu0 %1058
    %1060 = vrot.lane.b32.xlu0 %v502, 112
    %v1061 = vpop.permute.xlu0 %1060
    %1062 = vrot.lane.b32.xlu0 %v503, 112
    %v1063 = vpop.permute.xlu0 %1062
    %1064 = vrot.lane.b32.xlu0 %v504, 112
    %v1065 = vpop.permute.xlu0 %1064
    %1082 = vrot.lane.b32.xlu0 %v443, 96
    %v1083 = vpop.permute.xlu0 %1082
    %1084 = vrot.lane.b32.xlu0 %v493, 96
    %v1085 = vpop.permute.xlu0 %1084
    %1086 = vrot.lane.b32.xlu0 %v494, 96
    %v1087 = vpop.permute.xlu0 %1086
    %1088 = vrot.lane.b32.xlu0 %v495, 96
    %v1089 = vpop.permute.xlu0 %1088
    %1090 = vrot.lane.b32.xlu0 %v445, 96
    %v1091 = vpop.permute.xlu0 %1090
    %1092 = vrot.lane.b32.xlu0 %v496, 96
    %v1093 = vpop.permute.xlu0 %1092
    %1094 = vrot.lane.b32.xlu0 %v497, 96
    %v1095 = vpop.permute.xlu0 %1094
    %1096 = vrot.lane.b32.xlu0 %v498, 96
    %v1097 = vpop.permute.xlu0 %1096
    %1098 = vrot.lane.b32.xlu0 %v448, 96
    %v1099 = vpop.permute.xlu0 %1098
    %1100 = vrot.lane.b32.xlu0 %v499, 96
    %v1101 = vpop.permute.xlu0 %1100
    %1102 = vrot.lane.b32.xlu0 %v500, 96
    %v1103 = vpop.permute.xlu0 %1102
    %1104 = vrot.lane.b32.xlu0 %v501, 96
    %v1105 = vpop.permute.xlu0 %1104
    %1106 = vrot.lane.b32.xlu0 %v450, 96
    %v1107 = vpop.permute.xlu0 %1106
    %1108 = vrot.lane.b32.xlu0 %v502, 96
    %v1109 = vpop.permute.xlu0 %1108
    %1110 = vrot.lane.b32.xlu0 %v503, 96
    %v1111 = vpop.permute.xlu0 %1110
    %1112 = vrot.lane.b32.xlu0 %v504, 96
    %v1113 = vpop.permute.xlu0 %1112
    %1130 = vrot.lane.b32.xlu0 %v443, 80
    %v1131 = vpop.permute.xlu0 %1130
    %1132 = vrot.lane.b32.xlu0 %v493, 80
    %v1133 = vpop.permute.xlu0 %1132
    %1134 = vrot.lane.b32.xlu0 %v494, 80
    %v1135 = vpop.permute.xlu0 %1134
    %1136 = vrot.lane.b32.xlu0 %v495, 80
    %v1137 = vpop.permute.xlu0 %1136
    %1138 = vrot.lane.b32.xlu0 %v445, 80
    %v1139 = vpop.permute.xlu0 %1138
    %1140 = vrot.lane.b32.xlu0 %v496, 80
    %v1141 = vpop.permute.xlu0 %1140
    %1142 = vrot.lane.b32.xlu0 %v497, 80
    %v1143 = vpop.permute.xlu0 %1142
    %1144 = vrot.lane.b32.xlu0 %v498, 80
    %v1145 = vpop.permute.xlu0 %1144
    %1146 = vrot.lane.b32.xlu0 %v448, 80
    %v1147 = vpop.permute.xlu0 %1146
    %1148 = vrot.lane.b32.xlu0 %v499, 80
    %v1149 = vpop.permute.xlu0 %1148
    %1150 = vrot.lane.b32.xlu0 %v500, 80
    %v1151 = vpop.permute.xlu0 %1150
    %1152 = vrot.lane.b32.xlu0 %v501, 80
    %v1153 = vpop.permute.xlu0 %1152
    %1154 = vrot.lane.b32.xlu0 %v450, 80
    %v1155 = vpop.permute.xlu0 %1154
    %1156 = vrot.lane.b32.xlu0 %v502, 80
    %v1157 = vpop.permute.xlu0 %1156
    %1158 = vrot.lane.b32.xlu0 %v503, 80
    %v1159 = vpop.permute.xlu0 %1158
    %1160 = vrot.lane.b32.xlu0 %v504, 80
    %v1161 = vpop.permute.xlu0 %1160
    %1178 = vrot.lane.b32.xlu0 %v443, 64
    %v1179 = vpop.permute.xlu0 %1178
    %1180 = vrot.lane.b32.xlu0 %v493, 64
    %v1181 = vpop.permute.xlu0 %1180
    %1182 = vrot.lane.b32.xlu0 %v494, 64
    %v1183 = vpop.permute.xlu0 %1182
    %1184 = vrot.lane.b32.xlu0 %v495, 64
    %v1185 = vpop.permute.xlu0 %1184
    %1186 = vrot.lane.b32.xlu0 %v445, 64
    %v1187 = vpop.permute.xlu0 %1186
    %1188 = vrot.lane.b32.xlu0 %v496, 64
    %v1189 = vpop.permute.xlu0 %1188
    %1190 = vrot.lane.b32.xlu0 %v497, 64
    %v1191 = vpop.permute.xlu0 %1190
    %1192 = vrot.lane.b32.xlu0 %v498, 64
    %v1193 = vpop.permute.xlu0 %1192
    %1194 = vrot.lane.b32.xlu0 %v448, 64
    %v1195 = vpop.permute.xlu0 %1194
    %1196 = vrot.lane.b32.xlu0 %v499, 64
    %v1197 = vpop.permute.xlu0 %1196
    %1198 = vrot.lane.b32.xlu0 %v500, 64
    %v1199 = vpop.permute.xlu0 %1198
    %1200 = vrot.lane.b32.xlu0 %v501, 64
    %v1201 = vpop.permute.xlu0 %1200
    %1202 = vrot.lane.b32.xlu0 %v450, 64
    %v1203 = vpop.permute.xlu0 %1202
    %1204 = vrot.lane.b32.xlu0 %v502, 64
    %v1205 = vpop.permute.xlu0 %1204
    %1206 = vrot.lane.b32.xlu0 %v503, 64
    %v1207 = vpop.permute.xlu0 %1206
    %1208 = vrot.lane.b32.xlu0 %v504, 64
    %v1209 = vpop.permute.xlu0 %1208
    %1226 = vrot.lane.b32.xlu0 %v443, 48
    %v1227 = vpop.permute.xlu0 %1226
    %1228 = vrot.lane.b32.xlu0 %v493, 48
    %v1229 = vpop.permute.xlu0 %1228
    %1230 = vrot.lane.b32.xlu0 %v494, 48
    %v1231 = vpop.permute.xlu0 %1230
    %1232 = vrot.lane.b32.xlu0 %v495, 48
    %v1233 = vpop.permute.xlu0 %1232
    %1234 = vrot.lane.b32.xlu0 %v445, 48
    %v1235 = vpop.permute.xlu0 %1234
    %1236 = vrot.lane.b32.xlu0 %v496, 48
    %v1237 = vpop.permute.xlu0 %1236
    %1238 = vrot.lane.b32.xlu0 %v497, 48
    %v1239 = vpop.permute.xlu0 %1238
    %1240 = vrot.lane.b32.xlu0 %v498, 48
    %v1241 = vpop.permute.xlu0 %1240
    %1242 = vrot.lane.b32.xlu0 %v448, 48
    %v1243 = vpop.permute.xlu0 %1242
    %1244 = vrot.lane.b32.xlu0 %v499, 48
    %v1245 = vpop.permute.xlu0 %1244
    %1246 = vrot.lane.b32.xlu0 %v500, 48
    %v1247 = vpop.permute.xlu0 %1246
    %1248 = vrot.lane.b32.xlu0 %v501, 48
    %v1249 = vpop.permute.xlu0 %1248
    %1250 = vrot.lane.b32.xlu0 %v450, 48
    %v1251 = vpop.permute.xlu0 %1250
    %1252 = vrot.lane.b32.xlu0 %v502, 48
    %v1253 = vpop.permute.xlu0 %1252
    %1254 = vrot.lane.b32.xlu0 %v503, 48
    %v1255 = vpop.permute.xlu0 %1254
    %1256 = vrot.lane.b32.xlu0 %v504, 48
    %v1257 = vpop.permute.xlu0 %1256
    %1274 = vrot.lane.b32.xlu0 %v443, 32
    %v1275 = vpop.permute.xlu0 %1274
    %1276 = vrot.lane.b32.xlu0 %v493, 32
    %v1277 = vpop.permute.xlu0 %1276
    %1278 = vrot.lane.b32.xlu0 %v494, 32
    %v1279 = vpop.permute.xlu0 %1278
    %1280 = vrot.lane.b32.xlu0 %v495, 32
    %v1281 = vpop.permute.xlu0 %1280
    %1282 = vrot.lane.b32.xlu0 %v445, 32
    %v1283 = vpop.permute.xlu0 %1282
    %1284 = vrot.lane.b32.xlu0 %v496, 32
    %v1285 = vpop.permute.xlu0 %1284
    %1286 = vrot.lane.b32.xlu0 %v497, 32
    %v1287 = vpop.permute.xlu0 %1286
    %1288 = vrot.lane.b32.xlu0 %v498, 32
    %v1289 = vpop.permute.xlu0 %1288
    %1290 = vrot.lane.b32.xlu0 %v448, 32
    %v1291 = vpop.permute.xlu0 %1290
    %1292 = vrot.lane.b32.xlu0 %v499, 32
    %v1293 = vpop.permute.xlu0 %1292
    %1294 = vrot.lane.b32.xlu0 %v500, 32
    %v1295 = vpop.permute.xlu0 %1294
    %1296 = vrot.lane.b32.xlu0 %v501, 32
    %v1297 = vpop.permute.xlu0 %1296
    %1298 = vrot.lane.b32.xlu0 %v450, 32
    %v1299 = vpop.permute.xlu0 %1298
    %1300 = vrot.lane.b32.xlu0 %v502, 32
    %v1301 = vpop.permute.xlu0 %1300
    %1302 = vrot.lane.b32.xlu0 %v503, 32
    %v1303 = vpop.permute.xlu0 %1302
    %1304 = vrot.lane.b32.xlu0 %v504, 32
    %v1305 = vpop.permute.xlu0 %1304
    %1322 = vrot.lane.b32.xlu0 %v443, 16
    %v1323 = vpop.permute.xlu0 %1322
    %1324 = vrot.lane.b32.xlu0 %v493, 16
    %v1325 = vpop.permute.xlu0 %1324
    %1326 = vrot.lane.b32.xlu0 %v494, 16
    %v1327 = vpop.permute.xlu0 %1326
    %1328 = vrot.lane.b32.xlu0 %v495, 16
    %v1329 = vpop.permute.xlu0 %1328
    %1330 = vrot.lane.b32.xlu0 %v445, 16
    %v1331 = vpop.permute.xlu0 %1330
    %1332 = vrot.lane.b32.xlu0 %v496, 16
    %v1333 = vpop.permute.xlu0 %1332
    %1334 = vrot.lane.b32.xlu0 %v497, 16
    %v1335 = vpop.permute.xlu0 %1334
    %1336 = vrot.lane.b32.xlu0 %v498, 16
    %v1337 = vpop.permute.xlu0 %1336
    %1338 = vrot.lane.b32.xlu0 %v448, 16
    %v1339 = vpop.permute.xlu0 %1338
    %1340 = vrot.lane.b32.xlu0 %v499, 16
    %v1341 = vpop.permute.xlu0 %1340
    %1342 = vrot.lane.b32.xlu0 %v500, 16
    %v1343 = vpop.permute.xlu0 %1342
    %1344 = vrot.lane.b32.xlu0 %v501, 16
    %v1345 = vpop.permute.xlu0 %1344
    %1346 = vrot.lane.b32.xlu0 %v450, 16
    %v1347 = vpop.permute.xlu0 %1346
    %1348 = vrot.lane.b32.xlu0 %v502, 16
    %v1349 = vpop.permute.xlu0 %1348
    %1350 = vrot.lane.b32.xlu0 %v503, 16
    %v1351 = vpop.permute.xlu0 %1350
    %1352 = vrot.lane.b32.xlu0 %v504, 16
    %v1353 = vpop.permute.xlu0 %1352
    %v1370 = vrot.slane %v1035, 4
    %v1371 = vsel %vm714, %v1370, %v443
    %v1373 = vunpack.c.l.s4 1934713408
    %v1374 = vunpack.c.0.s8 %v1373
    %v1375 = vperm.slane %v1371, %v1374
    %v1376 = vrot.slane %v1131, 4
    %v1377 = vsel %vm714, %v1376, %v1083
    %v1379 = vunpack.c.l.s4 1934713408
    %v1380 = vunpack.c.0.s8 %v1379
    %v1381 = vperm.slane %v1377, %v1380
    %v1382 = vrot.slane %v1227, 4
    %v1383 = vsel %vm714, %v1382, %v1179
    %v1385 = vunpack.c.l.s4 1934713408
    %v1386 = vunpack.c.0.s8 %v1385
    %v1387 = vperm.slane %v1383, %v1386
    %v1388 = vrot.slane %v1323, 4
    %v1389 = vsel %vm714, %v1388, %v1275
    %v1391 = vunpack.c.l.s4 1934713408
    %v1392 = vunpack.c.0.s8 %v1391
    %v1393 = vperm.slane %v1389, %v1392
    %v1394 = vrot.slane %v1037, 4
    %v1395 = vsel %vm714, %v1394, %v493
    %v1397 = vunpack.c.l.s4 1934713408
    %v1398 = vunpack.c.0.s8 %v1397
    %v1399 = vperm.slane %v1395, %v1398
    %v1400 = vrot.slane %v1133, 4
    %v1401 = vsel %vm714, %v1400, %v1085
    %v1403 = vunpack.c.l.s4 1934713408
    %v1404 = vunpack.c.0.s8 %v1403
    %v1405 = vperm.slane %v1401, %v1404
    %v1406 = vrot.slane %v1229, 4
    %v1407 = vsel %vm714, %v1406, %v1181
    %v1409 = vunpack.c.l.s4 1934713408
    %v1410 = vunpack.c.0.s8 %v1409
    %v1411 = vperm.slane %v1407, %v1410
    %v1412 = vrot.slane %v1325, 4
    %v1413 = vsel %vm714, %v1412, %v1277
    %v1415 = vunpack.c.l.s4 1934713408
    %v1416 = vunpack.c.0.s8 %v1415
    %v1417 = vperm.slane %v1413, %v1416
    %v1418 = vrot.slane %v1039, 4
    %v1419 = vsel %vm714, %v1418, %v494
    %v1421 = vunpack.c.l.s4 1934713408
    %v1422 = vunpack.c.0.s8 %v1421
    %v1423 = vperm.slane %v1419, %v1422
    %v1424 = vrot.slane %v1135, 4
    %v1425 = vsel %vm714, %v1424, %v1087
    %v1427 = vunpack.c.l.s4 1934713408
    %v1428 = vunpack.c.0.s8 %v1427
    %v1429 = vperm.slane %v1425, %v1428
    %v1430 = vrot.slane %v1231, 4
    %v1431 = vsel %vm714, %v1430, %v1183
    %v1433 = vunpack.c.l.s4 1934713408
    %v1434 = vunpack.c.0.s8 %v1433
    %v1435 = vperm.slane %v1431, %v1434
    %v1436 = vrot.slane %v1327, 4
    %v1437 = vsel %vm714, %v1436, %v1279
    %v1439 = vunpack.c.l.s4 1934713408
    %v1440 = vunpack.c.0.s8 %v1439
    %v1441 = vperm.slane %v1437, %v1440
    %v1442 = vrot.slane %v1041, 4
    %v1443 = vsel %vm714, %v1442, %v495
    %v1445 = vunpack.c.l.s4 1934713408
    %v1446 = vunpack.c.0.s8 %v1445
    %v1447 = vperm.slane %v1443, %v1446
    %v1448 = vrot.slane %v1137, 4
    %v1449 = vsel %vm714, %v1448, %v1089
    %v1451 = vunpack.c.l.s4 1934713408
    %v1452 = vunpack.c.0.s8 %v1451
    %v1453 = vperm.slane %v1449, %v1452
    %v1454 = vrot.slane %v1233, 4
    %v1455 = vsel %vm714, %v1454, %v1185
    %v1457 = vunpack.c.l.s4 1934713408
    %v1458 = vunpack.c.0.s8 %v1457
    %v1459 = vperm.slane %v1455, %v1458
    %v1460 = vrot.slane %v1329, 4
    %v1461 = vsel %vm714, %v1460, %v1281
    %v1463 = vunpack.c.l.s4 1934713408
    %v1464 = vunpack.c.0.s8 %v1463
    %v1465 = vperm.slane %v1461, %v1464
    %v1466 = vrot.slane %v1043, 4
    %v1467 = vsel %vm714, %v1466, %v445
    %v1469 = vunpack.c.l.s4 1934713408
    %v1470 = vunpack.c.0.s8 %v1469
    %v1471 = vperm.slane %v1467, %v1470
    %v1472 = vrot.slane %v1139, 4
    %v1473 = vsel %vm714, %v1472, %v1091
    %v1475 = vunpack.c.l.s4 1934713408
    %v1476 = vunpack.c.0.s8 %v1475
    %v1477 = vperm.slane %v1473, %v1476
    %v1478 = vrot.slane %v1235, 4
    %v1479 = vsel %vm714, %v1478, %v1187
    %v1481 = vunpack.c.l.s4 1934713408
    %v1482 = vunpack.c.0.s8 %v1481
    %v1483 = vperm.slane %v1479, %v1482
    %v1484 = vrot.slane %v1331, 4
    %v1485 = vsel %vm714, %v1484, %v1283
    %v1487 = vunpack.c.l.s4 1934713408
    %v1488 = vunpack.c.0.s8 %v1487
    %v1489 = vperm.slane %v1485, %v1488
    %v1490 = vrot.slane %v1045, 4
    %v1491 = vsel %vm714, %v1490, %v496
    %v1493 = vunpack.c.l.s4 1934713408
    %v1494 = vunpack.c.0.s8 %v1493
    %v1495 = vperm.slane %v1491, %v1494
    %v1496 = vrot.slane %v1141, 4
    %v1497 = vsel %vm714, %v1496, %v1093
    %v1499 = vunpack.c.l.s4 1934713408
    %v1500 = vunpack.c.0.s8 %v1499
    %v1501 = vperm.slane %v1497, %v1500
    %v1502 = vrot.slane %v1237, 4
    %v1503 = vsel %vm714, %v1502, %v1189
    %v1505 = vunpack.c.l.s4 1934713408
    %v1506 = vunpack.c.0.s8 %v1505
    %v1507 = vperm.slane %v1503, %v1506
    %v1508 = vrot.slane %v1333, 4
    %v1509 = vsel %vm714, %v1508, %v1285
    %v1511 = vunpack.c.l.s4 1934713408
    %v1512 = vunpack.c.0.s8 %v1511
    %v1513 = vperm.slane %v1509, %v1512
    %v1514 = vrot.slane %v1047, 4
    %v1515 = vsel %vm714, %v1514, %v497
    %v1517 = vunpack.c.l.s4 1934713408
    %v1518 = vunpack.c.0.s8 %v1517
    %v1519 = vperm.slane %v1515, %v1518
    %v1520 = vrot.slane %v1143, 4
    %v1521 = vsel %vm714, %v1520, %v1095
    %v1523 = vunpack.c.l.s4 1934713408
    %v1524 = vunpack.c.0.s8 %v1523
    %v1525 = vperm.slane %v1521, %v1524
    %v1526 = vrot.slane %v1239, 4
    %v1527 = vsel %vm714, %v1526, %v1191
    %v1529 = vunpack.c.l.s4 1934713408
    %v1530 = vunpack.c.0.s8 %v1529
    %v1531 = vperm.slane %v1527, %v1530
    %v1532 = vrot.slane %v1335, 4
    %v1533 = vsel %vm714, %v1532, %v1287
    %v1535 = vunpack.c.l.s4 1934713408
    %v1536 = vunpack.c.0.s8 %v1535
    %v1537 = vperm.slane %v1533, %v1536
    %v1538 = vrot.slane %v1049, 4
    %v1539 = vsel %vm714, %v1538, %v498
    %v1541 = vunpack.c.l.s4 1934713408
    %v1542 = vunpack.c.0.s8 %v1541
    %v1543 = vperm.slane %v1539, %v1542
    %v1544 = vrot.slane %v1145, 4
    %v1545 = vsel %vm714, %v1544, %v1097
    %v1547 = vunpack.c.l.s4 1934713408
    %v1548 = vunpack.c.0.s8 %v1547
    %v1549 = vperm.slane %v1545, %v1548
    %v1550 = vrot.slane %v1241, 4
    %v1551 = vsel %vm714, %v1550, %v1193
    %v1553 = vunpack.c.l.s4 1934713408
    %v1554 = vunpack.c.0.s8 %v1553
    %v1555 = vperm.slane %v1551, %v1554
    %v1556 = vrot.slane %v1337, 4
    %v1557 = vsel %vm714, %v1556, %v1289
    %v1559 = vunpack.c.l.s4 1934713408
    %v1560 = vunpack.c.0.s8 %v1559
    %v1561 = vperm.slane %v1557, %v1560
    %v1562 = vrot.slane %v1051, 4
    %v1563 = vsel %vm714, %v1562, %v448
    %v1565 = vunpack.c.l.s4 1934713408
    %v1566 = vunpack.c.0.s8 %v1565
    %v1567 = vperm.slane %v1563, %v1566
    %v1568 = vrot.slane %v1147, 4
    %v1569 = vsel %vm714, %v1568, %v1099
    %v1571 = vunpack.c.l.s4 1934713408
    %v1572 = vunpack.c.0.s8 %v1571
    %v1573 = vperm.slane %v1569, %v1572
    %v1574 = vrot.slane %v1243, 4
    %v1575 = vsel %vm714, %v1574, %v1195
    %v1577 = vunpack.c.l.s4 1934713408
    %v1578 = vunpack.c.0.s8 %v1577
    %v1579 = vperm.slane %v1575, %v1578
    %v1580 = vrot.slane %v1339, 4
    %v1581 = vsel %vm714, %v1580, %v1291
    %v1583 = vunpack.c.l.s4 1934713408
    %v1584 = vunpack.c.0.s8 %v1583
    %v1585 = vperm.slane %v1581, %v1584
    %v1586 = vrot.slane %v1053, 4
    %v1587 = vsel %vm714, %v1586, %v499
    %v1589 = vunpack.c.l.s4 1934713408
    %v1590 = vunpack.c.0.s8 %v1589
    %v1591 = vperm.slane %v1587, %v1590
    %v1592 = vrot.slane %v1149, 4
    %v1593 = vsel %vm714, %v1592, %v1101
    %v1595 = vunpack.c.l.s4 1934713408
    %v1596 = vunpack.c.0.s8 %v1595
    %v1597 = vperm.slane %v1593, %v1596
    %v1598 = vrot.slane %v1245, 4
    %v1599 = vsel %vm714, %v1598, %v1197
    %v1601 = vunpack.c.l.s4 1934713408
    %v1602 = vunpack.c.0.s8 %v1601
    %v1603 = vperm.slane %v1599, %v1602
    %v1604 = vrot.slane %v1341, 4
    %v1605 = vsel %vm714, %v1604, %v1293
    %v1607 = vunpack.c.l.s4 1934713408
    %v1608 = vunpack.c.0.s8 %v1607
    %v1609 = vperm.slane %v1605, %v1608
    %v1610 = vrot.slane %v1055, 4
    %v1611 = vsel %vm714, %v1610, %v500
    %v1613 = vunpack.c.l.s4 1934713408
    %v1614 = vunpack.c.0.s8 %v1613
    %v1615 = vperm.slane %v1611, %v1614
    %v1616 = vrot.slane %v1151, 4
    %v1617 = vsel %vm714, %v1616, %v1103
    %v1619 = vunpack.c.l.s4 1934713408
    %v1620 = vunpack.c.0.s8 %v1619
    %v1621 = vperm.slane %v1617, %v1620
    %v1622 = vrot.slane %v1247, 4
    %v1623 = vsel %vm714, %v1622, %v1199
    %v1625 = vunpack.c.l.s4 1934713408
    %v1626 = vunpack.c.0.s8 %v1625
    %v1627 = vperm.slane %v1623, %v1626
    %v1628 = vrot.slane %v1343, 4
    %v1629 = vsel %vm714, %v1628, %v1295
    %v1631 = vunpack.c.l.s4 1934713408
    %v1632 = vunpack.c.0.s8 %v1631
    %v1633 = vperm.slane %v1629, %v1632
    %v1634 = vrot.slane %v1057, 4
    %v1635 = vsel %vm714, %v1634, %v501
    %v1637 = vunpack.c.l.s4 1934713408
    %v1638 = vunpack.c.0.s8 %v1637
    %v1639 = vperm.slane %v1635, %v1638
    %v1640 = vrot.slane %v1153, 4
    %v1641 = vsel %vm714, %v1640, %v1105
    %v1643 = vunpack.c.l.s4 1934713408
    %v1644 = vunpack.c.0.s8 %v1643
    %v1645 = vperm.slane %v1641, %v1644
    %v1646 = vrot.slane %v1249, 4
    %v1647 = vsel %vm714, %v1646, %v1201
    %v1649 = vunpack.c.l.s4 1934713408
    %v1650 = vunpack.c.0.s8 %v1649
    %v1651 = vperm.slane %v1647, %v1650
    %v1652 = vrot.slane %v1345, 4
    %v1653 = vsel %vm714, %v1652, %v1297
    %v1655 = vunpack.c.l.s4 1934713408
    %v1656 = vunpack.c.0.s8 %v1655
    %v1657 = vperm.slane %v1653, %v1656
    %v1658 = vrot.slane %v1059, 4
    %v1659 = vsel %vm714, %v1658, %v450
    %v1661 = vunpack.c.l.s4 1934713408
    %v1662 = vunpack.c.0.s8 %v1661
    %v1663 = vperm.slane %v1659, %v1662
    %v1664 = vrot.slane %v1155, 4
    %v1665 = vsel %vm714, %v1664, %v1107
    %v1667 = vunpack.c.l.s4 1934713408
    %v1668 = vunpack.c.0.s8 %v1667
    %v1669 = vperm.slane %v1665, %v1668
    %v1670 = vrot.slane %v1251, 4
    %v1671 = vsel %vm714, %v1670, %v1203
    %v1673 = vunpack.c.l.s4 1934713408
    %v1674 = vunpack.c.0.s8 %v1673
    %v1675 = vperm.slane %v1671, %v1674
    %v1676 = vrot.slane %v1347, 4
    %v1677 = vsel %vm714, %v1676, %v1299
    %v1679 = vunpack.c.l.s4 1934713408
    %v1680 = vunpack.c.0.s8 %v1679
    %v1681 = vperm.slane %v1677, %v1680
    %v1682 = vrot.slane %v1061, 4
    %v1683 = vsel %vm714, %v1682, %v502
    %v1685 = vunpack.c.l.s4 1934713408
    %v1686 = vunpack.c.0.s8 %v1685
    %v1687 = vperm.slane %v1683, %v1686
    %v1688 = vrot.slane %v1157, 4
    %v1689 = vsel %vm714, %v1688, %v1109
    %v1691 = vunpack.c.l.s4 1934713408
    %v1692 = vunpack.c.0.s8 %v1691
    %v1693 = vperm.slane %v1689, %v1692
    %v1694 = vrot.slane %v1253, 4
    %v1695 = vsel %vm714, %v1694, %v1205
    %v1697 = vunpack.c.l.s4 1934713408
    %v1698 = vunpack.c.0.s8 %v1697
    %v1699 = vperm.slane %v1695, %v1698
    %v1700 = vrot.slane %v1349, 4
    %v1701 = vsel %vm714, %v1700, %v1301
    %v1703 = vunpack.c.l.s4 1934713408
    %v1704 = vunpack.c.0.s8 %v1703
    %v1705 = vperm.slane %v1701, %v1704
    %v1706 = vrot.slane %v1063, 4
    %v1707 = vsel %vm714, %v1706, %v503
    %v1709 = vunpack.c.l.s4 1934713408
    %v1710 = vunpack.c.0.s8 %v1709
    %v1711 = vperm.slane %v1707, %v1710
    %v1712 = vrot.slane %v1159, 4
    %v1713 = vsel %vm714, %v1712, %v1111
    %v1715 = vunpack.c.l.s4 1934713408
    %v1716 = vunpack.c.0.s8 %v1715
    %v1717 = vperm.slane %v1713, %v1716
    %v1718 = vrot.slane %v1255, 4
    %v1719 = vsel %vm714, %v1718, %v1207
    %v1721 = vunpack.c.l.s4 1934713408
    %v1722 = vunpack.c.0.s8 %v1721
    %v1723 = vperm.slane %v1719, %v1722
    %v1724 = vrot.slane %v1351, 4
    %v1725 = vsel %vm714, %v1724, %v1303
    %v1727 = vunpack.c.l.s4 1934713408
    %v1728 = vunpack.c.0.s8 %v1727
    %v1729 = vperm.slane %v1725, %v1728
    %v1730 = vrot.slane %v1065, 4
    %v1731 = vsel %vm714, %v1730, %v504
    %v1733 = vunpack.c.l.s4 1934713408
    %v1734 = vunpack.c.0.s8 %v1733
    %v1735 = vperm.slane %v1731, %v1734
    %v1736 = vrot.slane %v1161, 4
    %v1737 = vsel %vm714, %v1736, %v1113
    %v1739 = vunpack.c.l.s4 1934713408
    %v1740 = vunpack.c.0.s8 %v1739
    %v1741 = vperm.slane %v1737, %v1740
    %v1742 = vrot.slane %v1257, 4
    %v1743 = vsel %vm714, %v1742, %v1209
    %v1745 = vunpack.c.l.s4 1934713408
    %v1746 = vunpack.c.0.s8 %v1745
    %v1747 = vperm.slane %v1743, %v1746
    %v1748 = vrot.slane %v1353, 4
    %v1749 = vsel %vm714, %v1748, %v1305
    %v1751 = vunpack.c.l.s4 1934713408
    %v1752 = vunpack.c.0.s8 %v1751
    %v1753 = vperm.slane %v1749, %v1752
    %v1754 = vrot.slane %v1399, 4
    %v1755 = vsel %vm714, %v1754, %v1375
    %v1757 = vunpack.c.l.s4 1934713408
    %v1758 = vunpack.c.0.s8 %v1757
    %v1759 = vperm.slane %v1755, %v1758
    %v1760 = vrot.slane %v1759, 4
    %v1761 = vsel %vm714, 0.0, %v1760
    %v1762 = vrot.slane %v1447, 4
    %v1763 = vsel %vm714, %v1762, %v1423
    %v1765 = vunpack.c.l.s4 1934713408
    %v1766 = vunpack.c.0.s8 %v1765
    %v1767 = vperm.slane %v1763, %v1766
    %v1768 = vrot.slane %v1767, 4
    %v1769 = vsel %vm714, 0.0, %v1768
    %v1770 = vrot.slane %v1495, 4
    %v1771 = vsel %vm714, %v1770, %v1471
    %v1773 = vunpack.c.l.s4 1934713408
    %v1774 = vunpack.c.0.s8 %v1773
    %v1775 = vperm.slane %v1771, %v1774
    %v1776 = vrot.slane %v1775, 4
    %v1777 = vsel %vm714, 0.0, %v1776
    %v1778 = vrot.slane %v1543, 4
    %v1779 = vsel %vm714, %v1778, %v1519
    %v1781 = vunpack.c.l.s4 1934713408
    %v1782 = vunpack.c.0.s8 %v1781
    %v1783 = vperm.slane %v1779, %v1782
    %v1784 = vrot.slane %v1783, 4
    %v1785 = vsel %vm714, 0.0, %v1784
    %v1786 = vrot.slane %v1591, 4
    %v1787 = vsel %vm714, %v1786, %v1567
    %v1789 = vunpack.c.l.s4 1934713408
    %v1790 = vunpack.c.0.s8 %v1789
    %v1791 = vperm.slane %v1787, %v1790
    %v1792 = vrot.slane %v1791, 4
    %v1793 = vsel %vm714, 0.0, %v1792
    %v1794 = vrot.slane %v1639, 4
    %v1795 = vsel %vm714, %v1794, %v1615
    %v1797 = vunpack.c.l.s4 1934713408
    %v1798 = vunpack.c.0.s8 %v1797
    %v1799 = vperm.slane %v1795, %v1798
    %v1800 = vrot.slane %v1799, 4
    %v1801 = vsel %vm714, 0.0, %v1800
    %v1802 = vrot.slane %v1687, 4
    %v1803 = vsel %vm714, %v1802, %v1663
    %v1805 = vunpack.c.l.s4 1934713408
    %v1806 = vunpack.c.0.s8 %v1805
    %v1807 = vperm.slane %v1803, %v1806
    %v1808 = vrot.slane %v1807, 4
    %v1809 = vsel %vm714, 0.0, %v1808
    %v1810 = vrot.slane %v1735, 4
    %v1811 = vsel %vm714, %v1810, %v1711
    %v1813 = vunpack.c.l.s4 1934713408
    %v1814 = vunpack.c.0.s8 %v1813
    %v1815 = vperm.slane %v1811, %v1814
    %v1816 = vrot.slane %v1815, 4
    %v1817 = vsel %vm714, 0.0, %v1816
    %v1818 = vrot.slane %v1405, 4
    %v1819 = vsel %vm714, %v1818, %v1381
    %v1821 = vunpack.c.l.s4 1934713408
    %v1822 = vunpack.c.0.s8 %v1821
    %v1823 = vperm.slane %v1819, %v1822
    %v1824 = vrot.slane %v1823, 4
    %v1825 = vsel %vm714, 0.0, %v1824
    %v1826 = vrot.slane %v1453, 4
    %v1827 = vsel %vm714, %v1826, %v1429
    %v1829 = vunpack.c.l.s4 1934713408
    %v1830 = vunpack.c.0.s8 %v1829
    %v1831 = vperm.slane %v1827, %v1830
    %v1832 = vrot.slane %v1831, 4
    %v1833 = vsel %vm714, 0.0, %v1832
    %v1834 = vrot.slane %v1501, 4
    %v1835 = vsel %vm714, %v1834, %v1477
    %v1837 = vunpack.c.l.s4 1934713408
    %v1838 = vunpack.c.0.s8 %v1837
    %v1839 = vperm.slane %v1835, %v1838
    %v1840 = vrot.slane %v1839, 4
    %v1841 = vsel %vm714, 0.0, %v1840
    %v1842 = vrot.slane %v1549, 4
    %v1843 = vsel %vm714, %v1842, %v1525
    %v1845 = vunpack.c.l.s4 1934713408
    %v1846 = vunpack.c.0.s8 %v1845
    %v1847 = vperm.slane %v1843, %v1846
    %v1848 = vrot.slane %v1847, 4
    %v1849 = vsel %vm714, 0.0, %v1848
    %v1850 = vrot.slane %v1597, 4
    %v1851 = vsel %vm714, %v1850, %v1573
    %v1853 = vunpack.c.l.s4 1934713408
    %v1854 = vunpack.c.0.s8 %v1853
    %v1855 = vperm.slane %v1851, %v1854
    %v1856 = vrot.slane %v1855, 4
    %v1857 = vsel %vm714, 0.0, %v1856
    %v1858 = vrot.slane %v1645, 4
    %v1859 = vsel %vm714, %v1858, %v1621
    %v1861 = vunpack.c.l.s4 1934713408
    %v1862 = vunpack.c.0.s8 %v1861
    %v1863 = vperm.slane %v1859, %v1862
    %v1864 = vrot.slane %v1863, 4
    %v1865 = vsel %vm714, 0.0, %v1864
    %v1866 = vrot.slane %v1693, 4
    %v1867 = vsel %vm714, %v1866, %v1669
    %v1869 = vunpack.c.l.s4 1934713408
    %v1870 = vunpack.c.0.s8 %v1869
    %v1871 = vperm.slane %v1867, %v1870
    %v1872 = vrot.slane %v1871, 4
    %v1873 = vsel %vm714, 0.0, %v1872
    %v1874 = vrot.slane %v1741, 4
    %v1875 = vsel %vm714, %v1874, %v1717
    %v1877 = vunpack.c.l.s4 1934713408
    %v1878 = vunpack.c.0.s8 %v1877
    %v1879 = vperm.slane %v1875, %v1878
    %v1880 = vrot.slane %v1879, 4
    %v1881 = vsel %vm714, 0.0, %v1880
    %v1882 = vrot.slane %v1411, 4
    %v1883 = vsel %vm714, %v1882, %v1387
    %v1885 = vunpack.c.l.s4 1934713408
    %v1886 = vunpack.c.0.s8 %v1885
    %v1887 = vperm.slane %v1883, %v1886
    %v1888 = vrot.slane %v1887, 4
    %v1889 = vsel %vm714, 0.0, %v1888
    %v1890 = vrot.slane %v1459, 4
    %v1891 = vsel %vm714, %v1890, %v1435
    %v1893 = vunpack.c.l.s4 1934713408
    %v1894 = vunpack.c.0.s8 %v1893
    %v1895 = vperm.slane %v1891, %v1894
    %v1896 = vrot.slane %v1895, 4
    %v1897 = vsel %vm714, 0.0, %v1896
    %v1898 = vrot.slane %v1507, 4
    %v1899 = vsel %vm714, %v1898, %v1483
    %v1901 = vunpack.c.l.s4 1934713408
    %v1902 = vunpack.c.0.s8 %v1901
    %v1903 = vperm.slane %v1899, %v1902
    %v1904 = vrot.slane %v1903, 4
    %v1905 = vsel %vm714, 0.0, %v1904
    %v1906 = vrot.slane %v1555, 4
    %v1907 = vsel %vm714, %v1906, %v1531
    %v1909 = vunpack.c.l.s4 1934713408
    %v1910 = vunpack.c.0.s8 %v1909
    %v1911 = vperm.slane %v1907, %v1910
    %v1912 = vrot.slane %v1911, 4
    %v1913 = vsel %vm714, 0.0, %v1912
    %v1914 = vrot.slane %v1603, 4
    %v1915 = vsel %vm714, %v1914, %v1579
    %v1917 = vunpack.c.l.s4 1934713408
    %v1918 = vunpack.c.0.s8 %v1917
    %v1919 = vperm.slane %v1915, %v1918
    %v1920 = vrot.slane %v1919, 4
    %v1921 = vsel %vm714, 0.0, %v1920
    %v1922 = vrot.slane %v1651, 4
    %v1923 = vsel %vm714, %v1922, %v1627
    %v1925 = vunpack.c.l.s4 1934713408
    %v1926 = vunpack.c.0.s8 %v1925
    %v1927 = vperm.slane %v1923, %v1926
    %v1928 = vrot.slane %v1927, 4
    %v1929 = vsel %vm714, 0.0, %v1928
    %v1930 = vrot.slane %v1699, 4
    %v1931 = vsel %vm714, %v1930, %v1675
    %v1933 = vunpack.c.l.s4 1934713408
    %v1934 = vunpack.c.0.s8 %v1933
    %v1935 = vperm.slane %v1931, %v1934
    %v1936 = vrot.slane %v1935, 4
    %v1937 = vsel %vm714, 0.0, %v1936
    %v1938 = vrot.slane %v1747, 4
    %v1939 = vsel %vm714, %v1938, %v1723
    %v1941 = vunpack.c.l.s4 1934713408
    %v1942 = vunpack.c.0.s8 %v1941
    %v1943 = vperm.slane %v1939, %v1942
    %v1944 = vrot.slane %v1943, 4
    %v1945 = vsel %vm714, 0.0, %v1944
    %v1946 = vrot.slane %v1417, 4
    %v1947 = vsel %vm714, %v1946, %v1393
    %v1949 = vunpack.c.l.s4 1934713408
    %v1950 = vunpack.c.0.s8 %v1949
    %v1951 = vperm.slane %v1947, %v1950
    %v1952 = vrot.slane %v1951, 4
    %v1953 = vsel %vm714, 0.0, %v1952
    %v1954 = vrot.slane %v1465, 4
    %v1955 = vsel %vm714, %v1954, %v1441
    %v1957 = vunpack.c.l.s4 1934713408
    %v1958 = vunpack.c.0.s8 %v1957
    %v1959 = vperm.slane %v1955, %v1958
    %v1960 = vrot.slane %v1959, 4
    %v1961 = vsel %vm714, 0.0, %v1960
    %v1962 = vrot.slane %v1513, 4
    %v1963 = vsel %vm714, %v1962, %v1489
    %v1965 = vunpack.c.l.s4 1934713408
    %v1966 = vunpack.c.0.s8 %v1965
    %v1967 = vperm.slane %v1963, %v1966
    %v1968 = vrot.slane %v1967, 4
    %v1969 = vsel %vm714, 0.0, %v1968
    %v1970 = vrot.slane %v1561, 4
    %v1971 = vsel %vm714, %v1970, %v1537
    %v1973 = vunpack.c.l.s4 1934713408
    %v1974 = vunpack.c.0.s8 %v1973
    %v1975 = vperm.slane %v1971, %v1974
    %v1976 = vrot.slane %v1975, 4
    %v1977 = vsel %vm714, 0.0, %v1976
    %v1978 = vrot.slane %v1609, 4
    %v1979 = vsel %vm714, %v1978, %v1585
    %v1981 = vunpack.c.l.s4 1934713408
    %v1982 = vunpack.c.0.s8 %v1981
    %v1983 = vperm.slane %v1979, %v1982
    %v1984 = vrot.slane %v1983, 4
    %v1985 = vsel %vm714, 0.0, %v1984
    %v1986 = vrot.slane %v1657, 4
    %v1987 = vsel %vm714, %v1986, %v1633
    %v1989 = vunpack.c.l.s4 1934713408
    %v1990 = vunpack.c.0.s8 %v1989
    %v1991 = vperm.slane %v1987, %v1990
    %v1992 = vrot.slane %v1991, 4
    %v1993 = vsel %vm714, 0.0, %v1992
    %v1994 = vrot.slane %v1705, 4
    %v1995 = vsel %vm714, %v1994, %v1681
    %v1997 = vunpack.c.l.s4 1934713408
    %v1998 = vunpack.c.0.s8 %v1997
    %v1999 = vperm.slane %v1995, %v1998
    %v2000 = vrot.slane %v1999, 4
    %v2001 = vsel %vm714, 0.0, %v2000
    %v2002 = vrot.slane %v1753, 4
    %v2003 = vsel %vm714, %v2002, %v1729
    %v2005 = vunpack.c.l.s4 1934713408
    %v2006 = vunpack.c.0.s8 %v2005
    %v2007 = vperm.slane %v2003, %v2006
    %v2008 = vrot.slane %v2007, 4
    %v2009 = vsel %vm714, 0.0, %v2008
    %2010 = vrot.lane.b32.xlu0 %v466, 112
    %v2011 = vpop.permute.xlu0 %2010
    %2012 = vrot.lane.b32.xlu0 %v521, 112
    %v2013 = vpop.permute.xlu0 %2012
    %2014 = vrot.lane.b32.xlu0 %v522, 112
    %v2015 = vpop.permute.xlu0 %2014
    %2016 = vrot.lane.b32.xlu0 %v523, 112
    %v2017 = vpop.permute.xlu0 %2016
    %2018 = vrot.lane.b32.xlu0 %v468, 112
    %v2019 = vpop.permute.xlu0 %2018
    %2020 = vrot.lane.b32.xlu0 %v524, 112
    %v2021 = vpop.permute.xlu0 %2020
    %2022 = vrot.lane.b32.xlu0 %v525, 112
    %v2023 = vpop.permute.xlu0 %2022
    %2024 = vrot.lane.b32.xlu0 %v526, 112
    %v2025 = vpop.permute.xlu0 %2024
    %2026 = vrot.lane.b32.xlu0 %v471, 112
    %v2027 = vpop.permute.xlu0 %2026
    %2028 = vrot.lane.b32.xlu0 %v527, 112
    %v2029 = vpop.permute.xlu0 %2028
    %2030 = vrot.lane.b32.xlu0 %v528, 112
    %v2031 = vpop.permute.xlu0 %2030
    %2032 = vrot.lane.b32.xlu0 %v529, 112
    %v2033 = vpop.permute.xlu0 %2032
    %2034 = vrot.lane.b32.xlu0 %v473, 112
    %v2035 = vpop.permute.xlu0 %2034
    %2036 = vrot.lane.b32.xlu0 %v530, 112
    %v2037 = vpop.permute.xlu0 %2036
    %2038 = vrot.lane.b32.xlu0 %v531, 112
    %v2039 = vpop.permute.xlu0 %2038
    %2040 = vrot.lane.b32.xlu0 %v532, 112
    %v2041 = vpop.permute.xlu0 %2040
    %2058 = vrot.lane.b32.xlu0 %v466, 96
    %v2059 = vpop.permute.xlu0 %2058
    %2060 = vrot.lane.b32.xlu0 %v521, 96
    %v2061 = vpop.permute.xlu0 %2060
    %2062 = vrot.lane.b32.xlu0 %v522, 96
    %v2063 = vpop.permute.xlu0 %2062
    %2064 = vrot.lane.b32.xlu0 %v523, 96
    %v2065 = vpop.permute.xlu0 %2064
    %2066 = vrot.lane.b32.xlu0 %v468, 96
    %v2067 = vpop.permute.xlu0 %2066
    %2068 = vrot.lane.b32.xlu0 %v524, 96
    %v2069 = vpop.permute.xlu0 %2068
    %2070 = vrot.lane.b32.xlu0 %v525, 96
    %v2071 = vpop.permute.xlu0 %2070
    %2072 = vrot.lane.b32.xlu0 %v526, 96
    %v2073 = vpop.permute.xlu0 %2072
    %2074 = vrot.lane.b32.xlu0 %v471, 96
    %v2075 = vpop.permute.xlu0 %2074
    %2076 = vrot.lane.b32.xlu0 %v527, 96
    %v2077 = vpop.permute.xlu0 %2076
    %2078 = vrot.lane.b32.xlu0 %v528, 96
    %v2079 = vpop.permute.xlu0 %2078
    %2080 = vrot.lane.b32.xlu0 %v529, 96
    %v2081 = vpop.permute.xlu0 %2080
    %2082 = vrot.lane.b32.xlu0 %v473, 96
    %v2083 = vpop.permute.xlu0 %2082
    %2084 = vrot.lane.b32.xlu0 %v530, 96
    %v2085 = vpop.permute.xlu0 %2084
    %2086 = vrot.lane.b32.xlu0 %v531, 96
    %v2087 = vpop.permute.xlu0 %2086
    %2088 = vrot.lane.b32.xlu0 %v532, 96
    %v2089 = vpop.permute.xlu0 %2088
    %2106 = vrot.lane.b32.xlu0 %v466, 80
    %v2107 = vpop.permute.xlu0 %2106
    %2108 = vrot.lane.b32.xlu0 %v521, 80
    %v2109 = vpop.permute.xlu0 %2108
    %2110 = vrot.lane.b32.xlu0 %v522, 80
    %v2111 = vpop.permute.xlu0 %2110
    %2112 = vrot.lane.b32.xlu0 %v523, 80
    %v2113 = vpop.permute.xlu0 %2112
    %2114 = vrot.lane.b32.xlu0 %v468, 80
    %v2115 = vpop.permute.xlu0 %2114
    %2116 = vrot.lane.b32.xlu0 %v524, 80
    %v2117 = vpop.permute.xlu0 %2116
    %2118 = vrot.lane.b32.xlu0 %v525, 80
    %v2119 = vpop.permute.xlu0 %2118
    %2120 = vrot.lane.b32.xlu0 %v526, 80
    %v2121 = vpop.permute.xlu0 %2120
    %2122 = vrot.lane.b32.xlu0 %v471, 80
    %v2123 = vpop.permute.xlu0 %2122
    %2124 = vrot.lane.b32.xlu0 %v527, 80
    %v2125 = vpop.permute.xlu0 %2124
    %2126 = vrot.lane.b32.xlu0 %v528, 80
    %v2127 = vpop.permute.xlu0 %2126
    %2128 = vrot.lane.b32.xlu0 %v529, 80
    %v2129 = vpop.permute.xlu0 %2128
    %2130 = vrot.lane.b32.xlu0 %v473, 80
    %v2131 = vpop.permute.xlu0 %2130
    %2132 = vrot.lane.b32.xlu0 %v530, 80
    %v2133 = vpop.permute.xlu0 %2132
    %2134 = vrot.lane.b32.xlu0 %v531, 80
    %v2135 = vpop.permute.xlu0 %2134
    %2136 = vrot.lane.b32.xlu0 %v532, 80
    %v2137 = vpop.permute.xlu0 %2136
    %2154 = vrot.lane.b32.xlu0 %v466, 64
    %v2155 = vpop.permute.xlu0 %2154
    %2156 = vrot.lane.b32.xlu0 %v521, 64
    %v2157 = vpop.permute.xlu0 %2156
    %2158 = vrot.lane.b32.xlu0 %v522, 64
    %v2159 = vpop.permute.xlu0 %2158
    %2160 = vrot.lane.b32.xlu0 %v523, 64
    %v2161 = vpop.permute.xlu0 %2160
    %2162 = vrot.lane.b32.xlu0 %v468, 64
    %v2163 = vpop.permute.xlu0 %2162
    %2164 = vrot.lane.b32.xlu0 %v524, 64
    %v2165 = vpop.permute.xlu0 %2164
    %2166 = vrot.lane.b32.xlu0 %v525, 64
    %v2167 = vpop.permute.xlu0 %2166
    %2168 = vrot.lane.b32.xlu0 %v526, 64
    %v2169 = vpop.permute.xlu0 %2168
    %2170 = vrot.lane.b32.xlu0 %v471, 64
    %v2171 = vpop.permute.xlu0 %2170
    %2172 = vrot.lane.b32.xlu0 %v527, 64
    %v2173 = vpop.permute.xlu0 %2172
    %2174 = vrot.lane.b32.xlu0 %v528, 64
    %v2175 = vpop.permute.xlu0 %2174
    %2176 = vrot.lane.b32.xlu0 %v529, 64
    %v2177 = vpop.permute.xlu0 %2176
    %2178 = vrot.lane.b32.xlu0 %v473, 64
    %v2179 = vpop.permute.xlu0 %2178
    %2180 = vrot.lane.b32.xlu0 %v530, 64
    %v2181 = vpop.permute.xlu0 %2180
    %2182 = vrot.lane.b32.xlu0 %v531, 64
    %v2183 = vpop.permute.xlu0 %2182
    %2184 = vrot.lane.b32.xlu0 %v532, 64
    %v2185 = vpop.permute.xlu0 %2184
    %2202 = vrot.lane.b32.xlu0 %v466, 48
    %v2203 = vpop.permute.xlu0 %2202
    %2204 = vrot.lane.b32.xlu0 %v521, 48
    %v2205 = vpop.permute.xlu0 %2204
    %2206 = vrot.lane.b32.xlu0 %v522, 48
    %v2207 = vpop.permute.xlu0 %2206
    %2208 = vrot.lane.b32.xlu0 %v523, 48
    %v2209 = vpop.permute.xlu0 %2208
    %2210 = vrot.lane.b32.xlu0 %v468, 48
    %v2211 = vpop.permute.xlu0 %2210
    %2212 = vrot.lane.b32.xlu0 %v524, 48
    %v2213 = vpop.permute.xlu0 %2212
    %2214 = vrot.lane.b32.xlu0 %v525, 48
    %v2215 = vpop.permute.xlu0 %2214
    %2216 = vrot.lane.b32.xlu0 %v526, 48
    %v2217 = vpop.permute.xlu0 %2216
    %2218 = vrot.lane.b32.xlu0 %v471, 48
    %v2219 = vpop.permute.xlu0 %2218
    %2220 = vrot.lane.b32.xlu0 %v527, 48
    %v2221 = vpop.permute.xlu0 %2220
    %2222 = vrot.lane.b32.xlu0 %v528, 48
    %v2223 = vpop.permute.xlu0 %2222
    %2224 = vrot.lane.b32.xlu0 %v529, 48
    %v2225 = vpop.permute.xlu0 %2224
    %2226 = vrot.lane.b32.xlu0 %v473, 48
    %v2227 = vpop.permute.xlu0 %2226
    %2228 = vrot.lane.b32.xlu0 %v530, 48
    %v2229 = vpop.permute.xlu0 %2228
    %2230 = vrot.lane.b32.xlu0 %v531, 48
    %v2231 = vpop.permute.xlu0 %2230
    %2232 = vrot.lane.b32.xlu0 %v532, 48
    %v2233 = vpop.permute.xlu0 %2232
    %2250 = vrot.lane.b32.xlu0 %v466, 32
    %v2251 = vpop.permute.xlu0 %2250
    %2252 = vrot.lane.b32.xlu0 %v521, 32
    %v2253 = vpop.permute.xlu0 %2252
    %2254 = vrot.lane.b32.xlu0 %v522, 32
    %v2255 = vpop.permute.xlu0 %2254
    %2256 = vrot.lane.b32.xlu0 %v523, 32
    %v2257 = vpop.permute.xlu0 %2256
    %2258 = vrot.lane.b32.xlu0 %v468, 32
    %v2259 = vpop.permute.xlu0 %2258
    %2260 = vrot.lane.b32.xlu0 %v524, 32
    %v2261 = vpop.permute.xlu0 %2260
    %2262 = vrot.lane.b32.xlu0 %v525, 32
    %v2263 = vpop.permute.xlu0 %2262
    %2264 = vrot.lane.b32.xlu0 %v526, 32
    %v2265 = vpop.permute.xlu0 %2264
    %2266 = vrot.lane.b32.xlu0 %v471, 32
    %v2267 = vpop.permute.xlu0 %2266
    %2268 = vrot.lane.b32.xlu0 %v527, 32
    %v2269 = vpop.permute.xlu0 %2268
    %2270 = vrot.lane.b32.xlu0 %v528, 32
    %v2271 = vpop.permute.xlu0 %2270
    %2272 = vrot.lane.b32.xlu0 %v529, 32
    %v2273 = vpop.permute.xlu0 %2272
    %2274 = vrot.lane.b32.xlu0 %v473, 32
    %v2275 = vpop.permute.xlu0 %2274
    %2276 = vrot.lane.b32.xlu0 %v530, 32
    %v2277 = vpop.permute.xlu0 %2276
    %2278 = vrot.lane.b32.xlu0 %v531, 32
    %v2279 = vpop.permute.xlu0 %2278
    %2280 = vrot.lane.b32.xlu0 %v532, 32
    %v2281 = vpop.permute.xlu0 %2280
    %2298 = vrot.lane.b32.xlu0 %v466, 16
    %v2299 = vpop.permute.xlu0 %2298
    %2300 = vrot.lane.b32.xlu0 %v521, 16
    %v2301 = vpop.permute.xlu0 %2300
    %2302 = vrot.lane.b32.xlu0 %v522, 16
    %v2303 = vpop.permute.xlu0 %2302
    %2304 = vrot.lane.b32.xlu0 %v523, 16
    %v2305 = vpop.permute.xlu0 %2304
    %2306 = vrot.lane.b32.xlu0 %v468, 16
    %v2307 = vpop.permute.xlu0 %2306
    %2308 = vrot.lane.b32.xlu0 %v524, 16
    %v2309 = vpop.permute.xlu0 %2308
    %2310 = vrot.lane.b32.xlu0 %v525, 16
    %v2311 = vpop.permute.xlu0 %2310
    %2312 = vrot.lane.b32.xlu0 %v526, 16
    %v2313 = vpop.permute.xlu0 %2312
    %2314 = vrot.lane.b32.xlu0 %v471, 16
    %v2315 = vpop.permute.xlu0 %2314
    %2316 = vrot.lane.b32.xlu0 %v527, 16
    %v2317 = vpop.permute.xlu0 %2316
    %2318 = vrot.lane.b32.xlu0 %v528, 16
    %v2319 = vpop.permute.xlu0 %2318
    %2320 = vrot.lane.b32.xlu0 %v529, 16
    %v2321 = vpop.permute.xlu0 %2320
    %2322 = vrot.lane.b32.xlu0 %v473, 16
    %v2323 = vpop.permute.xlu0 %2322
    %2324 = vrot.lane.b32.xlu0 %v530, 16
    %v2325 = vpop.permute.xlu0 %2324
    %2326 = vrot.lane.b32.xlu0 %v531, 16
    %v2327 = vpop.permute.xlu0 %2326
    %2328 = vrot.lane.b32.xlu0 %v532, 16
    %v2329 = vpop.permute.xlu0 %2328
    %v2346 = vrot.slane %v2011, 4
    %v2347 = vsel %vm714, %v2346, %v466
    %v2349 = vunpack.c.l.s4 1934713408
    %v2350 = vunpack.c.0.s8 %v2349
    %v2351 = vperm.slane %v2347, %v2350
    %v2352 = vrot.slane %v2107, 4
    %v2353 = vsel %vm714, %v2352, %v2059
    %v2355 = vunpack.c.l.s4 1934713408
    %v2356 = vunpack.c.0.s8 %v2355
    %v2357 = vperm.slane %v2353, %v2356
    %v2358 = vrot.slane %v2203, 4
    %v2359 = vsel %vm714, %v2358, %v2155
    %v2361 = vunpack.c.l.s4 1934713408
    %v2362 = vunpack.c.0.s8 %v2361
    %v2363 = vperm.slane %v2359, %v2362
    %v2364 = vrot.slane %v2299, 4
    %v2365 = vsel %vm714, %v2364, %v2251
    %v2367 = vunpack.c.l.s4 1934713408
    %v2368 = vunpack.c.0.s8 %v2367
    %v2369 = vperm.slane %v2365, %v2368
    %v2370 = vrot.slane %v2013, 4
    %v2371 = vsel %vm714, %v2370, %v521
    %v2373 = vunpack.c.l.s4 1934713408
    %v2374 = vunpack.c.0.s8 %v2373
    %v2375 = vperm.slane %v2371, %v2374
    %v2376 = vrot.slane %v2109, 4
    %v2377 = vsel %vm714, %v2376, %v2061
    %v2379 = vunpack.c.l.s4 1934713408
    %v2380 = vunpack.c.0.s8 %v2379
    %v2381 = vperm.slane %v2377, %v2380
    %v2382 = vrot.slane %v2205, 4
    %v2383 = vsel %vm714, %v2382, %v2157
    %v2385 = vunpack.c.l.s4 1934713408
    %v2386 = vunpack.c.0.s8 %v2385
    %v2387 = vperm.slane %v2383, %v2386
    %v2388 = vrot.slane %v2301, 4
    %v2389 = vsel %vm714, %v2388, %v2253
    %v2391 = vunpack.c.l.s4 1934713408
    %v2392 = vunpack.c.0.s8 %v2391
    %v2393 = vperm.slane %v2389, %v2392
    %v2394 = vrot.slane %v2015, 4
    %v2395 = vsel %vm714, %v2394, %v522
    %v2397 = vunpack.c.l.s4 1934713408
    %v2398 = vunpack.c.0.s8 %v2397
    %v2399 = vperm.slane %v2395, %v2398
    %v2400 = vrot.slane %v2111, 4
    %v2401 = vsel %vm714, %v2400, %v2063
    %v2403 = vunpack.c.l.s4 1934713408
    %v2404 = vunpack.c.0.s8 %v2403
    %v2405 = vperm.slane %v2401, %v2404
    %v2406 = vrot.slane %v2207, 4
    %v2407 = vsel %vm714, %v2406, %v2159
    %v2409 = vunpack.c.l.s4 1934713408
    %v2410 = vunpack.c.0.s8 %v2409
    %v2411 = vperm.slane %v2407, %v2410
    %v2412 = vrot.slane %v2303, 4
    %v2413 = vsel %vm714, %v2412, %v2255
    %v2415 = vunpack.c.l.s4 1934713408
    %v2416 = vunpack.c.0.s8 %v2415
    %v2417 = vperm.slane %v2413, %v2416
    %v2418 = vrot.slane %v2017, 4
    %v2419 = vsel %vm714, %v2418, %v523
    %v2421 = vunpack.c.l.s4 1934713408
    %v2422 = vunpack.c.0.s8 %v2421
    %v2423 = vperm.slane %v2419, %v2422
    %v2424 = vrot.slane %v2113, 4
    %v2425 = vsel %vm714, %v2424, %v2065
    %v2427 = vunpack.c.l.s4 1934713408
    %v2428 = vunpack.c.0.s8 %v2427
    %v2429 = vperm.slane %v2425, %v2428
    %v2430 = vrot.slane %v2209, 4
    %v2431 = vsel %vm714, %v2430, %v2161
    %v2433 = vunpack.c.l.s4 1934713408
    %v2434 = vunpack.c.0.s8 %v2433
    %v2435 = vperm.slane %v2431, %v2434
    %v2436 = vrot.slane %v2305, 4
    %v2437 = vsel %vm714, %v2436, %v2257
    %v2439 = vunpack.c.l.s4 1934713408
    %v2440 = vunpack.c.0.s8 %v2439
    %v2441 = vperm.slane %v2437, %v2440
    %v2442 = vrot.slane %v2019, 4
    %v2443 = vsel %vm714, %v2442, %v468
    %v2445 = vunpack.c.l.s4 1934713408
    %v2446 = vunpack.c.0.s8 %v2445
    %v2447 = vperm.slane %v2443, %v2446
    %v2448 = vrot.slane %v2115, 4
    %v2449 = vsel %vm714, %v2448, %v2067
    %v2451 = vunpack.c.l.s4 1934713408
    %v2452 = vunpack.c.0.s8 %v2451
    %v2453 = vperm.slane %v2449, %v2452
    %v2454 = vrot.slane %v2211, 4
    %v2455 = vsel %vm714, %v2454, %v2163
    %v2457 = vunpack.c.l.s4 1934713408
    %v2458 = vunpack.c.0.s8 %v2457
    %v2459 = vperm.slane %v2455, %v2458
    %v2460 = vrot.slane %v2307, 4
    %v2461 = vsel %vm714, %v2460, %v2259
    %v2463 = vunpack.c.l.s4 1934713408
    %v2464 = vunpack.c.0.s8 %v2463
    %v2465 = vperm.slane %v2461, %v2464
    %v2466 = vrot.slane %v2021, 4
    %v2467 = vsel %vm714, %v2466, %v524
    %v2469 = vunpack.c.l.s4 1934713408
    %v2470 = vunpack.c.0.s8 %v2469
    %v2471 = vperm.slane %v2467, %v2470
    %v2472 = vrot.slane %v2117, 4
    %v2473 = vsel %vm714, %v2472, %v2069
    %v2475 = vunpack.c.l.s4 1934713408
    %v2476 = vunpack.c.0.s8 %v2475
    %v2477 = vperm.slane %v2473, %v2476
    %v2478 = vrot.slane %v2213, 4
    %v2479 = vsel %vm714, %v2478, %v2165
    %v2481 = vunpack.c.l.s4 1934713408
    %v2482 = vunpack.c.0.s8 %v2481
    %v2483 = vperm.slane %v2479, %v2482
    %v2484 = vrot.slane %v2309, 4
    %v2485 = vsel %vm714, %v2484, %v2261
    %v2487 = vunpack.c.l.s4 1934713408
    %v2488 = vunpack.c.0.s8 %v2487
    %v2489 = vperm.slane %v2485, %v2488
    %v2490 = vrot.slane %v2023, 4
    %v2491 = vsel %vm714, %v2490, %v525
    %v2493 = vunpack.c.l.s4 1934713408
    %v2494 = vunpack.c.0.s8 %v2493
    %v2495 = vperm.slane %v2491, %v2494
    %v2496 = vrot.slane %v2119, 4
    %v2497 = vsel %vm714, %v2496, %v2071
    %v2499 = vunpack.c.l.s4 1934713408
    %v2500 = vunpack.c.0.s8 %v2499
    %v2501 = vperm.slane %v2497, %v2500
    %v2502 = vrot.slane %v2215, 4
    %v2503 = vsel %vm714, %v2502, %v2167
    %v2505 = vunpack.c.l.s4 1934713408
    %v2506 = vunpack.c.0.s8 %v2505
    %v2507 = vperm.slane %v2503, %v2506
    %v2508 = vrot.slane %v2311, 4
    %v2509 = vsel %vm714, %v2508, %v2263
    %v2511 = vunpack.c.l.s4 1934713408
    %v2512 = vunpack.c.0.s8 %v2511
    %v2513 = vperm.slane %v2509, %v2512
    %v2514 = vrot.slane %v2025, 4
    %v2515 = vsel %vm714, %v2514, %v526
    %v2517 = vunpack.c.l.s4 1934713408
    %v2518 = vunpack.c.0.s8 %v2517
    %v2519 = vperm.slane %v2515, %v2518
    %v2520 = vrot.slane %v2121, 4
    %v2521 = vsel %vm714, %v2520, %v2073
    %v2523 = vunpack.c.l.s4 1934713408
    %v2524 = vunpack.c.0.s8 %v2523
    %v2525 = vperm.slane %v2521, %v2524
    %v2526 = vrot.slane %v2217, 4
    %v2527 = vsel %vm714, %v2526, %v2169
    %v2529 = vunpack.c.l.s4 1934713408
    %v2530 = vunpack.c.0.s8 %v2529
    %v2531 = vperm.slane %v2527, %v2530
    %v2532 = vrot.slane %v2313, 4
    %v2533 = vsel %vm714, %v2532, %v2265
    %v2535 = vunpack.c.l.s4 1934713408
    %v2536 = vunpack.c.0.s8 %v2535
    %v2537 = vperm.slane %v2533, %v2536
    %v2538 = vrot.slane %v2027, 4
    %v2539 = vsel %vm714, %v2538, %v471
    %v2541 = vunpack.c.l.s4 1934713408
    %v2542 = vunpack.c.0.s8 %v2541
    %v2543 = vperm.slane %v2539, %v2542
    %v2544 = vrot.slane %v2123, 4
    %v2545 = vsel %vm714, %v2544, %v2075
    %v2547 = vunpack.c.l.s4 1934713408
    %v2548 = vunpack.c.0.s8 %v2547
    %v2549 = vperm.slane %v2545, %v2548
    %v2550 = vrot.slane %v2219, 4
    %v2551 = vsel %vm714, %v2550, %v2171
    %v2553 = vunpack.c.l.s4 1934713408
    %v2554 = vunpack.c.0.s8 %v2553
    %v2555 = vperm.slane %v2551, %v2554
    %v2556 = vrot.slane %v2315, 4
    %v2557 = vsel %vm714, %v2556, %v2267
    %v2559 = vunpack.c.l.s4 1934713408
    %v2560 = vunpack.c.0.s8 %v2559
    %v2561 = vperm.slane %v2557, %v2560
    %v2562 = vrot.slane %v2029, 4
    %v2563 = vsel %vm714, %v2562, %v527
    %v2565 = vunpack.c.l.s4 1934713408
    %v2566 = vunpack.c.0.s8 %v2565
    %v2567 = vperm.slane %v2563, %v2566
    %v2568 = vrot.slane %v2125, 4
    %v2569 = vsel %vm714, %v2568, %v2077
    %v2571 = vunpack.c.l.s4 1934713408
    %v2572 = vunpack.c.0.s8 %v2571
    %v2573 = vperm.slane %v2569, %v2572
    %v2574 = vrot.slane %v2221, 4
    %v2575 = vsel %vm714, %v2574, %v2173
    %v2577 = vunpack.c.l.s4 1934713408
    %v2578 = vunpack.c.0.s8 %v2577
    %v2579 = vperm.slane %v2575, %v2578
    %v2580 = vrot.slane %v2317, 4
    %v2581 = vsel %vm714, %v2580, %v2269
    %v2583 = vunpack.c.l.s4 1934713408
    %v2584 = vunpack.c.0.s8 %v2583
    %v2585 = vperm.slane %v2581, %v2584
    %v2586 = vrot.slane %v2031, 4
    %v2587 = vsel %vm714, %v2586, %v528
    %v2589 = vunpack.c.l.s4 1934713408
    %v2590 = vunpack.c.0.s8 %v2589
    %v2591 = vperm.slane %v2587, %v2590
    %v2592 = vrot.slane %v2127, 4
    %v2593 = vsel %vm714, %v2592, %v2079
    %v2595 = vunpack.c.l.s4 1934713408
    %v2596 = vunpack.c.0.s8 %v2595
    %v2597 = vperm.slane %v2593, %v2596
    %v2598 = vrot.slane %v2223, 4
    %v2599 = vsel %vm714, %v2598, %v2175
    %v2601 = vunpack.c.l.s4 1934713408
    %v2602 = vunpack.c.0.s8 %v2601
    %v2603 = vperm.slane %v2599, %v2602
    %v2604 = vrot.slane %v2319, 4
    %v2605 = vsel %vm714, %v2604, %v2271
    %v2607 = vunpack.c.l.s4 1934713408
    %v2608 = vunpack.c.0.s8 %v2607
    %v2609 = vperm.slane %v2605, %v2608
    %v2610 = vrot.slane %v2033, 4
    %v2611 = vsel %vm714, %v2610, %v529
    %v2613 = vunpack.c.l.s4 1934713408
    %v2614 = vunpack.c.0.s8 %v2613
    %v2615 = vperm.slane %v2611, %v2614
    %v2616 = vrot.slane %v2129, 4
    %v2617 = vsel %vm714, %v2616, %v2081
    %v2619 = vunpack.c.l.s4 1934713408
    %v2620 = vunpack.c.0.s8 %v2619
    %v2621 = vperm.slane %v2617, %v2620
    %v2622 = vrot.slane %v2225, 4
    %v2623 = vsel %vm714, %v2622, %v2177
    %v2625 = vunpack.c.l.s4 1934713408
    %v2626 = vunpack.c.0.s8 %v2625
    %v2627 = vperm.slane %v2623, %v2626
    %v2628 = vrot.slane %v2321, 4
    %v2629 = vsel %vm714, %v2628, %v2273
    %v2631 = vunpack.c.l.s4 1934713408
    %v2632 = vunpack.c.0.s8 %v2631
    %v2633 = vperm.slane %v2629, %v2632
    %v2634 = vrot.slane %v2035, 4
    %v2635 = vsel %vm714, %v2634, %v473
    %v2637 = vunpack.c.l.s4 1934713408
    %v2638 = vunpack.c.0.s8 %v2637
    %v2639 = vperm.slane %v2635, %v2638
    %v2640 = vrot.slane %v2131, 4
    %v2641 = vsel %vm714, %v2640, %v2083
    %v2643 = vunpack.c.l.s4 1934713408
    %v2644 = vunpack.c.0.s8 %v2643
    %v2645 = vperm.slane %v2641, %v2644
    %v2646 = vrot.slane %v2227, 4
    %v2647 = vsel %vm714, %v2646, %v2179
    %v2649 = vunpack.c.l.s4 1934713408
    %v2650 = vunpack.c.0.s8 %v2649
    %v2651 = vperm.slane %v2647, %v2650
    %v2652 = vrot.slane %v2323, 4
    %v2653 = vsel %vm714, %v2652, %v2275
    %v2655 = vunpack.c.l.s4 1934713408
    %v2656 = vunpack.c.0.s8 %v2655
    %v2657 = vperm.slane %v2653, %v2656
    %v2658 = vrot.slane %v2037, 4
    %v2659 = vsel %vm714, %v2658, %v530
    %v2661 = vunpack.c.l.s4 1934713408
    %v2662 = vunpack.c.0.s8 %v2661
    %v2663 = vperm.slane %v2659, %v2662
    %v2664 = vrot.slane %v2133, 4
    %v2665 = vsel %vm714, %v2664, %v2085
    %v2667 = vunpack.c.l.s4 1934713408
    %v2668 = vunpack.c.0.s8 %v2667
    %v2669 = vperm.slane %v2665, %v2668
    %v2670 = vrot.slane %v2229, 4
    %v2671 = vsel %vm714, %v2670, %v2181
    %v2673 = vunpack.c.l.s4 1934713408
    %v2674 = vunpack.c.0.s8 %v2673
    %v2675 = vperm.slane %v2671, %v2674
    %v2676 = vrot.slane %v2325, 4
    %v2677 = vsel %vm714, %v2676, %v2277
    %v2679 = vunpack.c.l.s4 1934713408
    %v2680 = vunpack.c.0.s8 %v2679
    %v2681 = vperm.slane %v2677, %v2680
    %v2682 = vrot.slane %v2039, 4
    %v2683 = vsel %vm714, %v2682, %v531
    %v2685 = vunpack.c.l.s4 1934713408
    %v2686 = vunpack.c.0.s8 %v2685
    %v2687 = vperm.slane %v2683, %v2686
    %v2688 = vrot.slane %v2135, 4
    %v2689 = vsel %vm714, %v2688, %v2087
    %v2691 = vunpack.c.l.s4 1934713408
    %v2692 = vunpack.c.0.s8 %v2691
    %v2693 = vperm.slane %v2689, %v2692
    %v2694 = vrot.slane %v2231, 4
    %v2695 = vsel %vm714, %v2694, %v2183
    %v2697 = vunpack.c.l.s4 1934713408
    %v2698 = vunpack.c.0.s8 %v2697
    %v2699 = vperm.slane %v2695, %v2698
    %v2700 = vrot.slane %v2327, 4
    %v2701 = vsel %vm714, %v2700, %v2279
    %v2703 = vunpack.c.l.s4 1934713408
    %v2704 = vunpack.c.0.s8 %v2703
    %v2705 = vperm.slane %v2701, %v2704
    %v2706 = vrot.slane %v2041, 4
    %v2707 = vsel %vm714, %v2706, %v532
    %v2709 = vunpack.c.l.s4 1934713408
    %v2710 = vunpack.c.0.s8 %v2709
    %v2711 = vperm.slane %v2707, %v2710
    %v2712 = vrot.slane %v2137, 4
    %v2713 = vsel %vm714, %v2712, %v2089
    %v2715 = vunpack.c.l.s4 1934713408
    %v2716 = vunpack.c.0.s8 %v2715
    %v2717 = vperm.slane %v2713, %v2716
    %v2718 = vrot.slane %v2233, 4
    %v2719 = vsel %vm714, %v2718, %v2185
    %v2721 = vunpack.c.l.s4 1934713408
    %v2722 = vunpack.c.0.s8 %v2721
    %v2723 = vperm.slane %v2719, %v2722
    %v2724 = vrot.slane %v2329, 4
    %v2725 = vsel %vm714, %v2724, %v2281
    %v2727 = vunpack.c.l.s4 1934713408
    %v2728 = vunpack.c.0.s8 %v2727
    %v2729 = vperm.slane %v2725, %v2728
    %v2730 = vrot.slane %v2375, 4
    %v2731 = vsel %vm714, %v2730, %v2351
    %v2733 = vunpack.c.l.s4 1934713408
    %v2734 = vunpack.c.0.s8 %v2733
    %v2735 = vperm.slane %v2731, %v2734
    %v2736 = vrot.slane %v2735, 4
    %v2737 = vsel %vm714, 0.0, %v2736
    %v2738 = vrot.slane %v2423, 4
    %v2739 = vsel %vm714, %v2738, %v2399
    %v2741 = vunpack.c.l.s4 1934713408
    %v2742 = vunpack.c.0.s8 %v2741
    %v2743 = vperm.slane %v2739, %v2742
    %v2744 = vrot.slane %v2743, 4
    %v2745 = vsel %vm714, 0.0, %v2744
    %v2746 = vrot.slane %v2471, 4
    %v2747 = vsel %vm714, %v2746, %v2447
    %v2749 = vunpack.c.l.s4 1934713408
    %v2750 = vunpack.c.0.s8 %v2749
    %v2751 = vperm.slane %v2747, %v2750
    %v2752 = vrot.slane %v2751, 4
    %v2753 = vsel %vm714, 0.0, %v2752
    %v2754 = vrot.slane %v2519, 4
    %v2755 = vsel %vm714, %v2754, %v2495
    %v2757 = vunpack.c.l.s4 1934713408
    %v2758 = vunpack.c.0.s8 %v2757
    %v2759 = vperm.slane %v2755, %v2758
    %v2760 = vrot.slane %v2759, 4
    %v2761 = vsel %vm714, 0.0, %v2760
    %v2762 = vrot.slane %v2567, 4
    %v2763 = vsel %vm714, %v2762, %v2543
    %v2765 = vunpack.c.l.s4 1934713408
    %v2766 = vunpack.c.0.s8 %v2765
    %v2767 = vperm.slane %v2763, %v2766
    %v2768 = vrot.slane %v2767, 4
    %v2769 = vsel %vm714, 0.0, %v2768
    %v2770 = vrot.slane %v2615, 4
    %v2771 = vsel %vm714, %v2770, %v2591
    %v2773 = vunpack.c.l.s4 1934713408
    %v2774 = vunpack.c.0.s8 %v2773
    %v2775 = vperm.slane %v2771, %v2774
    %v2776 = vrot.slane %v2775, 4
    %v2777 = vsel %vm714, 0.0, %v2776
    %v2778 = vrot.slane %v2663, 4
    %v2779 = vsel %vm714, %v2778, %v2639
    %v2781 = vunpack.c.l.s4 1934713408
    %v2782 = vunpack.c.0.s8 %v2781
    %v2783 = vperm.slane %v2779, %v2782
    %v2784 = vrot.slane %v2783, 4
    %v2785 = vsel %vm714, 0.0, %v2784
    %v2786 = vrot.slane %v2711, 4
    %v2787 = vsel %vm714, %v2786, %v2687
    %v2789 = vunpack.c.l.s4 1934713408
    %v2790 = vunpack.c.0.s8 %v2789
    %v2791 = vperm.slane %v2787, %v2790
    %v2792 = vrot.slane %v2791, 4
    %v2793 = vsel %vm714, 0.0, %v2792
    %v2794 = vrot.slane %v2381, 4
    %v2795 = vsel %vm714, %v2794, %v2357
    %v2797 = vunpack.c.l.s4 1934713408
    %v2798 = vunpack.c.0.s8 %v2797
    %v2799 = vperm.slane %v2795, %v2798
    %v2800 = vrot.slane %v2799, 4
    %v2801 = vsel %vm714, 0.0, %v2800
    %v2802 = vrot.slane %v2429, 4
    %v2803 = vsel %vm714, %v2802, %v2405
    %v2805 = vunpack.c.l.s4 1934713408
    %v2806 = vunpack.c.0.s8 %v2805
    %v2807 = vperm.slane %v2803, %v2806
    %v2808 = vrot.slane %v2807, 4
    %v2809 = vsel %vm714, 0.0, %v2808
    %v2810 = vrot.slane %v2477, 4
    %v2811 = vsel %vm714, %v2810, %v2453
    %v2813 = vunpack.c.l.s4 1934713408
    %v2814 = vunpack.c.0.s8 %v2813
    %v2815 = vperm.slane %v2811, %v2814
    %v2816 = vrot.slane %v2815, 4
    %v2817 = vsel %vm714, 0.0, %v2816
    %v2818 = vrot.slane %v2525, 4
    %v2819 = vsel %vm714, %v2818, %v2501
    %v2821 = vunpack.c.l.s4 1934713408
    %v2822 = vunpack.c.0.s8 %v2821
    %v2823 = vperm.slane %v2819, %v2822
    %v2824 = vrot.slane %v2823, 4
    %v2825 = vsel %vm714, 0.0, %v2824
    %v2826 = vrot.slane %v2573, 4
    %v2827 = vsel %vm714, %v2826, %v2549
    %v2829 = vunpack.c.l.s4 1934713408
    %v2830 = vunpack.c.0.s8 %v2829
    %v2831 = vperm.slane %v2827, %v2830
    %v2832 = vrot.slane %v2831, 4
    %v2833 = vsel %vm714, 0.0, %v2832
    %v2834 = vrot.slane %v2621, 4
    %v2835 = vsel %vm714, %v2834, %v2597
    %v2837 = vunpack.c.l.s4 1934713408
    %v2838 = vunpack.c.0.s8 %v2837
    %v2839 = vperm.slane %v2835, %v2838
    %v2840 = vrot.slane %v2839, 4
    %v2841 = vsel %vm714, 0.0, %v2840
    %v2842 = vrot.slane %v2669, 4
    %v2843 = vsel %vm714, %v2842, %v2645
    %v2845 = vunpack.c.l.s4 1934713408
    %v2846 = vunpack.c.0.s8 %v2845
    %v2847 = vperm.slane %v2843, %v2846
    %v2848 = vrot.slane %v2847, 4
    %v2849 = vsel %vm714, 0.0, %v2848
    %v2850 = vrot.slane %v2717, 4
    %v2851 = vsel %vm714, %v2850, %v2693
    %v2853 = vunpack.c.l.s4 1934713408
    %v2854 = vunpack.c.0.s8 %v2853
    %v2855 = vperm.slane %v2851, %v2854
    %v2856 = vrot.slane %v2855, 4
    %v2857 = vsel %vm714, 0.0, %v2856
    %v2858 = vrot.slane %v2387, 4
    %v2859 = vsel %vm714, %v2858, %v2363
    %v2861 = vunpack.c.l.s4 1934713408
    %v2862 = vunpack.c.0.s8 %v2861
    %v2863 = vperm.slane %v2859, %v2862
    %v2864 = vrot.slane %v2863, 4
    %v2865 = vsel %vm714, 0.0, %v2864
    %v2866 = vrot.slane %v2435, 4
    %v2867 = vsel %vm714, %v2866, %v2411
    %v2869 = vunpack.c.l.s4 1934713408
    %v2870 = vunpack.c.0.s8 %v2869
    %v2871 = vperm.slane %v2867, %v2870
    %v2872 = vrot.slane %v2871, 4
    %v2873 = vsel %vm714, 0.0, %v2872
    %v2874 = vrot.slane %v2483, 4
    %v2875 = vsel %vm714, %v2874, %v2459
    %v2877 = vunpack.c.l.s4 1934713408
    %v2878 = vunpack.c.0.s8 %v2877
    %v2879 = vperm.slane %v2875, %v2878
    %v2880 = vrot.slane %v2879, 4
    %v2881 = vsel %vm714, 0.0, %v2880
    %v2882 = vrot.slane %v2531, 4
    %v2883 = vsel %vm714, %v2882, %v2507
    %v2885 = vunpack.c.l.s4 1934713408
    %v2886 = vunpack.c.0.s8 %v2885
    %v2887 = vperm.slane %v2883, %v2886
    %v2888 = vrot.slane %v2887, 4
    %v2889 = vsel %vm714, 0.0, %v2888
    %v2890 = vrot.slane %v2579, 4
    %v2891 = vsel %vm714, %v2890, %v2555
    %v2893 = vunpack.c.l.s4 1934713408
    %v2894 = vunpack.c.0.s8 %v2893
    %v2895 = vperm.slane %v2891, %v2894
    %v2896 = vrot.slane %v2895, 4
    %v2897 = vsel %vm714, 0.0, %v2896
    %v2898 = vrot.slane %v2627, 4
    %v2899 = vsel %vm714, %v2898, %v2603
    %v2901 = vunpack.c.l.s4 1934713408
    %v2902 = vunpack.c.0.s8 %v2901
    %v2903 = vperm.slane %v2899, %v2902
    %v2904 = vrot.slane %v2903, 4
    %v2905 = vsel %vm714, 0.0, %v2904
    %v2906 = vrot.slane %v2675, 4
    %v2907 = vsel %vm714, %v2906, %v2651
    %v2909 = vunpack.c.l.s4 1934713408
    %v2910 = vunpack.c.0.s8 %v2909
    %v2911 = vperm.slane %v2907, %v2910
    %v2912 = vrot.slane %v2911, 4
    %v2913 = vsel %vm714, 0.0, %v2912
    %v2914 = vrot.slane %v2723, 4
    %v2915 = vsel %vm714, %v2914, %v2699
    %v2917 = vunpack.c.l.s4 1934713408
    %v2918 = vunpack.c.0.s8 %v2917
    %v2919 = vperm.slane %v2915, %v2918
    %v2920 = vrot.slane %v2919, 4
    %v2921 = vsel %vm714, 0.0, %v2920
    %v2922 = vrot.slane %v2393, 4
    %v2923 = vsel %vm714, %v2922, %v2369
    %v2925 = vunpack.c.l.s4 1934713408
    %v2926 = vunpack.c.0.s8 %v2925
    %v2927 = vperm.slane %v2923, %v2926
    %v2928 = vrot.slane %v2927, 4
    %v2929 = vsel %vm714, 0.0, %v2928
    %v2930 = vrot.slane %v2441, 4
    %v2931 = vsel %vm714, %v2930, %v2417
    %v2933 = vunpack.c.l.s4 1934713408
    %v2934 = vunpack.c.0.s8 %v2933
    %v2935 = vperm.slane %v2931, %v2934
    %v2936 = vrot.slane %v2935, 4
    %v2937 = vsel %vm714, 0.0, %v2936
    %v2938 = vrot.slane %v2489, 4
    %v2939 = vsel %vm714, %v2938, %v2465
    %v2941 = vunpack.c.l.s4 1934713408
    %v2942 = vunpack.c.0.s8 %v2941
    %v2943 = vperm.slane %v2939, %v2942
    %v2944 = vrot.slane %v2943, 4
    %v2945 = vsel %vm714, 0.0, %v2944
    %v2946 = vrot.slane %v2537, 4
    %v2947 = vsel %vm714, %v2946, %v2513
    %v2949 = vunpack.c.l.s4 1934713408
    %v2950 = vunpack.c.0.s8 %v2949
    %v2951 = vperm.slane %v2947, %v2950
    %v2952 = vrot.slane %v2951, 4
    %v2953 = vsel %vm714, 0.0, %v2952
    %v2954 = vrot.slane %v2585, 4
    %v2955 = vsel %vm714, %v2954, %v2561
    %v2957 = vunpack.c.l.s4 1934713408
    %v2958 = vunpack.c.0.s8 %v2957
    %v2959 = vperm.slane %v2955, %v2958
    %v2960 = vrot.slane %v2959, 4
    %v2961 = vsel %vm714, 0.0, %v2960
    %v2962 = vrot.slane %v2633, 4
    %v2963 = vsel %vm714, %v2962, %v2609
    %v2965 = vunpack.c.l.s4 1934713408
    %v2966 = vunpack.c.0.s8 %v2965
    %v2967 = vperm.slane %v2963, %v2966
    %v2968 = vrot.slane %v2967, 4
    %v2969 = vsel %vm714, 0.0, %v2968
    %v2970 = vrot.slane %v2681, 4
    %v2971 = vsel %vm714, %v2970, %v2657
    %v2973 = vunpack.c.l.s4 1934713408
    %v2974 = vunpack.c.0.s8 %v2973
    %v2975 = vperm.slane %v2971, %v2974
    %v2976 = vrot.slane %v2975, 4
    %v2977 = vsel %vm714, 0.0, %v2976
    %v2978 = vrot.slane %v2729, 4
    %v2979 = vsel %vm714, %v2978, %v2705
    %v2981 = vunpack.c.l.s4 1934713408
    %v2982 = vunpack.c.0.s8 %v2981
    %v2983 = vperm.slane %v2979, %v2982
    %v2984 = vrot.slane %v2983, 4
    %v2985 = vsel %vm714, 0.0, %v2984
    %3018 = vst [vmem:[#allocation1] ss:$4 sm:$0xff] %v911
    %s3019 = scalar_lea.vmem [#allocation1], 1
    %3020 = vst [vmem:[%s3019] ss:$4 sm:$0xff] %v919
    %s3021 = scalar_lea.vmem [#allocation1], 2
    %3022 = vst [vmem:[%s3021] ss:$4 sm:$0xff] %v927
    %s3023 = scalar_lea.vmem [#allocation1], 3
    %3024 = vst [vmem:[%s3023] ss:$4 sm:$0xff] %v935
    %v3025 = vld.sshfl [vmem:[#allocation1] sm:$0xff pattern:$0x73625140]
    %s3026 = scalar_lea.vmem [#allocation1], 32
    %3027 = vst [vmem:[%s3026] ss:$4 sm:$0xff] %v913
    %s3028 = scalar_lea.vmem [#allocation1], 33
    %3029 = vst [vmem:[%s3028] ss:$4 sm:$0xff] %v921
    %s3030 = scalar_lea.vmem [#allocation1], 34
    %3031 = vst [vmem:[%s3030] ss:$4 sm:$0xff] %v929
    %s3032 = scalar_lea.vmem [#allocation1], 35
    %3033 = vst [vmem:[%s3032] ss:$4 sm:$0xff] %v937
    %v3034 = vld.sshfl [vmem:[#allocation1 + $0x20] sm:$0xff pattern:$0x73625140]
    %3035 = vst [vmem:[#allocation1] ss:$4 sm:$0xff] %v943
    %3036 = vst [vmem:[%s3019] ss:$4 sm:$0xff] %v951
    %3037 = vst [vmem:[%s3021] ss:$4 sm:$0xff] %v959
    %3038 = vst [vmem:[%s3023] ss:$4 sm:$0xff] %v967
    %v3039 = vld.sshfl [vmem:[#allocation1] sm:$0xff pattern:$0x73625140]
    %3040 = vst [vmem:[%s3026] ss:$4 sm:$0xff] %v945
    %3041 = vst [vmem:[%s3028] ss:$4 sm:$0xff] %v953
    %3042 = vst [vmem:[%s3030] ss:$4 sm:$0xff] %v961
    %3043 = vst [vmem:[%s3032] ss:$4 sm:$0xff] %v969
    %v3044 = vld.sshfl [vmem:[#allocation1 + $0x20] sm:$0xff pattern:$0x73625140]
    %3045 = vst [vmem:[#allocation1] ss:$4 sm:$0xff] %v975
    %3046 = vst [vmem:[%s3019] ss:$4 sm:$0xff] %v983
    %3047 = vst [vmem:[%s3021] ss:$4 sm:$0xff] %v991
    %3048 = vst [vmem:[%s3023] ss:$4 sm:$0xff] %v999
    %v3049 = vld.sshfl [vmem:[#allocation1] sm:$0xff pattern:$0x73625140]
    %3050 = vst [vmem:[%s3026] ss:$4 sm:$0xff] %v977
    %3051 = vst [vmem:[%s3028] ss:$4 sm:$0xff] %v985
    %3052 = vst [vmem:[%s3030] ss:$4 sm:$0xff] %v993
    %3053 = vst [vmem:[%s3032] ss:$4 sm:$0xff] %v1001
    %v3054 = vld.sshfl [vmem:[#allocation1 + $0x20] sm:$0xff pattern:$0x73625140]
    %3055 = vst [vmem:[#allocation1] ss:$4 sm:$0xff] %v1007
    %3056 = vst [vmem:[%s3019] ss:$4 sm:$0xff] %v1015
    %3057 = vst [vmem:[%s3021] ss:$4 sm:$0xff] %v1023
    %3058 = vst [vmem:[%s3023] ss:$4 sm:$0xff] %v1031
    %v3059 = vld.sshfl [vmem:[#allocation1] sm:$0xff pattern:$0x73625140]
    %3060 = vst [vmem:[%s3026] ss:$4 sm:$0xff] %v1009
    %3061 = vst [vmem:[%s3028] ss:$4 sm:$0xff] %v1017
    %3062 = vst [vmem:[%s3030] ss:$4 sm:$0xff] %v1025
    %3063 = vst [vmem:[%s3032] ss:$4 sm:$0xff] %v1033
    %v3064 = vld.sshfl [vmem:[#allocation1 + $0x20] sm:$0xff pattern:$0x73625140]
    %v3073 = vpack.c.bf16 %v3025, %v3025
    %v3074 = vpack.c.bf16 %v3034, %v3034
    %v3075 = vpack.c.bf16 %v3039, %v3039
    %v3076 = vpack.c.bf16 %v3044, %v3044
    %v3077 = vpack.c.bf16 %v3049, %v3049
    %v3078 = vpack.c.bf16 %v3054, %v3054
    %v3079 = vpack.c.bf16 %v3059, %v3059
    %v3080 = vpack.c.bf16 %v3064, %v3064
    %3145 = vst [vmem:[#allocation1] ss:$4 sm:$0xff] %v1759
    %s3146 = scalar_lea.vmem [#allocation1], 1
    %3147 = vst [vmem:[%s3146] ss:$4 sm:$0xff] %v1767
    %s3148 = scalar_lea.vmem [#allocation1], 2
    %3149 = vst [vmem:[%s3148] ss:$4 sm:$0xff] %v1775
    %s3150 = scalar_lea.vmem [#allocation1], 3
    %3151 = vst [vmem:[%s3150] ss:$4 sm:$0xff] %v1783
    %s3152 = scalar_lea.vmem [#allocation1], 32
    %3153 = vst [vmem:[%s3152] ss:$4 sm:$0xff] %v1791
    %s3154 = scalar_lea.vmem [#allocation1], 33
    %3155 = vst [vmem:[%s3154] ss:$4 sm:$0xff] %v1799
    %s3156 = scalar_lea.vmem [#allocation1], 34
    %3157 = vst [vmem:[%s3156] ss:$4 sm:$0xff] %v1807
    %s3158 = scalar_lea.vmem [#allocation1], 35
    %3159 = vst [vmem:[%s3158] ss:$4 sm:$0xff] %v1815
    %v3160 = vld.sshfl [vmem:[#allocation1] sm:$0xff pattern:$0x73625140]
    %v3161 = vld.sshfl [vmem:[#allocation1 + $0x20] sm:$0xff pattern:$0x73625140]
    %3162 = vst [vmem:[#allocation1] ss:$4 sm:$0xff] %v1761
    %3163 = vst [vmem:[%s3146] ss:$4 sm:$0xff] %v1769
    %3164 = vst [vmem:[%s3148] ss:$4 sm:$0xff] %v1777
    %3165 = vst [vmem:[%s3150] ss:$4 sm:$0xff] %v1785
    %3166 = vst [vmem:[%s3152] ss:$4 sm:$0xff] %v1793
    %3167 = vst [vmem:[%s3154] ss:$4 sm:$0xff] %v1801
    %3168 = vst [vmem:[%s3156] ss:$4 sm:$0xff] %v1809
    %3169 = vst [vmem:[%s3158] ss:$4 sm:$0xff] %v1817
    %v3170 = vld.sshfl [vmem:[#allocation1] sm:$0xff pattern:$0x73625140]
    %v3171 = vld.sshfl [vmem:[#allocation1 + $0x20] sm:$0xff pattern:$0x73625140]
    %3172 = vst [vmem:[#allocation1] ss:$4 sm:$0xff] %v1823
    %3173 = vst [vmem:[%s3146] ss:$4 sm:$0xff] %v1831
    %3174 = vst [vmem:[%s3148] ss:$4 sm:$0xff] %v1839
    %3175 = vst [vmem:[%s3150] ss:$4 sm:$0xff] %v1847
    %3176 = vst [vmem:[%s3152] ss:$4 sm:$0xff] %v1855
    %3177 = vst [vmem:[%s3154] ss:$4 sm:$0xff] %v1863
    %3178 = vst [vmem:[%s3156] ss:$4 sm:$0xff] %v1871
    %3179 = vst [vmem:[%s3158] ss:$4 sm:$0xff] %v1879
    %v3180 = vld.sshfl [vmem:[#allocation1] sm:$0xff pattern:$0x73625140]
    %v3181 = vld.sshfl [vmem:[#allocation1 + $0x20] sm:$0xff pattern:$0x73625140]
    %3182 = vst [vmem:[#allocation1] ss:$4 sm:$0xff] %v1825
    %3183 = vst [vmem:[%s3146] ss:$4 sm:$0xff] %v1833
    %3184 = vst [vmem:[%s3148] ss:$4 sm:$0xff] %v1841
    %3185 = vst [vmem:[%s3150] ss:$4 sm:$0xff] %v1849
    %3186 = vst [vmem:[%s3152] ss:$4 sm:$0xff] %v1857
    %3187 = vst [vmem:[%s3154] ss:$4 sm:$0xff] %v1865
    %3188 = vst [vmem:[%s3156] ss:$4 sm:$0xff] %v1873
    %3189 = vst [vmem:[%s3158] ss:$4 sm:$0xff] %v1881
    %v3190 = vld.sshfl [vmem:[#allocation1] sm:$0xff pattern:$0x73625140]
    %v3191 = vld.sshfl [vmem:[#allocation1 + $0x20] sm:$0xff pattern:$0x73625140]
    %3192 = vst [vmem:[#allocation1] ss:$4 sm:$0xff] %v1887
    %3193 = vst [vmem:[%s3146] ss:$4 sm:$0xff] %v1895
    %3194 = vst [vmem:[%s3148] ss:$4 sm:$0xff] %v1903
    %3195 = vst [vmem:[%s3150] ss:$4 sm:$0xff] %v1911
    %3196 = vst [vmem:[%s3152] ss:$4 sm:$0xff] %v1919
    %3197 = vst [vmem:[%s3154] ss:$4 sm:$0xff] %v1927
    %3198 = vst [vmem:[%s3156] ss:$4 sm:$0xff] %v1935
    %3199 = vst [vmem:[%s3158] ss:$4 sm:$0xff] %v1943
    %v3200 = vld.sshfl [vmem:[#allocation1] sm:$0xff pattern:$0x73625140]
    %v3201 = vld.sshfl [vmem:[#allocation1 + $0x20] sm:$0xff pattern:$0x73625140]
    %3202 = vst [vmem:[#allocation1] ss:$4 sm:$0xff] %v1889
    %3203 = vst [vmem:[%s3146] ss:$4 sm:$0xff] %v1897
    %3204 = vst [vmem:[%s3148] ss:$4 sm:$0xff] %v1905
    %3205 = vst [vmem:[%s3150] ss:$4 sm:$0xff] %v1913
    %3206 = vst [vmem:[%s3152] ss:$4 sm:$0xff] %v1921
    %3207 = vst [vmem:[%s3154] ss:$4 sm:$0xff] %v1929
    %3208 = vst [vmem:[%s3156] ss:$4 sm:$0xff] %v1937
    %3209 = vst [vmem:[%s3158] ss:$4 sm:$0xff] %v1945
    %v3210 = vld.sshfl [vmem:[#allocation1] sm:$0xff pattern:$0x73625140]
    %v3211 = vld.sshfl [vmem:[#allocation1 + $0x20] sm:$0xff pattern:$0x73625140]
    %3212 = vst [vmem:[#allocation1] ss:$4 sm:$0xff] %v1951
    %3213 = vst [vmem:[%s3146] ss:$4 sm:$0xff] %v1959
    %3214 = vst [vmem:[%s3148] ss:$4 sm:$0xff] %v1967
    %3215 = vst [vmem:[%s3150] ss:$4 sm:$0xff] %v1975
    %3216 = vst [vmem:[%s3152] ss:$4 sm:$0xff] %v1983
    %3217 = vst [vmem:[%s3154] ss:$4 sm:$0xff] %v1991
    %3218 = vst [vmem:[%s3156] ss:$4 sm:$0xff] %v1999
    %3219 = vst [vmem:[%s3158] ss:$4 sm:$0xff] %v2007
    %v3220 = vld.sshfl [vmem:[#allocation1] sm:$0xff pattern:$0x73625140]
    %v3221 = vld.sshfl [vmem:[#allocation1 + $0x20] sm:$0xff pattern:$0x73625140]
    %3222 = vst [vmem:[#allocation1] ss:$4 sm:$0xff] %v1953
    %3223 = vst [vmem:[%s3146] ss:$4 sm:$0xff] %v1961
    %3224 = vst [vmem:[%s3148] ss:$4 sm:$0xff] %v1969
    %3225 = vst [vmem:[%s3150] ss:$4 sm:$0xff] %v1977
    %3226 = vst [vmem:[%s3152] ss:$4 sm:$0xff] %v1985
    %3227 = vst [vmem:[%s3154] ss:$4 sm:$0xff] %v1993
    %3228 = vst [vmem:[%s3156] ss:$4 sm:$0xff] %v2001
    %3229 = vst [vmem:[%s3158] ss:$4 sm:$0xff] %v2009
    %v3230 = vld.sshfl [vmem:[#allocation1] sm:$0xff pattern:$0x73625140]
    %v3231 = vld.sshfl [vmem:[#allocation1 + $0x20] sm:$0xff pattern:$0x73625140]
    %v3248 = vpack.c.bf16 %v3160, %v3160
    %v3249 = vpack.c.bf16 %v3161, %v3161
    %v3250 = vpack.c.bf16 %v3170, %v3170
    %v3251 = vpack.c.bf16 %v3171, %v3171
    %v3252 = vpack.c.bf16 %v3180, %v3180
    %v3253 = vpack.c.bf16 %v3181, %v3181
    %v3254 = vpack.c.bf16 %v3190, %v3190
    %v3255 = vpack.c.bf16 %v3191, %v3191
    %v3256 = vpack.c.bf16 %v3200, %v3200
    %v3257 = vpack.c.bf16 %v3201, %v3201
    %v3258 = vpack.c.bf16 %v3210, %v3210
    %v3259 = vpack.c.bf16 %v3211, %v3211
    %v3260 = vpack.c.bf16 %v3220, %v3220
    %v3261 = vpack.c.bf16 %v3221, %v3221
    %v3262 = vpack.c.bf16 %v3230, %v3230
    %v3263 = vpack.c.bf16 %v3231, %v3231
    %v3266 = vunpack.c.l.b16 %v3248
    %v3267 = vunpack.c.l.b16 %v3249
    %v3268 = vpack.c.b16 %v3267, %v3266
    %vm3269 = vcmask 130048
    %v3271 = vsel %vm3269, %v3073, 0
    %v3274 = vsel %vm3269, %v3268, 0
    %3276 = vmatpush.bf16.xpose.msra.mxu0 0
    %3277 = vmatpush.bf16.xpose.msra.mxu0 0
    %3278 = vmatpush.bf16.xpose.msra.mxu0 0
    %3279 = vmatpush.bf16.xpose.msra.mxu0 0
    %3280 = vmatpush.bf16.xpose.msra.mxu0 0
    %3281 = vmatpush.bf16.xpose.msra.mxu0 0
    %3282 = vmatpush.bf16.xpose.msra.mxu0 0
    %3283 = vmatpush.bf16.xpose.msra.mxu0 %v3274
    %3284 = vmatmul.bf16.gmra.mxu0 %v3271
    %v3285 = vpop.f32.mrf.mxu0
    %v3286 = vadd.f32 0.0, %v3285
    %v3287 = vpop.f32.mrf.mxu0
    %3288 = vdwg.mxu0
    %v3291 = vunpack.c.l.b16 %v3250
    %v3292 = vunpack.c.l.b16 %v3251
    %v3293 = vpack.c.b16 %v3292, %v3291
    %v3295 = vsel %vm3269, %v3074, 0
    %v3298 = vsel %vm3269, %v3293, 0
    %3300 = vmatpush.bf16.xpose.msra.mxu0 0
    %3301 = vmatpush.bf16.xpose.msra.mxu0 0
    %3302 = vmatpush.bf16.xpose.msra.mxu0 0
    %3303 = vmatpush.bf16.xpose.msra.mxu0 0
    %3304 = vmatpush.bf16.xpose.msra.mxu0 0
    %3305 = vmatpush.bf16.xpose.msra.mxu0 0
    %3306 = vmatpush.bf16.xpose.msra.mxu0 0
    %3307 = vmatpush.bf16.xpose.msra.mxu0 %v3298
    %3308 = vmatmul.bf16.gmra.mxu0 %v3295
    %v3309 = vpop.f32.mrf.mxu0
    %v3310 = vadd.f32 0.0, %v3309
    %v3311 = vpop.f32.mrf.mxu0
    %3312 = vdwg.mxu0
    %v3315 = vunpack.c.l.b16 %v3252
    %v3316 = vunpack.c.l.b16 %v3253
    %v3317 = vpack.c.b16 %v3316, %v3315
    %v3319 = vsel %vm3269, %v3075, 0
    %v3322 = vsel %vm3269, %v3317, 0
    %3324 = vmatpush.bf16.xpose.msra.mxu0 0
    %3325 = vmatpush.bf16.xpose.msra.mxu0 0
    %3326 = vmatpush.bf16.xpose.msra.mxu0 0
    %3327 = vmatpush.bf16.xpose.msra.mxu0 0
    %3328 = vmatpush.bf16.xpose.msra.mxu0 0
    %3329 = vmatpush.bf16.xpose.msra.mxu0 0
    %3330 = vmatpush.bf16.xpose.msra.mxu0 0
    %3331 = vmatpush.bf16.xpose.msra.mxu0 %v3322
    %3332 = vmatmul.bf16.gmra.mxu0 %v3319
    %v3333 = vpop.f32.mrf.mxu0
    %v3334 = vadd.f32 0.0, %v3333
    %v3335 = vpop.f32.mrf.mxu0
    %3336 = vdwg.mxu0
    %v3339 = vunpack.c.l.b16 %v3254
    %v3340 = vunpack.c.l.b16 %v3255
    %v3341 = vpack.c.b16 %v3340, %v3339
    %v3343 = vsel %vm3269, %v3076, 0
    %v3346 = vsel %vm3269, %v3341, 0
    %3348 = vmatpush.bf16.xpose.msra.mxu0 0
    %3349 = vmatpush.bf16.xpose.msra.mxu0 0
    %3350 = vmatpush.bf16.xpose.msra.mxu0 0
    %3351 = vmatpush.bf16.xpose.msra.mxu0 0
    %3352 = vmatpush.bf16.xpose.msra.mxu0 0
    %3353 = vmatpush.bf16.xpose.msra.mxu0 0
    %3354 = vmatpush.bf16.xpose.msra.mxu0 0
    %3355 = vmatpush.bf16.xpose.msra.mxu0 %v3346
    %3356 = vmatmul.bf16.gmra.mxu0 %v3343
    %v3357 = vpop.f32.mrf.mxu0
    %v3358 = vadd.f32 0.0, %v3357
    %v3359 = vpop.f32.mrf.mxu0
    %3360 = vdwg.mxu0
    %v3363 = vunpack.c.l.b16 %v3256
    %v3364 = vunpack.c.l.b16 %v3257
    %v3365 = vpack.c.b16 %v3364, %v3363
    %v3367 = vsel %vm3269, %v3077, 0
    %v3370 = vsel %vm3269, %v3365, 0
    %3372 = vmatpush.bf16.xpose.msra.mxu0 0
    %3373 = vmatpush.bf16.xpose.msra.mxu0 0
    %3374 = vmatpush.bf16.xpose.msra.mxu0 0
    %3375 = vmatpush.bf16.xpose.msra.mxu0 0
    %3376 = vmatpush.bf16.xpose.msra.mxu0 0
    %3377 = vmatpush.bf16.xpose.msra.mxu0 0
    %3378 = vmatpush.bf16.xpose.msra.mxu0 0
    %3379 = vmatpush.bf16.xpose.msra.mxu0 %v3370
    %3380 = vmatmul.bf16.gmra.mxu0 %v3367
    %v3381 = vpop.f32.mrf.mxu0
    %v3382 = vadd.f32 0.0, %v3381
    %v3383 = vpop.f32.mrf.mxu0
    %3384 = vdwg.mxu0
    %v3387 = vunpack.c.l.b16 %v3258
    %v3388 = vunpack.c.l.b16 %v3259
    %v3389 = vpack.c.b16 %v3388, %v3387
    %v3391 = vsel %vm3269, %v3078, 0
    %v3394 = vsel %vm3269, %v3389, 0
    %3396 = vmatpush.bf16.xpose.msra.mxu0 0
    %3397 = vmatpush.bf16.xpose.msra.mxu0 0
    %3398 = vmatpush.bf16.xpose.msra.mxu0 0
    %3399 = vmatpush.bf16.xpose.msra.mxu0 0
    %3400 = vmatpush.bf16.xpose.msra.mxu0 0
    %3401 = vmatpush.bf16.xpose.msra.mxu0 0
    %3402 = vmatpush.bf16.xpose.msra.mxu0 0
    %3403 = vmatpush.bf16.xpose.msra.mxu0 %v3394
    %3404 = vmatmul.bf16.gmra.mxu0 %v3391
    %v3405 = vpop.f32.mrf.mxu0
    %v3406 = vadd.f32 0.0, %v3405
    %v3407 = vpop.f32.mrf.mxu0
    %3408 = vdwg.mxu0
    %v3411 = vunpack.c.l.b16 %v3260
    %v3412 = vunpack.c.l.b16 %v3261
    %v3413 = vpack.c.b16 %v3412, %v3411
    %v3415 = vsel %vm3269, %v3079, 0
    %v3418 = vsel %vm3269, %v3413, 0
    %3420 = vmatpush.bf16.xpose.msra.mxu0 0
    %3421 = vmatpush.bf16.xpose.msra.mxu0 0
    %3422 = vmatpush.bf16.xpose.msra.mxu0 0
    %3423 = vmatpush.bf16.xpose.msra.mxu0 0
    %3424 = vmatpush.bf16.xpose.msra.mxu0 0
    %3425 = vmatpush.bf16.xpose.msra.mxu0 0
    %3426 = vmatpush.bf16.xpose.msra.mxu0 0
    %3427 = vmatpush.bf16.xpose.msra.mxu0 %v3418
    %3428 = vmatmul.bf16.gmra.mxu0 %v3415
    %v3429 = vpop.f32.mrf.mxu0
    %v3430 = vadd.f32 0.0, %v3429
    %v3431 = vpop.f32.mrf.mxu0
    %3432 = vdwg.mxu0
    %v3435 = vunpack.c.l.b16 %v3262
    %v3436 = vunpack.c.l.b16 %v3263
    %v3437 = vpack.c.b16 %v3436, %v3435
    %v3439 = vsel %vm3269, %v3080, 0
    %v3442 = vsel %vm3269, %v3437, 0
    %3444 = vmatpush.bf16.xpose.msra.mxu0 0
    %3445 = vmatpush.bf16.xpose.msra.mxu0 0
    %3446 = vmatpush.bf16.xpose.msra.mxu0 0
    %3447 = vmatpush.bf16.xpose.msra.mxu0 0
    %3448 = vmatpush.bf16.xpose.msra.mxu0 0
    %3449 = vmatpush.bf16.xpose.msra.mxu0 0
    %3450 = vmatpush.bf16.xpose.msra.mxu0 0
    %3451 = vmatpush.bf16.xpose.msra.mxu0 %v3442
    %3452 = vmatmul.bf16.gmra.mxu0 %v3439
    %v3453 = vpop.f32.mrf.mxu0
    %v3454 = vadd.f32 0.0, %v3453
    %v3455 = vpop.f32.mrf.mxu0
    %3456 = vdwg.mxu0
    %v3457 = vsel %vm3269, %v3286, -inf
    %3458 = vmax.xlane.f32.xlu0 %v3457
    %v3459 = vpop.xlane.xlu0 %3458
    %v3460 = vsel %vm3269, %v3310, -inf
    %3461 = vmax.xlane.f32.xlu0 %v3460
    %v3462 = vpop.xlane.xlu0 %3461
    %v3463 = vsel %vm3269, %v3334, -inf
    %3464 = vmax.xlane.f32.xlu0 %v3463
    %v3465 = vpop.xlane.xlu0 %3464
    %v3466 = vsel %vm3269, %v3358, -inf
    %3467 = vmax.xlane.f32.xlu0 %v3466
    %v3468 = vpop.xlane.xlu0 %3467
    %v3469 = vsel %vm3269, %v3382, -inf
    %3470 = vmax.xlane.f32.xlu0 %v3469
    %v3471 = vpop.xlane.xlu0 %3470
    %v3472 = vsel %vm3269, %v3406, -inf
    %3473 = vmax.xlane.f32.xlu0 %v3472
    %v3474 = vpop.xlane.xlu0 %3473
    %v3475 = vsel %vm3269, %v3430, -inf
    %3476 = vmax.xlane.f32.xlu0 %v3475
    %v3477 = vpop.xlane.xlu0 %3476
    %v3478 = vsel %vm3269, %v3454, -inf
    %3479 = vmax.xlane.f32.xlu0 %v3478
    %v3480 = vpop.xlane.xlu0 %3479
    %v3481 = vsub.f32 %v3286, %v3459
    %v3482 = vsub.f32 %v3310, %v3462
    %v3483 = vsub.f32 %v3334, %v3465
    %v3484 = vsub.f32 %v3358, %v3468
    %v3485 = vsub.f32 %v3382, %v3471
    %v3486 = vsub.f32 %v3406, %v3474
    %v3487 = vsub.f32 %v3430, %v3477
    %v3488 = vsub.f32 %v3454, %v3480
    %v3489 = vmul.f32 %v3481, 1.442695
    %v3490 = vpow.pop %v3489
    %v3491 = vmul.f32 %v3482, 1.442695
    %v3492 = vpow.pop %v3491
    %v3493 = vmul.f32 %v3483, 1.442695
    %v3494 = vpow.pop %v3493
    %v3495 = vmul.f32 %v3484, 1.442695
    %v3496 = vpow.pop %v3495
    %v3497 = vmul.f32 %v3485, 1.442695
    %v3498 = vpow.pop %v3497
    %v3499 = vmul.f32 %v3486, 1.442695
    %v3500 = vpow.pop %v3499
    %v3501 = vmul.f32 %v3487, 1.442695
    %v3502 = vpow.pop %v3501
    %v3503 = vmul.f32 %v3488, 1.442695
    %v3504 = vpow.pop %v3503
    %v3505 = vsel %vm3269, %v3490, 0.0
    %3506 = vadd.xlane.f32.xlu0 %v3505
    %v3507 = vpop.xlane.xlu0 %3506
    %v3508 = vsel %vm3269, %v3492, 0.0
    %3509 = vadd.xlane.f32.xlu0 %v3508
    %v3510 = vpop.xlane.xlu0 %3509
    %v3511 = vsel %vm3269, %v3494, 0.0
    %3512 = vadd.xlane.f32.xlu0 %v3511
    %v3513 = vpop.xlane.xlu0 %3512
    %v3514 = vsel %vm3269, %v3496, 0.0
    %3515 = vadd.xlane.f32.xlu0 %v3514
    %v3516 = vpop.xlane.xlu0 %3515
    %v3517 = vsel %vm3269, %v3498, 0.0
    %3518 = vadd.xlane.f32.xlu0 %v3517
    %v3519 = vpop.xlane.xlu0 %3518
    %v3520 = vsel %vm3269, %v3500, 0.0
    %3521 = vadd.xlane.f32.xlu0 %v3520
    %v3522 = vpop.xlane.xlu0 %3521
    %v3523 = vsel %vm3269, %v3502, 0.0
    %3524 = vadd.xlane.f32.xlu0 %v3523
    %v3525 = vpop.xlane.xlu0 %3524
    %v3526 = vsel %vm3269, %v3504, 0.0
    %3527 = vadd.xlane.f32.xlu0 %v3526
    %v3528 = vpop.xlane.xlu0 %3527
    %v3529 = vpack.c.bf16 %v3490, %v3490
    %v3530 = vpack.c.bf16 %v3492, %v3492
    %v3531 = vpack.c.bf16 %v3494, %v3494
    %v3532 = vpack.c.bf16 %v3496, %v3496
    %v3533 = vpack.c.bf16 %v3498, %v3498
    %v3534 = vpack.c.bf16 %v3500, %v3500
    %v3535 = vpack.c.bf16 %v3502, %v3502
    %v3536 = vpack.c.bf16 %v3504, %v3504
    %3601 = vst [vmem:[#allocation1] ss:$4 sm:$0xff] %v2735
    %s3602 = scalar_lea.vmem [#allocation1], 1
    %3603 = vst [vmem:[%s3602] ss:$4 sm:$0xff] %v2743
    %s3604 = scalar_lea.vmem [#allocation1], 2
    %3605 = vst [vmem:[%s3604] ss:$4 sm:$0xff] %v2751
    %s3606 = scalar_lea.vmem [#allocation1], 3
    %3607 = vst [vmem:[%s3606] ss:$4 sm:$0xff] %v2759
    %s3608 = scalar_lea.vmem [#allocation1], 32
    %3609 = vst [vmem:[%s3608] ss:$4 sm:$0xff] %v2767
    %s3610 = scalar_lea.vmem [#allocation1], 33
    %3611 = vst [vmem:[%s3610] ss:$4 sm:$0xff] %v2775
    %s3612 = scalar_lea.vmem [#allocation1], 34
    %3613 = vst [vmem:[%s3612] ss:$4 sm:$0xff] %v2783
    %s3614 = scalar_lea.vmem [#allocation1], 35
    %3615 = vst [vmem:[%s3614] ss:$4 sm:$0xff] %v2791
    %v3616 = vld.sshfl [vmem:[#allocation1] sm:$0xff pattern:$0x73625140]
    %v3617 = vld.sshfl [vmem:[#allocation1 + $0x20] sm:$0xff pattern:$0x73625140]
    %3618 = vst [vmem:[#allocation1] ss:$4 sm:$0xff] %v2737
    %3619 = vst [vmem:[%s3602] ss:$4 sm:$0xff] %v2745
    %3620 = vst [vmem:[%s3604] ss:$4 sm:$0xff] %v2753
    %3621 = vst [vmem:[%s3606] ss:$4 sm:$0xff] %v2761
    %3622 = vst [vmem:[%s3608] ss:$4 sm:$0xff] %v2769
    %3623 = vst [vmem:[%s3610] ss:$4 sm:$0xff] %v2777
    %3624 = vst [vmem:[%s3612] ss:$4 sm:$0xff] %v2785
    %3625 = vst [vmem:[%s3614] ss:$4 sm:$0xff] %v2793
    %v3626 = vld.sshfl [vmem:[#allocation1] sm:$0xff pattern:$0x73625140]
    %v3627 = vld.sshfl [vmem:[#allocation1 + $0x20] sm:$0xff pattern:$0x73625140]
    %3628 = vst [vmem:[#allocation1] ss:$4 sm:$0xff] %v2799
    %3629 = vst [vmem:[%s3602] ss:$4 sm:$0xff] %v2807
    %3630 = vst [vmem:[%s3604] ss:$4 sm:$0xff] %v2815
    %3631 = vst [vmem:[%s3606] ss:$4 sm:$0xff] %v2823
    %3632 = vst [vmem:[%s3608] ss:$4 sm:$0xff] %v2831
    %3633 = vst [vmem:[%s3610] ss:$4 sm:$0xff] %v2839
    %3634 = vst [vmem:[%s3612] ss:$4 sm:$0xff] %v2847
    %3635 = vst [vmem:[%s3614] ss:$4 sm:$0xff] %v2855
    %v3636 = vld.sshfl [vmem:[#allocation1] sm:$0xff pattern:$0x73625140]
    %v3637 = vld.sshfl [vmem:[#allocation1 + $0x20] sm:$0xff pattern:$0x73625140]
    %3638 = vst [vmem:[#allocation1] ss:$4 sm:$0xff] %v2801
    %3639 = vst [vmem:[%s3602] ss:$4 sm:$0xff] %v2809
    %3640 = vst [vmem:[%s3604] ss:$4 sm:$0xff] %v2817
    %3641 = vst [vmem:[%s3606] ss:$4 sm:$0xff] %v2825
    %3642 = vst [vmem:[%s3608] ss:$4 sm:$0xff] %v2833
    %3643 = vst [vmem:[%s3610] ss:$4 sm:$0xff] %v2841
    %3644 = vst [vmem:[%s3612] ss:$4 sm:$0xff] %v2849
    %3645 = vst [vmem:[%s3614] ss:$4 sm:$0xff] %v2857
    %v3646 = vld.sshfl [vmem:[#allocation1] sm:$0xff pattern:$0x73625140]
    %v3647 = vld.sshfl [vmem:[#allocation1 + $0x20] sm:$0xff pattern:$0x73625140]
    %3648 = vst [vmem:[#allocation1] ss:$4 sm:$0xff] %v2863
    %3649 = vst [vmem:[%s3602] ss:$4 sm:$0xff] %v2871
    %3650 = vst [vmem:[%s3604] ss:$4 sm:$0xff] %v2879
    %3651 = vst [vmem:[%s3606] ss:$4 sm:$0xff] %v2887
    %3652 = vst [vmem:[%s3608] ss:$4 sm:$0xff] %v2895
    %3653 = vst [vmem:[%s3610] ss:$4 sm:$0xff] %v2903
    %3654 = vst [vmem:[%s3612] ss:$4 sm:$0xff] %v2911
    %3655 = vst [vmem:[%s3614] ss:$4 sm:$0xff] %v2919
    %v3656 = vld.sshfl [vmem:[#allocation1] sm:$0xff pattern:$0x73625140]
    %v3657 = vld.sshfl [vmem:[#allocation1 + $0x20] sm:$0xff pattern:$0x73625140]
    %3658 = vst [vmem:[#allocation1] ss:$4 sm:$0xff] %v2865
    %3659 = vst [vmem:[%s3602] ss:$4 sm:$0xff] %v2873
    %3660 = vst [vmem:[%s3604] ss:$4 sm:$0xff] %v2881
    %3661 = vst [vmem:[%s3606] ss:$4 sm:$0xff] %v2889
    %3662 = vst [vmem:[%s3608] ss:$4 sm:$0xff] %v2897
    %3663 = vst [vmem:[%s3610] ss:$4 sm:$0xff] %v2905
    %3664 = vst [vmem:[%s3612] ss:$4 sm:$0xff] %v2913
    %3665 = vst [vmem:[%s3614] ss:$4 sm:$0xff] %v2921
    %v3666 = vld.sshfl [vmem:[#allocation1] sm:$0xff pattern:$0x73625140]
    %v3667 = vld.sshfl [vmem:[#allocation1 + $0x20] sm:$0xff pattern:$0x73625140]
    %3668 = vst [vmem:[#allocation1] ss:$4 sm:$0xff] %v2927
    %3669 = vst [vmem:[%s3602] ss:$4 sm:$0xff] %v2935
    %3670 = vst [vmem:[%s3604] ss:$4 sm:$0xff] %v2943
    %3671 = vst [vmem:[%s3606] ss:$4 sm:$0xff] %v2951
    %3672 = vst [vmem:[%s3608] ss:$4 sm:$0xff] %v2959
    %3673 = vst [vmem:[%s3610] ss:$4 sm:$0xff] %v2967
    %3674 = vst [vmem:[%s3612] ss:$4 sm:$0xff] %v2975
    %3675 = vst [vmem:[%s3614] ss:$4 sm:$0xff] %v2983
    %v3676 = vld.sshfl [vmem:[#allocation1] sm:$0xff pattern:$0x73625140]
    %v3677 = vld.sshfl [vmem:[#allocation1 + $0x20] sm:$0xff pattern:$0x73625140]
    %3678 = vst [vmem:[#allocation1] ss:$4 sm:$0xff] %v2929
    %3679 = vst [vmem:[%s3602] ss:$4 sm:$0xff] %v2937
    %3680 = vst [vmem:[%s3604] ss:$4 sm:$0xff] %v2945
    %3681 = vst [vmem:[%s3606] ss:$4 sm:$0xff] %v2953
    %3682 = vst [vmem:[%s3608] ss:$4 sm:$0xff] %v2961
    %3683 = vst [vmem:[%s3610] ss:$4 sm:$0xff] %v2969
    %3684 = vst [vmem:[%s3612] ss:$4 sm:$0xff] %v2977
    %3685 = vst [vmem:[%s3614] ss:$4 sm:$0xff] %v2985
    %v3686 = vld.sshfl [vmem:[#allocation1] sm:$0xff pattern:$0x73625140]
    %v3687 = vld.sshfl [vmem:[#allocation1 + $0x20] sm:$0xff pattern:$0x73625140]
    %v3704 = vpack.c.bf16 %v3616, %v3616
    %v3705 = vpack.c.bf16 %v3617, %v3617
    %v3706 = vpack.c.bf16 %v3626, %v3626
    %v3707 = vpack.c.bf16 %v3627, %v3627
    %v3708 = vpack.c.bf16 %v3636, %v3636
    %v3709 = vpack.c.bf16 %v3637, %v3637
    %v3710 = vpack.c.bf16 %v3646, %v3646
    %v3711 = vpack.c.bf16 %v3647, %v3647
    %v3712 = vpack.c.bf16 %v3656, %v3656
    %v3713 = vpack.c.bf16 %v3657, %v3657
    %v3714 = vpack.c.bf16 %v3666, %v3666
    %v3715 = vpack.c.bf16 %v3667, %v3667
    %v3716 = vpack.c.bf16 %v3676, %v3676
    %v3717 = vpack.c.bf16 %v3677, %v3677
    %v3718 = vpack.c.bf16 %v3686, %v3686
    %v3719 = vpack.c.bf16 %v3687, %v3687
    %v3722 = vunpack.c.l.b16 %v3704
    %v3723 = vunpack.c.l.b16 %v3705
    %v3724 = vpack.c.b16 %v3723, %v3722
    %v3727 = vsel %vm3269, %v3529, 0
    %3729 = vmatpush.bf16.msra.mxu0 0
    %3730 = vmatpush.bf16.msra.mxu0 0
    %3731 = vmatpush.bf16.msra.mxu0 0
    %3732 = vmatpush.bf16.msra.mxu0 0
    %3733 = vmatpush.bf16.msra.mxu0 0
    %3734 = vmatpush.bf16.msra.mxu0 0
    %3735 = vmatpush.bf16.msra.mxu0 0
    %3736 = vmatpush.bf16.msra.mxu0 %v3724
    %3737 = vmatmul.bf16.gmra.mxu0 %v3727
    %v3738 = vpop.f32.mrf.mxu0
    %v3739 = vadd.f32 0.0, %v3738
    %v3740 = vpop.f32.mrf.mxu0
    %3741 = vdwg.mxu0
    %v3744 = vunpack.c.l.b16 %v3706
    %v3745 = vunpack.c.l.b16 %v3707
    %v3746 = vpack.c.b16 %v3745, %v3744
    %v3749 = vsel %vm3269, %v3530, 0
    %3751 = vmatpush.bf16.msra.mxu0 0
    %3752 = vmatpush.bf16.msra.mxu0 0
    %3753 = vmatpush.bf16.msra.mxu0 0
    %3754 = vmatpush.bf16.msra.mxu0 0
    %3755 = vmatpush.bf16.msra.mxu0 0
    %3756 = vmatpush.bf16.msra.mxu0 0
    %3757 = vmatpush.bf16.msra.mxu0 0
    %3758 = vmatpush.bf16.msra.mxu0 %v3746
    %3759 = vmatmul.bf16.gmra.mxu0 %v3749
    %v3760 = vpop.f32.mrf.mxu0
    %v3761 = vadd.f32 0.0, %v3760
    %v3762 = vpop.f32.mrf.mxu0
    %3763 = vdwg.mxu0
    %v3766 = vunpack.c.l.b16 %v3708
    %v3767 = vunpack.c.l.b16 %v3709
    %v3768 = vpack.c.b16 %v3767, %v3766
    %v3771 = vsel %vm3269, %v3531, 0
    %3773 = vmatpush.bf16.msra.mxu0 0
    %3774 = vmatpush.bf16.msra.mxu0 0
    %3775 = vmatpush.bf16.msra.mxu0 0
    %3776 = vmatpush.bf16.msra.mxu0 0
    %3777 = vmatpush.bf16.msra.mxu0 0
    %3778 = vmatpush.bf16.msra.mxu0 0
    %3779 = vmatpush.bf16.msra.mxu0 0
    %3780 = vmatpush.bf16.msra.mxu0 %v3768
    %3781 = vmatmul.bf16.gmra.mxu0 %v3771
    %v3782 = vpop.f32.mrf.mxu0
    %v3783 = vadd.f32 0.0, %v3782
    %v3784 = vpop.f32.mrf.mxu0
    %3785 = vdwg.mxu0
    %v3788 = vunpack.c.l.b16 %v3710
    %v3789 = vunpack.c.l.b16 %v3711
    %v3790 = vpack.c.b16 %v3789, %v3788
    %v3793 = vsel %vm3269, %v3532, 0
    %3795 = vmatpush.bf16.msra.mxu0 0
    %3796 = vmatpush.bf16.msra.mxu0 0
    %3797 = vmatpush.bf16.msra.mxu0 0
    %3798 = vmatpush.bf16.msra.mxu0 0
    %3799 = vmatpush.bf16.msra.mxu0 0
    %3800 = vmatpush.bf16.msra.mxu0 0
    %3801 = vmatpush.bf16.msra.mxu0 0
    %3802 = vmatpush.bf16.msra.mxu0 %v3790
    %3803 = vmatmul.bf16.gmra.mxu0 %v3793
    %v3804 = vpop.f32.mrf.mxu0
    %v3805 = vadd.f32 0.0, %v3804
    %v3806 = vpop.f32.mrf.mxu0
    %3807 = vdwg.mxu0
    %v3810 = vunpack.c.l.b16 %v3712
    %v3811 = vunpack.c.l.b16 %v3713
    %v3812 = vpack.c.b16 %v3811, %v3810
    %v3815 = vsel %vm3269, %v3533, 0
    %3817 = vmatpush.bf16.msra.mxu0 0
    %3818 = vmatpush.bf16.msra.mxu0 0
    %3819 = vmatpush.bf16.msra.mxu0 0
    %3820 = vmatpush.bf16.msra.mxu0 0
    %3821 = vmatpush.bf16.msra.mxu0 0
    %3822 = vmatpush.bf16.msra.mxu0 0
    %3823 = vmatpush.bf16.msra.mxu0 0
    %3824 = vmatpush.bf16.msra.mxu0 %v3812
    %3825 = vmatmul.bf16.gmra.mxu0 %v3815
    %v3826 = vpop.f32.mrf.mxu0
    %v3827 = vadd.f32 0.0, %v3826
    %v3828 = vpop.f32.mrf.mxu0
    %3829 = vdwg.mxu0
    %v3832 = vunpack.c.l.b16 %v3714
    %v3833 = vunpack.c.l.b16 %v3715
    %v3834 = vpack.c.b16 %v3833, %v3832
    %v3837 = vsel %vm3269, %v3534, 0
    %3839 = vmatpush.bf16.msra.mxu0 0
    %3840 = vmatpush.bf16.msra.mxu0 0
    %3841 = vmatpush.bf16.msra.mxu0 0
    %3842 = vmatpush.bf16.msra.mxu0 0
    %3843 = vmatpush.bf16.msra.mxu0 0
    %3844 = vmatpush.bf16.msra.mxu0 0
    %3845 = vmatpush.bf16.msra.mxu0 0
    %3846 = vmatpush.bf16.msra.mxu0 %v3834
    %3847 = vmatmul.bf16.gmra.mxu0 %v3837
    %v3848 = vpop.f32.mrf.mxu0
    %v3849 = vadd.f32 0.0, %v3848
    %v3850 = vpop.f32.mrf.mxu0
    %3851 = vdwg.mxu0
    %v3854 = vunpack.c.l.b16 %v3716
    %v3855 = vunpack.c.l.b16 %v3717
    %v3856 = vpack.c.b16 %v3855, %v3854
    %v3859 = vsel %vm3269, %v3535, 0
    %3861 = vmatpush.bf16.msra.mxu0 0
    %3862 = vmatpush.bf16.msra.mxu0 0
    %3863 = vmatpush.bf16.msra.mxu0 0
    %3864 = vmatpush.bf16.msra.mxu0 0
    %3865 = vmatpush.bf16.msra.mxu0 0
    %3866 = vmatpush.bf16.msra.mxu0 0
    %3867 = vmatpush.bf16.msra.mxu0 0
    %3868 = vmatpush.bf16.msra.mxu0 %v3856
    %3869 = vmatmul.bf16.gmra.mxu0 %v3859
    %v3870 = vpop.f32.mrf.mxu0
    %v3871 = vadd.f32 0.0, %v3870
    %v3872 = vpop.f32.mrf.mxu0
    %3873 = vdwg.mxu0
    %v3876 = vunpack.c.l.b16 %v3718
    %v3877 = vunpack.c.l.b16 %v3719
    %v3878 = vpack.c.b16 %v3877, %v3876
    %v3881 = vsel %vm3269, %v3536, 0
    %3883 = vmatpush.bf16.msra.mxu0 0
    %3884 = vmatpush.bf16.msra.mxu0 0
    %3885 = vmatpush.bf16.msra.mxu0 0
    %3886 = vmatpush.bf16.msra.mxu0 0
    %3887 = vmatpush.bf16.msra.mxu0 0
    %3888 = vmatpush.bf16.msra.mxu0 0
    %3889 = vmatpush.bf16.msra.mxu0 0
    %3890 = vmatpush.bf16.msra.mxu0 %v3878
    %3891 = vmatmul.bf16.gmra.mxu0 %v3881
    %v3892 = vpop.f32.mrf.mxu0
    %v3893 = vadd.f32 0.0, %v3892
    %v3894 = vpop.f32.mrf.mxu0
    %3895 = vdwg.mxu0
    %v3896 = vrcp.pop %v3507
    %v3897 = vmul.f32 %v3507, %v3896
    %v3898 = vsub.f32 1.0, %v3897
    %v3899 = vmul.f32 %v3896, %v3898
    %v3900 = vadd.f32 %v3896, %v3899
    %vm3901 = vweird.f32 %v3507
    %vm3902 = vweird.f32 %v3896
    %vm3903 = vmor %vm3901, %vm3902
    %v3904 = vsel %vm3903, %v3896, %v3900
    %v3905 = vand.u32 2147483647, %v3507
    %vm3906 = vcmp.eq.f32.partialorder %v3905, 8.507059e+37
    %v3907 = vand.u32 %v3507, 2147483648
    %v3908 = vor.u32 1.1754944e-38, %v3907
    %v3909 = vsel %vm3906, %v3908, %v3904
    %v3910 = vrcp.pop %v3510
    %v3911 = vmul.f32 %v3510, %v3910
    %v3912 = vsub.f32 1.0, %v3911
    %v3913 = vmul.f32 %v3910, %v3912
    %v3914 = vadd.f32 %v3910, %v3913
    %vm3915 = vweird.f32 %v3510
    %vm3916 = vweird.f32 %v3910
    %vm3917 = vmor %vm3915, %vm3916
    %v3918 = vsel %vm3917, %v3910, %v3914
    %v3919 = vand.u32 2147483647, %v3510
    %vm3920 = vcmp.eq.f32.partialorder %v3919, 8.507059e+37
    %v3921 = vand.u32 %v3510, 2147483648
    %v3922 = vor.u32 1.1754944e-38, %v3921
    %v3923 = vsel %vm3920, %v3922, %v3918
    %v3924 = vrcp.pop %v3513
    %v3925 = vmul.f32 %v3513, %v3924
    %v3926 = vsub.f32 1.0, %v3925
    %v3927 = vmul.f32 %v3924, %v3926
    %v3928 = vadd.f32 %v3924, %v3927
    %vm3929 = vweird.f32 %v3513
    %vm3930 = vweird.f32 %v3924
    %vm3931 = vmor %vm3929, %vm3930
    %v3932 = vsel %vm3931, %v3924, %v3928
    %v3933 = vand.u32 2147483647, %v3513
    %vm3934 = vcmp.eq.f32.partialorder %v3933, 8.507059e+37
    %v3935 = vand.u32 %v3513, 2147483648
    %v3936 = vor.u32 1.1754944e-38, %v3935
    %v3937 = vsel %vm3934, %v3936, %v3932
    %v3938 = vrcp.pop %v3516
    %v3939 = vmul.f32 %v3516, %v3938
    %v3940 = vsub.f32 1.0, %v3939
    %v3941 = vmul.f32 %v3938, %v3940
    %v3942 = vadd.f32 %v3938, %v3941
    %vm3943 = vweird.f32 %v3516
    %vm3944 = vweird.f32 %v3938
    %vm3945 = vmor %vm3943, %vm3944
    %v3946 = vsel %vm3945, %v3938, %v3942
    %v3947 = vand.u32 2147483647, %v3516
    %vm3948 = vcmp.eq.f32.partialorder %v3947, 8.507059e+37
    %v3949 = vand.u32 %v3516, 2147483648
    %v3950 = vor.u32 1.1754944e-38, %v3949
    %v3951 = vsel %vm3948, %v3950, %v3946
    %v3952 = vrcp.pop %v3519
    %v3953 = vmul.f32 %v3519, %v3952
    %v3954 = vsub.f32 1.0, %v3953
    %v3955 = vmul.f32 %v3952, %v3954
    %v3956 = vadd.f32 %v3952, %v3955
    %vm3957 = vweird.f32 %v3519
    %vm3958 = vweird.f32 %v3952
    %vm3959 = vmor %vm3957, %vm3958
    %v3960 = vsel %vm3959, %v3952, %v3956
    %v3961 = vand.u32 2147483647, %v3519
    %vm3962 = vcmp.eq.f32.partialorder %v3961, 8.507059e+37
    %v3963 = vand.u32 %v3519, 2147483648
    %v3964 = vor.u32 1.1754944e-38, %v3963
    %v3965 = vsel %vm3962, %v3964, %v3960
    %v3966 = vrcp.pop %v3522
    %v3967 = vmul.f32 %v3522, %v3966
    %v3968 = vsub.f32 1.0, %v3967
    %v3969 = vmul.f32 %v3966, %v3968
    %v3970 = vadd.f32 %v3966, %v3969
    %vm3971 = vweird.f32 %v3522
    %vm3972 = vweird.f32 %v3966
    %vm3973 = vmor %vm3971, %vm3972
    %v3974 = vsel %vm3973, %v3966, %v3970
    %v3975 = vand.u32 2147483647, %v3522
    %vm3976 = vcmp.eq.f32.partialorder %v3975, 8.507059e+37
    %v3977 = vand.u32 %v3522, 2147483648
    %v3978 = vor.u32 1.1754944e-38, %v3977
    %v3979 = vsel %vm3976, %v3978, %v3974
    %v3980 = vrcp.pop %v3525
    %v3981 = vmul.f32 %v3525, %v3980
    %v3982 = vsub.f32 1.0, %v3981
    %v3983 = vmul.f32 %v3980, %v3982
    %v3984 = vadd.f32 %v3980, %v3983
    %vm3985 = vweird.f32 %v3525
    %vm3986 = vweird.f32 %v3980
    %vm3987 = vmor %vm3985, %vm3986
    %v3988 = vsel %vm3987, %v3980, %v3984
    %v3989 = vand.u32 2147483647, %v3525
    %vm3990 = vcmp.eq.f32.partialorder %v3989, 8.507059e+37
    %v3991 = vand.u32 %v3525, 2147483648
    %v3992 = vor.u32 1.1754944e-38, %v3991
    %v3993 = vsel %vm3990, %v3992, %v3988
    %v3994 = vrcp.pop %v3528
    %v3995 = vmul.f32 %v3528, %v3994
    %v3996 = vsub.f32 1.0, %v3995
    %v3997 = vmul.f32 %v3994, %v3996
    %v3998 = vadd.f32 %v3994, %v3997
    %vm3999 = vweird.f32 %v3528
    %vm4000 = vweird.f32 %v3994
    %vm4001 = vmor %vm3999, %vm4000
    %v4002 = vsel %vm4001, %v3994, %v3998
    %v4003 = vand.u32 2147483647, %v3528
    %vm4004 = vcmp.eq.f32.partialorder %v4003, 8.507059e+37
    %v4005 = vand.u32 %v3528, 2147483648
    %v4006 = vor.u32 1.1754944e-38, %v4005
    %v4007 = vsel %vm4004, %v4006, %v4002
    %v4008 = vmul.f32 %v3739, %v3909
    %v4009 = vmul.f32 %v3761, %v3923
    %v4010 = vmul.f32 %v3783, %v3937
    %v4011 = vmul.f32 %v3805, %v3951
    %v4012 = vmul.f32 %v3827, %v3965
    %v4013 = vmul.f32 %v3849, %v3979
    %v4014 = vmul.f32 %v3871, %v3993
    %v4015 = vmul.f32 %v3893, %v4007
    %v4016 = vrot.slane %v4010, 4
    %v4017 = vsel %vm714, %v4016, %v4008
    %v4018 = vrot.slane %v4008, 4
    %v4019 = vsel %vm714, %v4010, %v4018
    %v4021 = vunpack.c.l.s4 1983009808
    %v4022 = vunpack.c.0.s8 %v4021
    %v4023 = vperm.slane %v4017, %v4022
    %v4025 = vunpack.c.l.s4 1983009808
    %v4026 = vunpack.c.0.s8 %v4025
    %v4027 = vperm.slane %v4019, %v4026
    %v4028 = vrot.slane %v4011, 4
    %v4029 = vsel %vm714, %v4028, %v4009
    %v4030 = vrot.slane %v4009, 4
    %v4031 = vsel %vm714, %v4011, %v4030
    %v4033 = vunpack.c.l.s4 1983009808
    %v4034 = vunpack.c.0.s8 %v4033
    %v4035 = vperm.slane %v4029, %v4034
    %v4037 = vunpack.c.l.s4 1983009808
    %v4038 = vunpack.c.0.s8 %v4037
    %v4039 = vperm.slane %v4031, %v4038
    %v4040 = vrot.slane %v4014, 4
    %v4041 = vsel %vm714, %v4040, %v4012
    %v4042 = vrot.slane %v4012, 4
    %v4043 = vsel %vm714, %v4014, %v4042
    %v4045 = vunpack.c.l.s4 1983009808
    %v4046 = vunpack.c.0.s8 %v4045
    %v4047 = vperm.slane %v4041, %v4046
    %v4049 = vunpack.c.l.s4 1983009808
    %v4050 = vunpack.c.0.s8 %v4049
    %v4051 = vperm.slane %v4043, %v4050
    %v4052 = vrot.slane %v4015, 4
    %v4053 = vsel %vm714, %v4052, %v4013
    %v4054 = vrot.slane %v4013, 4
    %v4055 = vsel %vm714, %v4015, %v4054
    %v4057 = vunpack.c.l.s4 1983009808
    %v4058 = vunpack.c.0.s8 %v4057
    %v4059 = vperm.slane %v4053, %v4058
    %v4061 = vunpack.c.l.s4 1983009808
    %v4062 = vunpack.c.0.s8 %v4061
    %v4063 = vperm.slane %v4055, %v4062
    %v4064 = vrot.slane %v4035, 4
    %v4065 = vsel %vm714, %v4064, %v4023
    %v4066 = vrot.slane %v4023, 4
    %v4067 = vsel %vm714, %v4035, %v4066
    %v4069 = vunpack.c.l.s4 1934713408
    %v4070 = vunpack.c.0.s8 %v4069
    %v4071 = vperm.slane %v4065, %v4070
    %v4073 = vunpack.c.l.s4 1934713408
    %v4074 = vunpack.c.0.s8 %v4073
    %v4075 = vperm.slane %v4067, %v4074
    %v4076 = vrot.slane %v4039, 4
    %v4077 = vsel %vm714, %v4076, %v4027
    %v4078 = vrot.slane %v4027, 4
    %v4079 = vsel %vm714, %v4039, %v4078
    %v4081 = vunpack.c.l.s4 1934713408
    %v4082 = vunpack.c.0.s8 %v4081
    %v4083 = vperm.slane %v4077, %v4082
    %v4085 = vunpack.c.l.s4 1934713408
    %v4086 = vunpack.c.0.s8 %v4085
    %v4087 = vperm.slane %v4079, %v4086
    %v4088 = vrot.slane %v4059, 4
    %v4089 = vsel %vm714, %v4088, %v4047
    %v4090 = vrot.slane %v4047, 4
    %v4091 = vsel %vm714, %v4059, %v4090
    %v4093 = vunpack.c.l.s4 1934713408
    %v4094 = vunpack.c.0.s8 %v4093
    %v4095 = vperm.slane %v4089, %v4094
    %v4097 = vunpack.c.l.s4 1934713408
    %v4098 = vunpack.c.0.s8 %v4097
    %v4099 = vperm.slane %v4091, %v4098
    %v4100 = vrot.slane %v4063, 4
    %v4101 = vsel %vm714, %v4100, %v4051
    %v4102 = vrot.slane %v4051, 4
    %v4103 = vsel %vm714, %v4063, %v4102
    %v4105 = vunpack.c.l.s4 1934713408
    %v4106 = vunpack.c.0.s8 %v4105
    %v4107 = vperm.slane %v4101, %v4106
    %v4109 = vunpack.c.l.s4 1934713408
    %v4110 = vunpack.c.0.s8 %v4109
    %v4111 = vperm.slane %v4103, %v4110
    %v4112 = vrot.slane %v4095, 4
    %v4113 = vsel %vm714, %v4112, %v4071
    %v4114 = vrot.slane %v4071, 4
    %v4115 = vsel %vm714, %v4095, %v4114
    %v4116 = vrot.slane %v4099, 4
    %v4117 = vsel %vm714, %v4116, %v4075
    %v4118 = vrot.slane %v4075, 4
    %v4119 = vsel %vm714, %v4099, %v4118
    %v4120 = vrot.slane %v4107, 4
    %v4121 = vsel %vm714, %v4120, %v4083
    %v4122 = vrot.slane %v4083, 4
    %v4123 = vsel %vm714, %v4107, %v4122
    %v4124 = vrot.slane %v4111, 4
    %v4125 = vsel %vm714, %v4124, %v4087
    %v4126 = vrot.slane %v4087, 4
    %v4127 = vsel %vm714, %v4111, %v4126
    %v4128 = vrot.slane %v425, 7
    %v4129 = vrot.slane %v4128, 2
    %v4130 = vrot.slane %v546, 7
    %v4131 = vrot.slane %v4130, 2
    %v4132 = vrot.slane %v570, 7
    %v4133 = vrot.slane %v4132, 2
    %v4134 = vrot.slane %v594, 7
    %v4135 = vrot.slane %v4134, 2
    %v4136 = vrot.slane %v618, 7
    %v4137 = vrot.slane %v4136, 2
    %v4138 = vrot.slane %v642, 7
    %v4139 = vrot.slane %v4138, 2
    %v4140 = vrot.slane %v666, 7
    %v4141 = vrot.slane %v4140, 2
    %v4142 = vrot.slane %v690, 7
    %v4143 = vrot.slane %v4142, 2
    %v4144 = vrot.slane %v477, 7
    %v4145 = vrot.slane %v4144, 2
    %v4146 = vrot.slane %v548, 7
    %v4147 = vrot.slane %v4146, 2
    %v4148 = vrot.slane %v572, 7
    %v4149 = vrot.slane %v4148, 2
    %v4150 = vrot.slane %v596, 7
    %v4151 = vrot.slane %v4150, 2
    %v4152 = vrot.slane %v620, 7
    %v4153 = vrot.slane %v4152, 2
    %v4154 = vrot.slane %v644, 7
    %v4155 = vrot.slane %v4154, 2
    %v4156 = vrot.slane %v668, 7
    %v4157 = vrot.slane %v4156, 2
    %v4158 = vrot.slane %v692, 7
    %v4159 = vrot.slane %v4158, 2
    %v4160 = vrot.slane %v478, 7
    %v4161 = vrot.slane %v4160, 2
    %v4162 = vrot.slane %v550, 7
    %v4163 = vrot.slane %v4162, 2
    %v4164 = vrot.slane %v574, 7
    %v4165 = vrot.slane %v4164, 2
    %v4166 = vrot.slane %v598, 7
    %v4167 = vrot.slane %v4166, 2
    %v4168 = vrot.slane %v622, 7
    %v4169 = vrot.slane %v4168, 2
    %v4170 = vrot.slane %v646, 7
    %v4171 = vrot.slane %v4170, 2
    %v4172 = vrot.slane %v670, 7
    %v4173 = vrot.slane %v4172, 2
    %v4174 = vrot.slane %v694, 7
    %v4175 = vrot.slane %v4174, 2
    %v4176 = vrot.slane %v479, 7
    %v4177 = vrot.slane %v4176, 2
    %v4178 = vrot.slane %v552, 7
    %v4179 = vrot.slane %v4178, 2
    %v4180 = vrot.slane %v576, 7
    %v4181 = vrot.slane %v4180, 2
    %v4182 = vrot.slane %v600, 7
    %v4183 = vrot.slane %v4182, 2
    %v4184 = vrot.slane %v624, 7
    %v4185 = vrot.slane %v4184, 2
    %v4186 = vrot.slane %v648, 7
    %v4187 = vrot.slane %v4186, 2
    %v4188 = vrot.slane %v672, 7
    %v4189 = vrot.slane %v4188, 2
    %v4190 = vrot.slane %v696, 7
    %v4191 = vrot.slane %v4190, 2
    %v4192 = vrot.slane %v427, 7
    %v4193 = vrot.slane %v4192, 2
    %v4194 = vrot.slane %v554, 7
    %v4195 = vrot.slane %v4194, 2
    %v4196 = vrot.slane %v578, 7
    %v4197 = vrot.slane %v4196, 2
    %v4198 = vrot.slane %v602, 7
    %v4199 = vrot.slane %v4198, 2
    %v4200 = vrot.slane %v626, 7
    %v4201 = vrot.slane %v4200, 2
    %v4202 = vrot.slane %v650, 7
    %v4203 = vrot.slane %v4202, 2
    %v4204 = vrot.slane %v674, 7
    %v4205 = vrot.slane %v4204, 2
    %v4206 = vrot.slane %v698, 7
    %v4207 = vrot.slane %v4206, 2
    %v4208 = vrot.slane %v480, 7
    %v4209 = vrot.slane %v4208, 2
    %v4210 = vrot.slane %v556, 7
    %v4211 = vrot.slane %v4210, 2
    %v4212 = vrot.slane %v580, 7
    %v4213 = vrot.slane %v4212, 2
    %v4214 = vrot.slane %v604, 7
    %v4215 = vrot.slane %v4214, 2
    %v4216 = vrot.slane %v628, 7
    %v4217 = vrot.slane %v4216, 2
    %v4218 = vrot.slane %v652, 7
    %v4219 = vrot.slane %v4218, 2
    %v4220 = vrot.slane %v676, 7
    %v4221 = vrot.slane %v4220, 2
    %v4222 = vrot.slane %v700, 7
    %v4223 = vrot.slane %v4222, 2
    %v4224 = vrot.slane %v481, 7
    %v4225 = vrot.slane %v4224, 2
    %v4226 = vrot.slane %v558, 7
    %v4227 = vrot.slane %v4226, 2
    %v4228 = vrot.slane %v582, 7
    %v4229 = vrot.slane %v4228, 2
    %v4230 = vrot.slane %v606, 7
    %v4231 = vrot.slane %v4230, 2
    %v4232 = vrot.slane %v630, 7
    %v4233 = vrot.slane %v4232, 2
    %v4234 = vrot.slane %v654, 7
    %v4235 = vrot.slane %v4234, 2
    %v4236 = vrot.slane %v678, 7
    %v4237 = vrot.slane %v4236, 2
    %v4238 = vrot.slane %v702, 7
    %v4239 = vrot.slane %v4238, 2
    %v4240 = vrot.slane %v482, 7
    %v4241 = vrot.slane %v4240, 2
    %v4242 = vrot.slane %v560, 7
    %v4243 = vrot.slane %v4242, 2
    %v4244 = vrot.slane %v584, 7
    %v4245 = vrot.slane %v4244, 2
    %v4246 = vrot.slane %v608, 7
    %v4247 = vrot.slane %v4246, 2
    %v4248 = vrot.slane %v632, 7
    %v4249 = vrot.slane %v4248, 2
    %v4250 = vrot.slane %v656, 7
    %v4251 = vrot.slane %v4250, 2
    %v4252 = vrot.slane %v680, 7
    %v4253 = vrot.slane %v4252, 2
    %v4254 = vrot.slane %v704, 7
    %v4255 = vrot.slane %v4254, 2
    %v4320 = vrot.slane %v4131, 4
    %v4321 = vsel %vm714, %v4320, %v4129
    %v4323 = vunpack.c.l.s4 1934713408
    %v4324 = vunpack.c.0.s8 %v4323
    %v4325 = vperm.slane %v4321, %v4324
    %v4326 = vrot.slane %v4135, 4
    %v4327 = vsel %vm714, %v4326, %v4133
    %v4329 = vunpack.c.l.s4 1934713408
    %v4330 = vunpack.c.0.s8 %v4329
    %v4331 = vperm.slane %v4327, %v4330
    %v4332 = vrot.slane %v4139, 4
    %v4333 = vsel %vm714, %v4332, %v4137
    %v4335 = vunpack.c.l.s4 1934713408
    %v4336 = vunpack.c.0.s8 %v4335
    %v4337 = vperm.slane %v4333, %v4336
    %v4338 = vrot.slane %v4143, 4
    %v4339 = vsel %vm714, %v4338, %v4141
    %v4341 = vunpack.c.l.s4 1934713408
    %v4342 = vunpack.c.0.s8 %v4341
    %v4343 = vperm.slane %v4339, %v4342
    %v4344 = vrot.slane %v4147, 4
    %v4345 = vsel %vm714, %v4344, %v4145
    %v4347 = vunpack.c.l.s4 1934713408
    %v4348 = vunpack.c.0.s8 %v4347
    %v4349 = vperm.slane %v4345, %v4348
    %v4350 = vrot.slane %v4151, 4
    %v4351 = vsel %vm714, %v4350, %v4149
    %v4353 = vunpack.c.l.s4 1934713408
    %v4354 = vunpack.c.0.s8 %v4353
    %v4355 = vperm.slane %v4351, %v4354
    %v4356 = vrot.slane %v4155, 4
    %v4357 = vsel %vm714, %v4356, %v4153
    %v4359 = vunpack.c.l.s4 1934713408
    %v4360 = vunpack.c.0.s8 %v4359
    %v4361 = vperm.slane %v4357, %v4360
    %v4362 = vrot.slane %v4159, 4
    %v4363 = vsel %vm714, %v4362, %v4157
    %v4365 = vunpack.c.l.s4 1934713408
    %v4366 = vunpack.c.0.s8 %v4365
    %v4367 = vperm.slane %v4363, %v4366
    %v4368 = vrot.slane %v4163, 4
    %v4369 = vsel %vm714, %v4368, %v4161
    %v4371 = vunpack.c.l.s4 1934713408
    %v4372 = vunpack.c.0.s8 %v4371
    %v4373 = vperm.slane %v4369, %v4372
    %v4374 = vrot.slane %v4167, 4
    %v4375 = vsel %vm714, %v4374, %v4165
    %v4377 = vunpack.c.l.s4 1934713408
    %v4378 = vunpack.c.0.s8 %v4377
    %v4379 = vperm.slane %v4375, %v4378
    %v4380 = vrot.slane %v4171, 4
    %v4381 = vsel %vm714, %v4380, %v4169
    %v4383 = vunpack.c.l.s4 1934713408
    %v4384 = vunpack.c.0.s8 %v4383
    %v4385 = vperm.slane %v4381, %v4384
    %v4386 = vrot.slane %v4175, 4
    %v4387 = vsel %vm714, %v4386, %v4173
    %v4389 = vunpack.c.l.s4 1934713408
    %v4390 = vunpack.c.0.s8 %v4389
    %v4391 = vperm.slane %v4387, %v4390
    %v4392 = vrot.slane %v4179, 4
    %v4393 = vsel %vm714, %v4392, %v4177
    %v4395 = vunpack.c.l.s4 1934713408
    %v4396 = vunpack.c.0.s8 %v4395
    %v4397 = vperm.slane %v4393, %v4396
    %v4398 = vrot.slane %v4183, 4
    %v4399 = vsel %vm714, %v4398, %v4181
    %v4401 = vunpack.c.l.s4 1934713408
    %v4402 = vunpack.c.0.s8 %v4401
    %v4403 = vperm.slane %v4399, %v4402
    %v4404 = vrot.slane %v4187, 4
    %v4405 = vsel %vm714, %v4404, %v4185
    %v4407 = vunpack.c.l.s4 1934713408
    %v4408 = vunpack.c.0.s8 %v4407
    %v4409 = vperm.slane %v4405, %v4408
    %v4410 = vrot.slane %v4191, 4
    %v4411 = vsel %vm714, %v4410, %v4189
    %v4413 = vunpack.c.l.s4 1934713408
    %v4414 = vunpack.c.0.s8 %v4413
    %v4415 = vperm.slane %v4411, %v4414
    %v4416 = vrot.slane %v4195, 4
    %v4417 = vsel %vm714, %v4416, %v4193
    %v4419 = vunpack.c.l.s4 1934713408
    %v4420 = vunpack.c.0.s8 %v4419
    %v4421 = vperm.slane %v4417, %v4420
    %v4422 = vrot.slane %v4199, 4
    %v4423 = vsel %vm714, %v4422, %v4197
    %v4425 = vunpack.c.l.s4 1934713408
    %v4426 = vunpack.c.0.s8 %v4425
    %v4427 = vperm.slane %v4423, %v4426
    %v4428 = vrot.slane %v4203, 4
    %v4429 = vsel %vm714, %v4428, %v4201
    %v4431 = vunpack.c.l.s4 1934713408
    %v4432 = vunpack.c.0.s8 %v4431
    %v4433 = vperm.slane %v4429, %v4432
    %v4434 = vrot.slane %v4207, 4
    %v4435 = vsel %vm714, %v4434, %v4205
    %v4437 = vunpack.c.l.s4 1934713408
    %v4438 = vunpack.c.0.s8 %v4437
    %v4439 = vperm.slane %v4435, %v4438
    %v4440 = vrot.slane %v4211, 4
    %v4441 = vsel %vm714, %v4440, %v4209
    %v4443 = vunpack.c.l.s4 1934713408
    %v4444 = vunpack.c.0.s8 %v4443
    %v4445 = vperm.slane %v4441, %v4444
    %v4446 = vrot.slane %v4215, 4
    %v4447 = vsel %vm714, %v4446, %v4213
    %v4449 = vunpack.c.l.s4 1934713408
    %v4450 = vunpack.c.0.s8 %v4449
    %v4451 = vperm.slane %v4447, %v4450
    %v4452 = vrot.slane %v4219, 4
    %v4453 = vsel %vm714, %v4452, %v4217
    %v4455 = vunpack.c.l.s4 1934713408
    %v4456 = vunpack.c.0.s8 %v4455
    %v4457 = vperm.slane %v4453, %v4456
    %v4458 = vrot.slane %v4223, 4
    %v4459 = vsel %vm714, %v4458, %v4221
    %v4461 = vunpack.c.l.s4 1934713408
    %v4462 = vunpack.c.0.s8 %v4461
    %v4463 = vperm.slane %v4459, %v4462
    %v4464 = vrot.slane %v4227, 4
    %v4465 = vsel %vm714, %v4464, %v4225
    %v4467 = vunpack.c.l.s4 1934713408
    %v4468 = vunpack.c.0.s8 %v4467
    %v4469 = vperm.slane %v4465, %v4468
    %v4470 = vrot.slane %v4231, 4
    %v4471 = vsel %vm714, %v4470, %v4229
    %v4473 = vunpack.c.l.s4 1934713408
    %v4474 = vunpack.c.0.s8 %v4473
    %v4475 = vperm.slane %v4471, %v4474
    %v4476 = vrot.slane %v4235, 4
    %v4477 = vsel %vm714, %v4476, %v4233
    %v4479 = vunpack.c.l.s4 1934713408
    %v4480 = vunpack.c.0.s8 %v4479
    %v4481 = vperm.slane %v4477, %v4480
    %v4482 = vrot.slane %v4239, 4
    %v4483 = vsel %vm714, %v4482, %v4237
    %v4485 = vunpack.c.l.s4 1934713408
    %v4486 = vunpack.c.0.s8 %v4485
    %v4487 = vperm.slane %v4483, %v4486
    %v4488 = vrot.slane %v4243, 4
    %v4489 = vsel %vm714, %v4488, %v4241
    %v4491 = vunpack.c.l.s4 1934713408
    %v4492 = vunpack.c.0.s8 %v4491
    %v4493 = vperm.slane %v4489, %v4492
    %v4494 = vrot.slane %v4247, 4
    %v4495 = vsel %vm714, %v4494, %v4245
    %v4497 = vunpack.c.l.s4 1934713408
    %v4498 = vunpack.c.0.s8 %v4497
    %v4499 = vperm.slane %v4495, %v4498
    %v4500 = vrot.slane %v4251, 4
    %v4501 = vsel %vm714, %v4500, %v4249
    %v4503 = vunpack.c.l.s4 1934713408
    %v4504 = vunpack.c.0.s8 %v4503
    %v4505 = vperm.slane %v4501, %v4504
    %v4506 = vrot.slane %v4255, 4
    %v4507 = vsel %vm714, %v4506, %v4253
    %v4509 = vunpack.c.l.s4 1934713408
    %v4510 = vunpack.c.0.s8 %v4509
    %v4511 = vperm.slane %v4507, %v4510
    %v4512 = vrot.slane %v4349, 4
    %v4513 = vsel %vm714, %v4512, %v4325
    %v4515 = vunpack.c.l.s4 1934713408
    %v4516 = vunpack.c.0.s8 %v4515
    %v4517 = vperm.slane %v4513, %v4516
    %v4518 = vrot.slane %v4517, 4
    %v4519 = vsel %vm714, 0.0, %v4518
    %v4520 = vrot.slane %v4397, 4
    %v4521 = vsel %vm714, %v4520, %v4373
    %v4523 = vunpack.c.l.s4 1934713408
    %v4524 = vunpack.c.0.s8 %v4523
    %v4525 = vperm.slane %v4521, %v4524
    %v4526 = vrot.slane %v4525, 4
    %v4527 = vsel %vm714, 0.0, %v4526
    %v4528 = vrot.slane %v4445, 4
    %v4529 = vsel %vm714, %v4528, %v4421
    %v4531 = vunpack.c.l.s4 1934713408
    %v4532 = vunpack.c.0.s8 %v4531
    %v4533 = vperm.slane %v4529, %v4532
    %v4534 = vrot.slane %v4533, 4
    %v4535 = vsel %vm714, 0.0, %v4534
    %v4536 = vrot.slane %v4493, 4
    %v4537 = vsel %vm714, %v4536, %v4469
    %v4539 = vunpack.c.l.s4 1934713408
    %v4540 = vunpack.c.0.s8 %v4539
    %v4541 = vperm.slane %v4537, %v4540
    %v4542 = vrot.slane %v4541, 4
    %v4543 = vsel %vm714, 0.0, %v4542
    %v4544 = vrot.slane %v4355, 4
    %v4545 = vsel %vm714, %v4544, %v4331
    %v4547 = vunpack.c.l.s4 1934713408
    %v4548 = vunpack.c.0.s8 %v4547
    %v4549 = vperm.slane %v4545, %v4548
    %v4550 = vrot.slane %v4549, 4
    %v4551 = vsel %vm714, 0.0, %v4550
    %v4552 = vrot.slane %v4403, 4
    %v4553 = vsel %vm714, %v4552, %v4379
    %v4555 = vunpack.c.l.s4 1934713408
    %v4556 = vunpack.c.0.s8 %v4555
    %v4557 = vperm.slane %v4553, %v4556
    %v4558 = vrot.slane %v4557, 4
    %v4559 = vsel %vm714, 0.0, %v4558
    %v4560 = vrot.slane %v4451, 4
    %v4561 = vsel %vm714, %v4560, %v4427
    %v4563 = vunpack.c.l.s4 1934713408
    %v4564 = vunpack.c.0.s8 %v4563
    %v4565 = vperm.slane %v4561, %v4564
    %v4566 = vrot.slane %v4565, 4
    %v4567 = vsel %vm714, 0.0, %v4566
    %v4568 = vrot.slane %v4499, 4
    %v4569 = vsel %vm714, %v4568, %v4475
    %v4571 = vunpack.c.l.s4 1934713408
    %v4572 = vunpack.c.0.s8 %v4571
    %v4573 = vperm.slane %v4569, %v4572
    %v4574 = vrot.slane %v4573, 4
    %v4575 = vsel %vm714, 0.0, %v4574
    %v4576 = vrot.slane %v4361, 4
    %v4577 = vsel %vm714, %v4576, %v4337
    %v4579 = vunpack.c.l.s4 1934713408
    %v4580 = vunpack.c.0.s8 %v4579
    %v4581 = vperm.slane %v4577, %v4580
    %v4582 = vrot.slane %v4581, 4
    %v4583 = vsel %vm714, 0.0, %v4582
    %v4584 = vrot.slane %v4409, 4
    %v4585 = vsel %vm714, %v4584, %v4385
    %v4587 = vunpack.c.l.s4 1934713408
    %v4588 = vunpack.c.0.s8 %v4587
    %v4589 = vperm.slane %v4585, %v4588
    %v4590 = vrot.slane %v4589, 4
    %v4591 = vsel %vm714, 0.0, %v4590
    %v4592 = vrot.slane %v4457, 4
    %v4593 = vsel %vm714, %v4592, %v4433
    %v4595 = vunpack.c.l.s4 1934713408
    %v4596 = vunpack.c.0.s8 %v4595
    %v4597 = vperm.slane %v4593, %v4596
    %v4598 = vrot.slane %v4597, 4
    %v4599 = vsel %vm714, 0.0, %v4598
    %v4600 = vrot.slane %v4505, 4
    %v4601 = vsel %vm714, %v4600, %v4481
    %v4603 = vunpack.c.l.s4 1934713408
    %v4604 = vunpack.c.0.s8 %v4603
    %v4605 = vperm.slane %v4601, %v4604
    %v4606 = vrot.slane %v4605, 4
    %v4607 = vsel %vm714, 0.0, %v4606
    %v4608 = vrot.slane %v4367, 4
    %v4609 = vsel %vm714, %v4608, %v4343
    %v4611 = vunpack.c.l.s4 1934713408
    %v4612 = vunpack.c.0.s8 %v4611
    %v4613 = vperm.slane %v4609, %v4612
    %v4614 = vrot.slane %v4613, 4
    %v4615 = vsel %vm714, 0.0, %v4614
    %v4616 = vrot.slane %v4415, 4
    %v4617 = vsel %vm714, %v4616, %v4391
    %v4619 = vunpack.c.l.s4 1934713408
    %v4620 = vunpack.c.0.s8 %v4619
    %v4621 = vperm.slane %v4617, %v4620
    %v4622 = vrot.slane %v4621, 4
    %v4623 = vsel %vm714, 0.0, %v4622
    %v4624 = vrot.slane %v4463, 4
    %v4625 = vsel %vm714, %v4624, %v4439
    %v4627 = vunpack.c.l.s4 1934713408
    %v4628 = vunpack.c.0.s8 %v4627
    %v4629 = vperm.slane %v4625, %v4628
    %v4630 = vrot.slane %v4629, 4
    %v4631 = vsel %vm714, 0.0, %v4630
    %v4632 = vrot.slane %v4511, 4
    %v4633 = vsel %vm714, %v4632, %v4487
    %v4635 = vunpack.c.l.s4 1934713408
    %v4636 = vunpack.c.0.s8 %v4635
    %v4637 = vperm.slane %v4633, %v4636
    %v4638 = vrot.slane %v4637, 4
    %v4639 = vsel %vm714, 0.0, %v4638
    %v4640 = vrot.slane %v443, 7
    %v4641 = vrot.slane %v4640, 2
    %v4642 = vrot.slane %v1035, 7
    %v4643 = vrot.slane %v4642, 2
    %v4644 = vrot.slane %v1083, 7
    %v4645 = vrot.slane %v4644, 2
    %v4646 = vrot.slane %v1131, 7
    %v4647 = vrot.slane %v4646, 2
    %v4648 = vrot.slane %v1179, 7
    %v4649 = vrot.slane %v4648, 2
    %v4650 = vrot.slane %v1227, 7
    %v4651 = vrot.slane %v4650, 2
    %v4652 = vrot.slane %v1275, 7
    %v4653 = vrot.slane %v4652, 2
    %v4654 = vrot.slane %v1323, 7
    %v4655 = vrot.slane %v4654, 2
    %v4656 = vrot.slane %v493, 7
    %v4657 = vrot.slane %v4656, 2
    %v4658 = vrot.slane %v1037, 7
    %v4659 = vrot.slane %v4658, 2
    %v4660 = vrot.slane %v1085, 7
    %v4661 = vrot.slane %v4660, 2
    %v4662 = vrot.slane %v1133, 7
    %v4663 = vrot.slane %v4662, 2
    %v4664 = vrot.slane %v1181, 7
    %v4665 = vrot.slane %v4664, 2
    %v4666 = vrot.slane %v1229, 7
    %v4667 = vrot.slane %v4666, 2
    %v4668 = vrot.slane %v1277, 7
    %v4669 = vrot.slane %v4668, 2
    %v4670 = vrot.slane %v1325, 7
    %v4671 = vrot.slane %v4670, 2
    %v4672 = vrot.slane %v494, 7
    %v4673 = vrot.slane %v4672, 2
    %v4674 = vrot.slane %v1039, 7
    %v4675 = vrot.slane %v4674, 2
    %v4676 = vrot.slane %v1087, 7
    %v4677 = vrot.slane %v4676, 2
    %v4678 = vrot.slane %v1135, 7
    %v4679 = vrot.slane %v4678, 2
    %v4680 = vrot.slane %v1183, 7
    %v4681 = vrot.slane %v4680, 2
    %v4682 = vrot.slane %v1231, 7
    %v4683 = vrot.slane %v4682, 2
    %v4684 = vrot.slane %v1279, 7
    %v4685 = vrot.slane %v4684, 2
    %v4686 = vrot.slane %v1327, 7
    %v4687 = vrot.slane %v4686, 2
    %v4688 = vrot.slane %v495, 7
    %v4689 = vrot.slane %v4688, 2
    %v4690 = vrot.slane %v1041, 7
    %v4691 = vrot.slane %v4690, 2
    %v4692 = vrot.slane %v1089, 7
    %v4693 = vrot.slane %v4692, 2
    %v4694 = vrot.slane %v1137, 7
    %v4695 = vrot.slane %v4694, 2
    %v4696 = vrot.slane %v1185, 7
    %v4697 = vrot.slane %v4696, 2
    %v4698 = vrot.slane %v1233, 7
    %v4699 = vrot.slane %v4698, 2
    %v4700 = vrot.slane %v1281, 7
    %v4701 = vrot.slane %v4700, 2
    %v4702 = vrot.slane %v1329, 7
    %v4703 = vrot.slane %v4702, 2
    %v4704 = vrot.slane %v445, 7
    %v4705 = vrot.slane %v4704, 2
    %v4706 = vrot.slane %v1043, 7
    %v4707 = vrot.slane %v4706, 2
    %v4708 = vrot.slane %v1091, 7
    %v4709 = vrot.slane %v4708, 2
    %v4710 = vrot.slane %v1139, 7
    %v4711 = vrot.slane %v4710, 2
    %v4712 = vrot.slane %v1187, 7
    %v4713 = vrot.slane %v4712, 2
    %v4714 = vrot.slane %v1235, 7
    %v4715 = vrot.slane %v4714, 2
    %v4716 = vrot.slane %v1283, 7
    %v4717 = vrot.slane %v4716, 2
    %v4718 = vrot.slane %v1331, 7
    %v4719 = vrot.slane %v4718, 2
    %v4720 = vrot.slane %v496, 7
    %v4721 = vrot.slane %v4720, 2
    %v4722 = vrot.slane %v1045, 7
    %v4723 = vrot.slane %v4722, 2
    %v4724 = vrot.slane %v1093, 7
    %v4725 = vrot.slane %v4724, 2
    %v4726 = vrot.slane %v1141, 7
    %v4727 = vrot.slane %v4726, 2
    %v4728 = vrot.slane %v1189, 7
    %v4729 = vrot.slane %v4728, 2
    %v4730 = vrot.slane %v1237, 7
    %v4731 = vrot.slane %v4730, 2
    %v4732 = vrot.slane %v1285, 7
    %v4733 = vrot.slane %v4732, 2
    %v4734 = vrot.slane %v1333, 7
    %v4735 = vrot.slane %v4734, 2
    %v4736 = vrot.slane %v497, 7
    %v4737 = vrot.slane %v4736, 2
    %v4738 = vrot.slane %v1047, 7
    %v4739 = vrot.slane %v4738, 2
    %v4740 = vrot.slane %v1095, 7
    %v4741 = vrot.slane %v4740, 2
    %v4742 = vrot.slane %v1143, 7
    %v4743 = vrot.slane %v4742, 2
    %v4744 = vrot.slane %v1191, 7
    %v4745 = vrot.slane %v4744, 2
    %v4746 = vrot.slane %v1239, 7
    %v4747 = vrot.slane %v4746, 2
    %v4748 = vrot.slane %v1287, 7
    %v4749 = vrot.slane %v4748, 2
    %v4750 = vrot.slane %v1335, 7
    %v4751 = vrot.slane %v4750, 2
    %v4752 = vrot.slane %v498, 7
    %v4753 = vrot.slane %v4752, 2
    %v4754 = vrot.slane %v1049, 7
    %v4755 = vrot.slane %v4754, 2
    %v4756 = vrot.slane %v1097, 7
    %v4757 = vrot.slane %v4756, 2
    %v4758 = vrot.slane %v1145, 7
    %v4759 = vrot.slane %v4758, 2
    %v4760 = vrot.slane %v1193, 7
    %v4761 = vrot.slane %v4760, 2
    %v4762 = vrot.slane %v1241, 7
    %v4763 = vrot.slane %v4762, 2
    %v4764 = vrot.slane %v1289, 7
    %v4765 = vrot.slane %v4764, 2
    %v4766 = vrot.slane %v1337, 7
    %v4767 = vrot.slane %v4766, 2
    %v4768 = vrot.slane %v448, 7
    %v4769 = vrot.slane %v4768, 2
    %v4770 = vrot.slane %v1051, 7
    %v4771 = vrot.slane %v4770, 2
    %v4772 = vrot.slane %v1099, 7
    %v4773 = vrot.slane %v4772, 2
    %v4774 = vrot.slane %v1147, 7
    %v4775 = vrot.slane %v4774, 2
    %v4776 = vrot.slane %v1195, 7
    %v4777 = vrot.slane %v4776, 2
    %v4778 = vrot.slane %v1243, 7
    %v4779 = vrot.slane %v4778, 2
    %v4780 = vrot.slane %v1291, 7
    %v4781 = vrot.slane %v4780, 2
    %v4782 = vrot.slane %v1339, 7
    %v4783 = vrot.slane %v4782, 2
    %v4784 = vrot.slane %v499, 7
    %v4785 = vrot.slane %v4784, 2
    %v4786 = vrot.slane %v1053, 7
    %v4787 = vrot.slane %v4786, 2
    %v4788 = vrot.slane %v1101, 7
    %v4789 = vrot.slane %v4788, 2
    %v4790 = vrot.slane %v1149, 7
    %v4791 = vrot.slane %v4790, 2
    %v4792 = vrot.slane %v1197, 7
    %v4793 = vrot.slane %v4792, 2
    %v4794 = vrot.slane %v1245, 7
    %v4795 = vrot.slane %v4794, 2
    %v4796 = vrot.slane %v1293, 7
    %v4797 = vrot.slane %v4796, 2
    %v4798 = vrot.slane %v1341, 7
    %v4799 = vrot.slane %v4798, 2
    %v4800 = vrot.slane %v500, 7
    %v4801 = vrot.slane %v4800, 2
    %v4802 = vrot.slane %v1055, 7
    %v4803 = vrot.slane %v4802, 2
    %v4804 = vrot.slane %v1103, 7
    %v4805 = vrot.slane %v4804, 2
    %v4806 = vrot.slane %v1151, 7
    %v4807 = vrot.slane %v4806, 2
    %v4808 = vrot.slane %v1199, 7
    %v4809 = vrot.slane %v4808, 2
    %v4810 = vrot.slane %v1247, 7
    %v4811 = vrot.slane %v4810, 2
    %v4812 = vrot.slane %v1295, 7
    %v4813 = vrot.slane %v4812, 2
    %v4814 = vrot.slane %v1343, 7
    %v4815 = vrot.slane %v4814, 2
    %v4816 = vrot.slane %v501, 7
    %v4817 = vrot.slane %v4816, 2
    %v4818 = vrot.slane %v1057, 7
    %v4819 = vrot.slane %v4818, 2
    %v4820 = vrot.slane %v1105, 7
    %v4821 = vrot.slane %v4820, 2
    %v4822 = vrot.slane %v1153, 7
    %v4823 = vrot.slane %v4822, 2
    %v4824 = vrot.slane %v1201, 7
    %v4825 = vrot.slane %v4824, 2
    %v4826 = vrot.slane %v1249, 7
    %v4827 = vrot.slane %v4826, 2
    %v4828 = vrot.slane %v1297, 7
    %v4829 = vrot.slane %v4828, 2
    %v4830 = vrot.slane %v1345, 7
    %v4831 = vrot.slane %v4830, 2
    %v4832 = vrot.slane %v450, 7
    %v4833 = vrot.slane %v4832, 2
    %v4834 = vrot.slane %v1059, 7
    %v4835 = vrot.slane %v4834, 2
    %v4836 = vrot.slane %v1107, 7
    %v4837 = vrot.slane %v4836, 2
    %v4838 = vrot.slane %v1155, 7
    %v4839 = vrot.slane %v4838, 2
    %v4840 = vrot.slane %v1203, 7
    %v4841 = vrot.slane %v4840, 2
    %v4842 = vrot.slane %v1251, 7
    %v4843 = vrot.slane %v4842, 2
    %v4844 = vrot.slane %v1299, 7
    %v4845 = vrot.slane %v4844, 2
    %v4846 = vrot.slane %v1347, 7
    %v4847 = vrot.slane %v4846, 2
    %v4848 = vrot.slane %v502, 7
    %v4849 = vrot.slane %v4848, 2
    %v4850 = vrot.slane %v1061, 7
    %v4851 = vrot.slane %v4850, 2
    %v4852 = vrot.slane %v1109, 7
    %v4853 = vrot.slane %v4852, 2
    %v4854 = vrot.slane %v1157, 7
    %v4855 = vrot.slane %v4854, 2
    %v4856 = vrot.slane %v1205, 7
    %v4857 = vrot.slane %v4856, 2
    %v4858 = vrot.slane %v1253, 7
    %v4859 = vrot.slane %v4858, 2
    %v4860 = vrot.slane %v1301, 7
    %v4861 = vrot.slane %v4860, 2
    %v4862 = vrot.slane %v1349, 7
    %v4863 = vrot.slane %v4862, 2
    %v4864 = vrot.slane %v503, 7
    %v4865 = vrot.slane %v4864, 2
    %v4866 = vrot.slane %v1063, 7
    %v4867 = vrot.slane %v4866, 2
    %v4868 = vrot.slane %v1111, 7
    %v4869 = vrot.slane %v4868, 2
    %v4870 = vrot.slane %v1159, 7
    %v4871 = vrot.slane %v4870, 2
    %v4872 = vrot.slane %v1207, 7
    %v4873 = vrot.slane %v4872, 2
    %v4874 = vrot.slane %v1255, 7
    %v4875 = vrot.slane %v4874, 2
    %v4876 = vrot.slane %v1303, 7
    %v4877 = vrot.slane %v4876, 2
    %v4878 = vrot.slane %v1351, 7
    %v4879 = vrot.slane %v4878, 2
    %v4880 = vrot.slane %v504, 7
    %v4881 = vrot.slane %v4880, 2
    %v4882 = vrot.slane %v1065, 7
    %v4883 = vrot.slane %v4882, 2
    %v4884 = vrot.slane %v1113, 7
    %v4885 = vrot.slane %v4884, 2
    %v4886 = vrot.slane %v1161, 7
    %v4887 = vrot.slane %v4886, 2
    %v4888 = vrot.slane %v1209, 7
    %v4889 = vrot.slane %v4888, 2
    %v4890 = vrot.slane %v1257, 7
    %v4891 = vrot.slane %v4890, 2
    %v4892 = vrot.slane %v1305, 7
    %v4893 = vrot.slane %v4892, 2
    %v4894 = vrot.slane %v1353, 7
    %v4895 = vrot.slane %v4894, 2
    %v5024 = vrot.slane %v4643, 4
    %v5025 = vsel %vm714, %v5024, %v4641
    %v5027 = vunpack.c.l.s4 1934713408
    %v5028 = vunpack.c.0.s8 %v5027
    %v5029 = vperm.slane %v5025, %v5028
    %v5030 = vrot.slane %v4647, 4
    %v5031 = vsel %vm714, %v5030, %v4645
    %v5033 = vunpack.c.l.s4 1934713408
    %v5034 = vunpack.c.0.s8 %v5033
    %v5035 = vperm.slane %v5031, %v5034
    %v5036 = vrot.slane %v4651, 4
    %v5037 = vsel %vm714, %v5036, %v4649
    %v5039 = vunpack.c.l.s4 1934713408
    %v5040 = vunpack.c.0.s8 %v5039
    %v5041 = vperm.slane %v5037, %v5040
    %v5042 = vrot.slane %v4655, 4
    %v5043 = vsel %vm714, %v5042, %v4653
    %v5045 = vunpack.c.l.s4 1934713408
    %v5046 = vunpack.c.0.s8 %v5045
    %v5047 = vperm.slane %v5043, %v5046
    %v5048 = vrot.slane %v4659, 4
    %v5049 = vsel %vm714, %v5048, %v4657
    %v5051 = vunpack.c.l.s4 1934713408
    %v5052 = vunpack.c.0.s8 %v5051
    %v5053 = vperm.slane %v5049, %v5052
    %v5054 = vrot.slane %v4663, 4
    %v5055 = vsel %vm714, %v5054, %v4661
    %v5057 = vunpack.c.l.s4 1934713408
    %v5058 = vunpack.c.0.s8 %v5057
    %v5059 = vperm.slane %v5055, %v5058
    %v5060 = vrot.slane %v4667, 4
    %v5061 = vsel %vm714, %v5060, %v4665
    %v5063 = vunpack.c.l.s4 1934713408
    %v5064 = vunpack.c.0.s8 %v5063
    %v5065 = vperm.slane %v5061, %v5064
    %v5066 = vrot.slane %v4671, 4
    %v5067 = vsel %vm714, %v5066, %v4669
    %v5069 = vunpack.c.l.s4 1934713408
    %v5070 = vunpack.c.0.s8 %v5069
    %v5071 = vperm.slane %v5067, %v5070
    %v5072 = vrot.slane %v4675, 4
    %v5073 = vsel %vm714, %v5072, %v4673
    %v5075 = vunpack.c.l.s4 1934713408
    %v5076 = vunpack.c.0.s8 %v5075
    %v5077 = vperm.slane %v5073, %v5076
    %v5078 = vrot.slane %v4679, 4
    %v5079 = vsel %vm714, %v5078, %v4677
    %v5081 = vunpack.c.l.s4 1934713408
    %v5082 = vunpack.c.0.s8 %v5081
    %v5083 = vperm.slane %v5079, %v5082
    %v5084 = vrot.slane %v4683, 4
    %v5085 = vsel %vm714, %v5084, %v4681
    %v5087 = vunpack.c.l.s4 1934713408
    %v5088 = vunpack.c.0.s8 %v5087
    %v5089 = vperm.slane %v5085, %v5088
    %v5090 = vrot.slane %v4687, 4
    %v5091 = vsel %vm714, %v5090, %v4685
    %v5093 = vunpack.c.l.s4 1934713408
    %v5094 = vunpack.c.0.s8 %v5093
    %v5095 = vperm.slane %v5091, %v5094
    %v5096 = vrot.slane %v4691, 4
    %v5097 = vsel %vm714, %v5096, %v4689
    %v5099 = vunpack.c.l.s4 1934713408
    %v5100 = vunpack.c.0.s8 %v5099
    %v5101 = vperm.slane %v5097, %v5100
    %v5102 = vrot.slane %v4695, 4
    %v5103 = vsel %vm714, %v5102, %v4693
    %v5105 = vunpack.c.l.s4 1934713408
    %v5106 = vunpack.c.0.s8 %v5105
    %v5107 = vperm.slane %v5103, %v5106
    %v5108 = vrot.slane %v4699, 4
    %v5109 = vsel %vm714, %v5108, %v4697
    %v5111 = vunpack.c.l.s4 1934713408
    %v5112 = vunpack.c.0.s8 %v5111
    %v5113 = vperm.slane %v5109, %v5112
    %v5114 = vrot.slane %v4703, 4
    %v5115 = vsel %vm714, %v5114, %v4701
    %v5117 = vunpack.c.l.s4 1934713408
    %v5118 = vunpack.c.0.s8 %v5117
    %v5119 = vperm.slane %v5115, %v5118
    %v5120 = vrot.slane %v4707, 4
    %v5121 = vsel %vm714, %v5120, %v4705
    %v5123 = vunpack.c.l.s4 1934713408
    %v5124 = vunpack.c.0.s8 %v5123
    %v5125 = vperm.slane %v5121, %v5124
    %v5126 = vrot.slane %v4711, 4
    %v5127 = vsel %vm714, %v5126, %v4709
    %v5129 = vunpack.c.l.s4 1934713408
    %v5130 = vunpack.c.0.s8 %v5129
    %v5131 = vperm.slane %v5127, %v5130
    %v5132 = vrot.slane %v4715, 4
    %v5133 = vsel %vm714, %v5132, %v4713
    %v5135 = vunpack.c.l.s4 1934713408
    %v5136 = vunpack.c.0.s8 %v5135
    %v5137 = vperm.slane %v5133, %v5136
    %v5138 = vrot.slane %v4719, 4
    %v5139 = vsel %vm714, %v5138, %v4717
    %v5141 = vunpack.c.l.s4 1934713408
    %v5142 = vunpack.c.0.s8 %v5141
    %v5143 = vperm.slane %v5139, %v5142
    %v5144 = vrot.slane %v4723, 4
    %v5145 = vsel %vm714, %v5144, %v4721
    %v5147 = vunpack.c.l.s4 1934713408
    %v5148 = vunpack.c.0.s8 %v5147
    %v5149 = vperm.slane %v5145, %v5148
    %v5150 = vrot.slane %v4727, 4
    %v5151 = vsel %vm714, %v5150, %v4725
    %v5153 = vunpack.c.l.s4 1934713408
    %v5154 = vunpack.c.0.s8 %v5153
    %v5155 = vperm.slane %v5151, %v5154
    %v5156 = vrot.slane %v4731, 4
    %v5157 = vsel %vm714, %v5156, %v4729
    %v5159 = vunpack.c.l.s4 1934713408
    %v5160 = vunpack.c.0.s8 %v5159
    %v5161 = vperm.slane %v5157, %v5160
    %v5162 = vrot.slane %v4735, 4
    %v5163 = vsel %vm714, %v5162, %v4733
    %v5165 = vunpack.c.l.s4 1934713408
    %v5166 = vunpack.c.0.s8 %v5165
    %v5167 = vperm.slane %v5163, %v5166
    %v5168 = vrot.slane %v4739, 4
    %v5169 = vsel %vm714, %v5168, %v4737
    %v5171 = vunpack.c.l.s4 1934713408
    %v5172 = vunpack.c.0.s8 %v5171
    %v5173 = vperm.slane %v5169, %v5172
    %v5174 = vrot.slane %v4743, 4
    %v5175 = vsel %vm714, %v5174, %v4741
    %v5177 = vunpack.c.l.s4 1934713408
    %v5178 = vunpack.c.0.s8 %v5177
    %v5179 = vperm.slane %v5175, %v5178
    %v5180 = vrot.slane %v4747, 4
    %v5181 = vsel %vm714, %v5180, %v4745
    %v5183 = vunpack.c.l.s4 1934713408
    %v5184 = vunpack.c.0.s8 %v5183
    %v5185 = vperm.slane %v5181, %v5184
    %v5186 = vrot.slane %v4751, 4
    %v5187 = vsel %vm714, %v5186, %v4749
    %v5189 = vunpack.c.l.s4 1934713408
    %v5190 = vunpack.c.0.s8 %v5189
    %v5191 = vperm.slane %v5187, %v5190
    %v5192 = vrot.slane %v4755, 4
    %v5193 = vsel %vm714, %v5192, %v4753
    %v5195 = vunpack.c.l.s4 1934713408
    %v5196 = vunpack.c.0.s8 %v5195
    %v5197 = vperm.slane %v5193, %v5196
    %v5198 = vrot.slane %v4759, 4
    %v5199 = vsel %vm714, %v5198, %v4757
    %v5201 = vunpack.c.l.s4 1934713408
    %v5202 = vunpack.c.0.s8 %v5201
    %v5203 = vperm.slane %v5199, %v5202
    %v5204 = vrot.slane %v4763, 4
    %v5205 = vsel %vm714, %v5204, %v4761
    %v5207 = vunpack.c.l.s4 1934713408
    %v5208 = vunpack.c.0.s8 %v5207
    %v5209 = vperm.slane %v5205, %v5208
    %v5210 = vrot.slane %v4767, 4
    %v5211 = vsel %vm714, %v5210, %v4765
    %v5213 = vunpack.c.l.s4 1934713408
    %v5214 = vunpack.c.0.s8 %v5213
    %v5215 = vperm.slane %v5211, %v5214
    %v5216 = vrot.slane %v4771, 4
    %v5217 = vsel %vm714, %v5216, %v4769
    %v5219 = vunpack.c.l.s4 1934713408
    %v5220 = vunpack.c.0.s8 %v5219
    %v5221 = vperm.slane %v5217, %v5220
    %v5222 = vrot.slane %v4775, 4
    %v5223 = vsel %vm714, %v5222, %v4773
    %v5225 = vunpack.c.l.s4 1934713408
    %v5226 = vunpack.c.0.s8 %v5225
    %v5227 = vperm.slane %v5223, %v5226
    %v5228 = vrot.slane %v4779, 4
    %v5229 = vsel %vm714, %v5228, %v4777
    %v5231 = vunpack.c.l.s4 1934713408
    %v5232 = vunpack.c.0.s8 %v5231
    %v5233 = vperm.slane %v5229, %v5232
    %v5234 = vrot.slane %v4783, 4
    %v5235 = vsel %vm714, %v5234, %v4781
    %v5237 = vunpack.c.l.s4 1934713408
    %v5238 = vunpack.c.0.s8 %v5237
    %v5239 = vperm.slane %v5235, %v5238
    %v5240 = vrot.slane %v4787, 4
    %v5241 = vsel %vm714, %v5240, %v4785
    %v5243 = vunpack.c.l.s4 1934713408
    %v5244 = vunpack.c.0.s8 %v5243
    %v5245 = vperm.slane %v5241, %v5244
    %v5246 = vrot.slane %v4791, 4
    %v5247 = vsel %vm714, %v5246, %v4789
    %v5249 = vunpack.c.l.s4 1934713408
    %v5250 = vunpack.c.0.s8 %v5249
    %v5251 = vperm.slane %v5247, %v5250
    %v5252 = vrot.slane %v4795, 4
    %v5253 = vsel %vm714, %v5252, %v4793
    %v5255 = vunpack.c.l.s4 1934713408
    %v5256 = vunpack.c.0.s8 %v5255
    %v5257 = vperm.slane %v5253, %v5256
    %v5258 = vrot.slane %v4799, 4
    %v5259 = vsel %vm714, %v5258, %v4797
    %v5261 = vunpack.c.l.s4 1934713408
    %v5262 = vunpack.c.0.s8 %v5261
    %v5263 = vperm.slane %v5259, %v5262
    %v5264 = vrot.slane %v4803, 4
    %v5265 = vsel %vm714, %v5264, %v4801
    %v5267 = vunpack.c.l.s4 1934713408
    %v5268 = vunpack.c.0.s8 %v5267
    %v5269 = vperm.slane %v5265, %v5268
    %v5270 = vrot.slane %v4807, 4
    %v5271 = vsel %vm714, %v5270, %v4805
    %v5273 = vunpack.c.l.s4 1934713408
    %v5274 = vunpack.c.0.s8 %v5273
    %v5275 = vperm.slane %v5271, %v5274
    %v5276 = vrot.slane %v4811, 4
    %v5277 = vsel %vm714, %v5276, %v4809
    %v5279 = vunpack.c.l.s4 1934713408
    %v5280 = vunpack.c.0.s8 %v5279
    %v5281 = vperm.slane %v5277, %v5280
    %v5282 = vrot.slane %v4815, 4
    %v5283 = vsel %vm714, %v5282, %v4813
    %v5285 = vunpack.c.l.s4 1934713408
    %v5286 = vunpack.c.0.s8 %v5285
    %v5287 = vperm.slane %v5283, %v5286
    %v5288 = vrot.slane %v4819, 4
    %v5289 = vsel %vm714, %v5288, %v4817
    %v5291 = vunpack.c.l.s4 1934713408
    %v5292 = vunpack.c.0.s8 %v5291
    %v5293 = vperm.slane %v5289, %v5292
    %v5294 = vrot.slane %v4823, 4
    %v5295 = vsel %vm714, %v5294, %v4821
    %v5297 = vunpack.c.l.s4 1934713408
    %v5298 = vunpack.c.0.s8 %v5297
    %v5299 = vperm.slane %v5295, %v5298
    %v5300 = vrot.slane %v4827, 4
    %v5301 = vsel %vm714, %v5300, %v4825
    %v5303 = vunpack.c.l.s4 1934713408
    %v5304 = vunpack.c.0.s8 %v5303
    %v5305 = vperm.slane %v5301, %v5304
    %v5306 = vrot.slane %v4831, 4
    %v5307 = vsel %vm714, %v5306, %v4829
    %v5309 = vunpack.c.l.s4 1934713408
    %v5310 = vunpack.c.0.s8 %v5309
    %v5311 = vperm.slane %v5307, %v5310
    %v5312 = vrot.slane %v4835, 4
    %v5313 = vsel %vm714, %v5312, %v4833
    %v5315 = vunpack.c.l.s4 1934713408
    %v5316 = vunpack.c.0.s8 %v5315
    %v5317 = vperm.slane %v5313, %v5316
    %v5318 = vrot.slane %v4839, 4
    %v5319 = vsel %vm714, %v5318, %v4837
    %v5321 = vunpack.c.l.s4 1934713408
    %v5322 = vunpack.c.0.s8 %v5321
    %v5323 = vperm.slane %v5319, %v5322
    %v5324 = vrot.slane %v4843, 4
    %v5325 = vsel %vm714, %v5324, %v4841
    %v5327 = vunpack.c.l.s4 1934713408
    %v5328 = vunpack.c.0.s8 %v5327
    %v5329 = vperm.slane %v5325, %v5328
    %v5330 = vrot.slane %v4847, 4
    %v5331 = vsel %vm714, %v5330, %v4845
    %v5333 = vunpack.c.l.s4 1934713408
    %v5334 = vunpack.c.0.s8 %v5333
    %v5335 = vperm.slane %v5331, %v5334
    %v5336 = vrot.slane %v4851, 4
    %v5337 = vsel %vm714, %v5336, %v4849
    %v5339 = vunpack.c.l.s4 1934713408
    %v5340 = vunpack.c.0.s8 %v5339
    %v5341 = vperm.slane %v5337, %v5340
    %v5342 = vrot.slane %v4855, 4
    %v5343 = vsel %vm714, %v5342, %v4853
    %v5345 = vunpack.c.l.s4 1934713408
    %v5346 = vunpack.c.0.s8 %v5345
    %v5347 = vperm.slane %v5343, %v5346
    %v5348 = vrot.slane %v4859, 4
    %v5349 = vsel %vm714, %v5348, %v4857
    %v5351 = vunpack.c.l.s4 1934713408
    %v5352 = vunpack.c.0.s8 %v5351
    %v5353 = vperm.slane %v5349, %v5352
    %v5354 = vrot.slane %v4863, 4
    %v5355 = vsel %vm714, %v5354, %v4861
    %v5357 = vunpack.c.l.s4 1934713408
    %v5358 = vunpack.c.0.s8 %v5357
    %v5359 = vperm.slane %v5355, %v5358
    %v5360 = vrot.slane %v4867, 4
    %v5361 = vsel %vm714, %v5360, %v4865
    %v5363 = vunpack.c.l.s4 1934713408
    %v5364 = vunpack.c.0.s8 %v5363
    %v5365 = vperm.slane %v5361, %v5364
    %v5366 = vrot.slane %v4871, 4
    %v5367 = vsel %vm714, %v5366, %v4869
    %v5369 = vunpack.c.l.s4 1934713408
    %v5370 = vunpack.c.0.s8 %v5369
    %v5371 = vperm.slane %v5367, %v5370
    %v5372 = vrot.slane %v4875, 4
    %v5373 = vsel %vm714, %v5372, %v4873
    %v5375 = vunpack.c.l.s4 1934713408
    %v5376 = vunpack.c.0.s8 %v5375
    %v5377 = vperm.slane %v5373, %v5376
    %v5378 = vrot.slane %v4879, 4
    %v5379 = vsel %vm714, %v5378, %v4877
    %v5381 = vunpack.c.l.s4 1934713408
    %v5382 = vunpack.c.0.s8 %v5381
    %v5383 = vperm.slane %v5379, %v5382
    %v5384 = vrot.slane %v4883, 4
    %v5385 = vsel %vm714, %v5384, %v4881
    %v5387 = vunpack.c.l.s4 1934713408
    %v5388 = vunpack.c.0.s8 %v5387
    %v5389 = vperm.slane %v5385, %v5388
    %v5390 = vrot.slane %v4887, 4
    %v5391 = vsel %vm714, %v5390, %v4885
    %v5393 = vunpack.c.l.s4 1934713408
    %v5394 = vunpack.c.0.s8 %v5393
    %v5395 = vperm.slane %v5391, %v5394
    %v5396 = vrot.slane %v4891, 4
    %v5397 = vsel %vm714, %v5396, %v4889
    %v5399 = vunpack.c.l.s4 1934713408
    %v5400 = vunpack.c.0.s8 %v5399
    %v5401 = vperm.slane %v5397, %v5400
    %v5402 = vrot.slane %v4895, 4
    %v5403 = vsel %vm714, %v5402, %v4893
    %v5405 = vunpack.c.l.s4 1934713408
    %v5406 = vunpack.c.0.s8 %v5405
    %v5407 = vperm.slane %v5403, %v5406
    %v5408 = vrot.slane %v5053, 4
    %v5409 = vsel %vm714, %v5408, %v5029
    %v5411 = vunpack.c.l.s4 1934713408
    %v5412 = vunpack.c.0.s8 %v5411
    %v5413 = vperm.slane %v5409, %v5412
    %v5414 = vrot.slane %v5413, 4
    %v5415 = vsel %vm714, 0.0, %v5414
    %v5416 = vrot.slane %v5101, 4
    %v5417 = vsel %vm714, %v5416, %v5077
    %v5419 = vunpack.c.l.s4 1934713408
    %v5420 = vunpack.c.0.s8 %v5419
    %v5421 = vperm.slane %v5417, %v5420
    %v5422 = vrot.slane %v5421, 4
    %v5423 = vsel %vm714, 0.0, %v5422
    %v5424 = vrot.slane %v5149, 4
    %v5425 = vsel %vm714, %v5424, %v5125
    %v5427 = vunpack.c.l.s4 1934713408
    %v5428 = vunpack.c.0.s8 %v5427
    %v5429 = vperm.slane %v5425, %v5428
    %v5430 = vrot.slane %v5429, 4
    %v5431 = vsel %vm714, 0.0, %v5430
    %v5432 = vrot.slane %v5197, 4
    %v5433 = vsel %vm714, %v5432, %v5173
    %v5435 = vunpack.c.l.s4 1934713408
    %v5436 = vunpack.c.0.s8 %v5435
    %v5437 = vperm.slane %v5433, %v5436
    %v5438 = vrot.slane %v5437, 4
    %v5439 = vsel %vm714, 0.0, %v5438
    %v5440 = vrot.slane %v5245, 4
    %v5441 = vsel %vm714, %v5440, %v5221
    %v5443 = vunpack.c.l.s4 1934713408
    %v5444 = vunpack.c.0.s8 %v5443
    %v5445 = vperm.slane %v5441, %v5444
    %v5446 = vrot.slane %v5445, 4
    %v5447 = vsel %vm714, 0.0, %v5446
    %v5448 = vrot.slane %v5293, 4
    %v5449 = vsel %vm714, %v5448, %v5269
    %v5451 = vunpack.c.l.s4 1934713408
    %v5452 = vunpack.c.0.s8 %v5451
    %v5453 = vperm.slane %v5449, %v5452
    %v5454 = vrot.slane %v5453, 4
    %v5455 = vsel %vm714, 0.0, %v5454
    %v5456 = vrot.slane %v5341, 4
    %v5457 = vsel %vm714, %v5456, %v5317
    %v5459 = vunpack.c.l.s4 1934713408
    %v5460 = vunpack.c.0.s8 %v5459
    %v5461 = vperm.slane %v5457, %v5460
    %v5462 = vrot.slane %v5461, 4
    %v5463 = vsel %vm714, 0.0, %v5462
    %v5464 = vrot.slane %v5389, 4
    %v5465 = vsel %vm714, %v5464, %v5365
    %v5467 = vunpack.c.l.s4 1934713408
    %v5468 = vunpack.c.0.s8 %v5467
    %v5469 = vperm.slane %v5465, %v5468
    %v5470 = vrot.slane %v5469, 4
    %v5471 = vsel %vm714, 0.0, %v5470
    %v5472 = vrot.slane %v5059, 4
    %v5473 = vsel %vm714, %v5472, %v5035
    %v5475 = vunpack.c.l.s4 1934713408
    %v5476 = vunpack.c.0.s8 %v5475
    %v5477 = vperm.slane %v5473, %v5476
    %v5478 = vrot.slane %v5477, 4
    %v5479 = vsel %vm714, 0.0, %v5478
    %v5480 = vrot.slane %v5107, 4
    %v5481 = vsel %vm714, %v5480, %v5083
    %v5483 = vunpack.c.l.s4 1934713408
    %v5484 = vunpack.c.0.s8 %v5483
    %v5485 = vperm.slane %v5481, %v5484
    %v5486 = vrot.slane %v5485, 4
    %v5487 = vsel %vm714, 0.0, %v5486
    %v5488 = vrot.slane %v5155, 4
    %v5489 = vsel %vm714, %v5488, %v5131
    %v5491 = vunpack.c.l.s4 1934713408
    %v5492 = vunpack.c.0.s8 %v5491
    %v5493 = vperm.slane %v5489, %v5492
    %v5494 = vrot.slane %v5493, 4
    %v5495 = vsel %vm714, 0.0, %v5494
    %v5496 = vrot.slane %v5203, 4
    %v5497 = vsel %vm714, %v5496, %v5179
    %v5499 = vunpack.c.l.s4 1934713408
    %v5500 = vunpack.c.0.s8 %v5499
    %v5501 = vperm.slane %v5497, %v5500
    %v5502 = vrot.slane %v5501, 4
    %v5503 = vsel %vm714, 0.0, %v5502
    %v5504 = vrot.slane %v5251, 4
    %v5505 = vsel %vm714, %v5504, %v5227
    %v5507 = vunpack.c.l.s4 1934713408
    %v5508 = vunpack.c.0.s8 %v5507
    %v5509 = vperm.slane %v5505, %v5508
    %v5510 = vrot.slane %v5509, 4
    %v5511 = vsel %vm714, 0.0, %v5510
    %v5512 = vrot.slane %v5299, 4
    %v5513 = vsel %vm714, %v5512, %v5275
    %v5515 = vunpack.c.l.s4 1934713408
    %v5516 = vunpack.c.0.s8 %v5515
    %v5517 = vperm.slane %v5513, %v5516
    %v5518 = vrot.slane %v5517, 4
    %v5519 = vsel %vm714, 0.0, %v5518
    %v5520 = vrot.slane %v5347, 4
    %v5521 = vsel %vm714, %v5520, %v5323
    %v5523 = vunpack.c.l.s4 1934713408
    %v5524 = vunpack.c.0.s8 %v5523
    %v5525 = vperm.slane %v5521, %v5524
    %v5526 = vrot.slane %v5525, 4
    %v5527 = vsel %vm714, 0.0, %v5526
    %v5528 = vrot.slane %v5395, 4
    %v5529 = vsel %vm714, %v5528, %v5371
    %v5531 = vunpack.c.l.s4 1934713408
    %v5532 = vunpack.c.0.s8 %v5531
    %v5533 = vperm.slane %v5529, %v5532
    %v5534 = vrot.slane %v5533, 4
    %v5535 = vsel %vm714, 0.0, %v5534
    %v5536 = vrot.slane %v5065, 4
    %v5537 = vsel %vm714, %v5536, %v5041
    %v5539 = vunpack.c.l.s4 1934713408
    %v5540 = vunpack.c.0.s8 %v5539
    %v5541 = vperm.slane %v5537, %v5540
    %v5542 = vrot.slane %v5541, 4
    %v5543 = vsel %vm714, 0.0, %v5542
    %v5544 = vrot.slane %v5113, 4
    %v5545 = vsel %vm714, %v5544, %v5089
    %v5547 = vunpack.c.l.s4 1934713408
    %v5548 = vunpack.c.0.s8 %v5547
    %v5549 = vperm.slane %v5545, %v5548
    %v5550 = vrot.slane %v5549, 4
    %v5551 = vsel %vm714, 0.0, %v5550
    %v5552 = vrot.slane %v5161, 4
    %v5553 = vsel %vm714, %v5552, %v5137
    %v5555 = vunpack.c.l.s4 1934713408
    %v5556 = vunpack.c.0.s8 %v5555
    %v5557 = vperm.slane %v5553, %v5556
    %v5558 = vrot.slane %v5557, 4
    %v5559 = vsel %vm714, 0.0, %v5558
    %v5560 = vrot.slane %v5209, 4
    %v5561 = vsel %vm714, %v5560, %v5185
    %v5563 = vunpack.c.l.s4 1934713408
    %v5564 = vunpack.c.0.s8 %v5563
    %v5565 = vperm.slane %v5561, %v5564
    %v5566 = vrot.slane %v5565, 4
    %v5567 = vsel %vm714, 0.0, %v5566
    %v5568 = vrot.slane %v5257, 4
    %v5569 = vsel %vm714, %v5568, %v5233
    %v5571 = vunpack.c.l.s4 1934713408
    %v5572 = vunpack.c.0.s8 %v5571
    %v5573 = vperm.slane %v5569, %v5572
    %v5574 = vrot.slane %v5573, 4
    %v5575 = vsel %vm714, 0.0, %v5574
    %v5576 = vrot.slane %v5305, 4
    %v5577 = vsel %vm714, %v5576, %v5281
    %v5579 = vunpack.c.l.s4 1934713408
    %v5580 = vunpack.c.0.s8 %v5579
    %v5581 = vperm.slane %v5577, %v5580
    %v5582 = vrot.slane %v5581, 4
    %v5583 = vsel %vm714, 0.0, %v5582
    %v5584 = vrot.slane %v5353, 4
    %v5585 = vsel %vm714, %v5584, %v5329
    %v5587 = vunpack.c.l.s4 1934713408
    %v5588 = vunpack.c.0.s8 %v5587
    %v5589 = vperm.slane %v5585, %v5588
    %v5590 = vrot.slane %v5589, 4
    %v5591 = vsel %vm714, 0.0, %v5590
    %v5592 = vrot.slane %v5401, 4
    %v5593 = vsel %vm714, %v5592, %v5377
    %v5595 = vunpack.c.l.s4 1934713408
    %v5596 = vunpack.c.0.s8 %v5595
    %v5597 = vperm.slane %v5593, %v5596
    %v5598 = vrot.slane %v5597, 4
    %v5599 = vsel %vm714, 0.0, %v5598
    %v5600 = vrot.slane %v5071, 4
    %v5601 = vsel %vm714, %v5600, %v5047
    %v5603 = vunpack.c.l.s4 1934713408
    %v5604 = vunpack.c.0.s8 %v5603
    %v5605 = vperm.slane %v5601, %v5604
    %v5606 = vrot.slane %v5605, 4
    %v5607 = vsel %vm714, 0.0, %v5606
    %v5608 = vrot.slane %v5119, 4
    %v5609 = vsel %vm714, %v5608, %v5095
    %v5611 = vunpack.c.l.s4 1934713408
    %v5612 = vunpack.c.0.s8 %v5611
    %v5613 = vperm.slane %v5609, %v5612
    %v5614 = vrot.slane %v5613, 4
    %v5615 = vsel %vm714, 0.0, %v5614
    %v5616 = vrot.slane %v5167, 4
    %v5617 = vsel %vm714, %v5616, %v5143
    %v5619 = vunpack.c.l.s4 1934713408
    %v5620 = vunpack.c.0.s8 %v5619
    %v5621 = vperm.slane %v5617, %v5620
    %v5622 = vrot.slane %v5621, 4
    %v5623 = vsel %vm714, 0.0, %v5622
    %v5624 = vrot.slane %v5215, 4
    %v5625 = vsel %vm714, %v5624, %v5191
    %v5627 = vunpack.c.l.s4 1934713408
    %v5628 = vunpack.c.0.s8 %v5627
    %v5629 = vperm.slane %v5625, %v5628
    %v5630 = vrot.slane %v5629, 4
    %v5631 = vsel %vm714, 0.0, %v5630
    %v5632 = vrot.slane %v5263, 4
    %v5633 = vsel %vm714, %v5632, %v5239
    %v5635 = vunpack.c.l.s4 1934713408
    %v5636 = vunpack.c.0.s8 %v5635
    %v5637 = vperm.slane %v5633, %v5636
    %v5638 = vrot.slane %v5637, 4
    %v5639 = vsel %vm714, 0.0, %v5638
    %v5640 = vrot.slane %v5311, 4
    %v5641 = vsel %vm714, %v5640, %v5287
    %v5643 = vunpack.c.l.s4 1934713408
    %v5644 = vunpack.c.0.s8 %v5643
    %v5645 = vperm.slane %v5641, %v5644
    %v5646 = vrot.slane %v5645, 4
    %v5647 = vsel %vm714, 0.0, %v5646
    %v5648 = vrot.slane %v5359, 4
    %v5649 = vsel %vm714, %v5648, %v5335
    %v5651 = vunpack.c.l.s4 1934713408
    %v5652 = vunpack.c.0.s8 %v5651
    %v5653 = vperm.slane %v5649, %v5652
    %v5654 = vrot.slane %v5653, 4
    %v5655 = vsel %vm714, 0.0, %v5654
    %v5656 = vrot.slane %v5407, 4
    %v5657 = vsel %vm714, %v5656, %v5383
    %v5659 = vunpack.c.l.s4 1934713408
    %v5660 = vunpack.c.0.s8 %v5659
    %v5661 = vperm.slane %v5657, %v5660
    %v5662 = vrot.slane %v5661, 4
    %v5663 = vsel %vm714, 0.0, %v5662
    %v5664 = vrot.slane %v466, 7
    %v5665 = vrot.slane %v5664, 2
    %v5666 = vrot.slane %v2011, 7
    %v5667 = vrot.slane %v5666, 2
    %v5668 = vrot.slane %v2059, 7
    %v5669 = vrot.slane %v5668, 2
    %v5670 = vrot.slane %v2107, 7
    %v5671 = vrot.slane %v5670, 2
    %v5672 = vrot.slane %v2155, 7
    %v5673 = vrot.slane %v5672, 2
    %v5674 = vrot.slane %v2203, 7
    %v5675 = vrot.slane %v5674, 2
    %v5676 = vrot.slane %v2251, 7
    %v5677 = vrot.slane %v5676, 2
    %v5678 = vrot.slane %v2299, 7
    %v5679 = vrot.slane %v5678, 2
    %v5680 = vrot.slane %v521, 7
    %v5681 = vrot.slane %v5680, 2
    %v5682 = vrot.slane %v2013, 7
    %v5683 = vrot.slane %v5682, 2
    %v5684 = vrot.slane %v2061, 7
    %v5685 = vrot.slane %v5684, 2
    %v5686 = vrot.slane %v2109, 7
    %v5687 = vrot.slane %v5686, 2
    %v5688 = vrot.slane %v2157, 7
    %v5689 = vrot.slane %v5688, 2
    %v5690 = vrot.slane %v2205, 7
    %v5691 = vrot.slane %v5690, 2
    %v5692 = vrot.slane %v2253, 7
    %v5693 = vrot.slane %v5692, 2
    %v5694 = vrot.slane %v2301, 7
    %v5695 = vrot.slane %v5694, 2
    %v5696 = vrot.slane %v522, 7
    %v5697 = vrot.slane %v5696, 2
    %v5698 = vrot.slane %v2015, 7
    %v5699 = vrot.slane %v5698, 2
    %v5700 = vrot.slane %v2063, 7
    %v5701 = vrot.slane %v5700, 2
    %v5702 = vrot.slane %v2111, 7
    %v5703 = vrot.slane %v5702, 2
    %v5704 = vrot.slane %v2159, 7
    %v5705 = vrot.slane %v5704, 2
    %v5706 = vrot.slane %v2207, 7
    %v5707 = vrot.slane %v5706, 2
    %v5708 = vrot.slane %v2255, 7
    %v5709 = vrot.slane %v5708, 2
    %v5710 = vrot.slane %v2303, 7
    %v5711 = vrot.slane %v5710, 2
    %v5712 = vrot.slane %v523, 7
    %v5713 = vrot.slane %v5712, 2
    %v5714 = vrot.slane %v2017, 7
    %v5715 = vrot.slane %v5714, 2
    %v5716 = vrot.slane %v2065, 7
    %v5717 = vrot.slane %v5716, 2
    %v5718 = vrot.slane %v2113, 7
    %v5719 = vrot.slane %v5718, 2
    %v5720 = vrot.slane %v2161, 7
    %v5721 = vrot.slane %v5720, 2
    %v5722 = vrot.slane %v2209, 7
    %v5723 = vrot.slane %v5722, 2
    %v5724 = vrot.slane %v2257, 7
    %v5725 = vrot.slane %v5724, 2
    %v5726 = vrot.slane %v2305, 7
    %v5727 = vrot.slane %v5726, 2
    %v5728 = vrot.slane %v468, 7
    %v5729 = vrot.slane %v5728, 2
    %v5730 = vrot.slane %v2019, 7
    %v5731 = vrot.slane %v5730, 2
    %v5732 = vrot.slane %v2067, 7
    %v5733 = vrot.slane %v5732, 2
    %v5734 = vrot.slane %v2115, 7
    %v5735 = vrot.slane %v5734, 2
    %v5736 = vrot.slane %v2163, 7
    %v5737 = vrot.slane %v5736, 2
    %v5738 = vrot.slane %v2211, 7
    %v5739 = vrot.slane %v5738, 2
    %v5740 = vrot.slane %v2259, 7
    %v5741 = vrot.slane %v5740, 2
    %v5742 = vrot.slane %v2307, 7
    %v5743 = vrot.slane %v5742, 2
    %v5744 = vrot.slane %v524, 7
    %v5745 = vrot.slane %v5744, 2
    %v5746 = vrot.slane %v2021, 7
    %v5747 = vrot.slane %v5746, 2
    %v5748 = vrot.slane %v2069, 7
    %v5749 = vrot.slane %v5748, 2
    %v5750 = vrot.slane %v2117, 7
    %v5751 = vrot.slane %v5750, 2
    %v5752 = vrot.slane %v2165, 7
    %v5753 = vrot.slane %v5752, 2
    %v5754 = vrot.slane %v2213, 7
    %v5755 = vrot.slane %v5754, 2
    %v5756 = vrot.slane %v2261, 7
    %v5757 = vrot.slane %v5756, 2
    %v5758 = vrot.slane %v2309, 7
    %v5759 = vrot.slane %v5758, 2
    %v5760 = vrot.slane %v525, 7
    %v5761 = vrot.slane %v5760, 2
    %v5762 = vrot.slane %v2023, 7
    %v5763 = vrot.slane %v5762, 2
    %v5764 = vrot.slane %v2071, 7
    %v5765 = vrot.slane %v5764, 2
    %v5766 = vrot.slane %v2119, 7
    %v5767 = vrot.slane %v5766, 2
    %v5768 = vrot.slane %v2167, 7
    %v5769 = vrot.slane %v5768, 2
    %v5770 = vrot.slane %v2215, 7
    %v5771 = vrot.slane %v5770, 2
    %v5772 = vrot.slane %v2263, 7
    %v5773 = vrot.slane %v5772, 2
    %v5774 = vrot.slane %v2311, 7
    %v5775 = vrot.slane %v5774, 2
    %v5776 = vrot.slane %v526, 7
    %v5777 = vrot.slane %v5776, 2
    %v5778 = vrot.slane %v2025, 7
    %v5779 = vrot.slane %v5778, 2
    %v5780 = vrot.slane %v2073, 7
    %v5781 = vrot.slane %v5780, 2
    %v5782 = vrot.slane %v2121, 7
    %v5783 = vrot.slane %v5782, 2
    %v5784 = vrot.slane %v2169, 7
    %v5785 = vrot.slane %v5784, 2
    %v5786 = vrot.slane %v2217, 7
    %v5787 = vrot.slane %v5786, 2
    %v5788 = vrot.slane %v2265, 7
    %v5789 = vrot.slane %v5788, 2
    %v5790 = vrot.slane %v2313, 7
    %v5791 = vrot.slane %v5790, 2
    %v5792 = vrot.slane %v471, 7
    %v5793 = vrot.slane %v5792, 2
    %v5794 = vrot.slane %v2027, 7
    %v5795 = vrot.slane %v5794, 2
    %v5796 = vrot.slane %v2075, 7
    %v5797 = vrot.slane %v5796, 2
    %v5798 = vrot.slane %v2123, 7
    %v5799 = vrot.slane %v5798, 2
    %v5800 = vrot.slane %v2171, 7
    %v5801 = vrot.slane %v5800, 2
    %v5802 = vrot.slane %v2219, 7
    %v5803 = vrot.slane %v5802, 2
    %v5804 = vrot.slane %v2267, 7
    %v5805 = vrot.slane %v5804, 2
    %v5806 = vrot.slane %v2315, 7
    %v5807 = vrot.slane %v5806, 2
    %v5808 = vrot.slane %v527, 7
    %v5809 = vrot.slane %v5808, 2
    %v5810 = vrot.slane %v2029, 7
    %v5811 = vrot.slane %v5810, 2
    %v5812 = vrot.slane %v2077, 7
    %v5813 = vrot.slane %v5812, 2
    %v5814 = vrot.slane %v2125, 7
    %v5815 = vrot.slane %v5814, 2
    %v5816 = vrot.slane %v2173, 7
    %v5817 = vrot.slane %v5816, 2
    %v5818 = vrot.slane %v2221, 7
    %v5819 = vrot.slane %v5818, 2
    %v5820 = vrot.slane %v2269, 7
    %v5821 = vrot.slane %v5820, 2
    %v5822 = vrot.slane %v2317, 7
    %v5823 = vrot.slane %v5822, 2
    %v5824 = vrot.slane %v528, 7
    %v5825 = vrot.slane %v5824, 2
    %v5826 = vrot.slane %v2031, 7
    %v5827 = vrot.slane %v5826, 2
    %v5828 = vrot.slane %v2079, 7
    %v5829 = vrot.slane %v5828, 2
    %v5830 = vrot.slane %v2127, 7
    %v5831 = vrot.slane %v5830, 2
    %v5832 = vrot.slane %v2175, 7
    %v5833 = vrot.slane %v5832, 2
    %v5834 = vrot.slane %v2223, 7
    %v5835 = vrot.slane %v5834, 2
    %v5836 = vrot.slane %v2271, 7
    %v5837 = vrot.slane %v5836, 2
    %v5838 = vrot.slane %v2319, 7
    %v5839 = vrot.slane %v5838, 2
    %v5840 = vrot.slane %v529, 7
    %v5841 = vrot.slane %v5840, 2
    %v5842 = vrot.slane %v2033, 7
    %v5843 = vrot.slane %v5842, 2
    %v5844 = vrot.slane %v2081, 7
    %v5845 = vrot.slane %v5844, 2
    %v5846 = vrot.slane %v2129, 7
    %v5847 = vrot.slane %v5846, 2
    %v5848 = vrot.slane %v2177, 7
    %v5849 = vrot.slane %v5848, 2
    %v5850 = vrot.slane %v2225, 7
    %v5851 = vrot.slane %v5850, 2
    %v5852 = vrot.slane %v2273, 7
    %v5853 = vrot.slane %v5852, 2
    %v5854 = vrot.slane %v2321, 7
    %v5855 = vrot.slane %v5854, 2
    %v5856 = vrot.slane %v473, 7
    %v5857 = vrot.slane %v5856, 2
    %v5858 = vrot.slane %v2035, 7
    %v5859 = vrot.slane %v5858, 2
    %v5860 = vrot.slane %v2083, 7
    %v5861 = vrot.slane %v5860, 2
    %v5862 = vrot.slane %v2131, 7
    %v5863 = vrot.slane %v5862, 2
    %v5864 = vrot.slane %v2179, 7
    %v5865 = vrot.slane %v5864, 2
    %v5866 = vrot.slane %v2227, 7
    %v5867 = vrot.slane %v5866, 2
    %v5868 = vrot.slane %v2275, 7
    %v5869 = vrot.slane %v5868, 2
    %v5870 = vrot.slane %v2323, 7
    %v5871 = vrot.slane %v5870, 2
    %v5872 = vrot.slane %v530, 7
    %v5873 = vrot.slane %v5872, 2
    %v5874 = vrot.slane %v2037, 7
    %v5875 = vrot.slane %v5874, 2
    %v5876 = vrot.slane %v2085, 7
    %v5877 = vrot.slane %v5876, 2
    %v5878 = vrot.slane %v2133, 7
    %v5879 = vrot.slane %v5878, 2
    %v5880 = vrot.slane %v2181, 7
    %v5881 = vrot.slane %v5880, 2
    %v5882 = vrot.slane %v2229, 7
    %v5883 = vrot.slane %v5882, 2
    %v5884 = vrot.slane %v2277, 7
    %v5885 = vrot.slane %v5884, 2
    %v5886 = vrot.slane %v2325, 7
    %v5887 = vrot.slane %v5886, 2
    %v5888 = vrot.slane %v531, 7
    %v5889 = vrot.slane %v5888, 2
    %v5890 = vrot.slane %v2039, 7
    %v5891 = vrot.slane %v5890, 2
    %v5892 = vrot.slane %v2087, 7
    %v5893 = vrot.slane %v5892, 2
    %v5894 = vrot.slane %v2135, 7
    %v5895 = vrot.slane %v5894, 2
    %v5896 = vrot.slane %v2183, 7
    %v5897 = vrot.slane %v5896, 2
    %v5898 = vrot.slane %v2231, 7
    %v5899 = vrot.slane %v5898, 2
    %v5900 = vrot.slane %v2279, 7
    %v5901 = vrot.slane %v5900, 2
    %v5902 = vrot.slane %v2327, 7
    %v5903 = vrot.slane %v5902, 2
    %v5904 = vrot.slane %v532, 7
    %v5905 = vrot.slane %v5904, 2
    %v5906 = vrot.slane %v2041, 7
    %v5907 = vrot.slane %v5906, 2
    %v5908 = vrot.slane %v2089, 7
    %v5909 = vrot.slane %v5908, 2
    %v5910 = vrot.slane %v2137, 7
    %v5911 = vrot.slane %v5910, 2
    %v5912 = vrot.slane %v2185, 7
    %v5913 = vrot.slane %v5912, 2
    %v5914 = vrot.slane %v2233, 7
    %v5915 = vrot.slane %v5914, 2
    %v5916 = vrot.slane %v2281, 7
    %v5917 = vrot.slane %v5916, 2
    %v5918 = vrot.slane %v2329, 7
    %v5919 = vrot.slane %v5918, 2
    %v6048 = vrot.slane %v5667, 4
    %v6049 = vsel %vm714, %v6048, %v5665
    %v6051 = vunpack.c.l.s4 1934713408
    %v6052 = vunpack.c.0.s8 %v6051
    %v6053 = vperm.slane %v6049, %v6052
    %v6054 = vrot.slane %v5671, 4
    %v6055 = vsel %vm714, %v6054, %v5669
    %v6057 = vunpack.c.l.s4 1934713408
    %v6058 = vunpack.c.0.s8 %v6057
    %v6059 = vperm.slane %v6055, %v6058
    %v6060 = vrot.slane %v5675, 4
    %v6061 = vsel %vm714, %v6060, %v5673
    %v6063 = vunpack.c.l.s4 1934713408
    %v6064 = vunpack.c.0.s8 %v6063
    %v6065 = vperm.slane %v6061, %v6064
    %v6066 = vrot.slane %v5679, 4
    %v6067 = vsel %vm714, %v6066, %v5677
    %v6069 = vunpack.c.l.s4 1934713408
    %v6070 = vunpack.c.0.s8 %v6069
    %v6071 = vperm.slane %v6067, %v6070
    %v6072 = vrot.slane %v5683, 4
    %v6073 = vsel %vm714, %v6072, %v5681
    %v6075 = vunpack.c.l.s4 1934713408
    %v6076 = vunpack.c.0.s8 %v6075
    %v6077 = vperm.slane %v6073, %v6076
    %v6078 = vrot.slane %v5687, 4
    %v6079 = vsel %vm714, %v6078, %v5685
    %v6081 = vunpack.c.l.s4 1934713408
    %v6082 = vunpack.c.0.s8 %v6081
    %v6083 = vperm.slane %v6079, %v6082
    %v6084 = vrot.slane %v5691, 4
    %v6085 = vsel %vm714, %v6084, %v5689
    %v6087 = vunpack.c.l.s4 1934713408
    %v6088 = vunpack.c.0.s8 %v6087
    %v6089 = vperm.slane %v6085, %v6088
    %v6090 = vrot.slane %v5695, 4
    %v6091 = vsel %vm714, %v6090, %v5693
    %v6093 = vunpack.c.l.s4 1934713408
    %v6094 = vunpack.c.0.s8 %v6093
    %v6095 = vperm.slane %v6091, %v6094
    %v6096 = vrot.slane %v5699, 4
    %v6097 = vsel %vm714, %v6096, %v5697
    %v6099 = vunpack.c.l.s4 1934713408
    %v6100 = vunpack.c.0.s8 %v6099
    %v6101 = vperm.slane %v6097, %v6100
    %v6102 = vrot.slane %v5703, 4
    %v6103 = vsel %vm714, %v6102, %v5701
    %v6105 = vunpack.c.l.s4 1934713408
    %v6106 = vunpack.c.0.s8 %v6105
    %v6107 = vperm.slane %v6103, %v6106
    %v6108 = vrot.slane %v5707, 4
    %v6109 = vsel %vm714, %v6108, %v5705
    %v6111 = vunpack.c.l.s4 1934713408
    %v6112 = vunpack.c.0.s8 %v6111
    %v6113 = vperm.slane %v6109, %v6112
    %v6114 = vrot.slane %v5711, 4
    %v6115 = vsel %vm714, %v6114, %v5709
    %v6117 = vunpack.c.l.s4 1934713408
    %v6118 = vunpack.c.0.s8 %v6117
    %v6119 = vperm.slane %v6115, %v6118
    %v6120 = vrot.slane %v5715, 4
    %v6121 = vsel %vm714, %v6120, %v5713
    %v6123 = vunpack.c.l.s4 1934713408
    %v6124 = vunpack.c.0.s8 %v6123
    %v6125 = vperm.slane %v6121, %v6124
    %v6126 = vrot.slane %v5719, 4
    %v6127 = vsel %vm714, %v6126, %v5717
    %v6129 = vunpack.c.l.s4 1934713408
    %v6130 = vunpack.c.0.s8 %v6129
    %v6131 = vperm.slane %v6127, %v6130
    %v6132 = vrot.slane %v5723, 4
    %v6133 = vsel %vm714, %v6132, %v5721
    %v6135 = vunpack.c.l.s4 1934713408
    %v6136 = vunpack.c.0.s8 %v6135
    %v6137 = vperm.slane %v6133, %v6136
    %v6138 = vrot.slane %v5727, 4
    %v6139 = vsel %vm714, %v6138, %v5725
    %v6141 = vunpack.c.l.s4 1934713408
    %v6142 = vunpack.c.0.s8 %v6141
    %v6143 = vperm.slane %v6139, %v6142
    %v6144 = vrot.slane %v5731, 4
    %v6145 = vsel %vm714, %v6144, %v5729
    %v6147 = vunpack.c.l.s4 1934713408
    %v6148 = vunpack.c.0.s8 %v6147
    %v6149 = vperm.slane %v6145, %v6148
    %v6150 = vrot.slane %v5735, 4
    %v6151 = vsel %vm714, %v6150, %v5733
    %v6153 = vunpack.c.l.s4 1934713408
    %v6154 = vunpack.c.0.s8 %v6153
    %v6155 = vperm.slane %v6151, %v6154
    %v6156 = vrot.slane %v5739, 4
    %v6157 = vsel %vm714, %v6156, %v5737
    %v6159 = vunpack.c.l.s4 1934713408
    %v6160 = vunpack.c.0.s8 %v6159
    %v6161 = vperm.slane %v6157, %v6160
    %v6162 = vrot.slane %v5743, 4
    %v6163 = vsel %vm714, %v6162, %v5741
    %v6165 = vunpack.c.l.s4 1934713408
    %v6166 = vunpack.c.0.s8 %v6165
    %v6167 = vperm.slane %v6163, %v6166
    %v6168 = vrot.slane %v5747, 4
    %v6169 = vsel %vm714, %v6168, %v5745
    %v6171 = vunpack.c.l.s4 1934713408
    %v6172 = vunpack.c.0.s8 %v6171
    %v6173 = vperm.slane %v6169, %v6172
    %v6174 = vrot.slane %v5751, 4
    %v6175 = vsel %vm714, %v6174, %v5749
    %v6177 = vunpack.c.l.s4 1934713408
    %v6178 = vunpack.c.0.s8 %v6177
    %v6179 = vperm.slane %v6175, %v6178
    %v6180 = vrot.slane %v5755, 4
    %v6181 = vsel %vm714, %v6180, %v5753
    %v6183 = vunpack.c.l.s4 1934713408
    %v6184 = vunpack.c.0.s8 %v6183
    %v6185 = vperm.slane %v6181, %v6184
    %v6186 = vrot.slane %v5759, 4
    %v6187 = vsel %vm714, %v6186, %v5757
    %v6189 = vunpack.c.l.s4 1934713408
    %v6190 = vunpack.c.0.s8 %v6189
    %v6191 = vperm.slane %v6187, %v6190
    %v6192 = vrot.slane %v5763, 4
    %v6193 = vsel %vm714, %v6192, %v5761
    %v6195 = vunpack.c.l.s4 1934713408
    %v6196 = vunpack.c.0.s8 %v6195
    %v6197 = vperm.slane %v6193, %v6196
    %v6198 = vrot.slane %v5767, 4
    %v6199 = vsel %vm714, %v6198, %v5765
    %v6201 = vunpack.c.l.s4 1934713408
    %v6202 = vunpack.c.0.s8 %v6201
    %v6203 = vperm.slane %v6199, %v6202
    %v6204 = vrot.slane %v5771, 4
    %v6205 = vsel %vm714, %v6204, %v5769
    %v6207 = vunpack.c.l.s4 1934713408
    %v6208 = vunpack.c.0.s8 %v6207
    %v6209 = vperm.slane %v6205, %v6208
    %v6210 = vrot.slane %v5775, 4
    %v6211 = vsel %vm714, %v6210, %v5773
    %v6213 = vunpack.c.l.s4 1934713408
    %v6214 = vunpack.c.0.s8 %v6213
    %v6215 = vperm.slane %v6211, %v6214
    %v6216 = vrot.slane %v5779, 4
    %v6217 = vsel %vm714, %v6216, %v5777
    %v6219 = vunpack.c.l.s4 1934713408
    %v6220 = vunpack.c.0.s8 %v6219
    %v6221 = vperm.slane %v6217, %v6220
    %v6222 = vrot.slane %v5783, 4
    %v6223 = vsel %vm714, %v6222, %v5781
    %v6225 = vunpack.c.l.s4 1934713408
    %v6226 = vunpack.c.0.s8 %v6225
    %v6227 = vperm.slane %v6223, %v6226
    %v6228 = vrot.slane %v5787, 4
    %v6229 = vsel %vm714, %v6228, %v5785
    %v6231 = vunpack.c.l.s4 1934713408
    %v6232 = vunpack.c.0.s8 %v6231
    %v6233 = vperm.slane %v6229, %v6232
    %v6234 = vrot.slane %v5791, 4
    %v6235 = vsel %vm714, %v6234, %v5789
    %v6237 = vunpack.c.l.s4 1934713408
    %v6238 = vunpack.c.0.s8 %v6237
    %v6239 = vperm.slane %v6235, %v6238
    %v6240 = vrot.slane %v5795, 4
    %v6241 = vsel %vm714, %v6240, %v5793
    %v6243 = vunpack.c.l.s4 1934713408
    %v6244 = vunpack.c.0.s8 %v6243
    %v6245 = vperm.slane %v6241, %v6244
    %v6246 = vrot.slane %v5799, 4
    %v6247 = vsel %vm714, %v6246, %v5797
    %v6249 = vunpack.c.l.s4 1934713408
    %v6250 = vunpack.c.0.s8 %v6249
    %v6251 = vperm.slane %v6247, %v6250
    %v6252 = vrot.slane %v5803, 4
    %v6253 = vsel %vm714, %v6252, %v5801
    %v6255 = vunpack.c.l.s4 1934713408
    %v6256 = vunpack.c.0.s8 %v6255
    %v6257 = vperm.slane %v6253, %v6256
    %v6258 = vrot.slane %v5807, 4
    %v6259 = vsel %vm714, %v6258, %v5805
    %v6261 = vunpack.c.l.s4 1934713408
    %v6262 = vunpack.c.0.s8 %v6261
    %v6263 = vperm.slane %v6259, %v6262
    %v6264 = vrot.slane %v5811, 4
    %v6265 = vsel %vm714, %v6264, %v5809
    %v6267 = vunpack.c.l.s4 1934713408
    %v6268 = vunpack.c.0.s8 %v6267
    %v6269 = vperm.slane %v6265, %v6268
    %v6270 = vrot.slane %v5815, 4
    %v6271 = vsel %vm714, %v6270, %v5813
    %v6273 = vunpack.c.l.s4 1934713408
    %v6274 = vunpack.c.0.s8 %v6273
    %v6275 = vperm.slane %v6271, %v6274
    %v6276 = vrot.slane %v5819, 4
    %v6277 = vsel %vm714, %v6276, %v5817
    %v6279 = vunpack.c.l.s4 1934713408
    %v6280 = vunpack.c.0.s8 %v6279
    %v6281 = vperm.slane %v6277, %v6280
    %v6282 = vrot.slane %v5823, 4
    %v6283 = vsel %vm714, %v6282, %v5821
    %v6285 = vunpack.c.l.s4 1934713408
    %v6286 = vunpack.c.0.s8 %v6285
    %v6287 = vperm.slane %v6283, %v6286
    %v6288 = vrot.slane %v5827, 4
    %v6289 = vsel %vm714, %v6288, %v5825
    %v6291 = vunpack.c.l.s4 1934713408
    %v6292 = vunpack.c.0.s8 %v6291
    %v6293 = vperm.slane %v6289, %v6292
    %v6294 = vrot.slane %v5831, 4
    %v6295 = vsel %vm714, %v6294, %v5829
    %v6297 = vunpack.c.l.s4 1934713408
    %v6298 = vunpack.c.0.s8 %v6297
    %v6299 = vperm.slane %v6295, %v6298
    %v6300 = vrot.slane %v5835, 4
    %v6301 = vsel %vm714, %v6300, %v5833
    %v6303 = vunpack.c.l.s4 1934713408
    %v6304 = vunpack.c.0.s8 %v6303
    %v6305 = vperm.slane %v6301, %v6304
    %v6306 = vrot.slane %v5839, 4
    %v6307 = vsel %vm714, %v6306, %v5837
    %v6309 = vunpack.c.l.s4 1934713408
    %v6310 = vunpack.c.0.s8 %v6309
    %v6311 = vperm.slane %v6307, %v6310
    %v6312 = vrot.slane %v5843, 4
    %v6313 = vsel %vm714, %v6312, %v5841
    %v6315 = vunpack.c.l.s4 1934713408
    %v6316 = vunpack.c.0.s8 %v6315
    %v6317 = vperm.slane %v6313, %v6316
    %v6318 = vrot.slane %v5847, 4
    %v6319 = vsel %vm714, %v6318, %v5845
    %v6321 = vunpack.c.l.s4 1934713408
    %v6322 = vunpack.c.0.s8 %v6321
    %v6323 = vperm.slane %v6319, %v6322
    %v6324 = vrot.slane %v5851, 4
    %v6325 = vsel %vm714, %v6324, %v5849
    %v6327 = vunpack.c.l.s4 1934713408
    %v6328 = vunpack.c.0.s8 %v6327
    %v6329 = vperm.slane %v6325, %v6328
    %v6330 = vrot.slane %v5855, 4
    %v6331 = vsel %vm714, %v6330, %v5853
    %v6333 = vunpack.c.l.s4 1934713408
    %v6334 = vunpack.c.0.s8 %v6333
    %v6335 = vperm.slane %v6331, %v6334
    %v6336 = vrot.slane %v5859, 4
    %v6337 = vsel %vm714, %v6336, %v5857
    %v6339 = vunpack.c.l.s4 1934713408
    %v6340 = vunpack.c.0.s8 %v6339
    %v6341 = vperm.slane %v6337, %v6340
    %v6342 = vrot.slane %v5863, 4
    %v6343 = vsel %vm714, %v6342, %v5861
    %v6345 = vunpack.c.l.s4 1934713408
    %v6346 = vunpack.c.0.s8 %v6345
    %v6347 = vperm.slane %v6343, %v6346
    %v6348 = vrot.slane %v5867, 4
    %v6349 = vsel %vm714, %v6348, %v5865
    %v6351 = vunpack.c.l.s4 1934713408
    %v6352 = vunpack.c.0.s8 %v6351
    %v6353 = vperm.slane %v6349, %v6352
    %v6354 = vrot.slane %v5871, 4
    %v6355 = vsel %vm714, %v6354, %v5869
    %v6357 = vunpack.c.l.s4 1934713408
    %v6358 = vunpack.c.0.s8 %v6357
    %v6359 = vperm.slane %v6355, %v6358
    %v6360 = vrot.slane %v5875, 4
    %v6361 = vsel %vm714, %v6360, %v5873
    %v6363 = vunpack.c.l.s4 1934713408
    %v6364 = vunpack.c.0.s8 %v6363
    %v6365 = vperm.slane %v6361, %v6364
    %v6366 = vrot.slane %v5879, 4
    %v6367 = vsel %vm714, %v6366, %v5877
    %v6369 = vunpack.c.l.s4 1934713408
    %v6370 = vunpack.c.0.s8 %v6369
    %v6371 = vperm.slane %v6367, %v6370
    %v6372 = vrot.slane %v5883, 4
    %v6373 = vsel %vm714, %v6372, %v5881
    %v6375 = vunpack.c.l.s4 1934713408
    %v6376 = vunpack.c.0.s8 %v6375
    %v6377 = vperm.slane %v6373, %v6376
    %v6378 = vrot.slane %v5887, 4
    %v6379 = vsel %vm714, %v6378, %v5885
    %v6381 = vunpack.c.l.s4 1934713408
    %v6382 = vunpack.c.0.s8 %v6381
    %v6383 = vperm.slane %v6379, %v6382
    %v6384 = vrot.slane %v5891, 4
    %v6385 = vsel %vm714, %v6384, %v5889
    %v6387 = vunpack.c.l.s4 1934713408
    %v6388 = vunpack.c.0.s8 %v6387
    %v6389 = vperm.slane %v6385, %v6388
    %v6390 = vrot.slane %v5895, 4
    %v6391 = vsel %vm714, %v6390, %v5893
    %v6393 = vunpack.c.l.s4 1934713408
    %v6394 = vunpack.c.0.s8 %v6393
    %v6395 = vperm.slane %v6391, %v6394
    %v6396 = vrot.slane %v5899, 4
    %v6397 = vsel %vm714, %v6396, %v5897
    %v6399 = vunpack.c.l.s4 1934713408
    %v6400 = vunpack.c.0.s8 %v6399
    %v6401 = vperm.slane %v6397, %v6400
    %v6402 = vrot.slane %v5903, 4
    %v6403 = vsel %vm714, %v6402, %v5901
    %v6405 = vunpack.c.l.s4 1934713408
    %v6406 = vunpack.c.0.s8 %v6405
    %v6407 = vperm.slane %v6403, %v6406
    %v6408 = vrot.slane %v5907, 4
    %v6409 = vsel %vm714, %v6408, %v5905
    %v6411 = vunpack.c.l.s4 1934713408
    %v6412 = vunpack.c.0.s8 %v6411
    %v6413 = vperm.slane %v6409, %v6412
    %v6414 = vrot.slane %v5911, 4
    %v6415 = vsel %vm714, %v6414, %v5909
    %v6417 = vunpack.c.l.s4 1934713408
    %v6418 = vunpack.c.0.s8 %v6417
    %v6419 = vperm.slane %v6415, %v6418
    %v6420 = vrot.slane %v5915, 4
    %v6421 = vsel %vm714, %v6420, %v5913
    %v6423 = vunpack.c.l.s4 1934713408
    %v6424 = vunpack.c.0.s8 %v6423
    %v6425 = vperm.slane %v6421, %v6424
    %v6426 = vrot.slane %v5919, 4
    %v6427 = vsel %vm714, %v6426, %v5917
    %v6429 = vunpack.c.l.s4 1934713408
    %v6430 = vunpack.c.0.s8 %v6429
    %v6431 = vperm.slane %v6427, %v6430
    %v6432 = vrot.slane %v6077, 4
    %v6433 = vsel %vm714, %v6432, %v6053
    %v6435 = vunpack.c.l.s4 1934713408
    %v6436 = vunpack.c.0.s8 %v6435
    %v6437 = vperm.slane %v6433, %v6436
    %v6438 = vrot.slane %v6437, 4
    %v6439 = vsel %vm714, 0.0, %v6438
    %v6440 = vrot.slane %v6125, 4
    %v6441 = vsel %vm714, %v6440, %v6101
    %v6443 = vunpack.c.l.s4 1934713408
    %v6444 = vunpack.c.0.s8 %v6443
    %v6445 = vperm.slane %v6441, %v6444
    %v6446 = vrot.slane %v6445, 4
    %v6447 = vsel %vm714, 0.0, %v6446
    %v6448 = vrot.slane %v6173, 4
    %v6449 = vsel %vm714, %v6448, %v6149
    %v6451 = vunpack.c.l.s4 1934713408
    %v6452 = vunpack.c.0.s8 %v6451
    %v6453 = vperm.slane %v6449, %v6452
    %v6454 = vrot.slane %v6453, 4
    %v6455 = vsel %vm714, 0.0, %v6454
    %v6456 = vrot.slane %v6221, 4
    %v6457 = vsel %vm714, %v6456, %v6197
    %v6459 = vunpack.c.l.s4 1934713408
    %v6460 = vunpack.c.0.s8 %v6459
    %v6461 = vperm.slane %v6457, %v6460
    %v6462 = vrot.slane %v6461, 4
    %v6463 = vsel %vm714, 0.0, %v6462
    %v6464 = vrot.slane %v6269, 4
    %v6465 = vsel %vm714, %v6464, %v6245
    %v6467 = vunpack.c.l.s4 1934713408
    %v6468 = vunpack.c.0.s8 %v6467
    %v6469 = vperm.slane %v6465, %v6468
    %v6470 = vrot.slane %v6469, 4
    %v6471 = vsel %vm714, 0.0, %v6470
    %v6472 = vrot.slane %v6317, 4
    %v6473 = vsel %vm714, %v6472, %v6293
    %v6475 = vunpack.c.l.s4 1934713408
    %v6476 = vunpack.c.0.s8 %v6475
    %v6477 = vperm.slane %v6473, %v6476
    %v6478 = vrot.slane %v6477, 4
    %v6479 = vsel %vm714, 0.0, %v6478
    %v6480 = vrot.slane %v6365, 4
    %v6481 = vsel %vm714, %v6480, %v6341
    %v6483 = vunpack.c.l.s4 1934713408
    %v6484 = vunpack.c.0.s8 %v6483
    %v6485 = vperm.slane %v6481, %v6484
    %v6486 = vrot.slane %v6485, 4
    %v6487 = vsel %vm714, 0.0, %v6486
    %v6488 = vrot.slane %v6413, 4
    %v6489 = vsel %vm714, %v6488, %v6389
    %v6491 = vunpack.c.l.s4 1934713408
    %v6492 = vunpack.c.0.s8 %v6491
    %v6493 = vperm.slane %v6489, %v6492
    %v6494 = vrot.slane %v6493, 4
    %v6495 = vsel %vm714, 0.0, %v6494
    %v6496 = vrot.slane %v6083, 4
    %v6497 = vsel %vm714, %v6496, %v6059
    %v6499 = vunpack.c.l.s4 1934713408
    %v6500 = vunpack.c.0.s8 %v6499
    %v6501 = vperm.slane %v6497, %v6500
    %v6502 = vrot.slane %v6501, 4
    %v6503 = vsel %vm714, 0.0, %v6502
    %v6504 = vrot.slane %v6131, 4
    %v6505 = vsel %vm714, %v6504, %v6107
    %v6507 = vunpack.c.l.s4 1934713408
    %v6508 = vunpack.c.0.s8 %v6507
    %v6509 = vperm.slane %v6505, %v6508
    %v6510 = vrot.slane %v6509, 4
    %v6511 = vsel %vm714, 0.0, %v6510
    %v6512 = vrot.slane %v6179, 4
    %v6513 = vsel %vm714, %v6512, %v6155
    %v6515 = vunpack.c.l.s4 1934713408
    %v6516 = vunpack.c.0.s8 %v6515
    %v6517 = vperm.slane %v6513, %v6516
    %v6518 = vrot.slane %v6517, 4
    %v6519 = vsel %vm714, 0.0, %v6518
    %v6520 = vrot.slane %v6227, 4
    %v6521 = vsel %vm714, %v6520, %v6203
    %v6523 = vunpack.c.l.s4 1934713408
    %v6524 = vunpack.c.0.s8 %v6523
    %v6525 = vperm.slane %v6521, %v6524
    %v6526 = vrot.slane %v6525, 4
    %v6527 = vsel %vm714, 0.0, %v6526
    %v6528 = vrot.slane %v6275, 4
    %v6529 = vsel %vm714, %v6528, %v6251
    %v6531 = vunpack.c.l.s4 1934713408
    %v6532 = vunpack.c.0.s8 %v6531
    %v6533 = vperm.slane %v6529, %v6532
    %v6534 = vrot.slane %v6533, 4
    %v6535 = vsel %vm714, 0.0, %v6534
    %v6536 = vrot.slane %v6323, 4
    %v6537 = vsel %vm714, %v6536, %v6299
    %v6539 = vunpack.c.l.s4 1934713408
    %v6540 = vunpack.c.0.s8 %v6539
    %v6541 = vperm.slane %v6537, %v6540
    %v6542 = vrot.slane %v6541, 4
    %v6543 = vsel %vm714, 0.0, %v6542
    %v6544 = vrot.slane %v6371, 4
    %v6545 = vsel %vm714, %v6544, %v6347
    %v6547 = vunpack.c.l.s4 1934713408
    %v6548 = vunpack.c.0.s8 %v6547
    %v6549 = vperm.slane %v6545, %v6548
    %v6550 = vrot.slane %v6549, 4
    %v6551 = vsel %vm714, 0.0, %v6550
    %v6552 = vrot.slane %v6419, 4
    %v6553 = vsel %vm714, %v6552, %v6395
    %v6555 = vunpack.c.l.s4 1934713408
    %v6556 = vunpack.c.0.s8 %v6555
    %v6557 = vperm.slane %v6553, %v6556
    %v6558 = vrot.slane %v6557, 4
    %v6559 = vsel %vm714, 0.0, %v6558
    %v6560 = vrot.slane %v6089, 4
    %v6561 = vsel %vm714, %v6560, %v6065
    %v6563 = vunpack.c.l.s4 1934713408
    %v6564 = vunpack.c.0.s8 %v6563
    %v6565 = vperm.slane %v6561, %v6564
    %v6566 = vrot.slane %v6565, 4
    %v6567 = vsel %vm714, 0.0, %v6566
    %v6568 = vrot.slane %v6137, 4
    %v6569 = vsel %vm714, %v6568, %v6113
    %v6571 = vunpack.c.l.s4 1934713408
    %v6572 = vunpack.c.0.s8 %v6571
    %v6573 = vperm.slane %v6569, %v6572
    %v6574 = vrot.slane %v6573, 4
    %v6575 = vsel %vm714, 0.0, %v6574
    %v6576 = vrot.slane %v6185, 4
    %v6577 = vsel %vm714, %v6576, %v6161
    %v6579 = vunpack.c.l.s4 1934713408
    %v6580 = vunpack.c.0.s8 %v6579
    %v6581 = vperm.slane %v6577, %v6580
    %v6582 = vrot.slane %v6581, 4
    %v6583 = vsel %vm714, 0.0, %v6582
    %v6584 = vrot.slane %v6233, 4
    %v6585 = vsel %vm714, %v6584, %v6209
    %v6587 = vunpack.c.l.s4 1934713408
    %v6588 = vunpack.c.0.s8 %v6587
    %v6589 = vperm.slane %v6585, %v6588
    %v6590 = vrot.slane %v6589, 4
    %v6591 = vsel %vm714, 0.0, %v6590
    %v6592 = vrot.slane %v6281, 4
    %v6593 = vsel %vm714, %v6592, %v6257
    %v6595 = vunpack.c.l.s4 1934713408
    %v6596 = vunpack.c.0.s8 %v6595
    %v6597 = vperm.slane %v6593, %v6596
    %v6598 = vrot.slane %v6597, 4
    %v6599 = vsel %vm714, 0.0, %v6598
    %v6600 = vrot.slane %v6329, 4
    %v6601 = vsel %vm714, %v6600, %v6305
    %v6603 = vunpack.c.l.s4 1934713408
    %v6604 = vunpack.c.0.s8 %v6603
    %v6605 = vperm.slane %v6601, %v6604
    %v6606 = vrot.slane %v6605, 4
    %v6607 = vsel %vm714, 0.0, %v6606
    %v6608 = vrot.slane %v6377, 4
    %v6609 = vsel %vm714, %v6608, %v6353
    %v6611 = vunpack.c.l.s4 1934713408
    %v6612 = vunpack.c.0.s8 %v6611
    %v6613 = vperm.slane %v6609, %v6612
    %v6614 = vrot.slane %v6613, 4
    %v6615 = vsel %vm714, 0.0, %v6614
    %v6616 = vrot.slane %v6425, 4
    %v6617 = vsel %vm714, %v6616, %v6401
    %v6619 = vunpack.c.l.s4 1934713408
    %v6620 = vunpack.c.0.s8 %v6619
    %v6621 = vperm.slane %v6617, %v6620
    %v6622 = vrot.slane %v6621, 4
    %v6623 = vsel %vm714, 0.0, %v6622
    %v6624 = vrot.slane %v6095, 4
    %v6625 = vsel %vm714, %v6624, %v6071
    %v6627 = vunpack.c.l.s4 1934713408
    %v6628 = vunpack.c.0.s8 %v6627
    %v6629 = vperm.slane %v6625, %v6628
    %v6630 = vrot.slane %v6629, 4
    %v6631 = vsel %vm714, 0.0, %v6630
    %v6632 = vrot.slane %v6143, 4
    %v6633 = vsel %vm714, %v6632, %v6119
    %v6635 = vunpack.c.l.s4 1934713408
    %v6636 = vunpack.c.0.s8 %v6635
    %v6637 = vperm.slane %v6633, %v6636
    %v6638 = vrot.slane %v6637, 4
    %v6639 = vsel %vm714, 0.0, %v6638
    %v6640 = vrot.slane %v6191, 4
    %v6641 = vsel %vm714, %v6640, %v6167
    %v6643 = vunpack.c.l.s4 1934713408
    %v6644 = vunpack.c.0.s8 %v6643
    %v6645 = vperm.slane %v6641, %v6644
    %v6646 = vrot.slane %v6645, 4
    %v6647 = vsel %vm714, 0.0, %v6646
    %v6648 = vrot.slane %v6239, 4
    %v6649 = vsel %vm714, %v6648, %v6215
    %v6651 = vunpack.c.l.s4 1934713408
    %v6652 = vunpack.c.0.s8 %v6651
    %v6653 = vperm.slane %v6649, %v6652
    %v6654 = vrot.slane %v6653, 4
    %v6655 = vsel %vm714, 0.0, %v6654
    %v6656 = vrot.slane %v6287, 4
    %v6657 = vsel %vm714, %v6656, %v6263
    %v6659 = vunpack.c.l.s4 1934713408
    %v6660 = vunpack.c.0.s8 %v6659
    %v6661 = vperm.slane %v6657, %v6660
    %v6662 = vrot.slane %v6661, 4
    %v6663 = vsel %vm714, 0.0, %v6662
    %v6664 = vrot.slane %v6335, 4
    %v6665 = vsel %vm714, %v6664, %v6311
    %v6667 = vunpack.c.l.s4 1934713408
    %v6668 = vunpack.c.0.s8 %v6667
    %v6669 = vperm.slane %v6665, %v6668
    %v6670 = vrot.slane %v6669, 4
    %v6671 = vsel %vm714, 0.0, %v6670
    %v6672 = vrot.slane %v6383, 4
    %v6673 = vsel %vm714, %v6672, %v6359
    %v6675 = vunpack.c.l.s4 1934713408
    %v6676 = vunpack.c.0.s8 %v6675
    %v6677 = vperm.slane %v6673, %v6676
    %v6678 = vrot.slane %v6677, 4
    %v6679 = vsel %vm714, 0.0, %v6678
    %v6680 = vrot.slane %v6431, 4
    %v6681 = vsel %vm714, %v6680, %v6407
    %v6683 = vunpack.c.l.s4 1934713408
    %v6684 = vunpack.c.0.s8 %v6683
    %v6685 = vperm.slane %v6681, %v6684
    %v6686 = vrot.slane %v6685, 4
    %v6687 = vsel %vm714, 0.0, %v6686
    %6720 = vst [vmem:[#allocation1] ss:$4 sm:$0xff] %v4517
    %s6721 = scalar_lea.vmem [#allocation1], 1
    %6722 = vst [vmem:[%s6721] ss:$4 sm:$0xff] %v4525
    %s6723 = scalar_lea.vmem [#allocation1], 2
    %6724 = vst [vmem:[%s6723] ss:$4 sm:$0xff] %v4533
    %s6725 = scalar_lea.vmem [#allocation1], 3
    %6726 = vst [vmem:[%s6725] ss:$4 sm:$0xff] %v4541
    %v6727 = vld.sshfl [vmem:[#allocation1] sm:$0xff pattern:$0x73625140]
    %s6728 = scalar_lea.vmem [#allocation1], 32
    %6729 = vst [vmem:[%s6728] ss:$4 sm:$0xff] %v4519
    %s6730 = scalar_lea.vmem [#allocation1], 33
    %6731 = vst [vmem:[%s6730] ss:$4 sm:$0xff] %v4527
    %s6732 = scalar_lea.vmem [#allocation1], 34
    %6733 = vst [vmem:[%s6732] ss:$4 sm:$0xff] %v4535
    %s6734 = scalar_lea.vmem [#allocation1], 35
    %6735 = vst [vmem:[%s6734] ss:$4 sm:$0xff] %v4543
    %v6736 = vld.sshfl [vmem:[#allocation1 + $0x20] sm:$0xff pattern:$0x73625140]
    %6737 = vst [vmem:[#allocation1] ss:$4 sm:$0xff] %v4549
    %6738 = vst [vmem:[%s6721] ss:$4 sm:$0xff] %v4557
    %6739 = vst [vmem:[%s6723] ss:$4 sm:$0xff] %v4565
    %6740 = vst [vmem:[%s6725] ss:$4 sm:$0xff] %v4573
    %v6741 = vld.sshfl [vmem:[#allocation1] sm:$0xff pattern:$0x73625140]
    %6742 = vst [vmem:[%s6728] ss:$4 sm:$0xff] %v4551
    %6743 = vst [vmem:[%s6730] ss:$4 sm:$0xff] %v4559
    %6744 = vst [vmem:[%s6732] ss:$4 sm:$0xff] %v4567
    %6745 = vst [vmem:[%s6734] ss:$4 sm:$0xff] %v4575
    %v6746 = vld.sshfl [vmem:[#allocation1 + $0x20] sm:$0xff pattern:$0x73625140]
    %6747 = vst [vmem:[#allocation1] ss:$4 sm:$0xff] %v4581
    %6748 = vst [vmem:[%s6721] ss:$4 sm:$0xff] %v4589
    %6749 = vst [vmem:[%s6723] ss:$4 sm:$0xff] %v4597
    %6750 = vst [vmem:[%s6725] ss:$4 sm:$0xff] %v4605
    %v6751 = vld.sshfl [vmem:[#allocation1] sm:$0xff pattern:$0x73625140]
    %6752 = vst [vmem:[%s6728] ss:$4 sm:$0xff] %v4583
    %6753 = vst [vmem:[%s6730] ss:$4 sm:$0xff] %v4591
    %6754 = vst [vmem:[%s6732] ss:$4 sm:$0xff] %v4599
    %6755 = vst [vmem:[%s6734] ss:$4 sm:$0xff] %v4607
    %v6756 = vld.sshfl [vmem:[#allocation1 + $0x20] sm:$0xff pattern:$0x73625140]
    %6757 = vst [vmem:[#allocation1] ss:$4 sm:$0xff] %v4613
    %6758 = vst [vmem:[%s6721] ss:$4 sm:$0xff] %v4621
    %6759 = vst [vmem:[%s6723] ss:$4 sm:$0xff] %v4629
    %6760 = vst [vmem:[%s6725] ss:$4 sm:$0xff] %v4637
    %v6761 = vld.sshfl [vmem:[#allocation1] sm:$0xff pattern:$0x73625140]
    %6762 = vst [vmem:[%s6728] ss:$4 sm:$0xff] %v4615
    %6763 = vst [vmem:[%s6730] ss:$4 sm:$0xff] %v4623
    %6764 = vst [vmem:[%s6732] ss:$4 sm:$0xff] %v4631
    %6765 = vst [vmem:[%s6734] ss:$4 sm:$0xff] %v4639
    %v6766 = vld.sshfl [vmem:[#allocation1 + $0x20] sm:$0xff pattern:$0x73625140]
    %v6775 = vpack.c.bf16 %v6727, %v6727
    %v6776 = vpack.c.bf16 %v6736, %v6736
    %v6777 = vpack.c.bf16 %v6741, %v6741
    %v6778 = vpack.c.bf16 %v6746, %v6746
    %v6779 = vpack.c.bf16 %v6751, %v6751
    %v6780 = vpack.c.bf16 %v6756, %v6756
    %v6781 = vpack.c.bf16 %v6761, %v6761
    %v6782 = vpack.c.bf16 %v6766, %v6766
    %6847 = vst [vmem:[#allocation1] ss:$4 sm:$0xff] %v5413
    %s6848 = scalar_lea.vmem [#allocation1], 1
    %6849 = vst [vmem:[%s6848] ss:$4 sm:$0xff] %v5421
    %s6850 = scalar_lea.vmem [#allocation1], 2
    %6851 = vst [vmem:[%s6850] ss:$4 sm:$0xff] %v5429
    %s6852 = scalar_lea.vmem [#allocation1], 3
    %6853 = vst [vmem:[%s6852] ss:$4 sm:$0xff] %v5437
    %s6854 = scalar_lea.vmem [#allocation1], 32
    %6855 = vst [vmem:[%s6854] ss:$4 sm:$0xff] %v5445
    %s6856 = scalar_lea.vmem [#allocation1], 33
    %6857 = vst [vmem:[%s6856] ss:$4 sm:$0xff] %v5453
    %s6858 = scalar_lea.vmem [#allocation1], 34
    %6859 = vst [vmem:[%s6858] ss:$4 sm:$0xff] %v5461
    %s6860 = scalar_lea.vmem [#allocation1], 35
    %6861 = vst [vmem:[%s6860] ss:$4 sm:$0xff] %v5469
    %v6862 = vld.sshfl [vmem:[#allocation1] sm:$0xff pattern:$0x73625140]
    %v6863 = vld.sshfl [vmem:[#allocation1 + $0x20] sm:$0xff pattern:$0x73625140]
    %6864 = vst [vmem:[#allocation1] ss:$4 sm:$0xff] %v5415
    %6865 = vst [vmem:[%s6848] ss:$4 sm:$0xff] %v5423
    %6866 = vst [vmem:[%s6850] ss:$4 sm:$0xff] %v5431
    %6867 = vst [vmem:[%s6852] ss:$4 sm:$0xff] %v5439
    %6868 = vst [vmem:[%s6854] ss:$4 sm:$0xff] %v5447
    %6869 = vst [vmem:[%s6856] ss:$4 sm:$0xff] %v5455
    %6870 = vst [vmem:[%s6858] ss:$4 sm:$0xff] %v5463
    %6871 = vst [vmem:[%s6860] ss:$4 sm:$0xff] %v5471
    %v6872 = vld.sshfl [vmem:[#allocation1] sm:$0xff pattern:$0x73625140]
    %v6873 = vld.sshfl [vmem:[#allocation1 + $0x20] sm:$0xff pattern:$0x73625140]
    %6874 = vst [vmem:[#allocation1] ss:$4 sm:$0xff] %v5477
    %6875 = vst [vmem:[%s6848] ss:$4 sm:$0xff] %v5485
    %6876 = vst [vmem:[%s6850] ss:$4 sm:$0xff] %v5493
    %6877 = vst [vmem:[%s6852] ss:$4 sm:$0xff] %v5501
    %6878 = vst [vmem:[%s6854] ss:$4 sm:$0xff] %v5509
    %6879 = vst [vmem:[%s6856] ss:$4 sm:$0xff] %v5517
    %6880 = vst [vmem:[%s6858] ss:$4 sm:$0xff] %v5525
    %6881 = vst [vmem:[%s6860] ss:$4 sm:$0xff] %v5533
    %v6882 = vld.sshfl [vmem:[#allocation1] sm:$0xff pattern:$0x73625140]
    %v6883 = vld.sshfl [vmem:[#allocation1 + $0x20] sm:$0xff pattern:$0x73625140]
    %6884 = vst [vmem:[#allocation1] ss:$4 sm:$0xff] %v5479
    %6885 = vst [vmem:[%s6848] ss:$4 sm:$0xff] %v5487
    %6886 = vst [vmem:[%s6850] ss:$4 sm:$0xff] %v5495
    %6887 = vst [vmem:[%s6852] ss:$4 sm:$0xff] %v5503
    %6888 = vst [vmem:[%s6854] ss:$4 sm:$0xff] %v5511
    %6889 = vst [vmem:[%s6856] ss:$4 sm:$0xff] %v5519
    %6890 = vst [vmem:[%s6858] ss:$4 sm:$0xff] %v5527
    %6891 = vst [vmem:[%s6860] ss:$4 sm:$0xff] %v5535
    %v6892 = vld.sshfl [vmem:[#allocation1] sm:$0xff pattern:$0x73625140]
    %v6893 = vld.sshfl [vmem:[#allocation1 + $0x20] sm:$0xff pattern:$0x73625140]
    %6894 = vst [vmem:[#allocation1] ss:$4 sm:$0xff] %v5541
    %6895 = vst [vmem:[%s6848] ss:$4 sm:$0xff] %v5549
    %6896 = vst [vmem:[%s6850] ss:$4 sm:$0xff] %v5557
    %6897 = vst [vmem:[%s6852] ss:$4 sm:$0xff] %v5565
    %6898 = vst [vmem:[%s6854] ss:$4 sm:$0xff] %v5573
    %6899 = vst [vmem:[%s6856] ss:$4 sm:$0xff] %v5581
    %6900 = vst [vmem:[%s6858] ss:$4 sm:$0xff] %v5589
    %6901 = vst [vmem:[%s6860] ss:$4 sm:$0xff] %v5597
    %v6902 = vld.sshfl [vmem:[#allocation1] sm:$0xff pattern:$0x73625140]
    %v6903 = vld.sshfl [vmem:[#allocation1 + $0x20] sm:$0xff pattern:$0x73625140]
    %6904 = vst [vmem:[#allocation1] ss:$4 sm:$0xff] %v5543
    %6905 = vst [vmem:[%s6848] ss:$4 sm:$0xff] %v5551
    %6906 = vst [vmem:[%s6850] ss:$4 sm:$0xff] %v5559
    %6907 = vst [vmem:[%s6852] ss:$4 sm:$0xff] %v5567
    %6908 = vst [vmem:[%s6854] ss:$4 sm:$0xff] %v5575
    %6909 = vst [vmem:[%s6856] ss:$4 sm:$0xff] %v5583
    %6910 = vst [vmem:[%s6858] ss:$4 sm:$0xff] %v5591
    %6911 = vst [vmem:[%s6860] ss:$4 sm:$0xff] %v5599
    %v6912 = vld.sshfl [vmem:[#allocation1] sm:$0xff pattern:$0x73625140]
    %v6913 = vld.sshfl [vmem:[#allocation1 + $0x20] sm:$0xff pattern:$0x73625140]
    %6914 = vst [vmem:[#allocation1] ss:$4 sm:$0xff] %v5605
    %6915 = vst [vmem:[%s6848] ss:$4 sm:$0xff] %v5613
    %6916 = vst [vmem:[%s6850] ss:$4 sm:$0xff] %v5621
    %6917 = vst [vmem:[%s6852] ss:$4 sm:$0xff] %v5629
    %6918 = vst [vmem:[%s6854] ss:$4 sm:$0xff] %v5637
    %6919 = vst [vmem:[%s6856] ss:$4 sm:$0xff] %v5645
    %6920 = vst [vmem:[%s6858] ss:$4 sm:$0xff] %v5653
    %6921 = vst [vmem:[%s6860] ss:$4 sm:$0xff] %v5661
    %v6922 = vld.sshfl [vmem:[#allocation1] sm:$0xff pattern:$0x73625140]
    %v6923 = vld.sshfl [vmem:[#allocation1 + $0x20] sm:$0xff pattern:$0x73625140]
    %6924 = vst [vmem:[#allocation1] ss:$4 sm:$0xff] %v5607
    %6925 = vst [vmem:[%s6848] ss:$4 sm:$0xff] %v5615
    %6926 = vst [vmem:[%s6850] ss:$4 sm:$0xff] %v5623
    %6927 = vst [vmem:[%s6852] ss:$4 sm:$0xff] %v5631
    %6928 = vst [vmem:[%s6854] ss:$4 sm:$0xff] %v5639
    %6929 = vst [vmem:[%s6856] ss:$4 sm:$0xff] %v5647
    %6930 = vst [vmem:[%s6858] ss:$4 sm:$0xff] %v5655
    %6931 = vst [vmem:[%s6860] ss:$4 sm:$0xff] %v5663
    %v6932 = vld.sshfl [vmem:[#allocation1] sm:$0xff pattern:$0x73625140]
    %v6933 = vld.sshfl [vmem:[#allocation1 + $0x20] sm:$0xff pattern:$0x73625140]
    %v6950 = vpack.c.bf16 %v6862, %v6862
    %v6951 = vpack.c.bf16 %v6863, %v6863
    %v6952 = vpack.c.bf16 %v6872, %v6872
    %v6953 = vpack.c.bf16 %v6873, %v6873
    %v6954 = vpack.c.bf16 %v6882, %v6882
    %v6955 = vpack.c.bf16 %v6883, %v6883
    %v6956 = vpack.c.bf16 %v6892, %v6892
    %v6957 = vpack.c.bf16 %v6893, %v6893
    %v6958 = vpack.c.bf16 %v6902, %v6902
    %v6959 = vpack.c.bf16 %v6903, %v6903
    %v6960 = vpack.c.bf16 %v6912, %v6912
    %v6961 = vpack.c.bf16 %v6913, %v6913
    %v6962 = vpack.c.bf16 %v6922, %v6922
    %v6963 = vpack.c.bf16 %v6923, %v6923
    %v6964 = vpack.c.bf16 %v6932, %v6932
    %v6965 = vpack.c.bf16 %v6933, %v6933
    %v6968 = vunpack.c.l.b16 %v6950
    %v6969 = vunpack.c.l.b16 %v6951
    %v6970 = vpack.c.b16 %v6969, %v6968
    %v6972 = vsel %vm3269, %v6775, 0
    %v6975 = vsel %vm3269, %v6970, 0
    %6977 = vmatpush.bf16.xpose.msra.mxu0 0
    %6978 = vmatpush.bf16.xpose.msra.mxu0 0
    %6979 = vmatpush.bf16.xpose.msra.mxu0 0
    %6980 = vmatpush.bf16.xpose.msra.mxu0 0
    %6981 = vmatpush.bf16.xpose.msra.mxu0 0
    %6982 = vmatpush.bf16.xpose.msra.mxu0 0
    %6983 = vmatpush.bf16.xpose.msra.mxu0 0
    %6984 = vmatpush.bf16.xpose.msra.mxu0 %v6975
    %6985 = vmatmul.bf16.gmra.mxu0 %v6972
    %v6986 = vpop.f32.mrf.mxu0
    %v6987 = vadd.f32 0.0, %v6986
    %v6988 = vpop.f32.mrf.mxu0
    %6989 = vdwg.mxu0
    %v6992 = vunpack.c.l.b16 %v6952
    %v6993 = vunpack.c.l.b16 %v6953
    %v6994 = vpack.c.b16 %v6993, %v6992
    %v6996 = vsel %vm3269, %v6776, 0
    %v6999 = vsel %vm3269, %v6994, 0
    %7001 = vmatpush.bf16.xpose.msra.mxu0 0
    %7002 = vmatpush.bf16.xpose.msra.mxu0 0
    %7003 = vmatpush.bf16.xpose.msra.mxu0 0
    %7004 = vmatpush.bf16.xpose.msra.mxu0 0
    %7005 = vmatpush.bf16.xpose.msra.mxu0 0
    %7006 = vmatpush.bf16.xpose.msra.mxu0 0
    %7007 = vmatpush.bf16.xpose.msra.mxu0 0
    %7008 = vmatpush.bf16.xpose.msra.mxu0 %v6999
    %7009 = vmatmul.bf16.gmra.mxu0 %v6996
    %v7010 = vpop.f32.mrf.mxu0
    %v7011 = vadd.f32 0.0, %v7010
    %v7012 = vpop.f32.mrf.mxu0
    %7013 = vdwg.mxu0
    %v7016 = vunpack.c.l.b16 %v6954
    %v7017 = vunpack.c.l.b16 %v6955
    %v7018 = vpack.c.b16 %v7017, %v7016
    %v7020 = vsel %vm3269, %v6777, 0
    %v7023 = vsel %vm3269, %v7018, 0
    %7025 = vmatpush.bf16.xpose.msra.mxu0 0
    %7026 = vmatpush.bf16.xpose.msra.mxu0 0
    %7027 = vmatpush.bf16.xpose.msra.mxu0 0
    %7028 = vmatpush.bf16.xpose.msra.mxu0 0
    %7029 = vmatpush.bf16.xpose.msra.mxu0 0
    %7030 = vmatpush.bf16.xpose.msra.mxu0 0
    %7031 = vmatpush.bf16.xpose.msra.mxu0 0
    %7032 = vmatpush.bf16.xpose.msra.mxu0 %v7023
    %7033 = vmatmul.bf16.gmra.mxu0 %v7020
    %v7034 = vpop.f32.mrf.mxu0
    %v7035 = vadd.f32 0.0, %v7034
    %v7036 = vpop.f32.mrf.mxu0
    %7037 = vdwg.mxu0
    %v7040 = vunpack.c.l.b16 %v6956
    %v7041 = vunpack.c.l.b16 %v6957
    %v7042 = vpack.c.b16 %v7041, %v7040
    %v7044 = vsel %vm3269, %v6778, 0
    %v7047 = vsel %vm3269, %v7042, 0
    %7049 = vmatpush.bf16.xpose.msra.mxu0 0
    %7050 = vmatpush.bf16.xpose.msra.mxu0 0
    %7051 = vmatpush.bf16.xpose.msra.mxu0 0
    %7052 = vmatpush.bf16.xpose.msra.mxu0 0
    %7053 = vmatpush.bf16.xpose.msra.mxu0 0
    %7054 = vmatpush.bf16.xpose.msra.mxu0 0
    %7055 = vmatpush.bf16.xpose.msra.mxu0 0
    %7056 = vmatpush.bf16.xpose.msra.mxu0 %v7047
    %7057 = vmatmul.bf16.gmra.mxu0 %v7044
    %v7058 = vpop.f32.mrf.mxu0
    %v7059 = vadd.f32 0.0, %v7058
    %v7060 = vpop.f32.mrf.mxu0
    %7061 = vdwg.mxu0
    %v7064 = vunpack.c.l.b16 %v6958
    %v7065 = vunpack.c.l.b16 %v6959
    %v7066 = vpack.c.b16 %v7065, %v7064
    %v7068 = vsel %vm3269, %v6779, 0
    %v7071 = vsel %vm3269, %v7066, 0
    %7073 = vmatpush.bf16.xpose.msra.mxu0 0
    %7074 = vmatpush.bf16.xpose.msra.mxu0 0
    %7075 = vmatpush.bf16.xpose.msra.mxu0 0
    %7076 = vmatpush.bf16.xpose.msra.mxu0 0
    %7077 = vmatpush.bf16.xpose.msra.mxu0 0
    %7078 = vmatpush.bf16.xpose.msra.mxu0 0
    %7079 = vmatpush.bf16.xpose.msra.mxu0 0
    %7080 = vmatpush.bf16.xpose.msra.mxu0 %v7071
    %7081 = vmatmul.bf16.gmra.mxu0 %v7068
    %v7082 = vpop.f32.mrf.mxu0
    %v7083 = vadd.f32 0.0, %v7082
    %v7084 = vpop.f32.mrf.mxu0
    %7085 = vdwg.mxu0
    %v7088 = vunpack.c.l.b16 %v6960
    %v7089 = vunpack.c.l.b16 %v6961
    %v7090 = vpack.c.b16 %v7089, %v7088
    %v7092 = vsel %vm3269, %v6780, 0
    %v7095 = vsel %vm3269, %v7090, 0
    %7097 = vmatpush.bf16.xpose.msra.mxu0 0
    %7098 = vmatpush.bf16.xpose.msra.mxu0 0
    %7099 = vmatpush.bf16.xpose.msra.mxu0 0
    %7100 = vmatpush.bf16.xpose.msra.mxu0 0
    %7101 = vmatpush.bf16.xpose.msra.mxu0 0
    %7102 = vmatpush.bf16.xpose.msra.mxu0 0
    %7103 = vmatpush.bf16.xpose.msra.mxu0 0
    %7104 = vmatpush.bf16.xpose.msra.mxu0 %v7095
    %7105 = vmatmul.bf16.gmra.mxu0 %v7092
    %v7106 = vpop.f32.mrf.mxu0
    %v7107 = vadd.f32 0.0, %v7106
    %v7108 = vpop.f32.mrf.mxu0
    %7109 = vdwg.mxu0
    %v7112 = vunpack.c.l.b16 %v6962
    %v7113 = vunpack.c.l.b16 %v6963
    %v7114 = vpack.c.b16 %v7113, %v7112
    %v7116 = vsel %vm3269, %v6781, 0
    %v7119 = vsel %vm3269, %v7114, 0
    %7121 = vmatpush.bf16.xpose.msra.mxu0 0
    %7122 = vmatpush.bf16.xpose.msra.mxu0 0
    %7123 = vmatpush.bf16.xpose.msra.mxu0 0
    %7124 = vmatpush.bf16.xpose.msra.mxu0 0
    %7125 = vmatpush.bf16.xpose.msra.mxu0 0
    %7126 = vmatpush.bf16.xpose.msra.mxu0 0
    %7127 = vmatpush.bf16.xpose.msra.mxu0 0
    %7128 = vmatpush.bf16.xpose.msra.mxu0 %v7119
    %7129 = vmatmul.bf16.gmra.mxu0 %v7116
    %v7130 = vpop.f32.mrf.mxu0
    %v7131 = vadd.f32 0.0, %v7130
    %v7132 = vpop.f32.mrf.mxu0
    %7133 = vdwg.mxu0
    %v7136 = vunpack.c.l.b16 %v6964
    %v7137 = vunpack.c.l.b16 %v6965
    %v7138 = vpack.c.b16 %v7137, %v7136
    %v7140 = vsel %vm3269, %v6782, 0
    %v7143 = vsel %vm3269, %v7138, 0
    %7145 = vmatpush.bf16.xpose.msra.mxu0 0
    %7146 = vmatpush.bf16.xpose.msra.mxu0 0
    %7147 = vmatpush.bf16.xpose.msra.mxu0 0
    %7148 = vmatpush.bf16.xpose.msra.mxu0 0
    %7149 = vmatpush.bf16.xpose.msra.mxu0 0
    %7150 = vmatpush.bf16.xpose.msra.mxu0 0
    %7151 = vmatpush.bf16.xpose.msra.mxu0 0
    %7152 = vmatpush.bf16.xpose.msra.mxu0 %v7143
    %7153 = vmatmul.bf16.gmra.mxu0 %v7140
    %v7154 = vpop.f32.mrf.mxu0
    %v7155 = vadd.f32 0.0, %v7154
    %v7156 = vpop.f32.mrf.mxu0
    %7157 = vdwg.mxu0
    %v7158 = vsel %vm3269, %v6987, -inf
    %7159 = vmax.xlane.f32.xlu0 %v7158
    %v7160 = vpop.xlane.xlu0 %7159
    %v7161 = vsel %vm3269, %v7011, -inf
    %7162 = vmax.xlane.f32.xlu0 %v7161
    %v7163 = vpop.xlane.xlu0 %7162
    %v7164 = vsel %vm3269, %v7035, -inf
    %7165 = vmax.xlane.f32.xlu0 %v7164
    %v7166 = vpop.xlane.xlu0 %7165
    %v7167 = vsel %vm3269, %v7059, -inf
    %7168 = vmax.xlane.f32.xlu0 %v7167
    %v7169 = vpop.xlane.xlu0 %7168
    %v7170 = vsel %vm3269, %v7083, -inf
    %7171 = vmax.xlane.f32.xlu0 %v7170
    %v7172 = vpop.xlane.xlu0 %7171
    %v7173 = vsel %vm3269, %v7107, -inf
    %7174 = vmax.xlane.f32.xlu0 %v7173
    %v7175 = vpop.xlane.xlu0 %7174
    %v7176 = vsel %vm3269, %v7131, -inf
    %7177 = vmax.xlane.f32.xlu0 %v7176
    %v7178 = vpop.xlane.xlu0 %7177
    %v7179 = vsel %vm3269, %v7155, -inf
    %7180 = vmax.xlane.f32.xlu0 %v7179
    %v7181 = vpop.xlane.xlu0 %7180
    %v7182 = vsub.f32 %v6987, %v7160
    %v7183 = vsub.f32 %v7011, %v7163
    %v7184 = vsub.f32 %v7035, %v7166
    %v7185 = vsub.f32 %v7059, %v7169
    %v7186 = vsub.f32 %v7083, %v7172
    %v7187 = vsub.f32 %v7107, %v7175
    %v7188 = vsub.f32 %v7131, %v7178
    %v7189 = vsub.f32 %v7155, %v7181
    %v7190 = vmul.f32 %v7182, 1.442695
    %v7191 = vpow.pop %v7190
    %v7192 = vmul.f32 %v7183, 1.442695
    %v7193 = vpow.pop %v7192
    %v7194 = vmul.f32 %v7184, 1.442695
    %v7195 = vpow.pop %v7194
    %v7196 = vmul.f32 %v7185, 1.442695
    %v7197 = vpow.pop %v7196
    %v7198 = vmul.f32 %v7186, 1.442695
    %v7199 = vpow.pop %v7198
    %v7200 = vmul.f32 %v7187, 1.442695
    %v7201 = vpow.pop %v7200
    %v7202 = vmul.f32 %v7188, 1.442695
    %v7203 = vpow.pop %v7202
    %v7204 = vmul.f32 %v7189, 1.442695
    %v7205 = vpow.pop %v7204
    %v7206 = vsel %vm3269, %v7191, 0.0
    %7207 = vadd.xlane.f32.xlu0 %v7206
    %v7208 = vpop.xlane.xlu0 %7207
    %v7209 = vsel %vm3269, %v7193, 0.0
    %7210 = vadd.xlane.f32.xlu0 %v7209
    %v7211 = vpop.xlane.xlu0 %7210
    %v7212 = vsel %vm3269, %v7195, 0.0
    %7213 = vadd.xlane.f32.xlu0 %v7212
    %v7214 = vpop.xlane.xlu0 %7213
    %v7215 = vsel %vm3269, %v7197, 0.0
    %7216 = vadd.xlane.f32.xlu0 %v7215
    %v7217 = vpop.xlane.xlu0 %7216
    %v7218 = vsel %vm3269, %v7199, 0.0
    %7219 = vadd.xlane.f32.xlu0 %v7218
    %v7220 = vpop.xlane.xlu0 %7219
    %v7221 = vsel %vm3269, %v7201, 0.0
    %7222 = vadd.xlane.f32.xlu0 %v7221
    %v7223 = vpop.xlane.xlu0 %7222
    %v7224 = vsel %vm3269, %v7203, 0.0
    %7225 = vadd.xlane.f32.xlu0 %v7224
    %v7226 = vpop.xlane.xlu0 %7225
    %v7227 = vsel %vm3269, %v7205, 0.0
    %7228 = vadd.xlane.f32.xlu0 %v7227
    %v7229 = vpop.xlane.xlu0 %7228
    %v7230 = vpack.c.bf16 %v7191, %v7191
    %v7231 = vpack.c.bf16 %v7193, %v7193
    %v7232 = vpack.c.bf16 %v7195, %v7195
    %v7233 = vpack.c.bf16 %v7197, %v7197
    %v7234 = vpack.c.bf16 %v7199, %v7199
    %v7235 = vpack.c.bf16 %v7201, %v7201
    %v7236 = vpack.c.bf16 %v7203, %v7203
    %v7237 = vpack.c.bf16 %v7205, %v7205
    %7302 = vst [vmem:[#allocation1] ss:$4 sm:$0xff] %v6437
    %s7303 = scalar_lea.vmem [#allocation1], 1
    %7304 = vst [vmem:[%s7303] ss:$4 sm:$0xff] %v6445
    %s7305 = scalar_lea.vmem [#allocation1], 2
    %7306 = vst [vmem:[%s7305] ss:$4 sm:$0xff] %v6453
    %s7307 = scalar_lea.vmem [#allocation1], 3
    %7308 = vst [vmem:[%s7307] ss:$4 sm:$0xff] %v6461
    %s7309 = scalar_lea.vmem [#allocation1], 32
    %7310 = vst [vmem:[%s7309] ss:$4 sm:$0xff] %v6469
    %s7311 = scalar_lea.vmem [#allocation1], 33
    %7312 = vst [vmem:[%s7311] ss:$4 sm:$0xff] %v6477
    %s7313 = scalar_lea.vmem [#allocation1], 34
    %7314 = vst [vmem:[%s7313] ss:$4 sm:$0xff] %v6485
    %s7315 = scalar_lea.vmem [#allocation1], 35
    %7316 = vst [vmem:[%s7315] ss:$4 sm:$0xff] %v6493
    %v7317 = vld.sshfl [vmem:[#allocation1] sm:$0xff pattern:$0x73625140]
    %v7318 = vld.sshfl [vmem:[#allocation1 + $0x20] sm:$0xff pattern:$0x73625140]
    %7319 = vst [vmem:[#allocation1] ss:$4 sm:$0xff] %v6439
    %7320 = vst [vmem:[%s7303] ss:$4 sm:$0xff] %v6447
    %7321 = vst [vmem:[%s7305] ss:$4 sm:$0xff] %v6455
    %7322 = vst [vmem:[%s7307] ss:$4 sm:$0xff] %v6463
    %7323 = vst [vmem:[%s7309] ss:$4 sm:$0xff] %v6471
    %7324 = vst [vmem:[%s7311] ss:$4 sm:$0xff] %v6479
    %7325 = vst [vmem:[%s7313] ss:$4 sm:$0xff] %v6487
    %7326 = vst [vmem:[%s7315] ss:$4 sm:$0xff] %v6495
    %v7327 = vld.sshfl [vmem:[#allocation1] sm:$0xff pattern:$0x73625140]
    %v7328 = vld.sshfl [vmem:[#allocation1 + $0x20] sm:$0xff pattern:$0x73625140]
    %7329 = vst [vmem:[#allocation1] ss:$4 sm:$0xff] %v6501
    %7330 = vst [vmem:[%s7303] ss:$4 sm:$0xff] %v6509
    %7331 = vst [vmem:[%s7305] ss:$4 sm:$0xff] %v6517
    %7332 = vst [vmem:[%s7307] ss:$4 sm:$0xff] %v6525
    %7333 = vst [vmem:[%s7309] ss:$4 sm:$0xff] %v6533
    %7334 = vst [vmem:[%s7311] ss:$4 sm:$0xff] %v6541
    %7335 = vst [vmem:[%s7313] ss:$4 sm:$0xff] %v6549
    %7336 = vst [vmem:[%s7315] ss:$4 sm:$0xff] %v6557
    %v7337 = vld.sshfl [vmem:[#allocation1] sm:$0xff pattern:$0x73625140]
    %v7338 = vld.sshfl [vmem:[#allocation1 + $0x20] sm:$0xff pattern:$0x73625140]
    %7339 = vst [vmem:[#allocation1] ss:$4 sm:$0xff] %v6503
    %7340 = vst [vmem:[%s7303] ss:$4 sm:$0xff] %v6511
    %7341 = vst [vmem:[%s7305] ss:$4 sm:$0xff] %v6519
    %7342 = vst [vmem:[%s7307] ss:$4 sm:$0xff] %v6527
    %7343 = vst [vmem:[%s7309] ss:$4 sm:$0xff] %v6535
    %7344 = vst [vmem:[%s7311] ss:$4 sm:$0xff] %v6543
    %7345 = vst [vmem:[%s7313] ss:$4 sm:$0xff] %v6551
    %7346 = vst [vmem:[%s7315] ss:$4 sm:$0xff] %v6559
    %v7347 = vld.sshfl [vmem:[#allocation1] sm:$0xff pattern:$0x73625140]
    %v7348 = vld.sshfl [vmem:[#allocation1 + $0x20] sm:$0xff pattern:$0x73625140]
    %7349 = vst [vmem:[#allocation1] ss:$4 sm:$0xff] %v6565
    %7350 = vst [vmem:[%s7303] ss:$4 sm:$0xff] %v6573
    %7351 = vst [vmem:[%s7305] ss:$4 sm:$0xff] %v6581
    %7352 = vst [vmem:[%s7307] ss:$4 sm:$0xff] %v6589
    %7353 = vst [vmem:[%s7309] ss:$4 sm:$0xff] %v6597
    %7354 = vst [vmem:[%s7311] ss:$4 sm:$0xff] %v6605
    %7355 = vst [vmem:[%s7313] ss:$4 sm:$0xff] %v6613
    %7356 = vst [vmem:[%s7315] ss:$4 sm:$0xff] %v6621
    %v7357 = vld.sshfl [vmem:[#allocation1] sm:$0xff pattern:$0x73625140]
    %v7358 = vld.sshfl [vmem:[#allocation1 + $0x20] sm:$0xff pattern:$0x73625140]
    %7359 = vst [vmem:[#allocation1] ss:$4 sm:$0xff] %v6567
    %7360 = vst [vmem:[%s7303] ss:$4 sm:$0xff] %v6575
    %7361 = vst [vmem:[%s7305] ss:$4 sm:$0xff] %v6583
    %7362 = vst [vmem:[%s7307] ss:$4 sm:$0xff] %v6591
    %7363 = vst [vmem:[%s7309] ss:$4 sm:$0xff] %v6599
    %7364 = vst [vmem:[%s7311] ss:$4 sm:$0xff] %v6607
    %7365 = vst [vmem:[%s7313] ss:$4 sm:$0xff] %v6615
    %7366 = vst [vmem:[%s7315] ss:$4 sm:$0xff] %v6623
    %v7367 = vld.sshfl [vmem:[#allocation1] sm:$0xff pattern:$0x73625140]
    %v7368 = vld.sshfl [vmem:[#allocation1 + $0x20] sm:$0xff pattern:$0x73625140]
    %7369 = vst [vmem:[#allocation1] ss:$4 sm:$0xff] %v6629
    %7370 = vst [vmem:[%s7303] ss:$4 sm:$0xff] %v6637
    %7371 = vst [vmem:[%s7305] ss:$4 sm:$0xff] %v6645
    %7372 = vst [vmem:[%s7307] ss:$4 sm:$0xff] %v6653
    %7373 = vst [vmem:[%s7309] ss:$4 sm:$0xff] %v6661
    %7374 = vst [vmem:[%s7311] ss:$4 sm:$0xff] %v6669
    %7375 = vst [vmem:[%s7313] ss:$4 sm:$0xff] %v6677
    %7376 = vst [vmem:[%s7315] ss:$4 sm:$0xff] %v6685
    %v7377 = vld.sshfl [vmem:[#allocation1] sm:$0xff pattern:$0x73625140]
    %v7378 = vld.sshfl [vmem:[#allocation1 + $0x20] sm:$0xff pattern:$0x73625140]
    %7379 = vst [vmem:[#allocation1] ss:$4 sm:$0xff] %v6631
    %7380 = vst [vmem:[%s7303] ss:$4 sm:$0xff] %v6639
    %7381 = vst [vmem:[%s7305] ss:$4 sm:$0xff] %v6647
    %7382 = vst [vmem:[%s7307] ss:$4 sm:$0xff] %v6655
    %7383 = vst [vmem:[%s7309] ss:$4 sm:$0xff] %v6663
    %7384 = vst [vmem:[%s7311] ss:$4 sm:$0xff] %v6671
    %7385 = vst [vmem:[%s7313] ss:$4 sm:$0xff] %v6679
    %7386 = vst [vmem:[%s7315] ss:$4 sm:$0xff] %v6687
    %v7387 = vld.sshfl [vmem:[#allocation1] sm:$0xff pattern:$0x73625140]
    %v7388 = vld.sshfl [vmem:[#allocation1 + $0x20] sm:$0xff pattern:$0x73625140]
    %v7405 = vpack.c.bf16 %v7317, %v7317
    %v7406 = vpack.c.bf16 %v7318, %v7318
    %v7407 = vpack.c.bf16 %v7327, %v7327
    %v7408 = vpack.c.bf16 %v7328, %v7328
    %v7409 = vpack.c.bf16 %v7337, %v7337
    %v7410 = vpack.c.bf16 %v7338, %v7338
    %v7411 = vpack.c.bf16 %v7347, %v7347
    %v7412 = vpack.c.bf16 %v7348, %v7348
    %v7413 = vpack.c.bf16 %v7357, %v7357
    %v7414 = vpack.c.bf16 %v7358, %v7358
    %v7415 = vpack.c.bf16 %v7367, %v7367
    %v7416 = vpack.c.bf16 %v7368, %v7368
    %v7417 = vpack.c.bf16 %v7377, %v7377
    %v7418 = vpack.c.bf16 %v7378, %v7378
    %v7419 = vpack.c.bf16 %v7387, %v7387
    %v7420 = vpack.c.bf16 %v7388, %v7388
    %v7423 = vunpack.c.l.b16 %v7405
    %v7424 = vunpack.c.l.b16 %v7406
    %v7425 = vpack.c.b16 %v7424, %v7423
    %v7428 = vsel %vm3269, %v7230, 0
    %7430 = vmatpush.bf16.msra.mxu0 0
    %7431 = vmatpush.bf16.msra.mxu0 0
    %7432 = vmatpush.bf16.msra.mxu0 0
    %7433 = vmatpush.bf16.msra.mxu0 0
    %7434 = vmatpush.bf16.msra.mxu0 0
    %7435 = vmatpush.bf16.msra.mxu0 0
    %7436 = vmatpush.bf16.msra.mxu0 0
    %7437 = vmatpush.bf16.msra.mxu0 %v7425
    %7438 = vmatmul.bf16.gmra.mxu0 %v7428
    %v7439 = vpop.f32.mrf.mxu0
    %v7440 = vadd.f32 0.0, %v7439
    %v7441 = vpop.f32.mrf.mxu0
    %7442 = vdwg.mxu0
    %v7445 = vunpack.c.l.b16 %v7407
    %v7446 = vunpack.c.l.b16 %v7408
    %v7447 = vpack.c.b16 %v7446, %v7445
    %v7450 = vsel %vm3269, %v7231, 0
    %7452 = vmatpush.bf16.msra.mxu0 0
    %7453 = vmatpush.bf16.msra.mxu0 0
    %7454 = vmatpush.bf16.msra.mxu0 0
    %7455 = vmatpush.bf16.msra.mxu0 0
    %7456 = vmatpush.bf16.msra.mxu0 0
    %7457 = vmatpush.bf16.msra.mxu0 0
    %7458 = vmatpush.bf16.msra.mxu0 0
    %7459 = vmatpush.bf16.msra.mxu0 %v7447
    %7460 = vmatmul.bf16.gmra.mxu0 %v7450
    %v7461 = vpop.f32.mrf.mxu0
    %v7462 = vadd.f32 0.0, %v7461
    %v7463 = vpop.f32.mrf.mxu0
    %7464 = vdwg.mxu0
    %v7467 = vunpack.c.l.b16 %v7409
    %v7468 = vunpack.c.l.b16 %v7410
    %v7469 = vpack.c.b16 %v7468, %v7467
    %v7472 = vsel %vm3269, %v7232, 0
    %7474 = vmatpush.bf16.msra.mxu0 0
    %7475 = vmatpush.bf16.msra.mxu0 0
    %7476 = vmatpush.bf16.msra.mxu0 0
    %7477 = vmatpush.bf16.msra.mxu0 0
    %7478 = vmatpush.bf16.msra.mxu0 0
    %7479 = vmatpush.bf16.msra.mxu0 0
    %7480 = vmatpush.bf16.msra.mxu0 0
    %7481 = vmatpush.bf16.msra.mxu0 %v7469
    %7482 = vmatmul.bf16.gmra.mxu0 %v7472
    %v7483 = vpop.f32.mrf.mxu0
    %v7484 = vadd.f32 0.0, %v7483
    %v7485 = vpop.f32.mrf.mxu0
    %7486 = vdwg.mxu0
    %v7489 = vunpack.c.l.b16 %v7411
    %v7490 = vunpack.c.l.b16 %v7412
    %v7491 = vpack.c.b16 %v7490, %v7489
    %v7494 = vsel %vm3269, %v7233, 0
    %7496 = vmatpush.bf16.msra.mxu0 0
    %7497 = vmatpush.bf16.msra.mxu0 0
    %7498 = vmatpush.bf16.msra.mxu0 0
    %7499 = vmatpush.bf16.msra.mxu0 0
    %7500 = vmatpush.bf16.msra.mxu0 0
    %7501 = vmatpush.bf16.msra.mxu0 0
    %7502 = vmatpush.bf16.msra.mxu0 0
    %7503 = vmatpush.bf16.msra.mxu0 %v7491
    %7504 = vmatmul.bf16.gmra.mxu0 %v7494
    %v7505 = vpop.f32.mrf.mxu0
    %v7506 = vadd.f32 0.0, %v7505
    %v7507 = vpop.f32.mrf.mxu0
    %7508 = vdwg.mxu0
    %v7511 = vunpack.c.l.b16 %v7413
    %v7512 = vunpack.c.l.b16 %v7414
    %v7513 = vpack.c.b16 %v7512, %v7511
    %v7516 = vsel %vm3269, %v7234, 0
    %7518 = vmatpush.bf16.msra.mxu0 0
    %7519 = vmatpush.bf16.msra.mxu0 0
    %7520 = vmatpush.bf16.msra.mxu0 0
    %7521 = vmatpush.bf16.msra.mxu0 0
    %7522 = vmatpush.bf16.msra.mxu0 0
    %7523 = vmatpush.bf16.msra.mxu0 0
    %7524 = vmatpush.bf16.msra.mxu0 0
    %7525 = vmatpush.bf16.msra.mxu0 %v7513
    %7526 = vmatmul.bf16.gmra.mxu0 %v7516
    %v7527 = vpop.f32.mrf.mxu0
    %v7528 = vadd.f32 0.0, %v7527
    %v7529 = vpop.f32.mrf.mxu0
    %7530 = vdwg.mxu0
    %v7533 = vunpack.c.l.b16 %v7415
    %v7534 = vunpack.c.l.b16 %v7416
    %v7535 = vpack.c.b16 %v7534, %v7533
    %v7538 = vsel %vm3269, %v7235, 0
    %7540 = vmatpush.bf16.msra.mxu0 0
    %7541 = vmatpush.bf16.msra.mxu0 0
    %7542 = vmatpush.bf16.msra.mxu0 0
    %7543 = vmatpush.bf16.msra.mxu0 0
    %7544 = vmatpush.bf16.msra.mxu0 0
    %7545 = vmatpush.bf16.msra.mxu0 0
    %7546 = vmatpush.bf16.msra.mxu0 0
    %7547 = vmatpush.bf16.msra.mxu0 %v7535
    %7548 = vmatmul.bf16.gmra.mxu0 %v7538
    %v7549 = vpop.f32.mrf.mxu0
    %v7550 = vadd.f32 0.0, %v7549
    %v7551 = vpop.f32.mrf.mxu0
    %7552 = vdwg.mxu0
    %v7555 = vunpack.c.l.b16 %v7417
    %v7556 = vunpack.c.l.b16 %v7418
    %v7557 = vpack.c.b16 %v7556, %v7555
    %v7560 = vsel %vm3269, %v7236, 0
    %7562 = vmatpush.bf16.msra.mxu0 0
    %7563 = vmatpush.bf16.msra.mxu0 0
    %7564 = vmatpush.bf16.msra.mxu0 0
    %7565 = vmatpush.bf16.msra.mxu0 0
    %7566 = vmatpush.bf16.msra.mxu0 0
    %7567 = vmatpush.bf16.msra.mxu0 0
    %7568 = vmatpush.bf16.msra.mxu0 0
    %7569 = vmatpush.bf16.msra.mxu0 %v7557
    %7570 = vmatmul.bf16.gmra.mxu0 %v7560
    %v7571 = vpop.f32.mrf.mxu0
    %v7572 = vadd.f32 0.0, %v7571
    %v7573 = vpop.f32.mrf.mxu0
    %7574 = vdwg.mxu0
    %v7577 = vunpack.c.l.b16 %v7419
    %v7578 = vunpack.c.l.b16 %v7420
    %v7579 = vpack.c.b16 %v7578, %v7577
    %v7582 = vsel %vm3269, %v7237, 0
    %7584 = vmatpush.bf16.msra.mxu0 0
    %7585 = vmatpush.bf16.msra.mxu0 0
    %7586 = vmatpush.bf16.msra.mxu0 0
    %7587 = vmatpush.bf16.msra.mxu0 0
    %7588 = vmatpush.bf16.msra.mxu0 0
    %7589 = vmatpush.bf16.msra.mxu0 0
    %7590 = vmatpush.bf16.msra.mxu0 0
    %7591 = vmatpush.bf16.msra.mxu0 %v7579
    %7592 = vmatmul.bf16.gmra.mxu0 %v7582
    %v7593 = vpop.f32.mrf.mxu0
    %v7594 = vadd.f32 0.0, %v7593
    %v7595 = vpop.f32.mrf.mxu0
    %7596 = vdwg.mxu0
    %v7597 = vrcp.pop %v7208
    %v7598 = vmul.f32 %v7208, %v7597
    %v7599 = vsub.f32 1.0, %v7598
    %v7600 = vmul.f32 %v7597, %v7599
    %v7601 = vadd.f32 %v7597, %v7600
    %vm7602 = vweird.f32 %v7208
    %vm7603 = vweird.f32 %v7597
    %vm7604 = vmor %vm7602, %vm7603
    %v7605 = vsel %vm7604, %v7597, %v7601
    %v7606 = vand.u32 2147483647, %v7208
    %vm7607 = vcmp.eq.f32.partialorder %v7606, 8.507059e+37
    %v7608 = vand.u32 %v7208, 2147483648
    %v7609 = vor.u32 1.1754944e-38, %v7608
    %v7610 = vsel %vm7607, %v7609, %v7605
    %v7611 = vrcp.pop %v7211
    %v7612 = vmul.f32 %v7211, %v7611
    %v7613 = vsub.f32 1.0, %v7612
    %v7614 = vmul.f32 %v7611, %v7613
    %v7615 = vadd.f32 %v7611, %v7614
    %vm7616 = vweird.f32 %v7211
    %vm7617 = vweird.f32 %v7611
    %vm7618 = vmor %vm7616, %vm7617
    %v7619 = vsel %vm7618, %v7611, %v7615
    %v7620 = vand.u32 2147483647, %v7211
    %vm7621 = vcmp.eq.f32.partialorder %v7620, 8.507059e+37
    %v7622 = vand.u32 %v7211, 2147483648
    %v7623 = vor.u32 1.1754944e-38, %v7622
    %v7624 = vsel %vm7621, %v7623, %v7619
    %v7625 = vrcp.pop %v7214
    %v7626 = vmul.f32 %v7214, %v7625
    %v7627 = vsub.f32 1.0, %v7626
    %v7628 = vmul.f32 %v7625, %v7627
    %v7629 = vadd.f32 %v7625, %v7628
    %vm7630 = vweird.f32 %v7214
    %vm7631 = vweird.f32 %v7625
    %vm7632 = vmor %vm7630, %vm7631
    %v7633 = vsel %vm7632, %v7625, %v7629
    %v7634 = vand.u32 2147483647, %v7214
    %vm7635 = vcmp.eq.f32.partialorder %v7634, 8.507059e+37
    %v7636 = vand.u32 %v7214, 2147483648
    %v7637 = vor.u32 1.1754944e-38, %v7636
    %v7638 = vsel %vm7635, %v7637, %v7633
    %v7639 = vrcp.pop %v7217
    %v7640 = vmul.f32 %v7217, %v7639
    %v7641 = vsub.f32 1.0, %v7640
    %v7642 = vmul.f32 %v7639, %v7641
    %v7643 = vadd.f32 %v7639, %v7642
    %vm7644 = vweird.f32 %v7217
    %vm7645 = vweird.f32 %v7639
    %vm7646 = vmor %vm7644, %vm7645
    %v7647 = vsel %vm7646, %v7639, %v7643
    %v7648 = vand.u32 2147483647, %v7217
    %vm7649 = vcmp.eq.f32.partialorder %v7648, 8.507059e+37
    %v7650 = vand.u32 %v7217, 2147483648
    %v7651 = vor.u32 1.1754944e-38, %v7650
    %v7652 = vsel %vm7649, %v7651, %v7647
    %v7653 = vrcp.pop %v7220
    %v7654 = vmul.f32 %v7220, %v7653
    %v7655 = vsub.f32 1.0, %v7654
    %v7656 = vmul.f32 %v7653, %v7655
    %v7657 = vadd.f32 %v7653, %v7656
    %vm7658 = vweird.f32 %v7220
    %vm7659 = vweird.f32 %v7653
    %vm7660 = vmor %vm7658, %vm7659
    %v7661 = vsel %vm7660, %v7653, %v7657
    %v7662 = vand.u32 2147483647, %v7220
    %vm7663 = vcmp.eq.f32.partialorder %v7662, 8.507059e+37
    %v7664 = vand.u32 %v7220, 2147483648
    %v7665 = vor.u32 1.1754944e-38, %v7664
    %v7666 = vsel %vm7663, %v7665, %v7661
    %v7667 = vrcp.pop %v7223
    %v7668 = vmul.f32 %v7223, %v7667
    %v7669 = vsub.f32 1.0, %v7668
    %v7670 = vmul.f32 %v7667, %v7669
    %v7671 = vadd.f32 %v7667, %v7670
    %vm7672 = vweird.f32 %v7223
    %vm7673 = vweird.f32 %v7667
    %vm7674 = vmor %vm7672, %vm7673
    %v7675 = vsel %vm7674, %v7667, %v7671
    %v7676 = vand.u32 2147483647, %v7223
    %vm7677 = vcmp.eq.f32.partialorder %v7676, 8.507059e+37
    %v7678 = vand.u32 %v7223, 2147483648
    %v7679 = vor.u32 1.1754944e-38, %v7678
    %v7680 = vsel %vm7677, %v7679, %v7675
    %v7681 = vrcp.pop %v7226
    %v7682 = vmul.f32 %v7226, %v7681
    %v7683 = vsub.f32 1.0, %v7682
    %v7684 = vmul.f32 %v7681, %v7683
    %v7685 = vadd.f32 %v7681, %v7684
    %vm7686 = vweird.f32 %v7226
    %vm7687 = vweird.f32 %v7681
    %vm7688 = vmor %vm7686, %vm7687
    %v7689 = vsel %vm7688, %v7681, %v7685
    %v7690 = vand.u32 2147483647, %v7226
    %vm7691 = vcmp.eq.f32.partialorder %v7690, 8.507059e+37
    %v7692 = vand.u32 %v7226, 2147483648
    %v7693 = vor.u32 1.1754944e-38, %v7692
    %v7694 = vsel %vm7691, %v7693, %v7689
    %v7695 = vrcp.pop %v7229
    %v7696 = vmul.f32 %v7229, %v7695
    %v7697 = vsub.f32 1.0, %v7696
    %v7698 = vmul.f32 %v7695, %v7697
    %v7699 = vadd.f32 %v7695, %v7698
    %vm7700 = vweird.f32 %v7229
    %vm7701 = vweird.f32 %v7695
    %vm7702 = vmor %vm7700, %vm7701
    %v7703 = vsel %vm7702, %v7695, %v7699
    %v7704 = vand.u32 2147483647, %v7229
    %vm7705 = vcmp.eq.f32.partialorder %v7704, 8.507059e+37
    %v7706 = vand.u32 %v7229, 2147483648
    %v7707 = vor.u32 1.1754944e-38, %v7706
    %v7708 = vsel %vm7705, %v7707, %v7703
    %v7709 = vmul.f32 %v7440, %v7610
    %v7710 = vmul.f32 %v7462, %v7624
    %v7711 = vmul.f32 %v7484, %v7638
    %v7712 = vmul.f32 %v7506, %v7652
    %v7713 = vmul.f32 %v7528, %v7666
    %v7714 = vmul.f32 %v7550, %v7680
    %v7715 = vmul.f32 %v7572, %v7694
    %v7716 = vmul.f32 %v7594, %v7708
    %v7717 = vrot.slane %v7711, 4
    %v7718 = vsel %vm714, %v7717, %v7709
    %v7719 = vrot.slane %v7709, 4
    %v7720 = vsel %vm714, %v7711, %v7719
    %v7722 = vunpack.c.l.s4 1983009808
    %v7723 = vunpack.c.0.s8 %v7722
    %v7724 = vperm.slane %v7718, %v7723
    %v7726 = vunpack.c.l.s4 1983009808
    %v7727 = vunpack.c.0.s8 %v7726
    %v7728 = vperm.slane %v7720, %v7727
    %v7729 = vrot.slane %v7712, 4
    %v7730 = vsel %vm714, %v7729, %v7710
    %v7731 = vrot.slane %v7710, 4
    %v7732 = vsel %vm714, %v7712, %v7731
    %v7734 = vunpack.c.l.s4 1983009808
    %v7735 = vunpack.c.0.s8 %v7734
    %v7736 = vperm.slane %v7730, %v7735
    %v7738 = vunpack.c.l.s4 1983009808
    %v7739 = vunpack.c.0.s8 %v7738
    %v7740 = vperm.slane %v7732, %v7739
    %v7741 = vrot.slane %v7715, 4
    %v7742 = vsel %vm714, %v7741, %v7713
    %v7743 = vrot.slane %v7713, 4
    %v7744 = vsel %vm714, %v7715, %v7743
    %v7746 = vunpack.c.l.s4 1983009808
    %v7747 = vunpack.c.0.s8 %v7746
    %v7748 = vperm.slane %v7742, %v7747
    %v7750 = vunpack.c.l.s4 1983009808
    %v7751 = vunpack.c.0.s8 %v7750
    %v7752 = vperm.slane %v7744, %v7751
    %v7753 = vrot.slane %v7716, 4
    %v7754 = vsel %vm714, %v7753, %v7714
    %v7755 = vrot.slane %v7714, 4
    %v7756 = vsel %vm714, %v7716, %v7755
    %v7758 = vunpack.c.l.s4 1983009808
    %v7759 = vunpack.c.0.s8 %v7758
    %v7760 = vperm.slane %v7754, %v7759
    %v7762 = vunpack.c.l.s4 1983009808
    %v7763 = vunpack.c.0.s8 %v7762
    %v7764 = vperm.slane %v7756, %v7763
    %v7765 = vrot.slane %v7736, 4
    %v7766 = vsel %vm714, %v7765, %v7724
    %v7767 = vrot.slane %v7724, 4
    %v7768 = vsel %vm714, %v7736, %v7767
    %v7770 = vunpack.c.l.s4 1934713408
    %v7771 = vunpack.c.0.s8 %v7770
    %v7772 = vperm.slane %v7766, %v7771
    %v7774 = vunpack.c.l.s4 1934713408
    %v7775 = vunpack.c.0.s8 %v7774
    %v7776 = vperm.slane %v7768, %v7775
    %v7777 = vrot.slane %v7740, 4
    %v7778 = vsel %vm714, %v7777, %v7728
    %v7779 = vrot.slane %v7728, 4
    %v7780 = vsel %vm714, %v7740, %v7779
    %v7782 = vunpack.c.l.s4 1934713408
    %v7783 = vunpack.c.0.s8 %v7782
    %v7784 = vperm.slane %v7778, %v7783
    %v7786 = vunpack.c.l.s4 1934713408
    %v7787 = vunpack.c.0.s8 %v7786
    %v7788 = vperm.slane %v7780, %v7787
    %v7789 = vrot.slane %v7760, 4
    %v7790 = vsel %vm714, %v7789, %v7748
    %v7791 = vrot.slane %v7748, 4
    %v7792 = vsel %vm714, %v7760, %v7791
    %v7794 = vunpack.c.l.s4 1934713408
    %v7795 = vunpack.c.0.s8 %v7794
    %v7796 = vperm.slane %v7790, %v7795
    %v7798 = vunpack.c.l.s4 1934713408
    %v7799 = vunpack.c.0.s8 %v7798
    %v7800 = vperm.slane %v7792, %v7799
    %v7801 = vrot.slane %v7764, 4
    %v7802 = vsel %vm714, %v7801, %v7752
    %v7803 = vrot.slane %v7752, 4
    %v7804 = vsel %vm714, %v7764, %v7803
    %v7806 = vunpack.c.l.s4 1934713408
    %v7807 = vunpack.c.0.s8 %v7806
    %v7808 = vperm.slane %v7802, %v7807
    %v7810 = vunpack.c.l.s4 1934713408
    %v7811 = vunpack.c.0.s8 %v7810
    %v7812 = vperm.slane %v7804, %v7811
    %v7813 = vrot.slane %v7796, 4
    %v7814 = vsel %vm714, %v7813, %v7772
    %v7815 = vrot.slane %v7772, 4
    %v7816 = vsel %vm714, %v7796, %v7815
    %v7817 = vrot.slane %v7800, 4
    %v7818 = vsel %vm714, %v7817, %v7776
    %v7819 = vrot.slane %v7776, 4
    %v7820 = vsel %vm714, %v7800, %v7819
    %v7821 = vrot.slane %v7808, 4
    %v7822 = vsel %vm714, %v7821, %v7784
    %v7823 = vrot.slane %v7784, 4
    %v7824 = vsel %vm714, %v7808, %v7823
    %v7825 = vrot.slane %v7812, 4
    %v7826 = vsel %vm714, %v7825, %v7788
    %v7827 = vrot.slane %v7788, 4
    %v7828 = vsel %vm714, %v7812, %v7827
    %v7829 = vrot.slane %v4113, 4
    %v7830 = vsel %vm714, 0.0, %v7829
    %v7832 = vunpack.c.l.s4 1983009808
    %v7833 = vunpack.c.0.s8 %v7832
    %v7834 = vperm.slane %v4113, %v7833
    %v7836 = vunpack.c.l.s4 1983009808
    %v7837 = vunpack.c.0.s8 %v7836
    %v7838 = vperm.slane %v7830, %v7837
    %v7839 = vrot.slane %v7834, 4
    %v7840 = vsel %vm714, 0.0, %v7839
    %v7842 = vunpack.c.l.s4 1934713408
    %v7843 = vunpack.c.0.s8 %v7842
    %v7844 = vperm.slane %v7834, %v7843
    %v7846 = vunpack.c.l.s4 1934713408
    %v7847 = vunpack.c.0.s8 %v7846
    %v7848 = vperm.slane %v7840, %v7847
    %v7849 = vrot.slane %v7838, 4
    %v7850 = vsel %vm714, 0.0, %v7849
    %v7852 = vunpack.c.l.s4 1934713408
    %v7853 = vunpack.c.0.s8 %v7852
    %v7854 = vperm.slane %v7838, %v7853
    %v7856 = vunpack.c.l.s4 1934713408
    %v7857 = vunpack.c.0.s8 %v7856
    %v7858 = vperm.slane %v7850, %v7857
    %v7859 = vrot.slane %v7844, 4
    %v7860 = vsel %vm714, 0.0, %v7859
    %v7861 = vrot.slane %v7848, 4
    %v7862 = vsel %vm714, 0.0, %v7861
    %v7863 = vrot.slane %v7854, 4
    %v7864 = vsel %vm714, 0.0, %v7863
    %v7865 = vrot.slane %v7858, 4
    %v7866 = vsel %vm714, 0.0, %v7865
    %v7867 = vrot.slane %v4115, 4
    %v7868 = vsel %vm714, 0.0, %v7867
    %v7870 = vunpack.c.l.s4 1983009808
    %v7871 = vunpack.c.0.s8 %v7870
    %v7872 = vperm.slane %v4115, %v7871
    %v7874 = vunpack.c.l.s4 1983009808
    %v7875 = vunpack.c.0.s8 %v7874
    %v7876 = vperm.slane %v7868, %v7875
    %v7877 = vrot.slane %v7872, 4
    %v7878 = vsel %vm714, 0.0, %v7877
    %v7880 = vunpack.c.l.s4 1934713408
    %v7881 = vunpack.c.0.s8 %v7880
    %v7882 = vperm.slane %v7872, %v7881
    %v7884 = vunpack.c.l.s4 1934713408
    %v7885 = vunpack.c.0.s8 %v7884
    %v7886 = vperm.slane %v7878, %v7885
    %v7887 = vrot.slane %v7876, 4
    %v7888 = vsel %vm714, 0.0, %v7887
    %v7890 = vunpack.c.l.s4 1934713408
    %v7891 = vunpack.c.0.s8 %v7890
    %v7892 = vperm.slane %v7876, %v7891
    %v7894 = vunpack.c.l.s4 1934713408
    %v7895 = vunpack.c.0.s8 %v7894
    %v7896 = vperm.slane %v7888, %v7895
    %v7897 = vrot.slane %v7882, 4
    %v7898 = vsel %vm714, 0.0, %v7897
    %v7899 = vrot.slane %v7886, 4
    %v7900 = vsel %vm714, 0.0, %v7899
    %v7901 = vrot.slane %v7892, 4
    %v7902 = vsel %vm714, 0.0, %v7901
    %v7903 = vrot.slane %v7896, 4
    %v7904 = vsel %vm714, 0.0, %v7903
    %v7905 = vrot.slane %v4117, 4
    %v7906 = vsel %vm714, 0.0, %v7905
    %v7908 = vunpack.c.l.s4 1983009808
    %v7909 = vunpack.c.0.s8 %v7908
    %v7910 = vperm.slane %v4117, %v7909
    %v7912 = vunpack.c.l.s4 1983009808
    %v7913 = vunpack.c.0.s8 %v7912
    %v7914 = vperm.slane %v7906, %v7913
    %v7915 = vrot.slane %v7910, 4
    %v7916 = vsel %vm714, 0.0, %v7915
    %v7918 = vunpack.c.l.s4 1934713408
    %v7919 = vunpack.c.0.s8 %v7918
    %v7920 = vperm.slane %v7910, %v7919
    %v7922 = vunpack.c.l.s4 1934713408
    %v7923 = vunpack.c.0.s8 %v7922
    %v7924 = vperm.slane %v7916, %v7923
    %v7925 = vrot.slane %v7914, 4
    %v7926 = vsel %vm714, 0.0, %v7925
    %v7928 = vunpack.c.l.s4 1934713408
    %v7929 = vunpack.c.0.s8 %v7928
    %v7930 = vperm.slane %v7914, %v7929
    %v7932 = vunpack.c.l.s4 1934713408
    %v7933 = vunpack.c.0.s8 %v7932
    %v7934 = vperm.slane %v7926, %v7933
    %v7935 = vrot.slane %v7920, 4
    %v7936 = vsel %vm714, 0.0, %v7935
    %v7937 = vrot.slane %v7924, 4
    %v7938 = vsel %vm714, 0.0, %v7937
    %v7939 = vrot.slane %v7930, 4
    %v7940 = vsel %vm714, 0.0, %v7939
    %v7941 = vrot.slane %v7934, 4
    %v7942 = vsel %vm714, 0.0, %v7941
    %v7943 = vrot.slane %v4119, 4
    %v7944 = vsel %vm714, 0.0, %v7943
    %v7946 = vunpack.c.l.s4 1983009808
    %v7947 = vunpack.c.0.s8 %v7946
    %v7948 = vperm.slane %v4119, %v7947
    %v7950 = vunpack.c.l.s4 1983009808
    %v7951 = vunpack.c.0.s8 %v7950
    %v7952 = vperm.slane %v7944, %v7951
    %v7953 = vrot.slane %v7948, 4
    %v7954 = vsel %vm714, 0.0, %v7953
    %v7956 = vunpack.c.l.s4 1934713408
    %v7957 = vunpack.c.0.s8 %v7956
    %v7958 = vperm.slane %v7948, %v7957
    %v7960 = vunpack.c.l.s4 1934713408
    %v7961 = vunpack.c.0.s8 %v7960
    %v7962 = vperm.slane %v7954, %v7961
    %v7963 = vrot.slane %v7952, 4
    %v7964 = vsel %vm714, 0.0, %v7963
    %v7966 = vunpack.c.l.s4 1934713408
    %v7967 = vunpack.c.0.s8 %v7966
    %v7968 = vperm.slane %v7952, %v7967
    %v7970 = vunpack.c.l.s4 1934713408
    %v7971 = vunpack.c.0.s8 %v7970
    %v7972 = vperm.slane %v7964, %v7971
    %v7973 = vrot.slane %v7958, 4
    %v7974 = vsel %vm714, 0.0, %v7973
    %v7975 = vrot.slane %v7962, 4
    %v7976 = vsel %vm714, 0.0, %v7975
    %v7977 = vrot.slane %v7968, 4
    %v7978 = vsel %vm714, 0.0, %v7977
    %v7979 = vrot.slane %v7972, 4
    %v7980 = vsel %vm714, 0.0, %v7979
    %v7981 = vrot.slane %v4121, 4
    %v7982 = vsel %vm714, 0.0, %v7981
    %v7984 = vunpack.c.l.s4 1983009808
    %v7985 = vunpack.c.0.s8 %v7984
    %v7986 = vperm.slane %v4121, %v7985
    %v7988 = vunpack.c.l.s4 1983009808
    %v7989 = vunpack.c.0.s8 %v7988
    %v7990 = vperm.slane %v7982, %v7989
    %v7991 = vrot.slane %v7986, 4
    %v7992 = vsel %vm714, 0.0, %v7991
    %v7994 = vunpack.c.l.s4 1934713408
    %v7995 = vunpack.c.0.s8 %v7994
    %v7996 = vperm.slane %v7986, %v7995
    %v7998 = vunpack.c.l.s4 1934713408
    %v7999 = vunpack.c.0.s8 %v7998
    %v8000 = vperm.slane %v7992, %v7999
    %v8001 = vrot.slane %v7990, 4
    %v8002 = vsel %vm714, 0.0, %v8001
    %v8004 = vunpack.c.l.s4 1934713408
    %v8005 = vunpack.c.0.s8 %v8004
    %v8006 = vperm.slane %v7990, %v8005
    %v8008 = vunpack.c.l.s4 1934713408
    %v8009 = vunpack.c.0.s8 %v8008
    %v8010 = vperm.slane %v8002, %v8009
    %v8011 = vrot.slane %v7996, 4
    %v8012 = vsel %vm714, 0.0, %v8011
    %v8013 = vrot.slane %v8000, 4
    %v8014 = vsel %vm714, 0.0, %v8013
    %v8015 = vrot.slane %v8006, 4
    %v8016 = vsel %vm714, 0.0, %v8015
    %v8017 = vrot.slane %v8010, 4
    %v8018 = vsel %vm714, 0.0, %v8017
    %v8019 = vrot.slane %v4123, 4
    %v8020 = vsel %vm714, 0.0, %v8019
    %v8022 = vunpack.c.l.s4 1983009808
    %v8023 = vunpack.c.0.s8 %v8022
    %v8024 = vperm.slane %v4123, %v8023
    %v8026 = vunpack.c.l.s4 1983009808
    %v8027 = vunpack.c.0.s8 %v8026
    %v8028 = vperm.slane %v8020, %v8027
    %v8029 = vrot.slane %v8024, 4
    %v8030 = vsel %vm714, 0.0, %v8029
    %v8032 = vunpack.c.l.s4 1934713408
    %v8033 = vunpack.c.0.s8 %v8032
    %v8034 = vperm.slane %v8024, %v8033
    %v8036 = vunpack.c.l.s4 1934713408
    %v8037 = vunpack.c.0.s8 %v8036
    %v8038 = vperm.slane %v8030, %v8037
    %v8039 = vrot.slane %v8028, 4
    %v8040 = vsel %vm714, 0.0, %v8039
    %v8042 = vunpack.c.l.s4 1934713408
    %v8043 = vunpack.c.0.s8 %v8042
    %v8044 = vperm.slane %v8028, %v8043
    %v8046 = vunpack.c.l.s4 1934713408
    %v8047 = vunpack.c.0.s8 %v8046
    %v8048 = vperm.slane %v8040, %v8047
    %v8049 = vrot.slane %v8034, 4
    %v8050 = vsel %vm714, 0.0, %v8049
    %v8051 = vrot.slane %v8038, 4
    %v8052 = vsel %vm714, 0.0, %v8051
    %v8053 = vrot.slane %v8044, 4
    %v8054 = vsel %vm714, 0.0, %v8053
    %v8055 = vrot.slane %v8048, 4
    %v8056 = vsel %vm714, 0.0, %v8055
    %v8057 = vrot.slane %v4125, 4
    %v8058 = vsel %vm714, 0.0, %v8057
    %v8060 = vunpack.c.l.s4 1983009808
    %v8061 = vunpack.c.0.s8 %v8060
    %v8062 = vperm.slane %v4125, %v8061
    %v8064 = vunpack.c.l.s4 1983009808
    %v8065 = vunpack.c.0.s8 %v8064
    %v8066 = vperm.slane %v8058, %v8065
    %v8067 = vrot.slane %v8062, 4
    %v8068 = vsel %vm714, 0.0, %v8067
    %v8070 = vunpack.c.l.s4 1934713408
    %v8071 = vunpack.c.0.s8 %v8070
    %v8072 = vperm.slane %v8062, %v8071
    %v8074 = vunpack.c.l.s4 1934713408
    %v8075 = vunpack.c.0.s8 %v8074
    %v8076 = vperm.slane %v8068, %v8075
    %v8077 = vrot.slane %v8066, 4
    %v8078 = vsel %vm714, 0.0, %v8077
    %v8080 = vunpack.c.l.s4 1934713408
    %v8081 = vunpack.c.0.s8 %v8080
    %v8082 = vperm.slane %v8066, %v8081
    %v8084 = vunpack.c.l.s4 1934713408
    %v8085 = vunpack.c.0.s8 %v8084
    %v8086 = vperm.slane %v8078, %v8085
    %v8087 = vrot.slane %v8072, 4
    %v8088 = vsel %vm714, 0.0, %v8087
    %v8089 = vrot.slane %v8076, 4
    %v8090 = vsel %vm714, 0.0, %v8089
    %v8091 = vrot.slane %v8082, 4
    %v8092 = vsel %vm714, 0.0, %v8091
    %v8093 = vrot.slane %v8086, 4
    %v8094 = vsel %vm714, 0.0, %v8093
    %v8095 = vrot.slane %v4127, 4
    %v8096 = vsel %vm714, 0.0, %v8095
    %v8098 = vunpack.c.l.s4 1983009808
    %v8099 = vunpack.c.0.s8 %v8098
    %v8100 = vperm.slane %v4127, %v8099
    %v8102 = vunpack.c.l.s4 1983009808
    %v8103 = vunpack.c.0.s8 %v8102
    %v8104 = vperm.slane %v8096, %v8103
    %v8105 = vrot.slane %v8100, 4
    %v8106 = vsel %vm714, 0.0, %v8105
    %v8108 = vunpack.c.l.s4 1934713408
    %v8109 = vunpack.c.0.s8 %v8108
    %v8110 = vperm.slane %v8100, %v8109
    %v8112 = vunpack.c.l.s4 1934713408
    %v8113 = vunpack.c.0.s8 %v8112
    %v8114 = vperm.slane %v8106, %v8113
    %v8115 = vrot.slane %v8104, 4
    %v8116 = vsel %vm714, 0.0, %v8115
    %v8118 = vunpack.c.l.s4 1934713408
    %v8119 = vunpack.c.0.s8 %v8118
    %v8120 = vperm.slane %v8104, %v8119
    %v8122 = vunpack.c.l.s4 1934713408
    %v8123 = vunpack.c.0.s8 %v8122
    %v8124 = vperm.slane %v8116, %v8123
    %v8125 = vrot.slane %v8110, 4
    %v8126 = vsel %vm714, 0.0, %v8125
    %v8127 = vrot.slane %v8114, 4
    %v8128 = vsel %vm714, 0.0, %v8127
    %v8129 = vrot.slane %v8120, 4
    %v8130 = vsel %vm714, 0.0, %v8129
    %v8131 = vrot.slane %v8124, 4
    %v8132 = vsel %vm714, 0.0, %v8131
    %8141 = vrot.lane.b32.xlu0 %v7860, 16
    %v8142 = vpop.permute.xlu0 %8141
    %8143 = vrot.lane.b32.xlu0 %v7898, 16
    %v8144 = vpop.permute.xlu0 %8143
    %8145 = vrot.lane.b32.xlu0 %v7936, 16
    %v8146 = vpop.permute.xlu0 %8145
    %8147 = vrot.lane.b32.xlu0 %v7974, 16
    %v8148 = vpop.permute.xlu0 %8147
    %8149 = vrot.lane.b32.xlu0 %v8012, 16
    %v8150 = vpop.permute.xlu0 %8149
    %8151 = vrot.lane.b32.xlu0 %v8050, 16
    %v8152 = vpop.permute.xlu0 %8151
    %8153 = vrot.lane.b32.xlu0 %v8088, 16
    %v8154 = vpop.permute.xlu0 %8153
    %8155 = vrot.lane.b32.xlu0 %v8126, 16
    %v8156 = vpop.permute.xlu0 %8155
    %8173 = vrot.lane.b32.xlu0 %v7848, 32
    %v8174 = vpop.permute.xlu0 %8173
    %8175 = vrot.lane.b32.xlu0 %v7886, 32
    %v8176 = vpop.permute.xlu0 %8175
    %8177 = vrot.lane.b32.xlu0 %v7924, 32
    %v8178 = vpop.permute.xlu0 %8177
    %8179 = vrot.lane.b32.xlu0 %v7962, 32
    %v8180 = vpop.permute.xlu0 %8179
    %8181 = vrot.lane.b32.xlu0 %v8000, 32
    %v8182 = vpop.permute.xlu0 %8181
    %8183 = vrot.lane.b32.xlu0 %v8038, 32
    %v8184 = vpop.permute.xlu0 %8183
    %8185 = vrot.lane.b32.xlu0 %v8076, 32
    %v8186 = vpop.permute.xlu0 %8185
    %8187 = vrot.lane.b32.xlu0 %v8114, 32
    %v8188 = vpop.permute.xlu0 %8187
    %8205 = vrot.lane.b32.xlu0 %v7862, 48
    %v8206 = vpop.permute.xlu0 %8205
    %8207 = vrot.lane.b32.xlu0 %v7900, 48
    %v8208 = vpop.permute.xlu0 %8207
    %8209 = vrot.lane.b32.xlu0 %v7938, 48
    %v8210 = vpop.permute.xlu0 %8209
    %8211 = vrot.lane.b32.xlu0 %v7976, 48
    %v8212 = vpop.permute.xlu0 %8211
    %8213 = vrot.lane.b32.xlu0 %v8014, 48
    %v8214 = vpop.permute.xlu0 %8213
    %8215 = vrot.lane.b32.xlu0 %v8052, 48
    %v8216 = vpop.permute.xlu0 %8215
    %8217 = vrot.lane.b32.xlu0 %v8090, 48
    %v8218 = vpop.permute.xlu0 %8217
    %8219 = vrot.lane.b32.xlu0 %v8128, 48
    %v8220 = vpop.permute.xlu0 %8219
    %8237 = vrot.lane.b32.xlu0 %v7854, 64
    %v8238 = vpop.permute.xlu0 %8237
    %8239 = vrot.lane.b32.xlu0 %v7892, 64
    %v8240 = vpop.permute.xlu0 %8239
    %8241 = vrot.lane.b32.xlu0 %v7930, 64
    %v8242 = vpop.permute.xlu0 %8241
    %8243 = vrot.lane.b32.xlu0 %v7968, 64
    %v8244 = vpop.permute.xlu0 %8243
    %8245 = vrot.lane.b32.xlu0 %v8006, 64
    %v8246 = vpop.permute.xlu0 %8245
    %8247 = vrot.lane.b32.xlu0 %v8044, 64
    %v8248 = vpop.permute.xlu0 %8247
    %8249 = vrot.lane.b32.xlu0 %v8082, 64
    %v8250 = vpop.permute.xlu0 %8249
    %8251 = vrot.lane.b32.xlu0 %v8120, 64
    %v8252 = vpop.permute.xlu0 %8251
    %8269 = vrot.lane.b32.xlu0 %v7864, 80
    %v8270 = vpop.permute.xlu0 %8269
    %8271 = vrot.lane.b32.xlu0 %v7902, 80
    %v8272 = vpop.permute.xlu0 %8271
    %8273 = vrot.lane.b32.xlu0 %v7940, 80
    %v8274 = vpop.permute.xlu0 %8273
    %8275 = vrot.lane.b32.xlu0 %v7978, 80
    %v8276 = vpop.permute.xlu0 %8275
    %8277 = vrot.lane.b32.xlu0 %v8016, 80
    %v8278 = vpop.permute.xlu0 %8277
    %8279 = vrot.lane.b32.xlu0 %v8054, 80
    %v8280 = vpop.permute.xlu0 %8279
    %8281 = vrot.lane.b32.xlu0 %v8092, 80
    %v8282 = vpop.permute.xlu0 %8281
    %8283 = vrot.lane.b32.xlu0 %v8130, 80
    %v8284 = vpop.permute.xlu0 %8283
    %8301 = vrot.lane.b32.xlu0 %v7858, 96
    %v8302 = vpop.permute.xlu0 %8301
    %8303 = vrot.lane.b32.xlu0 %v7896, 96
    %v8304 = vpop.permute.xlu0 %8303
    %8305 = vrot.lane.b32.xlu0 %v7934, 96
    %v8306 = vpop.permute.xlu0 %8305
    %8307 = vrot.lane.b32.xlu0 %v7972, 96
    %v8308 = vpop.permute.xlu0 %8307
    %8309 = vrot.lane.b32.xlu0 %v8010, 96
    %v8310 = vpop.permute.xlu0 %8309
    %8311 = vrot.lane.b32.xlu0 %v8048, 96
    %v8312 = vpop.permute.xlu0 %8311
    %8313 = vrot.lane.b32.xlu0 %v8086, 96
    %v8314 = vpop.permute.xlu0 %8313
    %8315 = vrot.lane.b32.xlu0 %v8124, 96
    %v8316 = vpop.permute.xlu0 %8315
    %8333 = vrot.lane.b32.xlu0 %v7866, 112
    %v8334 = vpop.permute.xlu0 %8333
    %8335 = vrot.lane.b32.xlu0 %v7904, 112
    %v8336 = vpop.permute.xlu0 %8335
    %8337 = vrot.lane.b32.xlu0 %v7942, 112
    %v8338 = vpop.permute.xlu0 %8337
    %8339 = vrot.lane.b32.xlu0 %v7980, 112
    %v8340 = vpop.permute.xlu0 %8339
    %8341 = vrot.lane.b32.xlu0 %v8018, 112
    %v8342 = vpop.permute.xlu0 %8341
    %8343 = vrot.lane.b32.xlu0 %v8056, 112
    %v8344 = vpop.permute.xlu0 %8343
    %8345 = vrot.lane.b32.xlu0 %v8094, 112
    %v8346 = vpop.permute.xlu0 %8345
    %8347 = vrot.lane.b32.xlu0 %v8132, 112
    %v8348 = vpop.permute.xlu0 %8347
    %v8357 = vsel %vm3269, %v7844, %v8142
    %v8358 = vsel %vm3269, %v7882, %v8144
    %v8359 = vsel %vm3269, %v7920, %v8146
    %v8360 = vsel %vm3269, %v7958, %v8148
    %v8361 = vsel %vm3269, %v7996, %v8150
    %v8362 = vsel %vm3269, %v8034, %v8152
    %v8363 = vsel %vm3269, %v8072, %v8154
    %v8364 = vsel %vm3269, %v8110, %v8156
    %vm8365 = vcmask 261120
    %v8366 = vsel %vm8365, %v8357, %v8174
    %v8367 = vsel %vm8365, %v8358, %v8176
    %v8368 = vsel %vm8365, %v8359, %v8178
    %v8369 = vsel %vm8365, %v8360, %v8180
    %v8370 = vsel %vm8365, %v8361, %v8182
    %v8371 = vsel %vm8365, %v8362, %v8184
    %v8372 = vsel %vm8365, %v8363, %v8186
    %v8373 = vsel %vm8365, %v8364, %v8188
    %vm8374 = vcmask 392192
    %v8375 = vsel %vm8374, %v8366, %v8206
    %v8376 = vsel %vm8374, %v8367, %v8208
    %v8377 = vsel %vm8374, %v8368, %v8210
    %v8378 = vsel %vm8374, %v8369, %v8212
    %v8379 = vsel %vm8374, %v8370, %v8214
    %v8380 = vsel %vm8374, %v8371, %v8216
    %v8381 = vsel %vm8374, %v8372, %v8218
    %v8382 = vsel %vm8374, %v8373, %v8220
    %vm8383 = vcmask 523264
    %v8384 = vsel %vm8383, %v8375, %v8238
    %v8385 = vsel %vm8383, %v8376, %v8240
    %v8386 = vsel %vm8383, %v8377, %v8242
    %v8387 = vsel %vm8383, %v8378, %v8244
    %v8388 = vsel %vm8383, %v8379, %v8246
    %v8389 = vsel %vm8383, %v8380, %v8248
    %v8390 = vsel %vm8383, %v8381, %v8250
    %v8391 = vsel %vm8383, %v8382, %v8252
    %vm8392 = vcmask 654336
    %v8393 = vsel %vm8392, %v8384, %v8270
    %v8394 = vsel %vm8392, %v8385, %v8272
    %v8395 = vsel %vm8392, %v8386, %v8274
    %v8396 = vsel %vm8392, %v8387, %v8276
    %v8397 = vsel %vm8392, %v8388, %v8278
    %v8398 = vsel %vm8392, %v8389, %v8280
    %v8399 = vsel %vm8392, %v8390, %v8282
    %v8400 = vsel %vm8392, %v8391, %v8284
    %vm8401 = vcmask 785408
    %v8402 = vsel %vm8401, %v8393, %v8302
    %v8403 = vsel %vm8401, %v8394, %v8304
    %v8404 = vsel %vm8401, %v8395, %v8306
    %v8405 = vsel %vm8401, %v8396, %v8308
    %v8406 = vsel %vm8401, %v8397, %v8310
    %v8407 = vsel %vm8401, %v8398, %v8312
    %v8408 = vsel %vm8401, %v8399, %v8314
    %v8409 = vsel %vm8401, %v8400, %v8316
    %vm8410 = vcmask 916480
    %v8411 = vsel %vm8410, %v8402, %v8334
    %v8412 = vsel %vm8410, %v8403, %v8336
    %v8413 = vsel %vm8410, %v8404, %v8338
    %v8414 = vsel %vm8410, %v8405, %v8340
    %v8415 = vsel %vm8410, %v8406, %v8342
    %v8416 = vsel %vm8410, %v8407, %v8344
    %v8417 = vsel %vm8410, %v8408, %v8346
    %v8418 = vsel %vm8410, %v8409, %v8348
    %v8419 = vrot.slane %v7814, 4
    %v8420 = vsel %vm714, 0.0, %v8419
    %v8422 = vunpack.c.l.s4 1983009808
    %v8423 = vunpack.c.0.s8 %v8422
    %v8424 = vperm.slane %v7814, %v8423
    %v8426 = vunpack.c.l.s4 1983009808
    %v8427 = vunpack.c.0.s8 %v8426
    %v8428 = vperm.slane %v8420, %v8427
    %v8429 = vrot.slane %v8424, 4
    %v8430 = vsel %vm714, 0.0, %v8429
    %v8432 = vunpack.c.l.s4 1934713408
    %v8433 = vunpack.c.0.s8 %v8432
    %v8434 = vperm.slane %v8424, %v8433
    %v8436 = vunpack.c.l.s4 1934713408
    %v8437 = vunpack.c.0.s8 %v8436
    %v8438 = vperm.slane %v8430, %v8437
    %v8439 = vrot.slane %v8428, 4
    %v8440 = vsel %vm714, 0.0, %v8439
    %v8442 = vunpack.c.l.s4 1934713408
    %v8443 = vunpack.c.0.s8 %v8442
    %v8444 = vperm.slane %v8428, %v8443
    %v8446 = vunpack.c.l.s4 1934713408
    %v8447 = vunpack.c.0.s8 %v8446
    %v8448 = vperm.slane %v8440, %v8447
    %v8449 = vrot.slane %v8434, 4
    %v8450 = vsel %vm714, 0.0, %v8449
    %v8451 = vrot.slane %v8438, 4
    %v8452 = vsel %vm714, 0.0, %v8451
    %v8453 = vrot.slane %v8444, 4
    %v8454 = vsel %vm714, 0.0, %v8453
    %v8455 = vrot.slane %v8448, 4
    %v8456 = vsel %vm714, 0.0, %v8455
    %v8457 = vrot.slane %v7816, 4
    %v8458 = vsel %vm714, 0.0, %v8457
    %v8460 = vunpack.c.l.s4 1983009808
    %v8461 = vunpack.c.0.s8 %v8460
    %v8462 = vperm.slane %v7816, %v8461
    %v8464 = vunpack.c.l.s4 1983009808
    %v8465 = vunpack.c.0.s8 %v8464
    %v8466 = vperm.slane %v8458, %v8465
    %v8467 = vrot.slane %v8462, 4
    %v8468 = vsel %vm714, 0.0, %v8467
    %v8470 = vunpack.c.l.s4 1934713408
    %v8471 = vunpack.c.0.s8 %v8470
    %v8472 = vperm.slane %v8462, %v8471
    %v8474 = vunpack.c.l.s4 1934713408
    %v8475 = vunpack.c.0.s8 %v8474
    %v8476 = vperm.slane %v8468, %v8475
    %v8477 = vrot.slane %v8466, 4
    %v8478 = vsel %vm714, 0.0, %v8477
    %v8480 = vunpack.c.l.s4 1934713408
    %v8481 = vunpack.c.0.s8 %v8480
    %v8482 = vperm.slane %v8466, %v8481
    %v8484 = vunpack.c.l.s4 1934713408
    %v8485 = vunpack.c.0.s8 %v8484
    %v8486 = vperm.slane %v8478, %v8485
    %v8487 = vrot.slane %v8472, 4
    %v8488 = vsel %vm714, 0.0, %v8487
    %v8489 = vrot.slane %v8476, 4
    %v8490 = vsel %vm714, 0.0, %v8489
    %v8491 = vrot.slane %v8482, 4
    %v8492 = vsel %vm714, 0.0, %v8491
    %v8493 = vrot.slane %v8486, 4
    %v8494 = vsel %vm714, 0.0, %v8493
    %v8495 = vrot.slane %v7818, 4
    %v8496 = vsel %vm714, 0.0, %v8495
    %v8498 = vunpack.c.l.s4 1983009808
    %v8499 = vunpack.c.0.s8 %v8498
    %v8500 = vperm.slane %v7818, %v8499
    %v8502 = vunpack.c.l.s4 1983009808
    %v8503 = vunpack.c.0.s8 %v8502
    %v8504 = vperm.slane %v8496, %v8503
    %v8505 = vrot.slane %v8500, 4
    %v8506 = vsel %vm714, 0.0, %v8505
    %v8508 = vunpack.c.l.s4 1934713408
    %v8509 = vunpack.c.0.s8 %v8508
    %v8510 = vperm.slane %v8500, %v8509
    %v8512 = vunpack.c.l.s4 1934713408
    %v8513 = vunpack.c.0.s8 %v8512
    %v8514 = vperm.slane %v8506, %v8513
    %v8515 = vrot.slane %v8504, 4
    %v8516 = vsel %vm714, 0.0, %v8515
    %v8518 = vunpack.c.l.s4 1934713408
    %v8519 = vunpack.c.0.s8 %v8518
    %v8520 = vperm.slane %v8504, %v8519
    %v8522 = vunpack.c.l.s4 1934713408
    %v8523 = vunpack.c.0.s8 %v8522
    %v8524 = vperm.slane %v8516, %v8523
    %v8525 = vrot.slane %v8510, 4
    %v8526 = vsel %vm714, 0.0, %v8525
    %v8527 = vrot.slane %v8514, 4
    %v8528 = vsel %vm714, 0.0, %v8527
    %v8529 = vrot.slane %v8520, 4
    %v8530 = vsel %vm714, 0.0, %v8529
    %v8531 = vrot.slane %v8524, 4
    %v8532 = vsel %vm714, 0.0, %v8531
    %v8533 = vrot.slane %v7820, 4
    %v8534 = vsel %vm714, 0.0, %v8533
    %v8536 = vunpack.c.l.s4 1983009808
    %v8537 = vunpack.c.0.s8 %v8536
    %v8538 = vperm.slane %v7820, %v8537
    %v8540 = vunpack.c.l.s4 1983009808
    %v8541 = vunpack.c.0.s8 %v8540
    %v8542 = vperm.slane %v8534, %v8541
    %v8543 = vrot.slane %v8538, 4
    %v8544 = vsel %vm714, 0.0, %v8543
    %v8546 = vunpack.c.l.s4 1934713408
    %v8547 = vunpack.c.0.s8 %v8546
    %v8548 = vperm.slane %v8538, %v8547
    %v8550 = vunpack.c.l.s4 1934713408
    %v8551 = vunpack.c.0.s8 %v8550
    %v8552 = vperm.slane %v8544, %v8551
    %v8553 = vrot.slane %v8542, 4
    %v8554 = vsel %vm714, 0.0, %v8553
    %v8556 = vunpack.c.l.s4 1934713408
    %v8557 = vunpack.c.0.s8 %v8556
    %v8558 = vperm.slane %v8542, %v8557
    %v8560 = vunpack.c.l.s4 1934713408
    %v8561 = vunpack.c.0.s8 %v8560
    %v8562 = vperm.slane %v8554, %v8561
    %v8563 = vrot.slane %v8548, 4
    %v8564 = vsel %vm714, 0.0, %v8563
    %v8565 = vrot.slane %v8552, 4
    %v8566 = vsel %vm714, 0.0, %v8565
    %v8567 = vrot.slane %v8558, 4
    %v8568 = vsel %vm714, 0.0, %v8567
    %v8569 = vrot.slane %v8562, 4
    %v8570 = vsel %vm714, 0.0, %v8569
    %v8571 = vrot.slane %v7822, 4
    %v8572 = vsel %vm714, 0.0, %v8571
    %v8574 = vunpack.c.l.s4 1983009808
    %v8575 = vunpack.c.0.s8 %v8574
    %v8576 = vperm.slane %v7822, %v8575
    %v8578 = vunpack.c.l.s4 1983009808
    %v8579 = vunpack.c.0.s8 %v8578
    %v8580 = vperm.slane %v8572, %v8579
    %v8581 = vrot.slane %v8576, 4
    %v8582 = vsel %vm714, 0.0, %v8581
    %v8584 = vunpack.c.l.s4 1934713408
    %v8585 = vunpack.c.0.s8 %v8584
    %v8586 = vperm.slane %v8576, %v8585
    %v8588 = vunpack.c.l.s4 1934713408
    %v8589 = vunpack.c.0.s8 %v8588
    %v8590 = vperm.slane %v8582, %v8589
    %v8591 = vrot.slane %v8580, 4
    %v8592 = vsel %vm714, 0.0, %v8591
    %v8594 = vunpack.c.l.s4 1934713408
    %v8595 = vunpack.c.0.s8 %v8594
    %v8596 = vperm.slane %v8580, %v8595
    %v8598 = vunpack.c.l.s4 1934713408
    %v8599 = vunpack.c.0.s8 %v8598
    %v8600 = vperm.slane %v8592, %v8599
    %v8601 = vrot.slane %v8586, 4
    %v8602 = vsel %vm714, 0.0, %v8601
    %v8603 = vrot.slane %v8590, 4
    %v8604 = vsel %vm714, 0.0, %v8603
    %v8605 = vrot.slane %v8596, 4
    %v8606 = vsel %vm714, 0.0, %v8605
    %v8607 = vrot.slane %v8600, 4
    %v8608 = vsel %vm714, 0.0, %v8607
    %v8609 = vrot.slane %v7824, 4
    %v8610 = vsel %vm714, 0.0, %v8609
    %v8612 = vunpack.c.l.s4 1983009808
    %v8613 = vunpack.c.0.s8 %v8612
    %v8614 = vperm.slane %v7824, %v8613
    %v8616 = vunpack.c.l.s4 1983009808
    %v8617 = vunpack.c.0.s8 %v8616
    %v8618 = vperm.slane %v8610, %v8617
    %v8619 = vrot.slane %v8614, 4
    %v8620 = vsel %vm714, 0.0, %v8619
    %v8622 = vunpack.c.l.s4 1934713408
    %v8623 = vunpack.c.0.s8 %v8622
    %v8624 = vperm.slane %v8614, %v8623
    %v8626 = vunpack.c.l.s4 1934713408
    %v8627 = vunpack.c.0.s8 %v8626
    %v8628 = vperm.slane %v8620, %v8627
    %v8629 = vrot.slane %v8618, 4
    %v8630 = vsel %vm714, 0.0, %v8629
    %v8632 = vunpack.c.l.s4 1934713408
    %v8633 = vunpack.c.0.s8 %v8632
    %v8634 = vperm.slane %v8618, %v8633
    %v8636 = vunpack.c.l.s4 1934713408
    %v8637 = vunpack.c.0.s8 %v8636
    %v8638 = vperm.slane %v8630, %v8637
    %v8639 = vrot.slane %v8624, 4
    %v8640 = vsel %vm714, 0.0, %v8639
    %v8641 = vrot.slane %v8628, 4
    %v8642 = vsel %vm714, 0.0, %v8641
    %v8643 = vrot.slane %v8634, 4
    %v8644 = vsel %vm714, 0.0, %v8643
    %v8645 = vrot.slane %v8638, 4
    %v8646 = vsel %vm714, 0.0, %v8645
    %v8647 = vrot.slane %v7826, 4
    %v8648 = vsel %vm714, 0.0, %v8647
    %v8650 = vunpack.c.l.s4 1983009808
    %v8651 = vunpack.c.0.s8 %v8650
    %v8652 = vperm.slane %v7826, %v8651
    %v8654 = vunpack.c.l.s4 1983009808
    %v8655 = vunpack.c.0.s8 %v8654
    %v8656 = vperm.slane %v8648, %v8655
    %v8657 = vrot.slane %v8652, 4
    %v8658 = vsel %vm714, 0.0, %v8657
    %v8660 = vunpack.c.l.s4 1934713408
    %v8661 = vunpack.c.0.s8 %v8660
    %v8662 = vperm.slane %v8652, %v8661
    %v8664 = vunpack.c.l.s4 1934713408
    %v8665 = vunpack.c.0.s8 %v8664
    %v8666 = vperm.slane %v8658, %v8665
    %v8667 = vrot.slane %v8656, 4
    %v8668 = vsel %vm714, 0.0, %v8667
    %v8670 = vunpack.c.l.s4 1934713408
    %v8671 = vunpack.c.0.s8 %v8670
    %v8672 = vperm.slane %v8656, %v8671
    %v8674 = vunpack.c.l.s4 1934713408
    %v8675 = vunpack.c.0.s8 %v8674
    %v8676 = vperm.slane %v8668, %v8675
    %v8677 = vrot.slane %v8662, 4
    %v8678 = vsel %vm714, 0.0, %v8677
    %v8679 = vrot.slane %v8666, 4
    %v8680 = vsel %vm714, 0.0, %v8679
    %v8681 = vrot.slane %v8672, 4
    %v8682 = vsel %vm714, 0.0, %v8681
    %v8683 = vrot.slane %v8676, 4
    %v8684 = vsel %vm714, 0.0, %v8683
    %v8685 = vrot.slane %v7828, 4
    %v8686 = vsel %vm714, 0.0, %v8685
    %v8688 = vunpack.c.l.s4 1983009808
    %v8689 = vunpack.c.0.s8 %v8688
    %v8690 = vperm.slane %v7828, %v8689
    %v8692 = vunpack.c.l.s4 1983009808
    %v8693 = vunpack.c.0.s8 %v8692
    %v8694 = vperm.slane %v8686, %v8693
    %v8695 = vrot.slane %v8690, 4
    %v8696 = vsel %vm714, 0.0, %v8695
    %v8698 = vunpack.c.l.s4 1934713408
    %v8699 = vunpack.c.0.s8 %v8698
    %v8700 = vperm.slane %v8690, %v8699
    %v8702 = vunpack.c.l.s4 1934713408
    %v8703 = vunpack.c.0.s8 %v8702
    %v8704 = vperm.slane %v8696, %v8703
    %v8705 = vrot.slane %v8694, 4
    %v8706 = vsel %vm714, 0.0, %v8705
    %v8708 = vunpack.c.l.s4 1934713408
    %v8709 = vunpack.c.0.s8 %v8708
    %v8710 = vperm.slane %v8694, %v8709
    %v8712 = vunpack.c.l.s4 1934713408
    %v8713 = vunpack.c.0.s8 %v8712
    %v8714 = vperm.slane %v8706, %v8713
    %v8715 = vrot.slane %v8700, 4
    %v8716 = vsel %vm714, 0.0, %v8715
    %v8717 = vrot.slane %v8704, 4
    %v8718 = vsel %vm714, 0.0, %v8717
    %v8719 = vrot.slane %v8710, 4
    %v8720 = vsel %vm714, 0.0, %v8719
    %v8721 = vrot.slane %v8714, 4
    %v8722 = vsel %vm714, 0.0, %v8721
    %8731 = vrot.lane.b32.xlu0 %v8450, 16
    %v8732 = vpop.permute.xlu0 %8731
    %8733 = vrot.lane.b32.xlu0 %v8488, 16
    %v8734 = vpop.permute.xlu0 %8733
    %8735 = vrot.lane.b32.xlu0 %v8526, 16
    %v8736 = vpop.permute.xlu0 %8735
    %8737 = vrot.lane.b32.xlu0 %v8564, 16
    %v8738 = vpop.permute.xlu0 %8737
    %8739 = vrot.lane.b32.xlu0 %v8602, 16
    %v8740 = vpop.permute.xlu0 %8739
    %8741 = vrot.lane.b32.xlu0 %v8640, 16
    %v8742 = vpop.permute.xlu0 %8741
    %8743 = vrot.lane.b32.xlu0 %v8678, 16
    %v8744 = vpop.permute.xlu0 %8743
    %8745 = vrot.lane.b32.xlu0 %v8716, 16
    %v8746 = vpop.permute.xlu0 %8745
    %8763 = vrot.lane.b32.xlu0 %v8438, 32
    %v8764 = vpop.permute.xlu0 %8763
    %8765 = vrot.lane.b32.xlu0 %v8476, 32
    %v8766 = vpop.permute.xlu0 %8765
    %8767 = vrot.lane.b32.xlu0 %v8514, 32
    %v8768 = vpop.permute.xlu0 %8767
    %8769 = vrot.lane.b32.xlu0 %v8552, 32
    %v8770 = vpop.permute.xlu0 %8769
    %8771 = vrot.lane.b32.xlu0 %v8590, 32
    %v8772 = vpop.permute.xlu0 %8771
    %8773 = vrot.lane.b32.xlu0 %v8628, 32
    %v8774 = vpop.permute.xlu0 %8773
    %8775 = vrot.lane.b32.xlu0 %v8666, 32
    %v8776 = vpop.permute.xlu0 %8775
    %8777 = vrot.lane.b32.xlu0 %v8704, 32
    %v8778 = vpop.permute.xlu0 %8777
    %8795 = vrot.lane.b32.xlu0 %v8452, 48
    %v8796 = vpop.permute.xlu0 %8795
    %8797 = vrot.lane.b32.xlu0 %v8490, 48
    %v8798 = vpop.permute.xlu0 %8797
    %8799 = vrot.lane.b32.xlu0 %v8528, 48
    %v8800 = vpop.permute.xlu0 %8799
    %8801 = vrot.lane.b32.xlu0 %v8566, 48
    %v8802 = vpop.permute.xlu0 %8801
    %8803 = vrot.lane.b32.xlu0 %v8604, 48
    %v8804 = vpop.permute.xlu0 %8803
    %8805 = vrot.lane.b32.xlu0 %v8642, 48
    %v8806 = vpop.permute.xlu0 %8805
    %8807 = vrot.lane.b32.xlu0 %v8680, 48
    %v8808 = vpop.permute.xlu0 %8807
    %8809 = vrot.lane.b32.xlu0 %v8718, 48
    %v8810 = vpop.permute.xlu0 %8809
    %8827 = vrot.lane.b32.xlu0 %v8444, 64
    %v8828 = vpop.permute.xlu0 %8827
    %8829 = vrot.lane.b32.xlu0 %v8482, 64
    %v8830 = vpop.permute.xlu0 %8829
    %8831 = vrot.lane.b32.xlu0 %v8520, 64
    %v8832 = vpop.permute.xlu0 %8831
    %8833 = vrot.lane.b32.xlu0 %v8558, 64
    %v8834 = vpop.permute.xlu0 %8833
    %8835 = vrot.lane.b32.xlu0 %v8596, 64
    %v8836 = vpop.permute.xlu0 %8835
    %8837 = vrot.lane.b32.xlu0 %v8634, 64
    %v8838 = vpop.permute.xlu0 %8837
    %8839 = vrot.lane.b32.xlu0 %v8672, 64
    %v8840 = vpop.permute.xlu0 %8839
    %8841 = vrot.lane.b32.xlu0 %v8710, 64
    %v8842 = vpop.permute.xlu0 %8841
    %8859 = vrot.lane.b32.xlu0 %v8454, 80
    %v8860 = vpop.permute.xlu0 %8859
    %8861 = vrot.lane.b32.xlu0 %v8492, 80
    %v8862 = vpop.permute.xlu0 %8861
    %8863 = vrot.lane.b32.xlu0 %v8530, 80
    %v8864 = vpop.permute.xlu0 %8863
    %8865 = vrot.lane.b32.xlu0 %v8568, 80
    %v8866 = vpop.permute.xlu0 %8865
    %8867 = vrot.lane.b32.xlu0 %v8606, 80
    %v8868 = vpop.permute.xlu0 %8867
    %8869 = vrot.lane.b32.xlu0 %v8644, 80
    %v8870 = vpop.permute.xlu0 %8869
    %8871 = vrot.lane.b32.xlu0 %v8682, 80
    %v8872 = vpop.permute.xlu0 %8871
    %8873 = vrot.lane.b32.xlu0 %v8720, 80
    %v8874 = vpop.permute.xlu0 %8873
    %8891 = vrot.lane.b32.xlu0 %v8448, 96
    %v8892 = vpop.permute.xlu0 %8891
    %8893 = vrot.lane.b32.xlu0 %v8486, 96
    %v8894 = vpop.permute.xlu0 %8893
    %8895 = vrot.lane.b32.xlu0 %v8524, 96
    %v8896 = vpop.permute.xlu0 %8895
    %8897 = vrot.lane.b32.xlu0 %v8562, 96
    %v8898 = vpop.permute.xlu0 %8897
    %8899 = vrot.lane.b32.xlu0 %v8600, 96
    %v8900 = vpop.permute.xlu0 %8899
    %8901 = vrot.lane.b32.xlu0 %v8638, 96
    %v8902 = vpop.permute.xlu0 %8901
    %8903 = vrot.lane.b32.xlu0 %v8676, 96
    %v8904 = vpop.permute.xlu0 %8903
    %8905 = vrot.lane.b32.xlu0 %v8714, 96
    %v8906 = vpop.permute.xlu0 %8905
    %8923 = vrot.lane.b32.xlu0 %v8456, 112
    %v8924 = vpop.permute.xlu0 %8923
    %8925 = vrot.lane.b32.xlu0 %v8494, 112
    %v8926 = vpop.permute.xlu0 %8925
    %8927 = vrot.lane.b32.xlu0 %v8532, 112
    %v8928 = vpop.permute.xlu0 %8927
    %8929 = vrot.lane.b32.xlu0 %v8570, 112
    %v8930 = vpop.permute.xlu0 %8929
    %8931 = vrot.lane.b32.xlu0 %v8608, 112
    %v8932 = vpop.permute.xlu0 %8931
    %8933 = vrot.lane.b32.xlu0 %v8646, 112
    %v8934 = vpop.permute.xlu0 %8933
    %8935 = vrot.lane.b32.xlu0 %v8684, 112
    %v8936 = vpop.permute.xlu0 %8935
    %8937 = vrot.lane.b32.xlu0 %v8722, 112
    %v8938 = vpop.permute.xlu0 %8937
    %v8947 = vsel %vm3269, %v8434, %v8732
    %v8948 = vsel %vm3269, %v8472, %v8734
    %v8949 = vsel %vm3269, %v8510, %v8736
    %v8950 = vsel %vm3269, %v8548, %v8738
    %v8951 = vsel %vm3269, %v8586, %v8740
    %v8952 = vsel %vm3269, %v8624, %v8742
    %v8953 = vsel %vm3269, %v8662, %v8744
    %v8954 = vsel %vm3269, %v8700, %v8746
    %v8955 = vsel %vm8365, %v8947, %v8764
    %v8956 = vsel %vm8365, %v8948, %v8766
    %v8957 = vsel %vm8365, %v8949, %v8768
    %v8958 = vsel %vm8365, %v8950, %v8770
    %v8959 = vsel %vm8365, %v8951, %v8772
    %v8960 = vsel %vm8365, %v8952, %v8774
    %v8961 = vsel %vm8365, %v8953, %v8776
    %v8962 = vsel %vm8365, %v8954, %v8778
    %v8963 = vsel %vm8374, %v8955, %v8796
    %v8964 = vsel %vm8374, %v8956, %v8798
    %v8965 = vsel %vm8374, %v8957, %v8800
    %v8966 = vsel %vm8374, %v8958, %v8802
    %v8967 = vsel %vm8374, %v8959, %v8804
    %v8968 = vsel %vm8374, %v8960, %v8806
    %v8969 = vsel %vm8374, %v8961, %v8808
    %v8970 = vsel %vm8374, %v8962, %v8810
    %v8971 = vsel %vm8383, %v8963, %v8828
    %v8972 = vsel %vm8383, %v8964, %v8830
    %v8973 = vsel %vm8383, %v8965, %v8832
    %v8974 = vsel %vm8383, %v8966, %v8834
    %v8975 = vsel %vm8383, %v8967, %v8836
    %v8976 = vsel %vm8383, %v8968, %v8838
    %v8977 = vsel %vm8383, %v8969, %v8840
    %v8978 = vsel %vm8383, %v8970, %v8842
    %v8979 = vsel %vm8392, %v8971, %v8860
    %v8980 = vsel %vm8392, %v8972, %v8862
    %v8981 = vsel %vm8392, %v8973, %v8864
    %v8982 = vsel %vm8392, %v8974, %v8866
    %v8983 = vsel %vm8392, %v8975, %v8868
    %v8984 = vsel %vm8392, %v8976, %v8870
    %v8985 = vsel %vm8392, %v8977, %v8872
    %v8986 = vsel %vm8392, %v8978, %v8874
    %v8987 = vsel %vm8401, %v8979, %v8892
    %v8988 = vsel %vm8401, %v8980, %v8894
    %v8989 = vsel %vm8401, %v8981, %v8896
    %v8990 = vsel %vm8401, %v8982, %v8898
    %v8991 = vsel %vm8401, %v8983, %v8900
    %v8992 = vsel %vm8401, %v8984, %v8902
    %v8993 = vsel %vm8401, %v8985, %v8904
    %v8994 = vsel %vm8401, %v8986, %v8906
    %v8995 = vsel %vm8410, %v8987, %v8924
    %v8996 = vsel %vm8410, %v8988, %v8926
    %v8997 = vsel %vm8410, %v8989, %v8928
    %v8998 = vsel %vm8410, %v8990, %v8930
    %v8999 = vsel %vm8410, %v8991, %v8932
    %v9000 = vsel %vm8410, %v8992, %v8934
    %v9001 = vsel %vm8410, %v8993, %v8936
    %v9002 = vsel %vm8410, %v8994, %v8938
    %v9011 = vrot.slane %v8995, 7
    %v9012 = vrot.slane %v8996, 7
    %v9013 = vrot.slane %v8997, 7
    %v9014 = vrot.slane %v8998, 7
    %v9015 = vrot.slane %v8999, 7
    %v9016 = vrot.slane %v9000, 7
    %v9017 = vrot.slane %v9001, 7
    %v9018 = vrot.slane %v9002, 7
    %vm9027 = vcmask 1040384
    %v9028 = vsel %vm9027, %v8411, %v9011
    %v9029 = vsel %vm9027, %v8412, %v9012
    %v9030 = vsel %vm9027, %v8413, %v9013
    %v9031 = vsel %vm9027, %v8414, %v9014
    %v9032 = vsel %vm9027, %v8415, %v9015
    %v9033 = vsel %vm9027, %v8416, %v9016
    %v9034 = vsel %vm9027, %v8417, %v9017
    %v9035 = vsel %vm9027, %v8418, %v9018
    %9044 = vst [vmem:[#allocation1] ss:$4 sm:$0xff] %v9028
    %s9045 = scalar_lea.vmem [#allocation1], 1
    %9046 = vst [vmem:[%s9045] ss:$4 sm:$0xff] %v9029
    %s9047 = scalar_lea.vmem [#allocation1], 2
    %9048 = vst [vmem:[%s9047] ss:$4 sm:$0xff] %v9030
    %s9049 = scalar_lea.vmem [#allocation1], 3
    %9050 = vst [vmem:[%s9049] ss:$4 sm:$0xff] %v9031
    %s9051 = scalar_lea.vmem [#allocation1], 32
    %9052 = vst [vmem:[%s9051] ss:$4 sm:$0xff] %v9032
    %s9053 = scalar_lea.vmem [#allocation1], 33
    %9054 = vst [vmem:[%s9053] ss:$4 sm:$0xff] %v9033
    %s9055 = scalar_lea.vmem [#allocation1], 34
    %9056 = vst [vmem:[%s9055] ss:$4 sm:$0xff] %v9034
    %s9057 = scalar_lea.vmem [#allocation1], 35
    %9058 = vst [vmem:[%s9057] ss:$4 sm:$0xff] %v9035
    %v9059 = vld.sshfl [vmem:[#allocation1] sm:$0xff pattern:$0x73625140]
    %v9060 = vld.sshfl [vmem:[#allocation1 + $0x20] sm:$0xff pattern:$0x73625140]
    %v9063 = vpack.c.bf16 %v9060, %v9059
    %v9064 = vld [vmem:[%s10] sm:$0x1]
    %v9066 = vperm.slane %v9064, 0
    %9068 = vmatpush.bf16.msra.mxu0 %v244
    %9069 = vmatpush.bf16.msra.mxu0 %v243
    %9070 = vmatpush.bf16.msra.mxu0 %v242
    %9071 = vmatpush.bf16.msra.mxu0 %v241
    %9072 = vmatpush.bf16.msra.mxu0 %v240
    %9073 = vmatpush.bf16.msra.mxu0 %v239
    %9074 = vmatpush.bf16.msra.mxu0 %v238
    %9075 = vmatpush.bf16.msra.mxu0 %v237
    %9076 = vmatmul.bf16.gmra.mxu0 %v9063
    %v9077 = vpop.f32.mrf.mxu0
    %v9078 = vadd.f32 %v9066, %v9077
    %v9079 = vpop.f32.mrf.mxu0
    %v9080 = vadd.f32 %v9066, %v9079
    %9081 = vdwg.mxu0
    %v9084 = vrot.slane %v9078, 2
    %v9085 = vrot.slane %v9078, 4
    %v9086 = vrot.slane %v9078, 6
    %v9087 = vrot.slane %v9080, 2
    %v9088 = vrot.slane %v9080, 4
    %v9089 = vrot.slane %v9080, 6
    %9096 = vst [vmem:[#allocation14] sm:$0x3] %v9078
    %9097 = vst [vmem:[#allocation14 + $0x2] sm:$0x3] %v9084
    %9098 = vst [vmem:[#allocation14 + $0x4] sm:$0x3] %v9085
    %9099 = vst [vmem:[#allocation14 + $0x6] sm:$0x3] %v9086
    %9100 = vst [vmem:[#allocation14 + $0x8] sm:$0x3] %v9080
    %9101 = vst [vmem:[#allocation14 + $0xa] sm:$0x3] %v9087
    %9102 = vst [vmem:[#allocation14 + $0xc] sm:$0x3] %v9088
    %9103 = vst [vmem:[#allocation14 + $0xe] sm:$0x3] %v9089
    // Predicated region
    $region74: #{tpu_custom_call.1} parent=1 // pred_check
      _
    $region75: #{tpu_custom_call.1} parent=1 // pred_check_branch
      %9105 = sbr.rel (0) target = $region77
    $region76: #{tpu_custom_call.1} parent=1 // pred_region
      %9107 = vsyncadd [#allocation4], 0
      %s9108 = sshll.u32 [#allocation14], 4
      %s9109 = int_to_ptr.vmem [resolvable:$true] %s9108
      %s9110 = sshll.u32 %s11, 4
      %s9111 = int_to_ptr.hbm [resolvable:$true] %s9110
      %9116 = dma.vmem_to_hbm [thread:$0]  %s9109, 256, %s9111, [#allocation4], 32, 32, 2
    $region77: #{tpu_custom_call.1} parent=1 // pred_fallthru
      _
    // Predicated region
    $region78: #{tpu_custom_call.1} parent=1 // pred_check
      _
    $region79: #{tpu_custom_call.1} parent=1 // pred_check_branch
      %9118 = sbr.rel (0) target = $region81
    $region80: #{tpu_custom_call.1} parent=1 // pred_region
      %9120 = dma.done [#allocation4], 256
    $region81: #{tpu_custom_call.1} parent=1 // pred_fallthru
      _
    %9121 = vsyncpa [#allocation3], 1
    %9122 = vsyncpa [#allocation6], 1
    %9123 = vsyncpa [#allocation9], 1
    %9124 = vsyncpa [#allocation12], 1
    %9125 = vsyncpa [#allocation4], 1

</llo_original>
